<compile_context>
chip_gen: v6e
topology: v6e:2x2x1
jax: 0.10.0
libtpu: 0.0.40
codegen_flags: <defaults>
</compile_context>

<pallas_src>
import functools

import jax
import jax.numpy as jnp
from jax.experimental import pallas as pl
from jax.experimental.pallas import tpu as pltpu


NEG_SLOPE = 0.2        # GATv2Conv default negative_slope
MASK_VAL = -1e30


# ----------------------------------------------------------------------------
# Kernel
# ----------------------------------------------------------------------------
def _gnn_kernel(sched_ref,                                   # scalar prefetch (index maps only)
                x0_ref, adj_ref, oh_ref, cnt_ref,
                wlre_ref, attce_ref, attre_ref, be_ref,
                wlrp_ref, attcp_ref, attrp_ref, bp_ref,
                out_ref,
                xbuf_ref, hl_ref, hr_ref, hlt_ref, al_ref, ar_ref,
                attb_ref, bb_ref,
                *, n, h, tile_i, hc, t_total, adj_resident, logit_dtype):
    del sched_ref
    t = pl.program_id(0)                                     # layer step (sequential)
    i = pl.program_id(1)                                     # destination-row tile (sequential)
    n_tiles = pl.num_programs(1)
    row0 = pl.multiple_of(i * tile_i, tile_i)

    @pl.when((t == 0) & (i == 0))
    def _init():
        out_ref[...] = jnp.zeros_like(out_ref)

    # ---------------- hoisted once-per-layer-step work (row tile 0) ----------------
    def hoist(x_all, w_lr, att_col, att_row, bias):
        # Fused [in, 2h] weight: one wide MXU matmul computes lin_l and lin_r together.
        hlr = jnp.dot(x_all, w_lr, preferred_element_type=jnp.float32)     # [n, 2h]
        hl = hlr[:, :h]                                                    # source transform
        hr = hlr[:, h:]                                                    # target transform
        hl_ref[...] = hl
        hr_ref[...] = hr
        hl_t = hl.T                                                        # [h, n]
        hlt_ref[...] = hl_t
        # Linear part of att . leaky_relu(hr_i + hl_j), prescaled by the slope:
        #   leaky_relu(z) = slope*z + (1 - slope)*relu(z)
        al_ref[...] = NEG_SLOPE * jnp.sum(hl_t * att_col, axis=0, keepdims=True)  # [1, n]
        ar_ref[...] = NEG_SLOPE * jnp.sum(hr * att_row, axis=1, keepdims=True)    # [n, 1]
        attb_ref[...] = att_col                                            # current-layer att
        bb_ref[...] = bias                                                 # current-layer bias

    @pl.when(i == 0)
    def _hoist():
        @pl.when(t == 0)
        def _enc():
            hoist(x0_ref[...], wlre_ref[...], attce_ref[...], attre_ref[...],
                  be_ref[...])

        @pl.when(t > 0)
        def _proc():
            src = (t + 1) % 2
            hoist(xbuf_ref[src], wlrp_ref[0], attcp_ref[0], attrp_ref[0],
                  bp_ref[0])

    # --------------------------- per-row-tile work ----------------------------------
    if adj_resident:
        adj_tile = adj_ref[pl.ds(row0, tile_i), :]            # resident int8 [n, n]
    else:
        adj_tile = adj_ref[...]                               # streamed int8 [tile_i, n]
    mask = adj_tile.astype(jnp.float32) > 0.0
    oh_tile = oh_ref[...]                                     # [g, tile_i] f32

    hr_tile = hr_ref[pl.ds(row0, tile_i), :]                  # [tile_i, h] f32
    hr_t = hr_tile.T                                          # [h, tile_i] (one tiny transpose)
    hl_t = hlt_ref[...]                                       # [h, n] f32 (hoisted)
    att_all = attb_ref[...]                                   # [h, 1] f32

    # Nonlinear logit part: bounded [hc, tile_i, n] slab, bf16 VPU math, f32 accumulator.
    e_nl = jnp.zeros((tile_i, n), jnp.float32)
    for c0 in range(0, h, hc):
        hr_c = hr_t[c0:c0 + hc, :, None].astype(logit_dtype)      # [hc, tile_i, 1]
        hl_c = hl_t[c0:c0 + hc, None, :].astype(logit_dtype)      # [hc, 1, n]
        att_c = att_all[c0:c0 + hc, :, None].astype(logit_dtype)  # [hc, 1, 1]
        z = jnp.maximum(hr_c + hl_c, 0)                           # relu part only
        e_nl = e_nl + jnp.sum(z * att_c, axis=0).astype(jnp.float32)

    # Full logits: prescaled linear part (exact f32) + (1 - slope) * nonlinear part.
    e = (ar_ref[pl.ds(row0, tile_i), :] + al_ref[...]) + (1.0 - NEG_SLOPE) * e_nl

    # Masked softmax over source nodes (lane axis); all f32.
    e = jnp.where(mask, e, jnp.float32(MASK_VAL))
    m = jnp.max(e, axis=-1, keepdims=True)
    p = jnp.where(mask, jnp.exp(e - m), 0.0)
    denom = jnp.maximum(jnp.sum(p, axis=-1, keepdims=True), 1e-20)  # all-zero-row guard
    alpha = p * pl.reciprocal(denom, approx=True)

    # Attention-weighted aggregation: f32 operands / f32 accumulation (depth accuracy).
    out = jnp.dot(alpha, hl_ref[...], preferred_element_type=jnp.float32) + bb_ref[...]

    @pl.when(t < t_total - 1)
    def _store_activation():                                  # dead on the final step
        y = jnp.maximum(out, 0.0)                             # ReLU for the next layer
        xbuf_ref[pl.ds(t % 2, 1), pl.ds(row0, tile_i), :] = y[None]

    @pl.when(t == t_total - 1)
    def _pool():
        # Final layer feeds the pool WITHOUT ReLU (unless the encoder is the only layer).
        pool_src = jnp.maximum(out, 0.0) if t_total == 1 else out
        out_ref[...] = out_ref[...] + jnp.dot(oh_tile, pool_src,
                                              preferred_element_type=jnp.float32)

    @pl.when((t == t_total - 1) & (i == n_tiles - 1))
    def _normalize():
        cnt = jnp.maximum(cnt_ref[...], 1.0)                  # [g, 1]
        out_ref[...] = out_ref[...] / cnt


# ----------------------------------------------------------------------------
# Wrapper
# ----------------------------------------------------------------------------
def gnn_embedder_forward(x, adj, batch_onehot, params, *, num_layers, num_iter,
                         logit_dtype=jnp.bfloat16):
    """Mirrors GNNEmbedder.forward (dropout attr is unused in forward()).

    logit_dtype: dtype of the O(N^2*H) attention-logit slab; bf16 is ~2x VALU throughput
    on v6e/v7x. Pass jnp.float32 on v5e (no native bf16 VPU).
    """
    n0, f = x.shape
    h = params["encoder"]["wl"].shape[1]
    g = batch_onehot.shape[0]

    if num_layers > 1 and num_iter < 1:
        # TODO(synk): the PyTorch module silently returns None in this case.
        raise ValueError("num_iter must be >= 1 when num_layers > 1")

    p_layers = num_layers - 1
    t_total = 1 if num_layers == 1 else 1 + p_layers * num_iter

    # ---- pad the node axis to a lane-dense multiple of the row tile (no tile_i=n fallback)
    tile_i = 128            # TODO(synk): consider 256 on v5e/v6e where 128 MiB VMEM allows.
    n = ((n0 + tile_i - 1) // tile_i) * tile_i
    if n != n0:
        x = jnp.pad(x, ((0, n - n0), (0, 0)))
        adj = jnp.pad(adj, ((0, n - n0), (0, n - n0)))
        batch_onehot = jnp.pad(batch_onehot, ((0, 0), (0, n - n0)))
    n_tiles = n // tile_i

    adj_i8 = (adj != 0).astype(jnp.int8)                      # 0/1 mask, 1 byte/element
    batch_onehot = batch_onehot.astype(jnp.float32)
    counts = jnp.sum(batch_onehot, axis=1, keepdims=True)     # [g, 1] (padded cols are 0)

    enc = params["encoder"]
    wlr_e = jnp.concatenate([enc["wl"], enc["wr"]], axis=1)   # [f, 2h] fused wl|wr
    attc_e = enc["att"].astype(jnp.float32)                   # [h, 1]
    attr_e = attc_e.T                                         # [1, h]
    b_e = enc["bias"]

    # Per-step process-layer schedule (entry 0 is the encoder step; value unused there).
    if p_layers > 0:
        sched = jnp.asarray([0] + [(t - 1) % p_layers for t in range(1, t_total)],
                            dtype=jnp.int32)
        wlr_p = jnp.stack([jnp.concatenate([q["wl"], q["wr"]], axis=1)
                           for q in params["process"]])       # [P, h, 2h]
        attc_p = jnp.stack([q["att"] for q in params["process"]])        # [P, h, 1]
        attr_p = jnp.stack([q["att"].T for q in params["process"]])      # [P, 1, h]
        b_p = jnp.stack([q["bias"] for q in params["process"]])          # [P, 1, h]
    else:                                                     # dummies (never selected)
        sched = jnp.zeros((1,), jnp.int32)
        wlr_p = jnp.zeros((1, h, 2 * h), jnp.float32)
        attc_p = jnp.zeros((1, h, 1), jnp.float32)
        attr_p = jnp.zeros((1, 1, h), jnp.float32)
        b_p = jnp.zeros((1, 1, h), jnp.float32)

    # H-chunk size for the logit slab (bounds the [hc, tile_i, n] temporary).
    hc = next(c for c in (8, 4, 2, 1) if h % c == 0)
    lb = jnp.dtype(logit_dtype).itemsize
    while hc > 1 and hc * tile_i * n * lb > 8 * 1024 * 1024:
        hc //= 2

    # Adjacency residency: keep the whole int8 mask in VMEM when it is small enough,
    # so it is not re-streamed from HBM for every layer step.
    adj_resident = (n * n) <= 16 * 1024 * 1024
    if adj_resident:
        adj_spec = pl.BlockSpec((n, n), lambda t, i, s: (0, 0))
    else:
        adj_spec = pl.BlockSpec((tile_i, n), lambda t, i, s: (i, 0))

    # VMEM budget derived from shapes (instead of a hardcoded limit).
    f32 = 4
    scratch_bytes = (2 * n * h + n * h + n * h + h * n + n + n + h + h) * f32
    block_bytes = 2 * n * f * f32                              # x0 (double-buffered)
    block_bytes += (n * n) if adj_resident else (2 * tile_i * n)
    block_bytes += 2 * g * tile_i * f32 + 2 * g * f32          # one-hot tiles + counts
    block_bytes += 2 * (f * 2 * h + 2 * h + h) * f32           # encoder weights
    block_bytes += 2 * (h * 2 * h + 2 * h + h) * f32           # process weights
    block_bytes += 2 * g * h * f32                             # pooled output block
    temp_bytes = hc * tile_i * n * lb + 8 * tile_i * n * f32   # slab + e/p/alpha/mask temps
    budget = scratch_bytes + block_bytes + temp_bytes
    try:
        phys = pltpu.get_tpu_info().vmem_capacity_bytes
    except Exception:                                          # conservative (v7x-sized)
        phys = 64 * 1024 * 1024
    vmem_limit = min(int(0.85 * phys), max(32 * 1024 * 1024, int(1.5 * budget)))

    kern = functools.partial(_gnn_kernel, n=n, h=h, tile_i=tile_i, hc=hc,
                             t_total=t_total, adj_resident=adj_resident,
                             logit_dtype=logit_dtype)

    grid_spec = pltpu.PrefetchScalarGridSpec(
        num_scalar_prefetch=1,
        grid=(t_total, n_tiles),
        in_specs=[
            pl.BlockSpec((n, f), lambda t, i, s: (0, 0)),             # x0 (resident)
            adj_spec,                                                 # int8 adjacency
            pl.BlockSpec((g, tile_i), lambda t, i, s: (0, i)),        # one-hot column tiles
            pl.BlockSpec((g, 1), lambda t, i, s: (0, 0)),             # per-graph node counts
            pl.BlockSpec((f, 2 * h), lambda t, i, s: (0, 0)),         # encoder [wl|wr]
            pl.BlockSpec((h, 1), lambda t, i, s: (0, 0)),             # encoder att (col)
            pl.BlockSpec((1, h), lambda t, i, s: (0, 0)),             # encoder att (row)
            pl.BlockSpec((1, h), lambda t, i, s: (0, 0)),             # encoder bias
            pl.BlockSpec((1, h, 2 * h), lambda t, i, s: (s[t], 0, 0)),  # process [wl|wr]
            pl.BlockSpec((1, h, 1), lambda t, i, s: (s[t], 0, 0)),    # process att (col)
            pl.BlockSpec((1, 1, h), lambda t, i, s: (s[t], 0, 0)),    # process att (row)
            pl.BlockSpec((1, 1, h), lambda t, i, s: (s[t], 0, 0)),    # process bias
        ],
        out_specs=pl.BlockSpec((g, h), lambda t, i, s: (0, 0)),       # pooled accumulator
        scratch_shapes=[
            pltpu.VMEM((2, n, h), jnp.float32),   # activation ping-pong (static slots)
            pltpu.VMEM((n, h), jnp.float32),      # hl  : hoisted source transform
            pltpu.VMEM((n, h), jnp.float32),      # hr  : hoisted target transform
            pltpu.VMEM((h, n), jnp.float32),      # hl^T for the logit slab
            pltpu.VMEM((1, n), jnp.float32),      # slope * att.hl per source
            pltpu.VMEM((n, 1), jnp.float32),      # slope * att.hr per target
            pltpu.VMEM((h, 1), jnp.float32),      # current-layer att
            pltpu.VMEM((1, h), jnp.float32),      # current-layer bias
        ],
    )

    return pl.pallas_call(
        kern,
        out_shape=jax.ShapeDtypeStruct((g, h), jnp.float32),
        grid_spec=grid_spec,
        compiler_params=pltpu.CompilerParams(
            dimension_semantics=("arbitrary", "arbitrary"),
            vmem_limit_bytes=vmem_limit,
        ),
    )(sched, x, adj_i8, batch_onehot, counts,
      wlr_e, attc_e, attr_e, b_e, wlr_p, attc_p, attr_p, b_p)


# ----------------------------------------------------------------------------
# Deterministic parameter init (GATv2Conv shapes: lin_l, lin_r, att, bias)
# ----------------------------------------------------------------------------
def init_gat_params(key, in_dim, out_dim):
    k1, k2, k3 = jax.random.split(key, 3)
    s_in = 1.0 / jnp.sqrt(jnp.float32(in_dim))
    s_h = 1.0 / jnp.sqrt(jnp.float32(out_dim))
    return {
        "wl": jax.random.uniform(k1, (in_dim, out_dim), jnp.float32, -s_in, s_in),
        "wr": jax.random.uniform(k2, (in_dim, out_dim), jnp.float32, -s_in, s_in),
        "att": jax.random.uniform(k3, (out_dim, 1), jnp.float32, -s_h, s_h),
        "bias": jnp.zeros((1, out_dim), jnp.float32),
    }


# ----------------------------------------------------------------------------
# Pure-JAX reference (for a loose numerical sanity check)
# ----------------------------------------------------------------------------
def _gat_ref(x, adj, p, apply_relu):
    hl = x @ p["wl"]
    hr = x @ p["wr"]
    z = hr[:, None, :] + hl[None, :, :]
    z = jnp.maximum(z, NEG_SLOPE * z)
    e = jnp.einsum("ijh,h->ij", z, p["att"][:, 0])
    mask = adj > 0
    e = jnp.where(mask, e, MASK_VAL)
    e = e - jnp.max(e, axis=-1, keepdims=True)
    w = jnp.where(mask, jnp.exp(e), 0.0)
    alpha = w / jnp.maximum(jnp.sum(w, axis=-1, keepdims=True), 1e-20)
    out = alpha @ hl + p["bias"]
    return jnp.maximum(out, 0.0) if apply_relu else out


def _forward_ref(x, adj, batch_onehot, params, *, num_layers, num_iter):
    x = _gat_ref(x, adj, params["encoder"], True)
    if num_layers == 1:
        pooled = batch_onehot @ x
    else:
        for it in range(num_iter):
            for i, p in enumerate(params["process"]):
                last = (i == num_layers - 2) and (it == num_iter - 1)
                x = _gat_ref(x, adj, p, not last)
                if last:
                    pooled = batch_onehot @ x
    counts = jnp.sum(batch_onehot, axis=1, keepdims=True)
    return pooled / jnp.maximum(counts, 1.0)


if __name__ == "__main__":
    # Small deterministic problem: 2 graphs of 8 nodes each.
    N, F, H = 16, 8, 32
    G = 2
    NUM_LAYERS = 2
    NUM_ITER = 2

    root = jax.random.PRNGKey(0)
    kx, kadj, kenc, kproc = jax.random.split(root, 4)

    # Node features.
    x = jax.random.normal(kx, (N, F), jnp.float32)

    # Random symmetric adjacency with self-loops (dense 0/1 mask).
    a = (jax.random.uniform(kadj, (N, N)) < 0.25).astype(jnp.float32)
    adj = jnp.clip(a + a.T + jnp.eye(N, dtype=jnp.float32), 0.0, 1.0)

    # batch assignment: first 8 nodes -> graph 0, last 8 -> graph 1.
    batch = jnp.concatenate([jnp.zeros((8,), jnp.int32), jnp.ones((8,), jnp.int32)])
    batch_onehot = (batch[None, :] == jnp.arange(G, dtype=jnp.int32)[:, None]).astype(jnp.float32)

    params = {
        "encoder": init_gat_params(kenc, F, H),
        "process": [
            init_gat_params(jax.random.fold_in(kproc, i), H, H)
            for i in range(NUM_LAYERS - 1)
        ],
    }

    out = gnn_embedder_forward(
        x, adj, batch_onehot, params, num_layers=NUM_LAYERS, num_iter=NUM_ITER
    )
    out = jax.block_until_ready(out)
    assert out.shape == (G, H) and out.dtype == jnp.float32
    assert bool(jnp.all(jnp.isfinite(out)))

    ref = _forward_ref(
        x, adj, batch_onehot, params, num_layers=NUM_LAYERS, num_iter=NUM_ITER
    )
    ref = jax.block_until_ready(ref)
    # Loose tolerance: bf16 attention-logit slab + approx reciprocal in the softmax.
    assert bool(jnp.allclose(out, ref, rtol=5e-2, atol=5e-2)), (
        f"max abs diff {float(jnp.max(jnp.abs(out - ref)))}"
    )
    print("KERNEL_OK")
</pallas_src>

<mosaic_0001>
module attributes {stable_mosaic.version = 11 : i64} {
  func.func @_gnn_kernel(%arg0: i32, %arg1: i32, %arg2: memref<3xi32, #tpu.memory_space<smem>>, %arg3: memref<128x8xf32, #tpu.memory_space<vmem>>, %arg4: memref<128x128xi8, #tpu.memory_space<vmem>>, %arg5: memref<2x128xf32, #tpu.memory_space<vmem>>, %arg6: memref<2x1xf32, #tpu.memory_space<vmem>>, %arg7: memref<8x64xf32, #tpu.memory_space<vmem>>, %arg8: memref<32x1xf32, #tpu.memory_space<vmem>>, %arg9: memref<1x32xf32, #tpu.memory_space<vmem>>, %arg10: memref<1x32xf32, #tpu.memory_space<vmem>>, %arg11: memref<1x32x64xf32, #tpu.memory_space<vmem>>, %arg12: memref<1x32x1xf32, #tpu.memory_space<vmem>>, %arg13: memref<1x1x32xf32, #tpu.memory_space<vmem>>, %arg14: memref<1x1x32xf32, #tpu.memory_space<vmem>>, %arg15: memref<2x32xf32, #tpu.memory_space<vmem>>, %arg16: memref<2x128x32xf32, #tpu.memory_space<vmem>>, %arg17: memref<128x32xf32, #tpu.memory_space<vmem>>, %arg18: memref<128x32xf32, #tpu.memory_space<vmem>>, %arg19: memref<32x128xf32, #tpu.memory_space<vmem>>, %arg20: memref<1x128xf32, #tpu.memory_space<vmem>>, %arg21: memref<128x1xf32, #tpu.memory_space<vmem>>, %arg22: memref<32x1xf32, #tpu.memory_space<vmem>>, %arg23: memref<1x32xf32, #tpu.memory_space<vmem>>) attributes {dimension_semantics = [#tpu.dimension_semantics<arbitrary>, #tpu.dimension_semantics<arbitrary>], iteration_bounds = array<i64: 3, 1>, scalar_prefetch = 1 : i64, scratch_operands = 8 : i64, tpu.core_type = #tpu.core_type<tc>, window_params = [{pipeline_mode = #tpu.pipeline_mode<synchronous>, transform_indices = @transform_0, window_bounds = array<i64: 128, 8>}, {pipeline_mode = #tpu.pipeline_mode<synchronous>, transform_indices = @transform_1, window_bounds = array<i64: 128, 128>}, {transform_indices = @transform_2, window_bounds = array<i64: 2, 128>}, {pipeline_mode = #tpu.pipeline_mode<synchronous>, transform_indices = @transform_3, window_bounds = array<i64: 2, 1>}, {pipeline_mode = #tpu.pipeline_mode<synchronous>, transform_indices = @transform_4, window_bounds = array<i64: 8, 64>}, {pipeline_mode = #tpu.pipeline_mode<synchronous>, transform_indices = @transform_5, window_bounds = array<i64: 32, 1>}, {pipeline_mode = #tpu.pipeline_mode<synchronous>, transform_indices = @transform_6, window_bounds = array<i64: 1, 32>}, {pipeline_mode = #tpu.pipeline_mode<synchronous>, transform_indices = @transform_7, window_bounds = array<i64: 1, 32>}, {transform_indices = @transform_8, window_bounds = array<i64: 1, 32, 64>}, {transform_indices = @transform_9, window_bounds = array<i64: 1, 32, 1>}, {transform_indices = @transform_10, window_bounds = array<i64: 1, 1, 32>}, {transform_indices = @transform_11, window_bounds = array<i64: 1, 1, 32>}, {pipeline_mode = #tpu.pipeline_mode<synchronous>, transform_indices = @transform_12, window_bounds = array<i64: 2, 32>}]} {
    %c128_i32 = arith.constant 128 : i32
    %0 = arith.muli %arg1, %c128_i32 : i32
    %1 = tpu.assume_multiple %0, 128 : i32
    %c0_i32 = arith.constant 0 : i32
    %2 = arith.cmpi eq, %arg0, %c0_i32 : i32
    %c0_i32_0 = arith.constant 0 : i32
    %3 = arith.cmpi eq, %arg1, %c0_i32_0 : i32
    %4 = arith.andi %2, %3 : i1
    %5 = arith.extui %4 : i1 to i32
    %c0_i32_1 = arith.constant 0 : i32
    %6 = arith.cmpi ne, %5, %c0_i32_1 : i32
    scf.if %6 {
      %cst_40 = arith.constant 0.000000e+00 : f32
      %147 = vector.broadcast %cst_40 : f32 to vector<2x32xf32>
      %c0_41 = arith.constant 0 : index
      %c0_42 = arith.constant 0 : index
      %148 = vector.load %arg15[%c0_41, %c0_42] : memref<2x32xf32, #tpu.memory_space<vmem>>, vector<2x32xf32>
      tpu.vector_store %arg15[%c0_41, %c0_42], %147 {strides = array<i32>} : memref<2x32xf32, #tpu.memory_space<vmem>>, vector<2x32xf32>,
    } else {
    }
    %c0_i32_2 = arith.constant 0 : i32
    %7 = arith.cmpi eq, %arg1, %c0_i32_2 : i32
    %8 = arith.extui %7 : i1 to i32
    %c0_i32_3 = arith.constant 0 : i32
    %9 = arith.cmpi ne, %8, %c0_i32_3 : i32
    scf.if %9 {
      %c0_i32_40 = arith.constant 0 : i32
      %147 = arith.cmpi eq, %arg0, %c0_i32_40 : i32
      %148 = arith.extui %147 : i1 to i32
      %c0_i32_41 = arith.constant 0 : i32
      %149 = arith.cmpi ne, %148, %c0_i32_41 : i32
      scf.if %149 {
        %c0_44 = arith.constant 0 : index
        %c0_45 = arith.constant 0 : index
        %153 = vector.load %arg3[%c0_44, %c0_45] : memref<128x8xf32, #tpu.memory_space<vmem>>, vector<128x8xf32>
        %c0_46 = arith.constant 0 : index
        %c0_47 = arith.constant 0 : index
        %154 = vector.load %arg7[%c0_46, %c0_47] : memref<8x64xf32, #tpu.memory_space<vmem>>, vector<8x64xf32>
        %c0_48 = arith.constant 0 : index
        %c0_49 = arith.constant 0 : index
        %155 = vector.load %arg8[%c0_48, %c0_49] : memref<32x1xf32, #tpu.memory_space<vmem>>, vector<32x1xf32>
        %c0_50 = arith.constant 0 : index
        %c0_51 = arith.constant 0 : index
        %156 = vector.load %arg9[%c0_50, %c0_51] : memref<1x32xf32, #tpu.memory_space<vmem>>, vector<1x32xf32>
        %c0_52 = arith.constant 0 : index
        %c0_53 = arith.constant 0 : index
        %157 = vector.load %arg10[%c0_52, %c0_53] : memref<1x32xf32, #tpu.memory_space<vmem>>, vector<1x32xf32>
        %cst_54 = arith.constant dense<0.000000e+00> : vector<128x64xf32>
        %158 = tpu.matmul %153, %154, %cst_54 {dimension_numbers = #tpu.dot_dimension_numbers<[1], [0], [0], [1], [0, 0, 1, 1], [], []>} : vector<128x8xf32>, vector<8x64xf32>, vector<128x64xf32> -> vector<128x64xf32>
        %159 = vector.extract_strided_slice %158 {offsets = [0, 0], sizes = [128, 32], strides = [1, 1]} : vector<128x64xf32> to vector<128x32xf32>
        %160 = vector.extract_strided_slice %158 {offsets = [0, 32], sizes = [128, 32], strides = [1, 1]} : vector<128x64xf32> to vector<128x32xf32>
        %c0_55 = arith.constant 0 : index
        %c0_56 = arith.constant 0 : index
        %161 = vector.load %arg17[%c0_55, %c0_56] : memref<128x32xf32, #tpu.memory_space<vmem>>, vector<128x32xf32>
        tpu.vector_store %arg17[%c0_55, %c0_56], %159 {strides = array<i32>} : memref<128x32xf32, #tpu.memory_space<vmem>>, vector<128x32xf32>,
        %c0_57 = arith.constant 0 : index
        %c0_58 = arith.constant 0 : index
        %162 = vector.load %arg18[%c0_57, %c0_58] : memref<128x32xf32, #tpu.memory_space<vmem>>, vector<128x32xf32>
        tpu.vector_store %arg18[%c0_57, %c0_58], %160 {strides = array<i32>} : memref<128x32xf32, #tpu.memory_space<vmem>>, vector<128x32xf32>,
        %163 = tpu.transpose %159, [1, 0] : vector<128x32xf32> -> vector<32x128xf32>
        %c0_59 = arith.constant 0 : index
        %c0_60 = arith.constant 0 : index
        %164 = vector.load %arg19[%c0_59, %c0_60] : memref<32x128xf32, #tpu.memory_space<vmem>>, vector<32x128xf32>
        tpu.vector_store %arg19[%c0_59, %c0_60], %163 {strides = array<i32>} : memref<32x128xf32, #tpu.memory_space<vmem>>, vector<32x128xf32>,
        %165 = vector.broadcast %155 : vector<32x1xf32> to vector<32x128xf32>
        %166 = arith.mulf %163, %165 : vector<32x128xf32>
        %cst_61 = arith.constant dense<0.000000e+00> : vector<128xf32>
        %167 = vector.multi_reduction <add>, %166, %cst_61 [0] : vector<32x128xf32> to vector<128xf32>
        %168 = vector.shape_cast %167 : vector<128xf32> to vector<1x128xf32>
        %cst_62 = arith.constant 2.000000e-01 : f32
        %169 = vector.broadcast %cst_62 : f32 to vector<1x128xf32>
        %170 = arith.mulf %169, %168 : vector<1x128xf32>
        %c0_63 = arith.constant 0 : index
        %c0_64 = arith.constant 0 : index
        %171 = vector.load %arg20[%c0_63, %c0_64] : memref<1x128xf32, #tpu.memory_space<vmem>>, vector<1x128xf32>
        tpu.vector_store %arg20[%c0_63, %c0_64], %170 {strides = array<i32>} : memref<1x128xf32, #tpu.memory_space<vmem>>, vector<1x128xf32>,
        %172 = vector.broadcast %156 : vector<1x32xf32> to vector<128x32xf32>
        %173 = arith.mulf %160, %172 : vector<128x32xf32>
        %cst_65 = arith.constant dense<0.000000e+00> : vector<128xf32>
        %174 = vector.multi_reduction <add>, %173, %cst_65 [1] : vector<128x32xf32> to vector<128xf32>
        %175 = vector.shape_cast %174 : vector<128xf32> to vector<128x1xf32>
        %cst_66 = arith.constant 2.000000e-01 : f32
        %176 = vector.broadcast %cst_66 : f32 to vector<128x1xf32>
        %177 = arith.mulf %176, %175 : vector<128x1xf32>
        %c0_67 = arith.constant 0 : index
        %c0_68 = arith.constant 0 : index
        %178 = vector.load %arg21[%c0_67, %c0_68] : memref<128x1xf32, #tpu.memory_space<vmem>>, vector<128x1xf32>
        tpu.vector_store %arg21[%c0_67, %c0_68], %177 {strides = array<i32>} : memref<128x1xf32, #tpu.memory_space<vmem>>, vector<128x1xf32>,
        %c0_69 = arith.constant 0 : index
        %c0_70 = arith.constant 0 : index
        %179 = vector.load %arg22[%c0_69, %c0_70] : memref<32x1xf32, #tpu.memory_space<vmem>>, vector<32x1xf32>
        tpu.vector_store %arg22[%c0_69, %c0_70], %155 {strides = array<i32>} : memref<32x1xf32, #tpu.memory_space<vmem>>, vector<32x1xf32>,
        %c0_71 = arith.constant 0 : index
        %c0_72 = arith.constant 0 : index
        %180 = vector.load %arg23[%c0_71, %c0_72] : memref<1x32xf32, #tpu.memory_space<vmem>>, vector<1x32xf32>
        tpu.vector_store %arg23[%c0_71, %c0_72], %157 {strides = array<i32>} : memref<1x32xf32, #tpu.memory_space<vmem>>, vector<1x32xf32>,
      } else {
      }
      %c0_i32_42 = arith.constant 0 : i32
      %150 = arith.cmpi sgt, %arg0, %c0_i32_42 : i32
      %151 = arith.extui %150 : i1 to i32
      %c0_i32_43 = arith.constant 0 : i32
      %152 = arith.cmpi ne, %151, %c0_i32_43 : i32
      scf.if %152 {
        %c1_i32 = arith.constant 1 : i32
        %153 = arith.addi %arg0, %c1_i32 : i32
        %c2_i32_44 = arith.constant 2 : i32
        %c0_i32_45 = arith.constant 0 : i32
        %154 = arith.cmpi eq, %c2_i32_44, %c0_i32_45 : i32
        %c1_i32_46 = arith.constant 1 : i32
        %155 = arith.select %154, %c1_i32_46, %c2_i32_44 : i32
        %156 = arith.remsi %153, %155 : i32
        %c0_i32_47 = arith.constant 0 : i32
        %157 = arith.cmpi ne, %156, %c0_i32_47 : i32
        %c0_i32_48 = arith.constant 0 : i32
        %158 = arith.cmpi slt, %156, %c0_i32_48 : i32
        %c0_i32_49 = arith.constant 0 : i32
        %159 = arith.cmpi slt, %155, %c0_i32_49 : i32
        %160 = arith.xori %158, %159 : i1
        %161 = arith.andi %160, %157 : i1
        %162 = arith.addi %156, %155 : i32
        %163 = arith.select %161, %162, %156 : i32
        %164 = arith.index_cast %163 : i32 to index
        %c0_50 = arith.constant 0 : index
        %c0_51 = arith.constant 0 : index
        %165 = vector.load %arg16[%164, %c0_50, %c0_51] : memref<2x128x32xf32, #tpu.memory_space<vmem>>, vector<1x128x32xf32>
        %166 = vector.shape_cast %165 : vector<1x128x32xf32> to vector<128x32xf32>
        %c0_52 = arith.constant 0 : index
        %c0_53 = arith.constant 0 : index
        %c0_54 = arith.constant 0 : index
        %167 = vector.load %arg11[%c0_52, %c0_53, %c0_54] : memref<1x32x64xf32, #tpu.memory_space<vmem>>, vector<1x32x64xf32>
        %168 = vector.shape_cast %167 : vector<1x32x64xf32> to vector<32x64xf32>
        %c0_55 = arith.constant 0 : index
        %c0_56 = arith.constant 0 : index
        %c0_57 = arith.constant 0 : index
        %169 = vector.load %arg12[%c0_55, %c0_56, %c0_57] : memref<1x32x1xf32, #tpu.memory_space<vmem>>, vector<1x32x1xf32>
        %170 = vector.shape_cast %169 : vector<1x32x1xf32> to vector<32x1xf32>
        %c0_58 = arith.constant 0 : index
        %c0_59 = arith.constant 0 : index
        %c0_60 = arith.constant 0 : index
        %171 = vector.load %arg13[%c0_58, %c0_59, %c0_60] : memref<1x1x32xf32, #tpu.memory_space<vmem>>, vector<1x1x32xf32>
        %172 = vector.shape_cast %171 : vector<1x1x32xf32> to vector<1x32xf32>
        %c0_61 = arith.constant 0 : index
        %c0_62 = arith.constant 0 : index
        %c0_63 = arith.constant 0 : index
        %173 = vector.load %arg14[%c0_61, %c0_62, %c0_63] : memref<1x1x32xf32, #tpu.memory_space<vmem>>, vector<1x1x32xf32>
        %174 = vector.shape_cast %173 : vector<1x1x32xf32> to vector<1x32xf32>
        %cst_64 = arith.constant dense<0.000000e+00> : vector<128x64xf32>
        %175 = tpu.matmul %166, %168, %cst_64 {dimension_numbers = #tpu.dot_dimension_numbers<[1], [0], [0], [1], [0, 0, 1, 1], [], []>} : vector<128x32xf32>, vector<32x64xf32>, vector<128x64xf32> -> vector<128x64xf32>
        %176 = vector.extract_strided_slice %175 {offsets = [0, 0], sizes = [128, 32], strides = [1, 1]} : vector<128x64xf32> to vector<128x32xf32>
        %177 = vector.extract_strided_slice %175 {offsets = [0, 32], sizes = [128, 32], strides = [1, 1]} : vector<128x64xf32> to vector<128x32xf32>
        %c0_65 = arith.constant 0 : index
        %c0_66 = arith.constant 0 : index
        %178 = vector.load %arg17[%c0_65, %c0_66] : memref<128x32xf32, #tpu.memory_space<vmem>>, vector<128x32xf32>
        tpu.vector_store %arg17[%c0_65, %c0_66], %176 {strides = array<i32>} : memref<128x32xf32, #tpu.memory_space<vmem>>, vector<128x32xf32>,
        %c0_67 = arith.constant 0 : index
        %c0_68 = arith.constant 0 : index
        %179 = vector.load %arg18[%c0_67, %c0_68] : memref<128x32xf32, #tpu.memory_space<vmem>>, vector<128x32xf32>
        tpu.vector_store %arg18[%c0_67, %c0_68], %177 {strides = array<i32>} : memref<128x32xf32, #tpu.memory_space<vmem>>, vector<128x32xf32>,
        %180 = tpu.transpose %176, [1, 0] : vector<128x32xf32> -> vector<32x128xf32>
        %c0_69 = arith.constant 0 : index
        %c0_70 = arith.constant 0 : index
        %181 = vector.load %arg19[%c0_69, %c0_70] : memref<32x128xf32, #tpu.memory_space<vmem>>, vector<32x128xf32>
        tpu.vector_store %arg19[%c0_69, %c0_70], %180 {strides = array<i32>} : memref<32x128xf32, #tpu.memory_space<vmem>>, vector<32x128xf32>,
        %182 = vector.broadcast %170 : vector<32x1xf32> to vector<32x128xf32>
        %183 = arith.mulf %180, %182 : vector<32x128xf32>
        %cst_71 = arith.constant dense<0.000000e+00> : vector<128xf32>
        %184 = vector.multi_reduction <add>, %183, %cst_71 [0] : vector<32x128xf32> to vector<128xf32>
        %185 = vector.shape_cast %184 : vector<128xf32> to vector<1x128xf32>
        %cst_72 = arith.constant 2.000000e-01 : f32
        %186 = vector.broadcast %cst_72 : f32 to vector<1x128xf32>
        %187 = arith.mulf %186, %185 : vector<1x128xf32>
        %c0_73 = arith.constant 0 : index
        %c0_74 = arith.constant 0 : index
        %188 = vector.load %arg20[%c0_73, %c0_74] : memref<1x128xf32, #tpu.memory_space<vmem>>, vector<1x128xf32>
        tpu.vector_store %arg20[%c0_73, %c0_74], %187 {strides = array<i32>} : memref<1x128xf32, #tpu.memory_space<vmem>>, vector<1x128xf32>,
        %189 = vector.broadcast %172 : vector<1x32xf32> to vector<128x32xf32>
        %190 = arith.mulf %177, %189 : vector<128x32xf32>
        %cst_75 = arith.constant dense<0.000000e+00> : vector<128xf32>
        %191 = vector.multi_reduction <add>, %190, %cst_75 [1] : vector<128x32xf32> to vector<128xf32>
        %192 = vector.shape_cast %191 : vector<128xf32> to vector<128x1xf32>
        %cst_76 = arith.constant 2.000000e-01 : f32
        %193 = vector.broadcast %cst_76 : f32 to vector<128x1xf32>
        %194 = arith.mulf %193, %192 : vector<128x1xf32>
        %c0_77 = arith.constant 0 : index
        %c0_78 = arith.constant 0 : index
        %195 = vector.load %arg21[%c0_77, %c0_78] : memref<128x1xf32, #tpu.memory_space<vmem>>, vector<128x1xf32>
        tpu.vector_store %arg21[%c0_77, %c0_78], %194 {strides = array<i32>} : memref<128x1xf32, #tpu.memory_space<vmem>>, vector<128x1xf32>,
        %c0_79 = arith.constant 0 : index
        %c0_80 = arith.constant 0 : index
        %196 = vector.load %arg22[%c0_79, %c0_80] : memref<32x1xf32, #tpu.memory_space<vmem>>, vector<32x1xf32>
        tpu.vector_store %arg22[%c0_79, %c0_80], %170 {strides = array<i32>} : memref<32x1xf32, #tpu.memory_space<vmem>>, vector<32x1xf32>,
        %c0_81 = arith.constant 0 : index
        %c0_82 = arith.constant 0 : index
        %197 = vector.load %arg23[%c0_81, %c0_82] : memref<1x32xf32, #tpu.memory_space<vmem>>, vector<1x32xf32>
        tpu.vector_store %arg23[%c0_81, %c0_82], %174 {strides = array<i32>} : memref<1x32xf32, #tpu.memory_space<vmem>>, vector<1x32xf32>,
      } else {
      }
    } else {
    }
    %10 = arith.index_cast %1 : i32 to index
    %c0 = arith.constant 0 : index
    %11 = vector.load %arg4[%10, %c0] : memref<128x128xi8, #tpu.memory_space<vmem>>, vector<128x128xi8>
    %12 = arith.sitofp %11 : vector<128x128xi8> to vector<128x128xf32>
    %cst = arith.constant 0.000000e+00 : f32
    %13 = vector.broadcast %cst : f32 to vector<128x128xf32>
    %14 = arith.cmpf ogt, %12, %13 : vector<128x128xf32>
    %c0_4 = arith.constant 0 : index
    %c0_5 = arith.constant 0 : index
    %15 = vector.load %arg5[%c0_4, %c0_5] : memref<2x128xf32, #tpu.memory_space<vmem>>, vector<2x128xf32>
    %16 = arith.index_cast %1 : i32 to index
    %c0_6 = arith.constant 0 : index
    %17 = vector.load %arg18[%16, %c0_6] : memref<128x32xf32, #tpu.memory_space<vmem>>, vector<128x32xf32>
    %18 = tpu.transpose %17, [1, 0] : vector<128x32xf32> -> vector<32x128xf32>
    %c0_7 = arith.constant 0 : index
    %c0_8 = arith.constant 0 : index
    %19 = vector.load %arg19[%c0_7, %c0_8] : memref<32x128xf32, #tpu.memory_space<vmem>>, vector<32x128xf32>
    %c0_9 = arith.constant 0 : index
    %c0_10 = arith.constant 0 : index
    %20 = vector.load %arg22[%c0_9, %c0_10] : memref<32x1xf32, #tpu.memory_space<vmem>>, vector<32x1xf32>
    %cst_11 = arith.constant 0.000000e+00 : f32
    %21 = vector.broadcast %cst_11 : f32 to vector<128x128xf32>
    %22 = vector.extract_strided_slice %18 {offsets = [0, 0], sizes = [8, 128], strides = [1, 1]} : vector<32x128xf32> to vector<8x128xf32>
    %23 = vector.shape_cast %22 : vector<8x128xf32> to vector<8x128x1xf32>
    %24 = arith.truncf %23 : vector<8x128x1xf32> to vector<8x128x1xbf16>
    %25 = vector.extract_strided_slice %19 {offsets = [0, 0], sizes = [8, 128], strides = [1, 1]} : vector<32x128xf32> to vector<8x128xf32>
    %26 = vector.shape_cast %25 : vector<8x128xf32> to vector<8x1x128xf32>
    %27 = arith.truncf %26 : vector<8x1x128xf32> to vector<8x1x128xbf16>
    %28 = vector.extract_strided_slice %20 {offsets = [0, 0], sizes = [8, 1], strides = [1, 1]} : vector<32x1xf32> to vector<8x1xf32>
    %29 = vector.shape_cast %28 : vector<8x1xf32> to vector<8x1x1xf32>
    %30 = arith.truncf %29 : vector<8x1x1xf32> to vector<8x1x1xbf16>
    %31 = vector.broadcast %24 : vector<8x128x1xbf16> to vector<8x128x128xbf16>
    %32 = vector.broadcast %27 : vector<8x1x128xbf16> to vector<8x128x128xbf16>
    %33 = arith.addf %31, %32 : vector<8x128x128xbf16>
    %cst_12 = arith.constant 0.000000e+00 : bf16
    %34 = vector.broadcast %cst_12 : bf16 to vector<8x128x128xbf16>
    %35 = arith.maximumf %33, %34 : vector<8x128x128xbf16>
    %36 = vector.broadcast %30 : vector<8x1x1xbf16> to vector<8x128x128xbf16>
    %37 = arith.mulf %35, %36 : vector<8x128x128xbf16>
    %38 = arith.extf %37 : vector<8x128x128xbf16> to vector<8x128x128xf32>
    %cst_13 = arith.constant dense<0.000000e+00> : vector<128x128xf32>
    %39 = vector.multi_reduction <add>, %38, %cst_13 [0] : vector<8x128x128xf32> to vector<128x128xf32>
    %40 = arith.truncf %39 : vector<128x128xf32> to vector<128x128xbf16>
    %41 = arith.extf %40 : vector<128x128xbf16> to vector<128x128xf32>
    %42 = arith.addf %21, %41 : vector<128x128xf32>
    %43 = vector.extract_strided_slice %18 {offsets = [8, 0], sizes = [8, 128], strides = [1, 1]} : vector<32x128xf32> to vector<8x128xf32>
    %44 = vector.shape_cast %43 : vector<8x128xf32> to vector<8x128x1xf32>
    %45 = arith.truncf %44 : vector<8x128x1xf32> to vector<8x128x1xbf16>
    %46 = vector.extract_strided_slice %19 {offsets = [8, 0], sizes = [8, 128], strides = [1, 1]} : vector<32x128xf32> to vector<8x128xf32>
    %47 = vector.shape_cast %46 : vector<8x128xf32> to vector<8x1x128xf32>
    %48 = arith.truncf %47 : vector<8x1x128xf32> to vector<8x1x128xbf16>
    %49 = vector.extract_strided_slice %20 {offsets = [8, 0], sizes = [8, 1], strides = [1, 1]} : vector<32x1xf32> to vector<8x1xf32>
    %50 = vector.shape_cast %49 : vector<8x1xf32> to vector<8x1x1xf32>
    %51 = arith.truncf %50 : vector<8x1x1xf32> to vector<8x1x1xbf16>
    %52 = vector.broadcast %45 : vector<8x128x1xbf16> to vector<8x128x128xbf16>
    %53 = vector.broadcast %48 : vector<8x1x128xbf16> to vector<8x128x128xbf16>
    %54 = arith.addf %52, %53 : vector<8x128x128xbf16>
    %cst_14 = arith.constant 0.000000e+00 : bf16
    %55 = vector.broadcast %cst_14 : bf16 to vector<8x128x128xbf16>
    %56 = arith.maximumf %54, %55 : vector<8x128x128xbf16>
    %57 = vector.broadcast %51 : vector<8x1x1xbf16> to vector<8x128x128xbf16>
    %58 = arith.mulf %56, %57 : vector<8x128x128xbf16>
    %59 = arith.extf %58 : vector<8x128x128xbf16> to vector<8x128x128xf32>
    %cst_15 = arith.constant dense<0.000000e+00> : vector<128x128xf32>
    %60 = vector.multi_reduction <add>, %59, %cst_15 [0] : vector<8x128x128xf32> to vector<128x128xf32>
    %61 = arith.truncf %60 : vector<128x128xf32> to vector<128x128xbf16>
    %62 = arith.extf %61 : vector<128x128xbf16> to vector<128x128xf32>
    %63 = arith.addf %42, %62 : vector<128x128xf32>
    %64 = vector.extract_strided_slice %18 {offsets = [16, 0], sizes = [8, 128], strides = [1, 1]} : vector<32x128xf32> to vector<8x128xf32>
    %65 = vector.shape_cast %64 : vector<8x128xf32> to vector<8x128x1xf32>
    %66 = arith.truncf %65 : vector<8x128x1xf32> to vector<8x128x1xbf16>
    %67 = vector.extract_strided_slice %19 {offsets = [16, 0], sizes = [8, 128], strides = [1, 1]} : vector<32x128xf32> to vector<8x128xf32>
    %68 = vector.shape_cast %67 : vector<8x128xf32> to vector<8x1x128xf32>
    %69 = arith.truncf %68 : vector<8x1x128xf32> to vector<8x1x128xbf16>
    %70 = vector.extract_strided_slice %20 {offsets = [16, 0], sizes = [8, 1], strides = [1, 1]} : vector<32x1xf32> to vector<8x1xf32>
    %71 = vector.shape_cast %70 : vector<8x1xf32> to vector<8x1x1xf32>
    %72 = arith.truncf %71 : vector<8x1x1xf32> to vector<8x1x1xbf16>
    %73 = vector.broadcast %66 : vector<8x128x1xbf16> to vector<8x128x128xbf16>
    %74 = vector.broadcast %69 : vector<8x1x128xbf16> to vector<8x128x128xbf16>
    %75 = arith.addf %73, %74 : vector<8x128x128xbf16>
    %cst_16 = arith.constant 0.000000e+00 : bf16
    %76 = vector.broadcast %cst_16 : bf16 to vector<8x128x128xbf16>
    %77 = arith.maximumf %75, %76 : vector<8x128x128xbf16>
    %78 = vector.broadcast %72 : vector<8x1x1xbf16> to vector<8x128x128xbf16>
    %79 = arith.mulf %77, %78 : vector<8x128x128xbf16>
    %80 = arith.extf %79 : vector<8x128x128xbf16> to vector<8x128x128xf32>
    %cst_17 = arith.constant dense<0.000000e+00> : vector<128x128xf32>
    %81 = vector.multi_reduction <add>, %80, %cst_17 [0] : vector<8x128x128xf32> to vector<128x128xf32>
    %82 = arith.truncf %81 : vector<128x128xf32> to vector<128x128xbf16>
    %83 = arith.extf %82 : vector<128x128xbf16> to vector<128x128xf32>
    %84 = arith.addf %63, %83 : vector<128x128xf32>
    %85 = vector.extract_strided_slice %18 {offsets = [24, 0], sizes = [8, 128], strides = [1, 1]} : vector<32x128xf32> to vector<8x128xf32>
    %86 = vector.shape_cast %85 : vector<8x128xf32> to vector<8x128x1xf32>
    %87 = arith.truncf %86 : vector<8x128x1xf32> to vector<8x128x1xbf16>
    %88 = vector.extract_strided_slice %19 {offsets = [24, 0], sizes = [8, 128], strides = [1, 1]} : vector<32x128xf32> to vector<8x128xf32>
    %89 = vector.shape_cast %88 : vector<8x128xf32> to vector<8x1x128xf32>
    %90 = arith.truncf %89 : vector<8x1x128xf32> to vector<8x1x128xbf16>
    %91 = vector.extract_strided_slice %20 {offsets = [24, 0], sizes = [8, 1], strides = [1, 1]} : vector<32x1xf32> to vector<8x1xf32>
    %92 = vector.shape_cast %91 : vector<8x1xf32> to vector<8x1x1xf32>
    %93 = arith.truncf %92 : vector<8x1x1xf32> to vector<8x1x1xbf16>
    %94 = vector.broadcast %87 : vector<8x128x1xbf16> to vector<8x128x128xbf16>
    %95 = vector.broadcast %90 : vector<8x1x128xbf16> to vector<8x128x128xbf16>
    %96 = arith.addf %94, %95 : vector<8x128x128xbf16>
    %cst_18 = arith.constant 0.000000e+00 : bf16
    %97 = vector.broadcast %cst_18 : bf16 to vector<8x128x128xbf16>
    %98 = arith.maximumf %96, %97 : vector<8x128x128xbf16>
    %99 = vector.broadcast %93 : vector<8x1x1xbf16> to vector<8x128x128xbf16>
    %100 = arith.mulf %98, %99 : vector<8x128x128xbf16>
    %101 = arith.extf %100 : vector<8x128x128xbf16> to vector<8x128x128xf32>
    %cst_19 = arith.constant dense<0.000000e+00> : vector<128x128xf32>
    %102 = vector.multi_reduction <add>, %101, %cst_19 [0] : vector<8x128x128xf32> to vector<128x128xf32>
    %103 = arith.truncf %102 : vector<128x128xf32> to vector<128x128xbf16>
    %104 = arith.extf %103 : vector<128x128xbf16> to vector<128x128xf32>
    %105 = arith.addf %84, %104 : vector<128x128xf32>
    %106 = arith.index_cast %1 : i32 to index
    %c0_20 = arith.constant 0 : index
    %107 = vector.load %arg21[%106, %c0_20] : memref<128x1xf32, #tpu.memory_space<vmem>>, vector<128x1xf32>
    %c0_21 = arith.constant 0 : index
    %c0_22 = arith.constant 0 : index
    %108 = vector.load %arg20[%c0_21, %c0_22] : memref<1x128xf32, #tpu.memory_space<vmem>>, vector<1x128xf32>
    %109 = vector.broadcast %107 : vector<128x1xf32> to vector<128x128xf32>
    %110 = vector.broadcast %108 : vector<1x128xf32> to vector<128x128xf32>
    %111 = arith.addf %109, %110 : vector<128x128xf32>
    %cst_23 = arith.constant 8.000000e-01 : f32
    %112 = vector.broadcast %cst_23 : f32 to vector<128x128xf32>
    %113 = arith.mulf %112, %105 : vector<128x128xf32>
    %114 = arith.addf %111, %113 : vector<128x128xf32>
    %cst_24 = arith.constant -1.000000e+30 : f32
    %115 = vector.broadcast %cst_24 : f32 to vector<128x128xf32>
    %116 = arith.select %14, %114, %115 : vector<128x128xi1>, vector<128x128xf32>
    %cst_25 = arith.constant dense<0xFF800000> : vector<128xf32>
    %117 = vector.multi_reduction <maximumf>, %116, %cst_25 [1] : vector<128x128xf32> to vector<128xf32>
    %118 = vector.shape_cast %117 : vector<128xf32> to vector<128x1xf32>
    %119 = vector.broadcast %118 : vector<128x1xf32> to vector<128x128xf32>
    %120 = arith.subf %116, %119 : vector<128x128xf32>
    %121 = math.exp %120 : vector<128x128xf32>
    %cst_26 = arith.constant 0.000000e+00 : f32
    %122 = vector.broadcast %cst_26 : f32 to vector<128x128xf32>
    %123 = arith.select %14, %121, %122 : vector<128x128xi1>, vector<128x128xf32>
    %cst_27 = arith.constant dense<0.000000e+00> : vector<128xf32>
    %124 = vector.multi_reduction <add>, %123, %cst_27 [1] : vector<128x128xf32> to vector<128xf32>
    %125 = vector.shape_cast %124 : vector<128xf32> to vector<128x1xf32>
    %cst_28 = arith.constant 9.99999968E-21 : f32
    %126 = vector.broadcast %cst_28 : f32 to vector<128x1xf32>
    %127 = arith.maximumf %125, %126 : vector<128x1xf32>
    %128 = tpu.reciprocal %127 {approx = true} : vector<128x1xf32> -> vector<128x1xf32>
    %129 = vector.broadcast %128 : vector<128x1xf32> to vector<128x128xf32>
    %130 = arith.mulf %123, %129 : vector<128x128xf32>
    %c0_29 = arith.constant 0 : index
    %c0_30 = arith.constant 0 : index
    %131 = vector.load %arg17[%c0_29, %c0_30] : memref<128x32xf32, #tpu.memory_space<vmem>>, vector<128x32xf32>
    %cst_31 = arith.constant dense<0.000000e+00> : vector<128x32xf32>
    %132 = tpu.matmul %130, %131, %cst_31 {dimension_numbers = #tpu.dot_dimension_numbers<[1], [0], [0], [1], [0, 0, 1, 1], [], []>} : vector<128x128xf32>, vector<128x32xf32>, vector<128x32xf32> -> vector<128x32xf32>
    %c0_32 = arith.constant 0 : index
    %c0_33 = arith.constant 0 : index
    %133 = vector.load %arg23[%c0_32, %c0_33] : memref<1x32xf32, #tpu.memory_space<vmem>>, vector<1x32xf32>
    %134 = vector.broadcast %133 : vector<1x32xf32> to vector<128x32xf32>
    %135 = arith.addf %132, %134 : vector<128x32xf32>
    %c2_i32 = arith.constant 2 : i32
    %136 = arith.cmpi slt, %arg0, %c2_i32 : i32
    %137 = arith.extui %136 : i1 to i32
    %c0_i32_34 = arith.constant 0 : i32
    %138 = arith.cmpi ne, %137, %c0_i32_34 : i32
    scf.if %138 {
      %cst_40 = arith.constant 0.000000e+00 : f32
      %147 = vector.broadcast %cst_40 : f32 to vector<128x32xf32>
      %148 = arith.maximumf %135, %147 : vector<128x32xf32>
      %149 = vector.shape_cast %148 : vector<128x32xf32> to vector<1x128x32xf32>
      %c2_i32_41 = arith.constant 2 : i32
      %c0_i32_42 = arith.constant 0 : i32
      %150 = arith.cmpi eq, %c2_i32_41, %c0_i32_42 : i32
      %c1_i32 = arith.constant 1 : i32
      %151 = arith.select %150, %c1_i32, %c2_i32_41 : i32
      %152 = arith.remsi %arg0, %151 : i32
      %c0_i32_43 = arith.constant 0 : i32
      %153 = arith.cmpi ne, %152, %c0_i32_43 : i32
      %c0_i32_44 = arith.constant 0 : i32
      %154 = arith.cmpi slt, %152, %c0_i32_44 : i32
      %c0_i32_45 = arith.constant 0 : i32
      %155 = arith.cmpi slt, %151, %c0_i32_45 : i32
      %156 = arith.xori %154, %155 : i1
      %157 = arith.andi %156, %153 : i1
      %158 = arith.addi %152, %151 : i32
      %159 = arith.select %157, %158, %152 : i32
      %160 = arith.index_cast %159 : i32 to index
      %161 = arith.index_cast %1 : i32 to index
      %c0_46 = arith.constant 0 : index
      %162 = vector.load %arg16[%160, %161, %c0_46] : memref<2x128x32xf32, #tpu.memory_space<vmem>>, vector<1x128x32xf32>
      tpu.vector_store %arg16[%160, %161, %c0_46], %149 {strides = array<i32>} : memref<2x128x32xf32, #tpu.memory_space<vmem>>, vector<1x128x32xf32>,
    } else {
    }
    %c2_i32_35 = arith.constant 2 : i32
    %139 = arith.cmpi eq, %arg0, %c2_i32_35 : i32
    %140 = arith.extui %139 : i1 to i32
    %c0_i32_36 = arith.constant 0 : i32
    %141 = arith.cmpi ne, %140, %c0_i32_36 : i32
    scf.if %141 {
      %c0_40 = arith.constant 0 : index
      %c0_41 = arith.constant 0 : index
      %147 = vector.load %arg15[%c0_40, %c0_41] : memref<2x32xf32, #tpu.memory_space<vmem>>, vector<2x32xf32>
      %cst_42 = arith.constant dense<0.000000e+00> : vector<2x32xf32>
      %148 = tpu.matmul %15, %135, %cst_42 {dimension_numbers = #tpu.dot_dimension_numbers<[1], [0], [0], [1], [0, 0, 1, 1], [], []>} : vector<2x128xf32>, vector<128x32xf32>, vector<2x32xf32> -> vector<2x32xf32>
      %149 = arith.addf %147, %148 : vector<2x32xf32>
      %c0_43 = arith.constant 0 : index
      %c0_44 = arith.constant 0 : index
      %150 = vector.load %arg15[%c0_43, %c0_44] : memref<2x32xf32, #tpu.memory_space<vmem>>, vector<2x32xf32>
      tpu.vector_store %arg15[%c0_43, %c0_44], %149 {strides = array<i32>} : memref<2x32xf32, #tpu.memory_space<vmem>>, vector<2x32xf32>,
    } else {
    }
    %c2_i32_37 = arith.constant 2 : i32
    %142 = arith.cmpi eq, %arg0, %c2_i32_37 : i32
    %c0_i32_38 = arith.constant 0 : i32
    %143 = arith.cmpi eq, %arg1, %c0_i32_38 : i32
    %144 = arith.andi %142, %143 : i1
    %145 = arith.extui %144 : i1 to i32
    %c0_i32_39 = arith.constant 0 : i32
    %146 = arith.cmpi ne, %145, %c0_i32_39 : i32
    scf.if %146 {
      %c0_40 = arith.constant 0 : index
      %c0_41 = arith.constant 0 : index
      %147 = vector.load %arg6[%c0_40, %c0_41] : memref<2x1xf32, #tpu.memory_space<vmem>>, vector<2x1xf32>
      %cst_42 = arith.constant 1.000000e+00 : f32
      %148 = vector.broadcast %cst_42 : f32 to vector<2x1xf32>
      %149 = arith.maximumf %147, %148 : vector<2x1xf32>
      %c0_43 = arith.constant 0 : index
      %c0_44 = arith.constant 0 : index
      %150 = vector.load %arg15[%c0_43, %c0_44] : memref<2x32xf32, #tpu.memory_space<vmem>>, vector<2x32xf32>
      %151 = vector.broadcast %149 : vector<2x1xf32> to vector<2x32xf32>
      %152 = arith.divf %150, %151 : vector<2x32xf32>
      %c0_45 = arith.constant 0 : index
      %c0_46 = arith.constant 0 : index
      %153 = vector.load %arg15[%c0_45, %c0_46] : memref<2x32xf32, #tpu.memory_space<vmem>>, vector<2x32xf32>
      tpu.vector_store %arg15[%c0_45, %c0_46], %152 {strides = array<i32>} : memref<2x32xf32, #tpu.memory_space<vmem>>, vector<2x32xf32>,
    } else {
    }
    return
  }
  func.func @transform_0(%arg0: i32, %arg1: i32, %arg2: memref<3xi32, #tpu.memory_space<smem>>) -> (i32, i32) {
    %c0_i32 = arith.constant 0 : i32
    %c0_i32_0 = arith.constant 0 : i32
    %c0_i32_1 = arith.constant 0 : i32
    return %c0_i32, %c0_i32_0 : i32, i32
  }
  func.func @transform_1(%arg0: i32, %arg1: i32, %arg2: memref<3xi32, #tpu.memory_space<smem>>) -> (i32, i32) {
    %c0_i32 = arith.constant 0 : i32
    %c0_i32_0 = arith.constant 0 : i32
    %c0_i32_1 = arith.constant 0 : i32
    return %c0_i32, %c0_i32_0 : i32, i32
  }
  func.func @transform_2(%arg0: i32, %arg1: i32, %arg2: memref<3xi32, #tpu.memory_space<smem>>) -> (i32, i32) {
    %c0_i32 = arith.constant 0 : i32
    %c0_i32_0 = arith.constant 0 : i32
    return %c0_i32, %arg1 : i32, i32
  }
  func.func @transform_3(%arg0: i32, %arg1: i32, %arg2: memref<3xi32, #tpu.memory_space<smem>>) -> (i32, i32) {
    %c0_i32 = arith.constant 0 : i32
    %c0_i32_0 = arith.constant 0 : i32
    %c0_i32_1 = arith.constant 0 : i32
    return %c0_i32, %c0_i32_0 : i32, i32
  }
  func.func @transform_4(%arg0: i32, %arg1: i32, %arg2: memref<3xi32, #tpu.memory_space<smem>>) -> (i32, i32) {
    %c0_i32 = arith.constant 0 : i32
    %c0_i32_0 = arith.constant 0 : i32
    %c0_i32_1 = arith.constant 0 : i32
    return %c0_i32, %c0_i32_0 : i32, i32
  }
  func.func @transform_5(%arg0: i32, %arg1: i32, %arg2: memref<3xi32, #tpu.memory_space<smem>>) -> (i32, i32) {
    %c0_i32 = arith.constant 0 : i32
    %c0_i32_0 = arith.constant 0 : i32
    %c0_i32_1 = arith.constant 0 : i32
    return %c0_i32, %c0_i32_0 : i32, i32
  }
  func.func @transform_6(%arg0: i32, %arg1: i32, %arg2: memref<3xi32, #tpu.memory_space<smem>>) -> (i32, i32) {
    %c0_i32 = arith.constant 0 : i32
    %c0_i32_0 = arith.constant 0 : i32
    %c0_i32_1 = arith.constant 0 : i32
    return %c0_i32, %c0_i32_0 : i32, i32
  }
  func.func @transform_7(%arg0: i32, %arg1: i32, %arg2: memref<3xi32, #tpu.memory_space<smem>>) -> (i32, i32) {
    %c0_i32 = arith.constant 0 : i32
    %c0_i32_0 = arith.constant 0 : i32
    %c0_i32_1 = arith.constant 0 : i32
    return %c0_i32, %c0_i32_0 : i32, i32
  }
  func.func @transform_8(%arg0: i32, %arg1: i32, %arg2: memref<3xi32, #tpu.memory_space<smem>>) -> (i32, i32, i32) {
    %0 = arith.index_cast %arg0 : i32 to index
    %1 = memref.load %arg2[%0] : memref<3xi32, #tpu.memory_space<smem>>
    %c0_i32 = arith.constant 0 : i32
    %c0_i32_0 = arith.constant 0 : i32
    %c0_i32_1 = arith.constant 0 : i32
    return %1, %c0_i32, %c0_i32_0 : i32, i32, i32
  }
  func.func @transform_9(%arg0: i32, %arg1: i32, %arg2: memref<3xi32, #tpu.memory_space<smem>>) -> (i32, i32, i32) {
    %0 = arith.index_cast %arg0 : i32 to index
    %1 = memref.load %arg2[%0] : memref<3xi32, #tpu.memory_space<smem>>
    %c0_i32 = arith.constant 0 : i32
    %c0_i32_0 = arith.constant 0 : i32
    %c0_i32_1 = arith.constant 0 : i32
    return %1, %c0_i32, %c0_i32_0 : i32, i32, i32
  }
  func.func @transform_10(%arg0: i32, %arg1: i32, %arg2: memref<3xi32, #tpu.memory_space<smem>>) -> (i32, i32, i32) {
    %0 = arith.index_cast %arg0 : i32 to index
    %1 = memref.load %arg2[%0] : memref<3xi32, #tpu.memory_space<smem>>
    %c0_i32 = arith.constant 0 : i32
    %c0_i32_0 = arith.constant 0 : i32
    %c0_i32_1 = arith.constant 0 : i32
    return %1, %c0_i32, %c0_i32_0 : i32, i32, i32
  }
  func.func @transform_11(%arg0: i32, %arg1: i32, %arg2: memref<3xi32, #tpu.memory_space<smem>>) -> (i32, i32, i32) {
    %0 = arith.index_cast %arg0 : i32 to index
    %1 = memref.load %arg2[%0] : memref<3xi32, #tpu.memory_space<smem>>
    %c0_i32 = arith.constant 0 : i32
    %c0_i32_0 = arith.constant 0 : i32
    %c0_i32_1 = arith.constant 0 : i32
    return %1, %c0_i32, %c0_i32_0 : i32, i32, i32
  }
  func.func @transform_12(%arg0: i32, %arg1: i32, %arg2: memref<3xi32, #tpu.memory_space<smem>>) -> (i32, i32) {
    %c0_i32 = arith.constant 0 : i32
    %c0_i32_0 = arith.constant 0 : i32
    %c0_i32_1 = arith.constant 0 : i32
    return %c0_i32, %c0_i32_0 : i32, i32
  }
}

</mosaic_0001>

<llo_original>
// kernel: tpu_custom_call.1
$region0: #{tpu_custom_call.1}
  #allocation0 [shape = 'u32[]', space=smem, size = 0x4, offset = 0x4, fixed_abs, tag = 'smem constant byte address 0x4 - core index']
  #allocation1 [shape = 'u32[144,128]{1,0:T(1,128)}', space=vmem, size = 0x12000, scoped, tag = 'internal scratch']
  #allocation2 [shape = 'f32[2,128,32]{2,1,0:T(8,128)}', space=vmem, size = 0x20000, scoped, tag = 'scratch operand']
  #allocation3 [shape = 'f32[128,32]{1,0:T(8,128)}', space=vmem, size = 0x10000, scoped, tag = 'scratch operand']
  #allocation4 [shape = 'f32[128,32]{1,0:T(8,128)}', space=vmem, size = 0x10000, scoped, tag = 'scratch operand']
  #allocation5 [shape = 'f32[32,128]{1,0:T(8,128)}', space=vmem, size = 0x4000, scoped, tag = 'scratch operand']
  #allocation6 [shape = 'f32[1,128]{1,0:T(1,128)}', space=vmem, size = 0x200, scoped, tag = 'scratch operand']
  #allocation7 [shape = 'f32[128,1]{1,0:T(8,128)}', space=vmem, size = 0x10000, scoped, tag = 'scratch operand']
  #allocation8 [shape = 'f32[32,1]{1,0:T(8,128)}', space=vmem, size = 0x4000, scoped, tag = 'scratch operand']
  #allocation9 [shape = 'f32[1,32]{1,0:T(1,128)}', space=vmem, size = 0x200, scoped, tag = 'scratch operand']
  #allocation10 [shape = 's32[1]{0}', space=sflag, size = 0x4, scoped, tag = 'scoped memory for tpu_custom_call.1']
  #allocation11 [shape = 'u8[512]{0}', space=smem, size = 0x200, scoped, tag = 'prefetched SMEM operand 0']
  %s0 = inlined_call_operand.vmem [shape: s32[3], index: 0, kind: input, shape index: {}]
  %s1 = inlined_call_operand.vmem [shape: f32[128,8], index: 1, kind: input, shape index: {}]
  %s2 = inlined_call_operand.vmem [shape: s8[128,128], index: 2, kind: input, shape index: {}]
  %s3 = inlined_call_operand.vmem [shape: f32[2,128], index: 3, kind: input, shape index: {}]
  %s4 = inlined_call_operand.vmem [shape: f32[2,1], index: 4, kind: input, shape index: {}]
  %s5 = inlined_call_operand.vmem [shape: f32[8,64], index: 5, kind: input, shape index: {}]
  %s6 = inlined_call_operand.vmem [shape: f32[32,1], index: 6, kind: input, shape index: {}]
  %s7 = inlined_call_operand.vmem [shape: f32[1,32], index: 7, kind: input, shape index: {}]
  %s8 = inlined_call_operand.vmem [shape: f32[1,32], index: 8, kind: input, shape index: {}]
  %s9 = inlined_call_operand.vmem [shape: f32[1,32,64], index: 9, kind: input, shape index: {}]
  %s10 = inlined_call_operand.vmem [shape: f32[1,32,1], index: 10, kind: input, shape index: {}]
  %s11 = inlined_call_operand.vmem [shape: f32[1,1,32], index: 11, kind: input, shape index: {}]
  %s12 = inlined_call_operand.vmem [shape: f32[1,1,32], index: 12, kind: input, shape index: {}]
  %s13 = inlined_call_operand.hbm [shape: f32[2,32], index: 13, kind: output, shape index: {}]
  %s14 = sld [smem:[#allocation0]]
  $region109: #{tpu_custom_call.1} parent=0
    _
  %s16 = ssub.s32 1, %s14
  %s17 = scalar_select 0, %s16, %s14
  %s18 = sshll.u32 %s0, 4
  %s19 = int_to_ptr.vmem [resolvable:$true] %s18
  %21 = dma.vmem_to_smem %s19, 16, [#allocation11], [#allocation10]
  %22 = dma.done [#allocation10], 16
  %23 = sfence
  $region1: #{tpu_custom_call.1} parent=0
    #allocation12 [shape = 'u8[1024]{0}', space=vmem, size = 0x400, scoped, tag = 'output window, operand 0, single buffered']
    #allocation13 [shape = 's32[2]{0}', space=sflag, size = 0x8, scoped, tag = 'scoped memory for tpu_custom_call.1']
    %24 = vsyncpa [#allocation13], 0
    loop: start=0, step=1, limit=5
    $region2: #{tpu_custom_call.1} parent=1 // loop_pre_header
      _
    $region3: #{tpu_custom_call.1} parent=1 // loop_header
      %s26 = sphi 0, %s30
      %p27 = scmp.ge.s32.totalorder %s26, 5
      %s33 = sphi 0, %s45
      %s34 = sphi 0, %s41
      %s35 = sphi 0, %s33
      %s36 = sphi 0, %s34
      %s37 = sphi 0, %s35
      %s38 = sphi 0, %s36
      %s46 = sphi 0, %s46
      %s48 = sphi 0, %s46
      %s49 = sphi 0, %s48
      %s63 = sphi 0, %s49
      %s67 = sphi 0, %s67
      %s69 = sphi 0, %s67
      %s70 = sphi 0, %s69
      %s84 = sphi 0, %s70
      %s90 = sphi 0, %s92
      %s93 = sphi 0, %s90
      %s94 = sphi 0, %s93
      %s110 = sphi 0, %s94
      %s114 = sphi 0, %s114
      %s116 = sphi 0, %s114
      %s117 = sphi 0, %s116
      %s131 = sphi 0, %s117
      %s135 = sphi 0, %s135
      %s137 = sphi 0, %s135
      %s138 = sphi 0, %s137
      %s152 = sphi 0, %s138
      %s156 = sphi 0, %s156
      %s158 = sphi 0, %s156
      %s159 = sphi 0, %s158
      %s173 = sphi 0, %s159
      %s177 = sphi 0, %s177
      %s179 = sphi 0, %s177
      %s180 = sphi 0, %s179
      %s194 = sphi 0, %s180
      %s198 = sphi 0, %s198
      %s200 = sphi 0, %s198
      %s201 = sphi 0, %s200
      %s215 = sphi 0, %s201
      %s223 = sphi 0, %s225
      %s226 = sphi 0, %s223
      %s227 = sphi 0, %s226
      %s243 = sphi 0, %s227
      %s251 = sphi 0, %s253
      %s254 = sphi 0, %s251
      %s255 = sphi 0, %s254
      %s271 = sphi 0, %s255
      %s279 = sphi 0, %s281
      %s282 = sphi 0, %s279
      %s283 = sphi 0, %s282
      %s299 = sphi 0, %s283
      %s307 = sphi 0, %s309
      %s310 = sphi 0, %s307
      %s311 = sphi 0, %s310
      %s327 = sphi 0, %s311
      %s331 = sphi 0, %s331
      %s333 = sphi 0, %s331
      %s334 = sphi 0, %s333
      %s348 = sphi 0, %s334
    $region4: #{tpu_custom_call.1} parent=1 // loop_header_branch
      %29 = sbr.rel (%p27) target = $region8
    $region5: #{tpu_custom_call.1} parent=1 // loop_body
      %s31 = ssub.s32 %s26, 1
      %s32 = ssub.s32 %s26, 2
      %s39 = sadd.s32 1, %s34
      %p40 = scmp.ge.s32.totalorder %s39, 1
      %s41 = scalar_select %p40, 0, %s39
      %s42 = sadd.s32 1, %s33
      %s43 = scalar_select %p40, %s42, %s33
      %p44 = scmp.ge.s32.totalorder %s43, 3
      %s45 = scalar_select %p44, 0, %s43
      %s47 = sadd.s32 %s46, 1
      %p50 = scmp.eq.s32.totalorder %s26, 2
      %p51 = scmp.ne.s32.totalorder %s46, %s48
      %p52 = scmp.eq.s32.totalorder %s26, 0
      %p53 = por %p51, %p52
      %p54 = scmp.ne.s32.totalorder %s46, %s48
      %p55 = scmp.eq.s32.totalorder %s31, 2
      %p56 = por %p54, %p55
      %p57 = scmp.ne.s32.totalorder %s48, %s49
      %p58 = scmp.eq.s32.totalorder %s31, 0
      %p59 = por %p57, %p58
      %p60 = scmp.ne.s32.totalorder %s48, %s49
      %p61 = scmp.eq.s32.totalorder %s32, 2
      %p62 = por %p60, %p61
      %p64 = scmp.ne.s32.totalorder %s49, %s63
      %p65 = scmp.eq.s32.totalorder %s32, 0
      %p66 = por %p64, %p65
      %s68 = sadd.s32 %s67, 1
      %p71 = scmp.eq.s32.totalorder %s26, 2
      %p72 = scmp.ne.s32.totalorder %s67, %s69
      %p73 = scmp.eq.s32.totalorder %s26, 0
      %p74 = por %p72, %p73
      %p75 = scmp.ne.s32.totalorder %s67, %s69
      %p76 = scmp.eq.s32.totalorder %s31, 2
      %p77 = por %p75, %p76
      %p78 = scmp.ne.s32.totalorder %s69, %s70
      %p79 = scmp.eq.s32.totalorder %s31, 0
      %p80 = por %p78, %p79
      %p81 = scmp.ne.s32.totalorder %s69, %s70
      %p82 = scmp.eq.s32.totalorder %s32, 2
      %p83 = por %p81, %p82
      %p85 = scmp.ne.s32.totalorder %s70, %s84
      %p86 = scmp.eq.s32.totalorder %s32, 0
      %p87 = por %p85, %p86
      %s88 = ssub.s32 %s34, %s41
      %p89 = scmp.eq.s32.totalorder %s88, 0
      %s91 = sadd.s32 %s90, 1
      %s92 = scalar_select %p89, %s90, %s91
      %p95 = pneg %p89
      %p96 = scmp.eq.s32.totalorder %s26, 2
      %p97 = por %p95, %p96
      %p98 = scmp.ne.s32.totalorder %s90, %s93
      %p99 = scmp.eq.s32.totalorder %s26, 0
      %p100 = por %p98, %p99
      %p101 = scmp.ne.s32.totalorder %s90, %s93
      %p102 = scmp.eq.s32.totalorder %s31, 2
      %p103 = por %p101, %p102
      %p104 = scmp.ne.s32.totalorder %s93, %s94
      %p105 = scmp.eq.s32.totalorder %s31, 0
      %p106 = por %p104, %p105
      %p107 = scmp.ne.s32.totalorder %s93, %s94
      %p108 = scmp.eq.s32.totalorder %s32, 2
      %p109 = por %p107, %p108
      %p111 = scmp.ne.s32.totalorder %s94, %s110
      %p112 = scmp.eq.s32.totalorder %s32, 0
      %p113 = por %p111, %p112
      %s115 = sadd.s32 %s114, 1
      %p118 = scmp.eq.s32.totalorder %s26, 2
      %p119 = scmp.ne.s32.totalorder %s114, %s116
      %p120 = scmp.eq.s32.totalorder %s26, 0
      %p121 = por %p119, %p120
      %p122 = scmp.ne.s32.totalorder %s114, %s116
      %p123 = scmp.eq.s32.totalorder %s31, 2
      %p124 = por %p122, %p123
      %p125 = scmp.ne.s32.totalorder %s116, %s117
      %p126 = scmp.eq.s32.totalorder %s31, 0
      %p127 = por %p125, %p126
      %p128 = scmp.ne.s32.totalorder %s116, %s117
      %p129 = scmp.eq.s32.totalorder %s32, 2
      %p130 = por %p128, %p129
      %p132 = scmp.ne.s32.totalorder %s117, %s131
      %p133 = scmp.eq.s32.totalorder %s32, 0
      %p134 = por %p132, %p133
      %s136 = sadd.s32 %s135, 1
      %p139 = scmp.eq.s32.totalorder %s26, 2
      %p140 = scmp.ne.s32.totalorder %s135, %s137
      %p141 = scmp.eq.s32.totalorder %s26, 0
      %p142 = por %p140, %p141
      %p143 = scmp.ne.s32.totalorder %s135, %s137
      %p144 = scmp.eq.s32.totalorder %s31, 2
      %p145 = por %p143, %p144
      %p146 = scmp.ne.s32.totalorder %s137, %s138
      %p147 = scmp.eq.s32.totalorder %s31, 0
      %p148 = por %p146, %p147
      %p149 = scmp.ne.s32.totalorder %s137, %s138
      %p150 = scmp.eq.s32.totalorder %s32, 2
      %p151 = por %p149, %p150
      %p153 = scmp.ne.s32.totalorder %s138, %s152
      %p154 = scmp.eq.s32.totalorder %s32, 0
      %p155 = por %p153, %p154
      %s157 = sadd.s32 %s156, 1
      %p160 = scmp.eq.s32.totalorder %s26, 2
      %p161 = scmp.ne.s32.totalorder %s156, %s158
      %p162 = scmp.eq.s32.totalorder %s26, 0
      %p163 = por %p161, %p162
      %p164 = scmp.ne.s32.totalorder %s156, %s158
      %p165 = scmp.eq.s32.totalorder %s31, 2
      %p166 = por %p164, %p165
      %p167 = scmp.ne.s32.totalorder %s158, %s159
      %p168 = scmp.eq.s32.totalorder %s31, 0
      %p169 = por %p167, %p168
      %p170 = scmp.ne.s32.totalorder %s158, %s159
      %p171 = scmp.eq.s32.totalorder %s32, 2
      %p172 = por %p170, %p171
      %p174 = scmp.ne.s32.totalorder %s159, %s173
      %p175 = scmp.eq.s32.totalorder %s32, 0
      %p176 = por %p174, %p175
      %s178 = sadd.s32 %s177, 1
      %p181 = scmp.eq.s32.totalorder %s26, 2
      %p182 = scmp.ne.s32.totalorder %s177, %s179
      %p183 = scmp.eq.s32.totalorder %s26, 0
      %p184 = por %p182, %p183
      %p185 = scmp.ne.s32.totalorder %s177, %s179
      %p186 = scmp.eq.s32.totalorder %s31, 2
      %p187 = por %p185, %p186
      %p188 = scmp.ne.s32.totalorder %s179, %s180
      %p189 = scmp.eq.s32.totalorder %s31, 0
      %p190 = por %p188, %p189
      %p191 = scmp.ne.s32.totalorder %s179, %s180
      %p192 = scmp.eq.s32.totalorder %s32, 2
      %p193 = por %p191, %p192
      %p195 = scmp.ne.s32.totalorder %s180, %s194
      %p196 = scmp.eq.s32.totalorder %s32, 0
      %p197 = por %p195, %p196
      %s199 = sadd.s32 %s198, 1
      %p202 = scmp.eq.s32.totalorder %s26, 2
      %p203 = scmp.ne.s32.totalorder %s198, %s200
      %p204 = scmp.eq.s32.totalorder %s26, 0
      %p205 = por %p203, %p204
      %p206 = scmp.ne.s32.totalorder %s198, %s200
      %p207 = scmp.eq.s32.totalorder %s31, 2
      %p208 = por %p206, %p207
      %p209 = scmp.ne.s32.totalorder %s200, %s201
      %p210 = scmp.eq.s32.totalorder %s31, 0
      %p211 = por %p209, %p210
      %p212 = scmp.ne.s32.totalorder %s200, %s201
      %p213 = scmp.eq.s32.totalorder %s32, 2
      %p214 = por %p212, %p213
      %p216 = scmp.ne.s32.totalorder %s201, %s215
      %p217 = scmp.eq.s32.totalorder %s32, 0
      %p218 = por %p216, %p217
      %s219 = sld [smem:[#allocation11 + %s33]]
      %s220 = sld [smem:[#allocation11 + %s45]]
      %s221 = ssub.s32 %s219, %s220
      %p222 = scmp.eq.s32.totalorder %s221, 0
      %s224 = sadd.s32 %s223, 1
      %s225 = scalar_select %p222, %s223, %s224
      %p228 = pneg %p222
      %p229 = scmp.eq.s32.totalorder %s26, 2
      %p230 = por %p228, %p229
      %p231 = scmp.ne.s32.totalorder %s223, %s226
      %p232 = scmp.eq.s32.totalorder %s26, 0
      %p233 = por %p231, %p232
      %p234 = scmp.ne.s32.totalorder %s223, %s226
      %p235 = scmp.eq.s32.totalorder %s31, 2
      %p236 = por %p234, %p235
      %p237 = scmp.ne.s32.totalorder %s226, %s227
      %p238 = scmp.eq.s32.totalorder %s31, 0
      %p239 = por %p237, %p238
      %p240 = scmp.ne.s32.totalorder %s226, %s227
      %p241 = scmp.eq.s32.totalorder %s32, 2
      %p242 = por %p240, %p241
      %p244 = scmp.ne.s32.totalorder %s227, %s243
      %p245 = scmp.eq.s32.totalorder %s32, 0
      %p246 = por %p244, %p245
      %s247 = sld [smem:[#allocation11 + %s33]]
      %s248 = sld [smem:[#allocation11 + %s45]]
      %s249 = ssub.s32 %s247, %s248
      %p250 = scmp.eq.s32.totalorder %s249, 0
      %s252 = sadd.s32 %s251, 1
      %s253 = scalar_select %p250, %s251, %s252
      %p256 = pneg %p250
      %p257 = scmp.eq.s32.totalorder %s26, 2
      %p258 = por %p256, %p257
      %p259 = scmp.ne.s32.totalorder %s251, %s254
      %p260 = scmp.eq.s32.totalorder %s26, 0
      %p261 = por %p259, %p260
      %p262 = scmp.ne.s32.totalorder %s251, %s254
      %p263 = scmp.eq.s32.totalorder %s31, 2
      %p264 = por %p262, %p263
      %p265 = scmp.ne.s32.totalorder %s254, %s255
      %p266 = scmp.eq.s32.totalorder %s31, 0
      %p267 = por %p265, %p266
      %p268 = scmp.ne.s32.totalorder %s254, %s255
      %p269 = scmp.eq.s32.totalorder %s32, 2
      %p270 = por %p268, %p269
      %p272 = scmp.ne.s32.totalorder %s255, %s271
      %p273 = scmp.eq.s32.totalorder %s32, 0
      %p274 = por %p272, %p273
      %s275 = sld [smem:[#allocation11 + %s33]]
      %s276 = sld [smem:[#allocation11 + %s45]]
      %s277 = ssub.s32 %s275, %s276
      %p278 = scmp.eq.s32.totalorder %s277, 0
      %s280 = sadd.s32 %s279, 1
      %s281 = scalar_select %p278, %s279, %s280
      %p284 = pneg %p278
      %p285 = scmp.eq.s32.totalorder %s26, 2
      %p286 = por %p284, %p285
      %p287 = scmp.ne.s32.totalorder %s279, %s282
      %p288 = scmp.eq.s32.totalorder %s26, 0
      %p289 = por %p287, %p288
      %p290 = scmp.ne.s32.totalorder %s279, %s282
      %p291 = scmp.eq.s32.totalorder %s31, 2
      %p292 = por %p290, %p291
      %p293 = scmp.ne.s32.totalorder %s282, %s283
      %p294 = scmp.eq.s32.totalorder %s31, 0
      %p295 = por %p293, %p294
      %p296 = scmp.ne.s32.totalorder %s282, %s283
      %p297 = scmp.eq.s32.totalorder %s32, 2
      %p298 = por %p296, %p297
      %p300 = scmp.ne.s32.totalorder %s283, %s299
      %p301 = scmp.eq.s32.totalorder %s32, 0
      %p302 = por %p300, %p301
      %s303 = sld [smem:[#allocation11 + %s33]]
      %s304 = sld [smem:[#allocation11 + %s45]]
      %s305 = ssub.s32 %s303, %s304
      %p306 = scmp.eq.s32.totalorder %s305, 0
      %s308 = sadd.s32 %s307, 1
      %s309 = scalar_select %p306, %s307, %s308
      %p312 = pneg %p306
      %p313 = scmp.eq.s32.totalorder %s26, 2
      %p314 = por %p312, %p313
      %p315 = scmp.ne.s32.totalorder %s307, %s310
      %p316 = scmp.eq.s32.totalorder %s26, 0
      %p317 = por %p315, %p316
      %p318 = scmp.ne.s32.totalorder %s307, %s310
      %p319 = scmp.eq.s32.totalorder %s31, 2
      %p320 = por %p318, %p319
      %p321 = scmp.ne.s32.totalorder %s310, %s311
      %p322 = scmp.eq.s32.totalorder %s31, 0
      %p323 = por %p321, %p322
      %p324 = scmp.ne.s32.totalorder %s310, %s311
      %p325 = scmp.eq.s32.totalorder %s32, 2
      %p326 = por %p324, %p325
      %p328 = scmp.ne.s32.totalorder %s311, %s327
      %p329 = scmp.eq.s32.totalorder %s32, 0
      %p330 = por %p328, %p329
      %s332 = sadd.s32 %s331, 1
      %p335 = scmp.eq.s32.totalorder %s26, 2
      %p336 = scmp.ne.s32.totalorder %s331, %s333
      %p337 = scmp.eq.s32.totalorder %s26, 0
      %p338 = por %p336, %p337
      %p339 = scmp.ne.s32.totalorder %s331, %s333
      %p340 = scmp.eq.s32.totalorder %s31, 2
      %p341 = por %p339, %p340
      %p342 = scmp.ne.s32.totalorder %s333, %s334
      %p343 = scmp.eq.s32.totalorder %s31, 0
      %p344 = por %p342, %p343
      %p345 = scmp.ne.s32.totalorder %s333, %s334
      %p346 = scmp.eq.s32.totalorder %s32, 2
      %p347 = por %p345, %p346
      %p349 = scmp.ne.s32.totalorder %s334, %s348
      %p350 = scmp.eq.s32.totalorder %s32, 0
      %p351 = por %p349, %p350
      %p352 = scmp.le.s32.totalorder 1, %s26
      %p353 = scmp.lt.s32.totalorder %s26, 4
      %p354 = pnand %p352, %p353
      %p355 = pneg %p354
      // Predicated region
      $region9: #{tpu_custom_call.1} parent=5 // pred_check
        _
      $region10: #{tpu_custom_call.1} parent=5 // pred_check_branch
        %357 = sbr.rel (%p354) target = $region12
      $region11: #{tpu_custom_call.1} parent=5 // pred_region
        %s358 = ssub.s32 %s26, 1
        // Predicated region
        $region13: #{tpu_custom_call.1} parent=11 // pred_check
          %p359 = pneg %p59
        $region14: #{tpu_custom_call.1} parent=11 // pred_check_branch
          %361 = sbr.rel (%p359) target = $region16
        $region15: #{tpu_custom_call.1} parent=11 // pred_region
          _
        $region16: #{tpu_custom_call.1} parent=11 // pred_fallthru
          _
        // Predicated region
        $region17: #{tpu_custom_call.1} parent=11 // pred_check
          %p362 = pneg %p80
        $region18: #{tpu_custom_call.1} parent=11 // pred_check_branch
          %364 = sbr.rel (%p362) target = $region20
        $region19: #{tpu_custom_call.1} parent=11 // pred_region
          _
        $region20: #{tpu_custom_call.1} parent=11 // pred_fallthru
          _
        // Predicated region
        $region21: #{tpu_custom_call.1} parent=11 // pred_check
          %p365 = pneg %p106
        $region22: #{tpu_custom_call.1} parent=11 // pred_check_branch
          %367 = sbr.rel (%p365) target = $region24
        $region23: #{tpu_custom_call.1} parent=11 // pred_region
          %p368 = scmp.lt.s32.totalorder %s36, 0
          %s369 = scalar_select %p368, %s36, 0
          %s370 = smul.addr %s369, 2
          %s371 = scalar_lea.vmem %s3, %s370
        $region24: #{tpu_custom_call.1} parent=11 // pred_fallthru
          _
        // Predicated region
        $region25: #{tpu_custom_call.1} parent=11 // pred_check
          %p372 = pneg %p127
        $region26: #{tpu_custom_call.1} parent=11 // pred_check_branch
          %374 = sbr.rel (%p372) target = $region28
        $region27: #{tpu_custom_call.1} parent=11 // pred_region
          _
        $region28: #{tpu_custom_call.1} parent=11 // pred_fallthru
          _
        // Predicated region
        $region29: #{tpu_custom_call.1} parent=11 // pred_check
          %p375 = pneg %p148
        $region30: #{tpu_custom_call.1} parent=11 // pred_check_branch
          %377 = sbr.rel (%p375) target = $region32
        $region31: #{tpu_custom_call.1} parent=11 // pred_region
          _
        $region32: #{tpu_custom_call.1} parent=11 // pred_fallthru
          _
        // Predicated region
        $region33: #{tpu_custom_call.1} parent=11 // pred_check
          %p378 = pneg %p169
        $region34: #{tpu_custom_call.1} parent=11 // pred_check_branch
          %380 = sbr.rel (%p378) target = $region36
        $region35: #{tpu_custom_call.1} parent=11 // pred_region
          _
        $region36: #{tpu_custom_call.1} parent=11 // pred_fallthru
          _
        // Predicated region
        $region37: #{tpu_custom_call.1} parent=11 // pred_check
          %p381 = pneg %p190
        $region38: #{tpu_custom_call.1} parent=11 // pred_check_branch
          %383 = sbr.rel (%p381) target = $region40
        $region39: #{tpu_custom_call.1} parent=11 // pred_region
          _
        $region40: #{tpu_custom_call.1} parent=11 // pred_fallthru
          _
        // Predicated region
        $region41: #{tpu_custom_call.1} parent=11 // pred_check
          %p384 = pneg %p211
        $region42: #{tpu_custom_call.1} parent=11 // pred_check_branch
          %386 = sbr.rel (%p384) target = $region44
        $region43: #{tpu_custom_call.1} parent=11 // pred_region
          _
        $region44: #{tpu_custom_call.1} parent=11 // pred_fallthru
          _
      $region12: #{tpu_custom_call.1} parent=5 // pred_fallthru
        _
      %p387 = scmp.lt.s32.totalorder %s26, 3
      // Predicated region
      $region45: #{tpu_custom_call.1} parent=5 // pred_check
        %p388 = pneg %p387
      $region46: #{tpu_custom_call.1} parent=5 // pred_check_branch
        %390 = sbr.rel (%p388) target = $region48
      $region47: #{tpu_custom_call.1} parent=5 // pred_region
        // Predicated region
        $region49: #{tpu_custom_call.1} parent=47 // pred_check
          %p391 = pneg %p233
        $region50: #{tpu_custom_call.1} parent=47 // pred_check_branch
          %393 = sbr.rel (%p391) target = $region52
        $region51: #{tpu_custom_call.1} parent=47 // pred_region
          %s394 = sld [smem:[#allocation11 + %s33]]
          %p395 = scmp.lt.s32.totalorder %s394, 0
          %s396 = scalar_select %p395, %s394, 0
          %s397 = smul.addr %s396, 4
          %s398 = smul.addr %s397, 8
          %s399 = scalar_lea.vmem %s9, %s398
          %s400 = sld [smem:[#allocation11 + %s33]]
        $region52: #{tpu_custom_call.1} parent=47 // pred_fallthru
          _
        // Predicated region
        $region53: #{tpu_custom_call.1} parent=47 // pred_check
          %p401 = pneg %p261
        $region54: #{tpu_custom_call.1} parent=47 // pred_check_branch
          %403 = sbr.rel (%p401) target = $region56
        $region55: #{tpu_custom_call.1} parent=47 // pred_region
          %s404 = sld [smem:[#allocation11 + %s33]]
          %p405 = scmp.lt.s32.totalorder %s404, 0
          %s406 = scalar_select %p405, %s404, 0
          %s407 = smul.addr %s406, 4
          %s408 = smul.addr %s407, 8
          %s409 = scalar_lea.vmem %s10, %s408
          %s410 = sld [smem:[#allocation11 + %s33]]
        $region56: #{tpu_custom_call.1} parent=47 // pred_fallthru
          _
        // Predicated region
        $region57: #{tpu_custom_call.1} parent=47 // pred_check
          %p411 = pneg %p289
        $region58: #{tpu_custom_call.1} parent=47 // pred_check_branch
          %413 = sbr.rel (%p411) target = $region60
        $region59: #{tpu_custom_call.1} parent=47 // pred_region
          %s414 = sld [smem:[#allocation11 + %s33]]
          %p415 = scmp.lt.s32.totalorder %s414, 0
          %s416 = scalar_select %p415, %s414, 0
          %s417 = scalar_lea.vmem %s11, %s416
          %s418 = sld [smem:[#allocation11 + %s33]]
        $region60: #{tpu_custom_call.1} parent=47 // pred_fallthru
          _
        // Predicated region
        $region61: #{tpu_custom_call.1} parent=47 // pred_check
          %p419 = pneg %p317
        $region62: #{tpu_custom_call.1} parent=47 // pred_check_branch
          %421 = sbr.rel (%p419) target = $region64
        $region63: #{tpu_custom_call.1} parent=47 // pred_region
          %s422 = sld [smem:[#allocation11 + %s33]]
          %p423 = scmp.lt.s32.totalorder %s422, 0
          %s424 = scalar_select %p423, %s422, 0
          %s425 = scalar_lea.vmem %s12, %s424
          %s426 = sld [smem:[#allocation11 + %s33]]
        $region64: #{tpu_custom_call.1} parent=47 // pred_fallthru
          _
      $region48: #{tpu_custom_call.1} parent=5 // pred_fallthru
        _
      %p427 = scmp.le.s32.totalorder 1, %s26
      %p428 = scmp.lt.s32.totalorder %s26, 4
      %p429 = pnand %p427, %p428
      %p430 = pneg %p429
      // Predicated region
      $region65: #{tpu_custom_call.1} parent=5 // pred_check
        _
      $region66: #{tpu_custom_call.1} parent=5 // pred_check_branch
        %432 = sbr.rel (%p429) target = $region68
      $region67: #{tpu_custom_call.1} parent=5 // pred_region
        %s433 = ssub.s32 %s26, 1
        %p434 = pneg %p59
        %p435 = pneg %p56
        %p436 = pneg %p80
        %p437 = pneg %p77
        %p438 = scmp.lt.s32.totalorder %s36, 0
        %s439 = scalar_select %p438, %s36, 0
        %s440 = smul.addr %s439, 2
        %s441 = scalar_lea.vmem %s3, %s440
        %p442 = pneg %p106
        %p443 = pneg %p103
        %p444 = pneg %p127
        %p445 = pneg %p124
        %p446 = pneg %p148
        %p447 = pneg %p145
        %p448 = pneg %p169
        %p449 = pneg %p166
        %p450 = pneg %p190
        %p451 = pneg %p187
        %p452 = pneg %p211
        %p453 = pneg %p208
        %s454 = sld [smem:[#allocation11 + %s35]]
        %p455 = scmp.lt.s32.totalorder %s454, 0
        %s456 = scalar_select %p455, %s454, 0
        %s457 = smul.addr %s456, 4
        %s458 = smul.addr %s457, 8
        %s459 = scalar_lea.vmem %s9, %s458
        %p460 = pneg %p239
        %p461 = pneg %p236
        %s462 = sld [smem:[#allocation11 + %s35]]
        %p463 = scmp.lt.s32.totalorder %s462, 0
        %s464 = scalar_select %p463, %s462, 0
        %s465 = smul.addr %s464, 4
        %s466 = smul.addr %s465, 8
        %s467 = scalar_lea.vmem %s10, %s466
        %p468 = pneg %p267
        %p469 = pneg %p264
        %s470 = sld [smem:[#allocation11 + %s35]]
        %p471 = scmp.lt.s32.totalorder %s470, 0
        %s472 = scalar_select %p471, %s470, 0
        %s473 = scalar_lea.vmem %s11, %s472
        %p474 = pneg %p295
        %p475 = pneg %p292
        %s476 = sld [smem:[#allocation11 + %s35]]
        %p477 = scmp.lt.s32.totalorder %s476, 0
        %s478 = scalar_select %p477, %s476, 0
        %s479 = scalar_lea.vmem %s12, %s478
        %p480 = pneg %p323
        %p481 = pneg %p320
        %p482 = pneg %p344
        %p483 = pneg %p341
        %p484 = scmp.lt.s32.totalorder %s36, 0
        %s485 = scalar_select %p484, %s36, 0
        %s486 = smul.addr %s485, 2
        %s487 = scalar_lea.vmem %s3, %s486
        %s488 = sld [smem:[#allocation11 + %s35]]
        %p489 = scmp.lt.s32.totalorder %s488, 0
        %s490 = scalar_select %p489, %s488, 0
        %s491 = smul.addr %s490, 4
        %s492 = smul.addr %s491, 8
        %s493 = scalar_lea.vmem %s9, %s492
        %s494 = sld [smem:[#allocation11 + %s35]]
        %s495 = sld [smem:[#allocation11 + %s35]]
        %p496 = scmp.lt.s32.totalorder %s495, 0
        %s497 = scalar_select %p496, %s495, 0
        %s498 = smul.addr %s497, 4
        %s499 = smul.addr %s498, 8
        %s500 = scalar_lea.vmem %s10, %s499
        %s501 = sld [smem:[#allocation11 + %s35]]
        %s502 = sld [smem:[#allocation11 + %s35]]
        %p503 = scmp.lt.s32.totalorder %s502, 0
        %s504 = scalar_select %p503, %s502, 0
        %s505 = scalar_lea.vmem %s11, %s504
        %s506 = sld [smem:[#allocation11 + %s35]]
        %s507 = sld [smem:[#allocation11 + %s35]]
        %p508 = scmp.lt.s32.totalorder %s507, 0
        %s509 = scalar_select %p508, %s507, 0
        %s510 = scalar_lea.vmem %s12, %s509
        %s511 = sld [smem:[#allocation11 + %s35]]
        %s513 = smul.u32 %s36, 128
        %p514 = scmp.eq.s32.totalorder %s35, 0
        %p515 = scmp.eq.s32.totalorder %s36, 0
        %p516 = pnand %p514, %p515
        %p517 = pneg %p516
        // Predicated region
        $region69: #{tpu_custom_call.1} parent=67 // pred_check
          _
        $region70: #{tpu_custom_call.1} parent=67 // pred_check_branch
          %519 = sbr.rel (%p516) target = $region72
        $region71: #{tpu_custom_call.1} parent=67 // pred_region
          %vm520 = vcmask 254976
          %521 = vst.msk [vmem:[#allocation12] sm:$0x3] %vm520, 0.0
        $region72: #{tpu_custom_call.1} parent=67 // pred_fallthru
          _
        // Predicated region
        $region73: #{tpu_custom_call.1} parent=67 // pred_check
          %p522 = pneg %p515
        $region74: #{tpu_custom_call.1} parent=67 // pred_check_branch
          %524 = sbr.rel (%p522) target = $region76
        $region75: #{tpu_custom_call.1} parent=67 // pred_region
          // Predicated region
          $region77: #{tpu_custom_call.1} parent=75 // pred_check
            %p525 = pneg %p514
          $region78: #{tpu_custom_call.1} parent=75 // pred_check_branch
            %527 = sbr.rel (%p525) target = $region80
          $region79: #{tpu_custom_call.1} parent=75 // pred_region
            %v528 = vld [vmem:[%s1] sm:$0xff]
            %v529 = vld [vmem:[%s1 + $0x8] sm:$0xff]
            %v530 = vld [vmem:[%s1 + $0x10] sm:$0xff]
            %v531 = vld [vmem:[%s1 + $0x18] sm:$0xff]
            %v532 = vld [vmem:[%s1 + $0x20] sm:$0xff]
            %v533 = vld [vmem:[%s1 + $0x28] sm:$0xff]
            %v534 = vld [vmem:[%s1 + $0x30] sm:$0xff]
            %v535 = vld [vmem:[%s1 + $0x38] sm:$0xff]
            %v536 = vld [vmem:[%s1 + $0x40] sm:$0xff]
            %v537 = vld [vmem:[%s1 + $0x48] sm:$0xff]
            %v538 = vld [vmem:[%s1 + $0x50] sm:$0xff]
            %v539 = vld [vmem:[%s1 + $0x58] sm:$0xff]
            %v540 = vld [vmem:[%s1 + $0x60] sm:$0xff]
            %v541 = vld [vmem:[%s1 + $0x68] sm:$0xff]
            %v542 = vld [vmem:[%s1 + $0x70] sm:$0xff]
            %v543 = vld [vmem:[%s1 + $0x78] sm:$0xff]
            %v544 = vld [vmem:[%s5] sm:$0xff]
            %v545 = vld [vmem:[%s6] sm:$0xff]
            %v546 = vld [vmem:[%s6 + $0x8] sm:$0xff]
            %v547 = vld [vmem:[%s6 + $0x10] sm:$0xff]
            %v548 = vld [vmem:[%s6 + $0x18] sm:$0xff]
            %v549 = vld [vmem:[%s7] sm:$0x1]
            %v550 = vld [vmem:[%s8] sm:$0x1]
            %vm551 = vcmask 64512
            %v553 = vsel %vm551, %v528, 0
            %v556 = vsel %vm551, %v529, 0
            %v559 = vsel %vm551, %v530, 0
            %v562 = vsel %vm551, %v531, 0
            %v565 = vsel %vm551, %v532, 0
            %v568 = vsel %vm551, %v533, 0
            %v571 = vsel %vm551, %v534, 0
            %v574 = vsel %vm551, %v535, 0
            %v577 = vsel %vm551, %v536, 0
            %v580 = vsel %vm551, %v537, 0
            %v583 = vsel %vm551, %v538, 0
            %v586 = vsel %vm551, %v539, 0
            %v589 = vsel %vm551, %v540, 0
            %v592 = vsel %vm551, %v541, 0
            %v595 = vsel %vm551, %v542, 0
            %v598 = vsel %vm551, %v543, 0
            %600 = vmatprep.subr.mxu0 0.0
            %601 = vmatpush1.msra.mxu0 0.0
            %602 = vmatprep.subr.mxu0 0.0
            %603 = vmatpush1.msra.mxu0 0.0
            %604 = vmatprep.subr.mxu0 0.0
            %605 = vmatpush1.msra.mxu0 0.0
            %606 = vmatprep.subr.mxu0 0.0
            %607 = vmatpush1.msra.mxu0 0.0
            %608 = vmatprep.subr.mxu0 0.0
            %609 = vmatpush1.msra.mxu0 0.0
            %610 = vmatprep.subr.mxu0 0.0
            %611 = vmatpush1.msra.mxu0 0.0
            %612 = vmatprep.subr.mxu0 0.0
            %613 = vmatpush1.msra.mxu0 0.0
            %614 = vmatprep.subr.mxu0 0.0
            %615 = vmatpush1.msra.mxu0 0.0
            %616 = vmatprep.subr.mxu0 0.0
            %617 = vmatpush1.msra.mxu0 0.0
            %618 = vmatprep.subr.mxu0 0.0
            %619 = vmatpush1.msra.mxu0 0.0
            %620 = vmatprep.subr.mxu0 0.0
            %621 = vmatpush1.msra.mxu0 0.0
            %622 = vmatprep.subr.mxu0 0.0
            %623 = vmatpush1.msra.mxu0 0.0
            %624 = vmatprep.subr.mxu0 0.0
            %625 = vmatpush1.msra.mxu0 0.0
            %626 = vmatprep.subr.mxu0 0.0
            %627 = vmatpush1.msra.mxu0 0.0
            %628 = vmatprep.subr.mxu0 0.0
            %629 = vmatpush1.msra.mxu0 0.0
            %630 = vmatprep.subr.mxu0 0.0
            %631 = vmatpush1.msra.mxu0 %v544
            %632 = vmatprep.subr.mxu0 0.0
            %633 = vmatpush2.msra.mxu0 0.0
            %634 = vmatprep.subr.mxu0 0.0
            %635 = vmatpush2.msra.mxu0 0.0
            %636 = vmatprep.subr.mxu0 0.0
            %637 = vmatpush2.msra.mxu0 0.0
            %638 = vmatprep.subr.mxu0 0.0
            %639 = vmatpush2.msra.mxu0 0.0
            %640 = vmatprep.subr.mxu0 0.0
            %641 = vmatpush2.msra.mxu0 0.0
            %642 = vmatprep.subr.mxu0 0.0
            %643 = vmatpush2.msra.mxu0 0.0
            %644 = vmatprep.subr.mxu0 0.0
            %645 = vmatpush2.msra.mxu0 0.0
            %646 = vmatprep.subr.mxu0 0.0
            %647 = vmatpush2.msra.mxu0 0.0
            %648 = vmatprep.subr.mxu0 0.0
            %649 = vmatpush2.msra.mxu0 0.0
            %650 = vmatprep.subr.mxu0 0.0
            %651 = vmatpush2.msra.mxu0 0.0
            %652 = vmatprep.subr.mxu0 0.0
            %653 = vmatpush2.msra.mxu0 0.0
            %654 = vmatprep.subr.mxu0 0.0
            %655 = vmatpush2.msra.mxu0 0.0
            %656 = vmatprep.subr.mxu0 0.0
            %657 = vmatpush2.msra.mxu0 0.0
            %658 = vmatprep.subr.mxu0 0.0
            %659 = vmatpush2.msra.mxu0 0.0
            %660 = vmatprep.subr.mxu0 0.0
            %661 = vmatpush2.msra.mxu0 0.0
            %662 = vmatprep.subr.mxu0 0.0
            %663 = vmatpush2.msra.mxu0 0.0
            %664 = vmatprep.mubr.f32.mxu0 0.0
            %665 = vmatmul.mubr.f32.gmra.mxu0 %v553
            %v666 = vpop.f32.mrf.mxu0
            %v667 = vadd.f32 0.0, %v666
            %v668 = vpop.f32.mrf.mxu0
            %669 = vmatprep.mubr.f32.mxu0 0.0
            %670 = vmatmul.mubr.f32.gmra.mxu0 %v556
            %v671 = vpop.f32.mrf.mxu0
            %v672 = vadd.f32 0.0, %v671
            %v673 = vpop.f32.mrf.mxu0
            %674 = vmatprep.mubr.f32.mxu0 0.0
            %675 = vmatmul.mubr.f32.gmra.mxu0 %v559
            %v676 = vpop.f32.mrf.mxu0
            %v677 = vadd.f32 0.0, %v676
            %v678 = vpop.f32.mrf.mxu0
            %679 = vmatprep.mubr.f32.mxu0 0.0
            %680 = vmatmul.mubr.f32.gmra.mxu0 %v562
            %v681 = vpop.f32.mrf.mxu0
            %v682 = vadd.f32 0.0, %v681
            %v683 = vpop.f32.mrf.mxu0
            %684 = vmatprep.mubr.f32.mxu0 0.0
            %685 = vmatmul.mubr.f32.gmra.mxu0 %v565
            %v686 = vpop.f32.mrf.mxu0
            %v687 = vadd.f32 0.0, %v686
            %v688 = vpop.f32.mrf.mxu0
            %689 = vmatprep.mubr.f32.mxu0 0.0
            %690 = vmatmul.mubr.f32.gmra.mxu0 %v568
            %v691 = vpop.f32.mrf.mxu0
            %v692 = vadd.f32 0.0, %v691
            %v693 = vpop.f32.mrf.mxu0
            %694 = vmatprep.mubr.f32.mxu0 0.0
            %695 = vmatmul.mubr.f32.gmra.mxu0 %v571
            %v696 = vpop.f32.mrf.mxu0
            %v697 = vadd.f32 0.0, %v696
            %v698 = vpop.f32.mrf.mxu0
            %699 = vmatprep.mubr.f32.mxu0 0.0
            %700 = vmatmul.mubr.f32.gmra.mxu0 %v574
            %v701 = vpop.f32.mrf.mxu0
            %v702 = vadd.f32 0.0, %v701
            %v703 = vpop.f32.mrf.mxu0
            %704 = vmatprep.mubr.f32.mxu0 0.0
            %705 = vmatmul.mubr.f32.gmra.mxu0 %v577
            %v706 = vpop.f32.mrf.mxu0
            %v707 = vadd.f32 0.0, %v706
            %v708 = vpop.f32.mrf.mxu0
            %709 = vmatprep.mubr.f32.mxu0 0.0
            %710 = vmatmul.mubr.f32.gmra.mxu0 %v580
            %v711 = vpop.f32.mrf.mxu0
            %v712 = vadd.f32 0.0, %v711
            %v713 = vpop.f32.mrf.mxu0
            %714 = vmatprep.mubr.f32.mxu0 0.0
            %715 = vmatmul.mubr.f32.gmra.mxu0 %v583
            %v716 = vpop.f32.mrf.mxu0
            %v717 = vadd.f32 0.0, %v716
            %v718 = vpop.f32.mrf.mxu0
            %719 = vmatprep.mubr.f32.mxu0 0.0
            %720 = vmatmul.mubr.f32.gmra.mxu0 %v586
            %v721 = vpop.f32.mrf.mxu0
            %v722 = vadd.f32 0.0, %v721
            %v723 = vpop.f32.mrf.mxu0
            %724 = vmatprep.mubr.f32.mxu0 0.0
            %725 = vmatmul.mubr.f32.gmra.mxu0 %v589
            %v726 = vpop.f32.mrf.mxu0
            %v727 = vadd.f32 0.0, %v726
            %v728 = vpop.f32.mrf.mxu0
            %729 = vmatprep.mubr.f32.mxu0 0.0
            %730 = vmatmul.mubr.f32.gmra.mxu0 %v592
            %v731 = vpop.f32.mrf.mxu0
            %v732 = vadd.f32 0.0, %v731
            %v733 = vpop.f32.mrf.mxu0
            %734 = vmatprep.mubr.f32.mxu0 0.0
            %735 = vmatmul.mubr.f32.gmra.mxu0 %v595
            %v736 = vpop.f32.mrf.mxu0
            %v737 = vadd.f32 0.0, %v736
            %v738 = vpop.f32.mrf.mxu0
            %739 = vmatprep.mubr.f32.mxu0 0.0
            %740 = vmatmul.mubr.f32.gmra.mxu0 %v598
            %v741 = vpop.f32.mrf.mxu0
            %v742 = vadd.f32 0.0, %v741
            %v743 = vpop.f32.mrf.mxu0
            %744 = vdwg.mxu0
            %vm745 = vcmask 261120
            %746 = vst.msk [vmem:[#allocation3] sm:$0xff] %vm745, %v667
            %747 = vst.msk [vmem:[#allocation3 + $0x8] sm:$0xff] %vm745, %v672
            %748 = vst.msk [vmem:[#allocation3 + $0x10] sm:$0xff] %vm745, %v677
            %749 = vst.msk [vmem:[#allocation3 + $0x18] sm:$0xff] %vm745, %v682
            %750 = vst.msk [vmem:[#allocation3 + $0x20] sm:$0xff] %vm745, %v687
            %751 = vst.msk [vmem:[#allocation3 + $0x28] sm:$0xff] %vm745, %v692
            %752 = vst.msk [vmem:[#allocation3 + $0x30] sm:$0xff] %vm745, %v697
            %753 = vst.msk [vmem:[#allocation3 + $0x38] sm:$0xff] %vm745, %v702
            %754 = vst.msk [vmem:[#allocation3 + $0x40] sm:$0xff] %vm745, %v707
            %755 = vst.msk [vmem:[#allocation3 + $0x48] sm:$0xff] %vm745, %v712
            %756 = vst.msk [vmem:[#allocation3 + $0x50] sm:$0xff] %vm745, %v717
            %757 = vst.msk [vmem:[#allocation3 + $0x58] sm:$0xff] %vm745, %v722
            %758 = vst.msk [vmem:[#allocation3 + $0x60] sm:$0xff] %vm745, %v727
            %759 = vst.msk [vmem:[#allocation3 + $0x68] sm:$0xff] %vm745, %v732
            %760 = vst.msk [vmem:[#allocation3 + $0x70] sm:$0xff] %vm745, %v737
            %761 = vst.msk [vmem:[#allocation3 + $0x78] sm:$0xff] %vm745, %v742
            %778 = vrot.lane.b32.xlu0 %v667, 96
            %v779 = vpop.permute.xlu0 %778
            %780 = vrot.lane.b32.xlu0 %v672, 96
            %v781 = vpop.permute.xlu0 %780
            %782 = vrot.lane.b32.xlu0 %v677, 96
            %v783 = vpop.permute.xlu0 %782
            %784 = vrot.lane.b32.xlu0 %v682, 96
            %v785 = vpop.permute.xlu0 %784
            %786 = vrot.lane.b32.xlu0 %v687, 96
            %v787 = vpop.permute.xlu0 %786
            %788 = vrot.lane.b32.xlu0 %v692, 96
            %v789 = vpop.permute.xlu0 %788
            %790 = vrot.lane.b32.xlu0 %v697, 96
            %v791 = vpop.permute.xlu0 %790
            %792 = vrot.lane.b32.xlu0 %v702, 96
            %v793 = vpop.permute.xlu0 %792
            %794 = vrot.lane.b32.xlu0 %v707, 96
            %v795 = vpop.permute.xlu0 %794
            %796 = vrot.lane.b32.xlu0 %v712, 96
            %v797 = vpop.permute.xlu0 %796
            %798 = vrot.lane.b32.xlu0 %v717, 96
            %v799 = vpop.permute.xlu0 %798
            %800 = vrot.lane.b32.xlu0 %v722, 96
            %v801 = vpop.permute.xlu0 %800
            %802 = vrot.lane.b32.xlu0 %v727, 96
            %v803 = vpop.permute.xlu0 %802
            %804 = vrot.lane.b32.xlu0 %v732, 96
            %v805 = vpop.permute.xlu0 %804
            %806 = vrot.lane.b32.xlu0 %v737, 96
            %v807 = vpop.permute.xlu0 %806
            %808 = vrot.lane.b32.xlu0 %v742, 96
            %v809 = vpop.permute.xlu0 %808
            %826 = vst.msk [vmem:[#allocation4] sm:$0xff] %vm745, %v779
            %827 = vst.msk [vmem:[#allocation4 + $0x8] sm:$0xff] %vm745, %v781
            %828 = vst.msk [vmem:[#allocation4 + $0x10] sm:$0xff] %vm745, %v783
            %829 = vst.msk [vmem:[#allocation4 + $0x18] sm:$0xff] %vm745, %v785
            %830 = vst.msk [vmem:[#allocation4 + $0x20] sm:$0xff] %vm745, %v787
            %831 = vst.msk [vmem:[#allocation4 + $0x28] sm:$0xff] %vm745, %v789
            %832 = vst.msk [vmem:[#allocation4 + $0x30] sm:$0xff] %vm745, %v791
            %833 = vst.msk [vmem:[#allocation4 + $0x38] sm:$0xff] %vm745, %v793
            %834 = vst.msk [vmem:[#allocation4 + $0x40] sm:$0xff] %vm745, %v795
            %835 = vst.msk [vmem:[#allocation4 + $0x48] sm:$0xff] %vm745, %v797
            %836 = vst.msk [vmem:[#allocation4 + $0x50] sm:$0xff] %vm745, %v799
            %837 = vst.msk [vmem:[#allocation4 + $0x58] sm:$0xff] %vm745, %v801
            %838 = vst.msk [vmem:[#allocation4 + $0x60] sm:$0xff] %vm745, %v803
            %839 = vst.msk [vmem:[#allocation4 + $0x68] sm:$0xff] %vm745, %v805
            %840 = vst.msk [vmem:[#allocation4 + $0x70] sm:$0xff] %vm745, %v807
            %841 = vst.msk [vmem:[#allocation4 + $0x78] sm:$0xff] %vm745, %v809
            %842 = vxpose.xlu0.b32.start [1/16] %v667, 128
            %843 = vxpose.xlu0.b32.cont [2/16] %v672, 128
            %844 = vxpose.xlu0.b32.cont [3/16] %v677, 128
            %845 = vxpose.xlu0.b32.cont [4/16] %v682, 128
            %846 = vxpose.xlu0.b32.cont [5/16] %v687, 128
            %847 = vxpose.xlu0.b32.cont [6/16] %v692, 128
            %848 = vxpose.xlu0.b32.cont [7/16] %v697, 128
            %849 = vxpose.xlu0.b32.cont [8/16] %v702, 128
            %850 = vxpose.xlu0.b32.cont [9/16] %v707, 128
            %851 = vxpose.xlu0.b32.cont [10/16] %v712, 128
            %852 = vxpose.xlu0.b32.cont [11/16] %v717, 128
            %853 = vxpose.xlu0.b32.cont [12/16] %v722, 128
            %854 = vxpose.xlu0.b32.cont [13/16] %v727, 128
            %855 = vxpose.xlu0.b32.cont [14/16] %v732, 128
            %856 = vxpose.xlu0.b32.cont [15/16] %v737, 128
            %857 = vxpose.xlu0.b32.end [16/16] %v742, 128
            %v858 = vpop.trf.xlu0
            %v859 = vpop.trf.xlu0
            %v860 = vpop.trf.xlu0
            %v861 = vpop.trf.xlu0
            %v862 = vpop.trf.xlu0
            %v863 = vpop.trf.xlu0
            %v864 = vpop.trf.xlu0
            %v865 = vpop.trf.xlu0
            %v866 = vpop.trf.xlu0
            %v867 = vpop.trf.xlu0
            %v868 = vpop.trf.xlu0
            %v869 = vpop.trf.xlu0
            %v870 = vpop.trf.xlu0
            %v871 = vpop.trf.xlu0
            %v872 = vpop.trf.xlu0
            %v873 = vpop.trf.xlu0
            %874 = vst [vmem:[#allocation5] sm:$0xff] %v858
            %875 = vst [vmem:[#allocation5 + $0x8] sm:$0xff] %v859
            %876 = vst [vmem:[#allocation5 + $0x10] sm:$0xff] %v860
            %877 = vst [vmem:[#allocation5 + $0x18] sm:$0xff] %v861
            %879 = vset.pattern.permute.xlu0 0
            %880 = vperm.xlu0 %879, %v545
            %v881 = vpop.permute.xlu0 %880
            %884 = vset.pattern.permute.xlu0 0
            %885 = vperm.xlu0 %884, %v546
            %v886 = vpop.permute.xlu0 %885
            %889 = vset.pattern.permute.xlu0 0
            %890 = vperm.xlu0 %889, %v547
            %v891 = vpop.permute.xlu0 %890
            %894 = vset.pattern.permute.xlu0 0
            %895 = vperm.xlu0 %894, %v548
            %v896 = vpop.permute.xlu0 %895
            %v898 = vmul.f32 %v858, %v881
            %v899 = vmul.f32 %v859, %v886
            %v900 = vmul.f32 %v860, %v891
            %v901 = vmul.f32 %v861, %v896
            %v902 = vadd.f32 %v898, %v899
            %v903 = vadd.f32 %v902, %v900
            %v904 = vadd.f32 %v903, %v901
            %v905 = vrot.slane %v904, 4
            %v906 = vadd.f32 %v904, %v905
            %v907 = vrot.slane %v906, 2
            %v908 = vadd.f32 %v906, %v907
            %v909 = vrot.slane %v908, 1
            %v910 = vadd.f32 %v908, %v909
            %v911 = vmul.f32 %v910, 0.2
            %912 = vst [vmem:[#allocation6] sm:$0x1] %v911
            %v914 = vlaneseq
            %v915 = vshrl.u32 %v914, 7
            %v916 = vsub.s32 0, %v915
            %v917 = vrot.slane %v549, %v916
            %918 = vrot.lane.b32.xlu0 %v917, 32
            %v919 = vpop.permute.xlu0 %918
            %v921 = vmul.f32 %v667, %v919
            %v922 = vmul.f32 %v672, %v919
            %v923 = vmul.f32 %v677, %v919
            %v924 = vmul.f32 %v682, %v919
            %v925 = vmul.f32 %v687, %v919
            %v926 = vmul.f32 %v692, %v919
            %v927 = vmul.f32 %v697, %v919
            %v928 = vmul.f32 %v702, %v919
            %v929 = vmul.f32 %v707, %v919
            %v930 = vmul.f32 %v712, %v919
            %v931 = vmul.f32 %v717, %v919
            %v932 = vmul.f32 %v722, %v919
            %v933 = vmul.f32 %v727, %v919
            %v934 = vmul.f32 %v732, %v919
            %v935 = vmul.f32 %v737, %v919
            %v936 = vmul.f32 %v742, %v919
            %953 = vrot.lane.b32.xlu0 %v921, 96
            %v954 = vpop.permute.xlu0 %953
            %955 = vrot.lane.b32.xlu0 %v922, 96
            %v956 = vpop.permute.xlu0 %955
            %957 = vrot.lane.b32.xlu0 %v923, 96
            %v958 = vpop.permute.xlu0 %957
            %959 = vrot.lane.b32.xlu0 %v924, 96
            %v960 = vpop.permute.xlu0 %959
            %961 = vrot.lane.b32.xlu0 %v925, 96
            %v962 = vpop.permute.xlu0 %961
            %963 = vrot.lane.b32.xlu0 %v926, 96
            %v964 = vpop.permute.xlu0 %963
            %965 = vrot.lane.b32.xlu0 %v927, 96
            %v966 = vpop.permute.xlu0 %965
            %967 = vrot.lane.b32.xlu0 %v928, 96
            %v968 = vpop.permute.xlu0 %967
            %969 = vrot.lane.b32.xlu0 %v929, 96
            %v970 = vpop.permute.xlu0 %969
            %971 = vrot.lane.b32.xlu0 %v930, 96
            %v972 = vpop.permute.xlu0 %971
            %973 = vrot.lane.b32.xlu0 %v931, 96
            %v974 = vpop.permute.xlu0 %973
            %975 = vrot.lane.b32.xlu0 %v932, 96
            %v976 = vpop.permute.xlu0 %975
            %977 = vrot.lane.b32.xlu0 %v933, 96
            %v978 = vpop.permute.xlu0 %977
            %979 = vrot.lane.b32.xlu0 %v934, 96
            %v980 = vpop.permute.xlu0 %979
            %981 = vrot.lane.b32.xlu0 %v935, 96
            %v982 = vpop.permute.xlu0 %981
            %983 = vrot.lane.b32.xlu0 %v936, 96
            %v984 = vpop.permute.xlu0 %983
            %v1001 = vsel %vm745, %v954, 0.0
            %1002 = vadd.xlane.f32.xlu0 %v1001
            %v1003 = vpop.xlane.xlu0 %1002
            %v1004 = vsel %vm745, %v956, 0.0
            %1005 = vadd.xlane.f32.xlu0 %v1004
            %v1006 = vpop.xlane.xlu0 %1005
            %v1007 = vsel %vm745, %v958, 0.0
            %1008 = vadd.xlane.f32.xlu0 %v1007
            %v1009 = vpop.xlane.xlu0 %1008
            %v1010 = vsel %vm745, %v960, 0.0
            %1011 = vadd.xlane.f32.xlu0 %v1010
            %v1012 = vpop.xlane.xlu0 %1011
            %v1013 = vsel %vm745, %v962, 0.0
            %1014 = vadd.xlane.f32.xlu0 %v1013
            %v1015 = vpop.xlane.xlu0 %1014
            %v1016 = vsel %vm745, %v964, 0.0
            %1017 = vadd.xlane.f32.xlu0 %v1016
            %v1018 = vpop.xlane.xlu0 %1017
            %v1019 = vsel %vm745, %v966, 0.0
            %1020 = vadd.xlane.f32.xlu0 %v1019
            %v1021 = vpop.xlane.xlu0 %1020
            %v1022 = vsel %vm745, %v968, 0.0
            %1023 = vadd.xlane.f32.xlu0 %v1022
            %v1024 = vpop.xlane.xlu0 %1023
            %v1025 = vsel %vm745, %v970, 0.0
            %1026 = vadd.xlane.f32.xlu0 %v1025
            %v1027 = vpop.xlane.xlu0 %1026
            %v1028 = vsel %vm745, %v972, 0.0
            %1029 = vadd.xlane.f32.xlu0 %v1028
            %v1030 = vpop.xlane.xlu0 %1029
            %v1031 = vsel %vm745, %v974, 0.0
            %1032 = vadd.xlane.f32.xlu0 %v1031
            %v1033 = vpop.xlane.xlu0 %1032
            %v1034 = vsel %vm745, %v976, 0.0
            %1035 = vadd.xlane.f32.xlu0 %v1034
            %v1036 = vpop.xlane.xlu0 %1035
            %v1037 = vsel %vm745, %v978, 0.0
            %1038 = vadd.xlane.f32.xlu0 %v1037
            %v1039 = vpop.xlane.xlu0 %1038
            %v1040 = vsel %vm745, %v980, 0.0
            %1041 = vadd.xlane.f32.xlu0 %v1040
            %v1042 = vpop.xlane.xlu0 %1041
            %v1043 = vsel %vm745, %v982, 0.0
            %1044 = vadd.xlane.f32.xlu0 %v1043
            %v1045 = vpop.xlane.xlu0 %1044
            %v1046 = vsel %vm745, %v984, 0.0
            %1047 = vadd.xlane.f32.xlu0 %v1046
            %v1048 = vpop.xlane.xlu0 %1047
            %v1049 = vmul.f32 %v1003, 0.2
            %v1050 = vmul.f32 %v1006, 0.2
            %v1051 = vmul.f32 %v1009, 0.2
            %v1052 = vmul.f32 %v1012, 0.2
            %v1053 = vmul.f32 %v1015, 0.2
            %v1054 = vmul.f32 %v1018, 0.2
            %v1055 = vmul.f32 %v1021, 0.2
            %v1056 = vmul.f32 %v1024, 0.2
            %v1057 = vmul.f32 %v1027, 0.2
            %v1058 = vmul.f32 %v1030, 0.2
            %v1059 = vmul.f32 %v1033, 0.2
            %v1060 = vmul.f32 %v1036, 0.2
            %v1061 = vmul.f32 %v1039, 0.2
            %v1062 = vmul.f32 %v1042, 0.2
            %v1063 = vmul.f32 %v1045, 0.2
            %v1064 = vmul.f32 %v1048, 0.2
            %vm1065 = vcmask 7168
            %1066 = vst.msk [vmem:[#allocation7] sm:$0xff] %vm1065, %v1049
            %1067 = vst.msk [vmem:[#allocation7 + $0x8] sm:$0xff] %vm1065, %v1050
            %1068 = vst.msk [vmem:[#allocation7 + $0x10] sm:$0xff] %vm1065, %v1051
            %1069 = vst.msk [vmem:[#allocation7 + $0x18] sm:$0xff] %vm1065, %v1052
            %1070 = vst.msk [vmem:[#allocation7 + $0x20] sm:$0xff] %vm1065, %v1053
            %1071 = vst.msk [vmem:[#allocation7 + $0x28] sm:$0xff] %vm1065, %v1054
            %1072 = vst.msk [vmem:[#allocation7 + $0x30] sm:$0xff] %vm1065, %v1055
            %1073 = vst.msk [vmem:[#allocation7 + $0x38] sm:$0xff] %vm1065, %v1056
            %1074 = vst.msk [vmem:[#allocation7 + $0x40] sm:$0xff] %vm1065, %v1057
            %1075 = vst.msk [vmem:[#allocation7 + $0x48] sm:$0xff] %vm1065, %v1058
            %1076 = vst.msk [vmem:[#allocation7 + $0x50] sm:$0xff] %vm1065, %v1059
            %1077 = vst.msk [vmem:[#allocation7 + $0x58] sm:$0xff] %vm1065, %v1060
            %1078 = vst.msk [vmem:[#allocation7 + $0x60] sm:$0xff] %vm1065, %v1061
            %1079 = vst.msk [vmem:[#allocation7 + $0x68] sm:$0xff] %vm1065, %v1062
            %1080 = vst.msk [vmem:[#allocation7 + $0x70] sm:$0xff] %vm1065, %v1063
            %1081 = vst.msk [vmem:[#allocation7 + $0x78] sm:$0xff] %vm1065, %v1064
            %1082 = vst.msk [vmem:[#allocation8] sm:$0xff] %vm1065, %v545
            %1083 = vst.msk [vmem:[#allocation8 + $0x8] sm:$0xff] %vm1065, %v546
            %1084 = vst.msk [vmem:[#allocation8 + $0x10] sm:$0xff] %vm1065, %v547
            %1085 = vst.msk [vmem:[#allocation8 + $0x18] sm:$0xff] %vm1065, %v548
            %vm1086 = vcmask 253952
            %1087 = vst.msk [vmem:[#allocation9] sm:$0x1] %vm1086, %v550
          $region80: #{tpu_custom_call.1} parent=75 // pred_fallthru
            _
          %p1088 = scmp.gt.s32.totalorder %s35, 0
          // Predicated region
          $region81: #{tpu_custom_call.1} parent=75 // pred_check
            %p1089 = pneg %p1088
          $region82: #{tpu_custom_call.1} parent=75 // pred_check_branch
            %1091 = sbr.rel (%p1089) target = $region84
          $region83: #{tpu_custom_call.1} parent=75 // pred_region
            %s1092 = sadd.s32 %s35, 1
            %p1093 = scmp.lt.s32.totalorder %s1092, 0
            %s1094 = ssub.s32 0, %s1092
            %s1095 = scalar_select %p1093, %s1094, %s1092
            %s1096 = sand.u32 %s1095, 1
            %s1097 = ssub.s32 0, %s1096
            %s1098 = scalar_select %p1093, %s1097, %s1096
            %p1099 = scmp.ne.s32.totalorder %s1098, 0
            %p1100 = scmp.lt.s32.totalorder %s1098, 0
            %p1101 = pnand %p1100, %p1099
            %p1102 = pneg %p1101
            %s1103 = sadd.s32 %s1098, 2
            %s1104 = scalar_select %p1102, %s1103, %s1098
            %s1105 = smul.u32 %s1104, 128
            %s1106 = scalar_lea.vmem [#allocation2], %s1105
            %v1107 = vld [vmem:[%s1106] sm:$0xff]
            %v1108 = vld [vmem:[%s1106 + $0x8] sm:$0xff]
            %v1109 = vld [vmem:[%s1106 + $0x10] sm:$0xff]
            %v1110 = vld [vmem:[%s1106 + $0x18] sm:$0xff]
            %v1111 = vld [vmem:[%s1106 + $0x20] sm:$0xff]
            %v1112 = vld [vmem:[%s1106 + $0x28] sm:$0xff]
            %v1113 = vld [vmem:[%s1106 + $0x30] sm:$0xff]
            %v1114 = vld [vmem:[%s1106 + $0x38] sm:$0xff]
            %v1115 = vld [vmem:[%s1106 + $0x40] sm:$0xff]
            %v1116 = vld [vmem:[%s1106 + $0x48] sm:$0xff]
            %v1117 = vld [vmem:[%s1106 + $0x50] sm:$0xff]
            %v1118 = vld [vmem:[%s1106 + $0x58] sm:$0xff]
            %v1119 = vld [vmem:[%s1106 + $0x60] sm:$0xff]
            %v1120 = vld [vmem:[%s1106 + $0x68] sm:$0xff]
            %v1121 = vld [vmem:[%s1106 + $0x70] sm:$0xff]
            %v1122 = vld [vmem:[%s1106 + $0x78] sm:$0xff]
            %v1123 = vld [vmem:[%s493] sm:$0xff]
            %v1124 = vld [vmem:[%s493 + $0x8] sm:$0xff]
            %v1125 = vld [vmem:[%s493 + $0x10] sm:$0xff]
            %v1126 = vld [vmem:[%s493 + $0x18] sm:$0xff]
            %v1127 = vld [vmem:[%s500] sm:$0xff]
            %v1128 = vld [vmem:[%s500 + $0x8] sm:$0xff]
            %v1129 = vld [vmem:[%s500 + $0x10] sm:$0xff]
            %v1130 = vld [vmem:[%s500 + $0x18] sm:$0xff]
            %v1131 = vld [vmem:[%s505] sm:$0x1]
            %v1132 = vld [vmem:[%s510] sm:$0x1]
            %vm1133 = vcmask 261120
            %v1135 = vsel %vm1133, %v1107, 0
            %v1138 = vsel %vm1133, %v1108, 0
            %v1141 = vsel %vm1133, %v1109, 0
            %v1144 = vsel %vm1133, %v1110, 0
            %v1147 = vsel %vm1133, %v1111, 0
            %v1150 = vsel %vm1133, %v1112, 0
            %v1153 = vsel %vm1133, %v1113, 0
            %v1156 = vsel %vm1133, %v1114, 0
            %v1159 = vsel %vm1133, %v1115, 0
            %v1162 = vsel %vm1133, %v1116, 0
            %v1165 = vsel %vm1133, %v1117, 0
            %v1168 = vsel %vm1133, %v1118, 0
            %v1171 = vsel %vm1133, %v1119, 0
            %v1174 = vsel %vm1133, %v1120, 0
            %v1177 = vsel %vm1133, %v1121, 0
            %v1180 = vsel %vm1133, %v1122, 0
            %1182 = vmatprep.subr.mxu0 0.0
            %1183 = vmatpush1.msra.mxu0 0.0
            %1184 = vmatprep.subr.mxu0 0.0
            %1185 = vmatpush1.msra.mxu0 0.0
            %1186 = vmatprep.subr.mxu0 0.0
            %1187 = vmatpush1.msra.mxu0 0.0
            %1188 = vmatprep.subr.mxu0 0.0
            %1189 = vmatpush1.msra.mxu0 0.0
            %1190 = vmatprep.subr.mxu0 0.0
            %1191 = vmatpush1.msra.mxu0 0.0
            %1192 = vmatprep.subr.mxu0 0.0
            %1193 = vmatpush1.msra.mxu0 0.0
            %1194 = vmatprep.subr.mxu0 0.0
            %1195 = vmatpush1.msra.mxu0 0.0
            %1196 = vmatprep.subr.mxu0 0.0
            %1197 = vmatpush1.msra.mxu0 0.0
            %1198 = vmatprep.subr.mxu0 0.0
            %1199 = vmatpush1.msra.mxu0 0.0
            %1200 = vmatprep.subr.mxu0 0.0
            %1201 = vmatpush1.msra.mxu0 0.0
            %1202 = vmatprep.subr.mxu0 0.0
            %1203 = vmatpush1.msra.mxu0 0.0
            %1204 = vmatprep.subr.mxu0 0.0
            %1205 = vmatpush1.msra.mxu0 0.0
            %1206 = vmatprep.subr.mxu0 0.0
            %1207 = vmatpush1.msra.mxu0 %v1126
            %1208 = vmatprep.subr.mxu0 0.0
            %1209 = vmatpush1.msra.mxu0 %v1125
            %1210 = vmatprep.subr.mxu0 0.0
            %1211 = vmatpush1.msra.mxu0 %v1124
            %1212 = vmatprep.subr.mxu0 0.0
            %1213 = vmatpush1.msra.mxu0 %v1123
            %1214 = vmatprep.subr.mxu0 0.0
            %1215 = vmatpush2.msra.mxu0 0.0
            %1216 = vmatprep.subr.mxu0 0.0
            %1217 = vmatpush2.msra.mxu0 0.0
            %1218 = vmatprep.subr.mxu0 0.0
            %1219 = vmatpush2.msra.mxu0 0.0
            %1220 = vmatprep.subr.mxu0 0.0
            %1221 = vmatpush2.msra.mxu0 0.0
            %1222 = vmatprep.subr.mxu0 0.0
            %1223 = vmatpush2.msra.mxu0 0.0
            %1224 = vmatprep.subr.mxu0 0.0
            %1225 = vmatpush2.msra.mxu0 0.0
            %1226 = vmatprep.subr.mxu0 0.0
            %1227 = vmatpush2.msra.mxu0 0.0
            %1228 = vmatprep.subr.mxu0 0.0
            %1229 = vmatpush2.msra.mxu0 0.0
            %1230 = vmatprep.subr.mxu0 0.0
            %1231 = vmatpush2.msra.mxu0 0.0
            %1232 = vmatprep.subr.mxu0 0.0
            %1233 = vmatpush2.msra.mxu0 0.0
            %1234 = vmatprep.subr.mxu0 0.0
            %1235 = vmatpush2.msra.mxu0 0.0
            %1236 = vmatprep.subr.mxu0 0.0
            %1237 = vmatpush2.msra.mxu0 0.0
            %1238 = vmatprep.subr.mxu0 0.0
            %1239 = vmatpush2.msra.mxu0 0.0
            %1240 = vmatprep.subr.mxu0 0.0
            %1241 = vmatpush2.msra.mxu0 0.0
            %1242 = vmatprep.subr.mxu0 0.0
            %1243 = vmatpush2.msra.mxu0 0.0
            %1244 = vmatprep.subr.mxu0 0.0
            %1245 = vmatpush2.msra.mxu0 0.0
            %1246 = vmatprep.mubr.f32.mxu0 0.0
            %1247 = vmatmul.mubr.f32.gmra.mxu0 %v1135
            %v1248 = vpop.f32.mrf.mxu0
            %v1249 = vadd.f32 0.0, %v1248
            %v1250 = vpop.f32.mrf.mxu0
            %1251 = vmatprep.mubr.f32.mxu0 0.0
            %1252 = vmatmul.mubr.f32.gmra.mxu0 %v1138
            %v1253 = vpop.f32.mrf.mxu0
            %v1254 = vadd.f32 0.0, %v1253
            %v1255 = vpop.f32.mrf.mxu0
            %1256 = vmatprep.mubr.f32.mxu0 0.0
            %1257 = vmatmul.mubr.f32.gmra.mxu0 %v1141
            %v1258 = vpop.f32.mrf.mxu0
            %v1259 = vadd.f32 0.0, %v1258
            %v1260 = vpop.f32.mrf.mxu0
            %1261 = vmatprep.mubr.f32.mxu0 0.0
            %1262 = vmatmul.mubr.f32.gmra.mxu0 %v1144
            %v1263 = vpop.f32.mrf.mxu0
            %v1264 = vadd.f32 0.0, %v1263
            %v1265 = vpop.f32.mrf.mxu0
            %1266 = vmatprep.mubr.f32.mxu0 0.0
            %1267 = vmatmul.mubr.f32.gmra.mxu0 %v1147
            %v1268 = vpop.f32.mrf.mxu0
            %v1269 = vadd.f32 0.0, %v1268
            %v1270 = vpop.f32.mrf.mxu0
            %1271 = vmatprep.mubr.f32.mxu0 0.0
            %1272 = vmatmul.mubr.f32.gmra.mxu0 %v1150
            %v1273 = vpop.f32.mrf.mxu0
            %v1274 = vadd.f32 0.0, %v1273
            %v1275 = vpop.f32.mrf.mxu0
            %1276 = vmatprep.mubr.f32.mxu0 0.0
            %1277 = vmatmul.mubr.f32.gmra.mxu0 %v1153
            %v1278 = vpop.f32.mrf.mxu0
            %v1279 = vadd.f32 0.0, %v1278
            %v1280 = vpop.f32.mrf.mxu0
            %1281 = vmatprep.mubr.f32.mxu0 0.0
            %1282 = vmatmul.mubr.f32.gmra.mxu0 %v1156
            %v1283 = vpop.f32.mrf.mxu0
            %v1284 = vadd.f32 0.0, %v1283
            %v1285 = vpop.f32.mrf.mxu0
            %1286 = vmatprep.mubr.f32.mxu0 0.0
            %1287 = vmatmul.mubr.f32.gmra.mxu0 %v1159
            %v1288 = vpop.f32.mrf.mxu0
            %v1289 = vadd.f32 0.0, %v1288
            %v1290 = vpop.f32.mrf.mxu0
            %1291 = vmatprep.mubr.f32.mxu0 0.0
            %1292 = vmatmul.mubr.f32.gmra.mxu0 %v1162
            %v1293 = vpop.f32.mrf.mxu0
            %v1294 = vadd.f32 0.0, %v1293
            %v1295 = vpop.f32.mrf.mxu0
            %1296 = vmatprep.mubr.f32.mxu0 0.0
            %1297 = vmatmul.mubr.f32.gmra.mxu0 %v1165
            %v1298 = vpop.f32.mrf.mxu0
            %v1299 = vadd.f32 0.0, %v1298
            %v1300 = vpop.f32.mrf.mxu0
            %1301 = vmatprep.mubr.f32.mxu0 0.0
            %1302 = vmatmul.mubr.f32.gmra.mxu0 %v1168
            %v1303 = vpop.f32.mrf.mxu0
            %v1304 = vadd.f32 0.0, %v1303
            %v1305 = vpop.f32.mrf.mxu0
            %1306 = vmatprep.mubr.f32.mxu0 0.0
            %1307 = vmatmul.mubr.f32.gmra.mxu0 %v1171
            %v1308 = vpop.f32.mrf.mxu0
            %v1309 = vadd.f32 0.0, %v1308
            %v1310 = vpop.f32.mrf.mxu0
            %1311 = vmatprep.mubr.f32.mxu0 0.0
            %1312 = vmatmul.mubr.f32.gmra.mxu0 %v1174
            %v1313 = vpop.f32.mrf.mxu0
            %v1314 = vadd.f32 0.0, %v1313
            %v1315 = vpop.f32.mrf.mxu0
            %1316 = vmatprep.mubr.f32.mxu0 0.0
            %1317 = vmatmul.mubr.f32.gmra.mxu0 %v1177
            %v1318 = vpop.f32.mrf.mxu0
            %v1319 = vadd.f32 0.0, %v1318
            %v1320 = vpop.f32.mrf.mxu0
            %1321 = vmatprep.mubr.f32.mxu0 0.0
            %1322 = vmatmul.mubr.f32.gmra.mxu0 %v1180
            %v1323 = vpop.f32.mrf.mxu0
            %v1324 = vadd.f32 0.0, %v1323
            %v1325 = vpop.f32.mrf.mxu0
            %1326 = vdwg.mxu0
            %1327 = vst.msk [vmem:[#allocation3] sm:$0xff] %vm1133, %v1249
            %1328 = vst.msk [vmem:[#allocation3 + $0x8] sm:$0xff] %vm1133, %v1254
            %1329 = vst.msk [vmem:[#allocation3 + $0x10] sm:$0xff] %vm1133, %v1259
            %1330 = vst.msk [vmem:[#allocation3 + $0x18] sm:$0xff] %vm1133, %v1264
            %1331 = vst.msk [vmem:[#allocation3 + $0x20] sm:$0xff] %vm1133, %v1269
            %1332 = vst.msk [vmem:[#allocation3 + $0x28] sm:$0xff] %vm1133, %v1274
            %1333 = vst.msk [vmem:[#allocation3 + $0x30] sm:$0xff] %vm1133, %v1279
            %1334 = vst.msk [vmem:[#allocation3 + $0x38] sm:$0xff] %vm1133, %v1284
            %1335 = vst.msk [vmem:[#allocation3 + $0x40] sm:$0xff] %vm1133, %v1289
            %1336 = vst.msk [vmem:[#allocation3 + $0x48] sm:$0xff] %vm1133, %v1294
            %1337 = vst.msk [vmem:[#allocation3 + $0x50] sm:$0xff] %vm1133, %v1299
            %1338 = vst.msk [vmem:[#allocation3 + $0x58] sm:$0xff] %vm1133, %v1304
            %1339 = vst.msk [vmem:[#allocation3 + $0x60] sm:$0xff] %vm1133, %v1309
            %1340 = vst.msk [vmem:[#allocation3 + $0x68] sm:$0xff] %vm1133, %v1314
            %1341 = vst.msk [vmem:[#allocation3 + $0x70] sm:$0xff] %vm1133, %v1319
            %1342 = vst.msk [vmem:[#allocation3 + $0x78] sm:$0xff] %vm1133, %v1324
            %1359 = vrot.lane.b32.xlu0 %v1249, 96
            %v1360 = vpop.permute.xlu0 %1359
            %1361 = vrot.lane.b32.xlu0 %v1254, 96
            %v1362 = vpop.permute.xlu0 %1361
            %1363 = vrot.lane.b32.xlu0 %v1259, 96
            %v1364 = vpop.permute.xlu0 %1363
            %1365 = vrot.lane.b32.xlu0 %v1264, 96
            %v1366 = vpop.permute.xlu0 %1365
            %1367 = vrot.lane.b32.xlu0 %v1269, 96
            %v1368 = vpop.permute.xlu0 %1367
            %1369 = vrot.lane.b32.xlu0 %v1274, 96
            %v1370 = vpop.permute.xlu0 %1369
            %1371 = vrot.lane.b32.xlu0 %v1279, 96
            %v1372 = vpop.permute.xlu0 %1371
            %1373 = vrot.lane.b32.xlu0 %v1284, 96
            %v1374 = vpop.permute.xlu0 %1373
            %1375 = vrot.lane.b32.xlu0 %v1289, 96
            %v1376 = vpop.permute.xlu0 %1375
            %1377 = vrot.lane.b32.xlu0 %v1294, 96
            %v1378 = vpop.permute.xlu0 %1377
            %1379 = vrot.lane.b32.xlu0 %v1299, 96
            %v1380 = vpop.permute.xlu0 %1379
            %1381 = vrot.lane.b32.xlu0 %v1304, 96
            %v1382 = vpop.permute.xlu0 %1381
            %1383 = vrot.lane.b32.xlu0 %v1309, 96
            %v1384 = vpop.permute.xlu0 %1383
            %1385 = vrot.lane.b32.xlu0 %v1314, 96
            %v1386 = vpop.permute.xlu0 %1385
            %1387 = vrot.lane.b32.xlu0 %v1319, 96
            %v1388 = vpop.permute.xlu0 %1387
            %1389 = vrot.lane.b32.xlu0 %v1324, 96
            %v1390 = vpop.permute.xlu0 %1389
            %1407 = vst.msk [vmem:[#allocation4] sm:$0xff] %vm1133, %v1360
            %1408 = vst.msk [vmem:[#allocation4 + $0x8] sm:$0xff] %vm1133, %v1362
            %1409 = vst.msk [vmem:[#allocation4 + $0x10] sm:$0xff] %vm1133, %v1364
            %1410 = vst.msk [vmem:[#allocation4 + $0x18] sm:$0xff] %vm1133, %v1366
            %1411 = vst.msk [vmem:[#allocation4 + $0x20] sm:$0xff] %vm1133, %v1368
            %1412 = vst.msk [vmem:[#allocation4 + $0x28] sm:$0xff] %vm1133, %v1370
            %1413 = vst.msk [vmem:[#allocation4 + $0x30] sm:$0xff] %vm1133, %v1372
            %1414 = vst.msk [vmem:[#allocation4 + $0x38] sm:$0xff] %vm1133, %v1374
            %1415 = vst.msk [vmem:[#allocation4 + $0x40] sm:$0xff] %vm1133, %v1376
            %1416 = vst.msk [vmem:[#allocation4 + $0x48] sm:$0xff] %vm1133, %v1378
            %1417 = vst.msk [vmem:[#allocation4 + $0x50] sm:$0xff] %vm1133, %v1380
            %1418 = vst.msk [vmem:[#allocation4 + $0x58] sm:$0xff] %vm1133, %v1382
            %1419 = vst.msk [vmem:[#allocation4 + $0x60] sm:$0xff] %vm1133, %v1384
            %1420 = vst.msk [vmem:[#allocation4 + $0x68] sm:$0xff] %vm1133, %v1386
            %1421 = vst.msk [vmem:[#allocation4 + $0x70] sm:$0xff] %vm1133, %v1388
            %1422 = vst.msk [vmem:[#allocation4 + $0x78] sm:$0xff] %vm1133, %v1390
            %1423 = vxpose.xlu0.b32.start [1/16] %v1249, 128
            %1424 = vxpose.xlu0.b32.cont [2/16] %v1254, 128
            %1425 = vxpose.xlu0.b32.cont [3/16] %v1259, 128
            %1426 = vxpose.xlu0.b32.cont [4/16] %v1264, 128
            %1427 = vxpose.xlu0.b32.cont [5/16] %v1269, 128
            %1428 = vxpose.xlu0.b32.cont [6/16] %v1274, 128
            %1429 = vxpose.xlu0.b32.cont [7/16] %v1279, 128
            %1430 = vxpose.xlu0.b32.cont [8/16] %v1284, 128
            %1431 = vxpose.xlu0.b32.cont [9/16] %v1289, 128
            %1432 = vxpose.xlu0.b32.cont [10/16] %v1294, 128
            %1433 = vxpose.xlu0.b32.cont [11/16] %v1299, 128
            %1434 = vxpose.xlu0.b32.cont [12/16] %v1304, 128
            %1435 = vxpose.xlu0.b32.cont [13/16] %v1309, 128
            %1436 = vxpose.xlu0.b32.cont [14/16] %v1314, 128
            %1437 = vxpose.xlu0.b32.cont [15/16] %v1319, 128
            %1438 = vxpose.xlu0.b32.end [16/16] %v1324, 128
            %v1439 = vpop.trf.xlu0
            %v1440 = vpop.trf.xlu0
            %v1441 = vpop.trf.xlu0
            %v1442 = vpop.trf.xlu0
            %v1443 = vpop.trf.xlu0
            %v1444 = vpop.trf.xlu0
            %v1445 = vpop.trf.xlu0
            %v1446 = vpop.trf.xlu0
            %v1447 = vpop.trf.xlu0
            %v1448 = vpop.trf.xlu0
            %v1449 = vpop.trf.xlu0
            %v1450 = vpop.trf.xlu0
            %v1451 = vpop.trf.xlu0
            %v1452 = vpop.trf.xlu0
            %v1453 = vpop.trf.xlu0
            %v1454 = vpop.trf.xlu0
            %1455 = vst [vmem:[#allocation5] sm:$0xff] %v1439
            %1456 = vst [vmem:[#allocation5 + $0x8] sm:$0xff] %v1440
            %1457 = vst [vmem:[#allocation5 + $0x10] sm:$0xff] %v1441
            %1458 = vst [vmem:[#allocation5 + $0x18] sm:$0xff] %v1442
            %1460 = vset.pattern.permute.xlu0 0
            %1461 = vperm.xlu0 %1460, %v1127
            %v1462 = vpop.permute.xlu0 %1461
            %1465 = vset.pattern.permute.xlu0 0
            %1466 = vperm.xlu0 %1465, %v1128
            %v1467 = vpop.permute.xlu0 %1466
            %1470 = vset.pattern.permute.xlu0 0
            %1471 = vperm.xlu0 %1470, %v1129
            %v1472 = vpop.permute.xlu0 %1471
            %1475 = vset.pattern.permute.xlu0 0
            %1476 = vperm.xlu0 %1475, %v1130
            %v1477 = vpop.permute.xlu0 %1476
            %v1479 = vmul.f32 %v1439, %v1462
            %v1480 = vmul.f32 %v1440, %v1467
            %v1481 = vmul.f32 %v1441, %v1472
            %v1482 = vmul.f32 %v1442, %v1477
            %v1483 = vadd.f32 %v1479, %v1480
            %v1484 = vadd.f32 %v1483, %v1481
            %v1485 = vadd.f32 %v1484, %v1482
            %v1486 = vrot.slane %v1485, 4
            %v1487 = vadd.f32 %v1485, %v1486
            %v1488 = vrot.slane %v1487, 2
            %v1489 = vadd.f32 %v1487, %v1488
            %v1490 = vrot.slane %v1489, 1
            %v1491 = vadd.f32 %v1489, %v1490
            %v1492 = vmul.f32 %v1491, 0.2
            %1493 = vst [vmem:[#allocation6] sm:$0x1] %v1492
            %v1495 = vlaneseq
            %v1496 = vshrl.u32 %v1495, 7
            %v1497 = vsub.s32 0, %v1496
            %v1498 = vrot.slane %v1131, %v1497
            %1499 = vrot.lane.b32.xlu0 %v1498, 32
            %v1500 = vpop.permute.xlu0 %1499
            %v1502 = vmul.f32 %v1249, %v1500
            %v1503 = vmul.f32 %v1254, %v1500
            %v1504 = vmul.f32 %v1259, %v1500
            %v1505 = vmul.f32 %v1264, %v1500
            %v1506 = vmul.f32 %v1269, %v1500
            %v1507 = vmul.f32 %v1274, %v1500
            %v1508 = vmul.f32 %v1279, %v1500
            %v1509 = vmul.f32 %v1284, %v1500
            %v1510 = vmul.f32 %v1289, %v1500
            %v1511 = vmul.f32 %v1294, %v1500
            %v1512 = vmul.f32 %v1299, %v1500
            %v1513 = vmul.f32 %v1304, %v1500
            %v1514 = vmul.f32 %v1309, %v1500
            %v1515 = vmul.f32 %v1314, %v1500
            %v1516 = vmul.f32 %v1319, %v1500
            %v1517 = vmul.f32 %v1324, %v1500
            %1534 = vrot.lane.b32.xlu0 %v1502, 96
            %v1535 = vpop.permute.xlu0 %1534
            %1536 = vrot.lane.b32.xlu0 %v1503, 96
            %v1537 = vpop.permute.xlu0 %1536
            %1538 = vrot.lane.b32.xlu0 %v1504, 96
            %v1539 = vpop.permute.xlu0 %1538
            %1540 = vrot.lane.b32.xlu0 %v1505, 96
            %v1541 = vpop.permute.xlu0 %1540
            %1542 = vrot.lane.b32.xlu0 %v1506, 96
            %v1543 = vpop.permute.xlu0 %1542
            %1544 = vrot.lane.b32.xlu0 %v1507, 96
            %v1545 = vpop.permute.xlu0 %1544
            %1546 = vrot.lane.b32.xlu0 %v1508, 96
            %v1547 = vpop.permute.xlu0 %1546
            %1548 = vrot.lane.b32.xlu0 %v1509, 96
            %v1549 = vpop.permute.xlu0 %1548
            %1550 = vrot.lane.b32.xlu0 %v1510, 96
            %v1551 = vpop.permute.xlu0 %1550
            %1552 = vrot.lane.b32.xlu0 %v1511, 96
            %v1553 = vpop.permute.xlu0 %1552
            %1554 = vrot.lane.b32.xlu0 %v1512, 96
            %v1555 = vpop.permute.xlu0 %1554
            %1556 = vrot.lane.b32.xlu0 %v1513, 96
            %v1557 = vpop.permute.xlu0 %1556
            %1558 = vrot.lane.b32.xlu0 %v1514, 96
            %v1559 = vpop.permute.xlu0 %1558
            %1560 = vrot.lane.b32.xlu0 %v1515, 96
            %v1561 = vpop.permute.xlu0 %1560
            %1562 = vrot.lane.b32.xlu0 %v1516, 96
            %v1563 = vpop.permute.xlu0 %1562
            %1564 = vrot.lane.b32.xlu0 %v1517, 96
            %v1565 = vpop.permute.xlu0 %1564
            %v1582 = vsel %vm1133, %v1535, 0.0
            %1583 = vadd.xlane.f32.xlu0 %v1582
            %v1584 = vpop.xlane.xlu0 %1583
            %v1585 = vsel %vm1133, %v1537, 0.0
            %1586 = vadd.xlane.f32.xlu0 %v1585
            %v1587 = vpop.xlane.xlu0 %1586
            %v1588 = vsel %vm1133, %v1539, 0.0
            %1589 = vadd.xlane.f32.xlu0 %v1588
            %v1590 = vpop.xlane.xlu0 %1589
            %v1591 = vsel %vm1133, %v1541, 0.0
            %1592 = vadd.xlane.f32.xlu0 %v1591
            %v1593 = vpop.xlane.xlu0 %1592
            %v1594 = vsel %vm1133, %v1543, 0.0
            %1595 = vadd.xlane.f32.xlu0 %v1594
            %v1596 = vpop.xlane.xlu0 %1595
            %v1597 = vsel %vm1133, %v1545, 0.0
            %1598 = vadd.xlane.f32.xlu0 %v1597
            %v1599 = vpop.xlane.xlu0 %1598
            %v1600 = vsel %vm1133, %v1547, 0.0
            %1601 = vadd.xlane.f32.xlu0 %v1600
            %v1602 = vpop.xlane.xlu0 %1601
            %v1603 = vsel %vm1133, %v1549, 0.0
            %1604 = vadd.xlane.f32.xlu0 %v1603
            %v1605 = vpop.xlane.xlu0 %1604
            %v1606 = vsel %vm1133, %v1551, 0.0
            %1607 = vadd.xlane.f32.xlu0 %v1606
            %v1608 = vpop.xlane.xlu0 %1607
            %v1609 = vsel %vm1133, %v1553, 0.0
            %1610 = vadd.xlane.f32.xlu0 %v1609
            %v1611 = vpop.xlane.xlu0 %1610
            %v1612 = vsel %vm1133, %v1555, 0.0
            %1613 = vadd.xlane.f32.xlu0 %v1612
            %v1614 = vpop.xlane.xlu0 %1613
            %v1615 = vsel %vm1133, %v1557, 0.0
            %1616 = vadd.xlane.f32.xlu0 %v1615
            %v1617 = vpop.xlane.xlu0 %1616
            %v1618 = vsel %vm1133, %v1559, 0.0
            %1619 = vadd.xlane.f32.xlu0 %v1618
            %v1620 = vpop.xlane.xlu0 %1619
            %v1621 = vsel %vm1133, %v1561, 0.0
            %1622 = vadd.xlane.f32.xlu0 %v1621
            %v1623 = vpop.xlane.xlu0 %1622
            %v1624 = vsel %vm1133, %v1563, 0.0
            %1625 = vadd.xlane.f32.xlu0 %v1624
            %v1626 = vpop.xlane.xlu0 %1625
            %v1627 = vsel %vm1133, %v1565, 0.0
            %1628 = vadd.xlane.f32.xlu0 %v1627
            %v1629 = vpop.xlane.xlu0 %1628
            %v1630 = vmul.f32 %v1584, 0.2
            %v1631 = vmul.f32 %v1587, 0.2
            %v1632 = vmul.f32 %v1590, 0.2
            %v1633 = vmul.f32 %v1593, 0.2
            %v1634 = vmul.f32 %v1596, 0.2
            %v1635 = vmul.f32 %v1599, 0.2
            %v1636 = vmul.f32 %v1602, 0.2
            %v1637 = vmul.f32 %v1605, 0.2
            %v1638 = vmul.f32 %v1608, 0.2
            %v1639 = vmul.f32 %v1611, 0.2
            %v1640 = vmul.f32 %v1614, 0.2
            %v1641 = vmul.f32 %v1617, 0.2
            %v1642 = vmul.f32 %v1620, 0.2
            %v1643 = vmul.f32 %v1623, 0.2
            %v1644 = vmul.f32 %v1626, 0.2
            %v1645 = vmul.f32 %v1629, 0.2
            %vm1646 = vcmask 7168
            %1647 = vst.msk [vmem:[#allocation7] sm:$0xff] %vm1646, %v1630
            %1648 = vst.msk [vmem:[#allocation7 + $0x8] sm:$0xff] %vm1646, %v1631
            %1649 = vst.msk [vmem:[#allocation7 + $0x10] sm:$0xff] %vm1646, %v1632
            %1650 = vst.msk [vmem:[#allocation7 + $0x18] sm:$0xff] %vm1646, %v1633
            %1651 = vst.msk [vmem:[#allocation7 + $0x20] sm:$0xff] %vm1646, %v1634
            %1652 = vst.msk [vmem:[#allocation7 + $0x28] sm:$0xff] %vm1646, %v1635
            %1653 = vst.msk [vmem:[#allocation7 + $0x30] sm:$0xff] %vm1646, %v1636
            %1654 = vst.msk [vmem:[#allocation7 + $0x38] sm:$0xff] %vm1646, %v1637
            %1655 = vst.msk [vmem:[#allocation7 + $0x40] sm:$0xff] %vm1646, %v1638
            %1656 = vst.msk [vmem:[#allocation7 + $0x48] sm:$0xff] %vm1646, %v1639
            %1657 = vst.msk [vmem:[#allocation7 + $0x50] sm:$0xff] %vm1646, %v1640
            %1658 = vst.msk [vmem:[#allocation7 + $0x58] sm:$0xff] %vm1646, %v1641
            %1659 = vst.msk [vmem:[#allocation7 + $0x60] sm:$0xff] %vm1646, %v1642
            %1660 = vst.msk [vmem:[#allocation7 + $0x68] sm:$0xff] %vm1646, %v1643
            %1661 = vst.msk [vmem:[#allocation7 + $0x70] sm:$0xff] %vm1646, %v1644
            %1662 = vst.msk [vmem:[#allocation7 + $0x78] sm:$0xff] %vm1646, %v1645
            %1663 = vst.msk [vmem:[#allocation8] sm:$0xff] %vm1646, %v1127
            %1664 = vst.msk [vmem:[#allocation8 + $0x8] sm:$0xff] %vm1646, %v1128
            %1665 = vst.msk [vmem:[#allocation8 + $0x10] sm:$0xff] %vm1646, %v1129
            %1666 = vst.msk [vmem:[#allocation8 + $0x18] sm:$0xff] %vm1646, %v1130
            %vm1667 = vcmask 253952
            %1668 = vst.msk [vmem:[#allocation9] sm:$0x1] %vm1667, %v1132
          $region84: #{tpu_custom_call.1} parent=75 // pred_fallthru
            _
        $region76: #{tpu_custom_call.1} parent=67 // pred_fallthru
          _
        %s1669 = sshra.s32 %s513, 5
        %s1670 = sand.u32 %s513, 31
        %s1671 = smul.addr %s1669, 8
        %s1672 = scalar_lea.vmem %s2, %s1671
        %v1673 = vld [vmem:[%s1672] sm:$0xff]
        %v1674 = vld [vmem:[%s1672 + $0x8] sm:$0xff]
        %v1675 = vld [vmem:[%s1672 + $0x10] sm:$0xff]
        %v1676 = vld [vmem:[%s1672 + $0x18] sm:$0xff]
        %v1677 = vunpack.c.0.s8 %v1673
        %v1678 = vunpack.c.1.s8 %v1673
        %v1679 = vunpack.c.2.s8 %v1673
        %v1680 = vunpack.c.3.s8 %v1673
        %v1681 = vunpack.c.0.s8 %v1674
        %v1682 = vunpack.c.1.s8 %v1674
        %v1683 = vunpack.c.2.s8 %v1674
        %v1684 = vunpack.c.3.s8 %v1674
        %v1685 = vunpack.c.0.s8 %v1675
        %v1686 = vunpack.c.1.s8 %v1675
        %v1687 = vunpack.c.2.s8 %v1675
        %v1688 = vunpack.c.3.s8 %v1675
        %v1689 = vunpack.c.0.s8 %v1676
        %v1690 = vunpack.c.1.s8 %v1676
        %v1691 = vunpack.c.2.s8 %v1676
        %v1692 = vunpack.c.3.s8 %v1676
        %v1693 = vcvt.s32.f32 %v1677
        %v1694 = vcvt.s32.f32 %v1678
        %v1695 = vcvt.s32.f32 %v1679
        %v1696 = vcvt.s32.f32 %v1680
        %v1697 = vcvt.s32.f32 %v1681
        %v1698 = vcvt.s32.f32 %v1682
        %v1699 = vcvt.s32.f32 %v1683
        %v1700 = vcvt.s32.f32 %v1684
        %v1701 = vcvt.s32.f32 %v1685
        %v1702 = vcvt.s32.f32 %v1686
        %v1703 = vcvt.s32.f32 %v1687
        %v1704 = vcvt.s32.f32 %v1688
        %v1705 = vcvt.s32.f32 %v1689
        %v1706 = vcvt.s32.f32 %v1690
        %v1707 = vcvt.s32.f32 %v1691
        %v1708 = vcvt.s32.f32 %v1692
        %vm1709 = vcmp.gt.f32.partialorder %v1693, 0.0
        %vm1710 = vcmp.gt.f32.partialorder %v1694, 0.0
        %vm1711 = vcmp.gt.f32.partialorder %v1695, 0.0
        %vm1712 = vcmp.gt.f32.partialorder %v1696, 0.0
        %vm1713 = vcmp.gt.f32.partialorder %v1697, 0.0
        %vm1714 = vcmp.gt.f32.partialorder %v1698, 0.0
        %vm1715 = vcmp.gt.f32.partialorder %v1699, 0.0
        %vm1716 = vcmp.gt.f32.partialorder %v1700, 0.0
        %vm1717 = vcmp.gt.f32.partialorder %v1701, 0.0
        %vm1718 = vcmp.gt.f32.partialorder %v1702, 0.0
        %vm1719 = vcmp.gt.f32.partialorder %v1703, 0.0
        %vm1720 = vcmp.gt.f32.partialorder %v1704, 0.0
        %vm1721 = vcmp.gt.f32.partialorder %v1705, 0.0
        %vm1722 = vcmp.gt.f32.partialorder %v1706, 0.0
        %vm1723 = vcmp.gt.f32.partialorder %v1707, 0.0
        %vm1724 = vcmp.gt.f32.partialorder %v1708, 0.0
        %v1725 = vld [vmem:[%s487] sm:$0x3]
        %s1726 = scalar_lea.vmem [#allocation4], %s513
        %v1727 = vld [vmem:[%s1726] sm:$0xff]
        %v1728 = vld [vmem:[%s1726 + $0x8] sm:$0xff]
        %v1729 = vld [vmem:[%s1726 + $0x10] sm:$0xff]
        %v1730 = vld [vmem:[%s1726 + $0x18] sm:$0xff]
        %v1731 = vld [vmem:[%s1726 + $0x20] sm:$0xff]
        %v1732 = vld [vmem:[%s1726 + $0x28] sm:$0xff]
        %v1733 = vld [vmem:[%s1726 + $0x30] sm:$0xff]
        %v1734 = vld [vmem:[%s1726 + $0x38] sm:$0xff]
        %v1735 = vld [vmem:[%s1726 + $0x40] sm:$0xff]
        %v1736 = vld [vmem:[%s1726 + $0x48] sm:$0xff]
        %v1737 = vld [vmem:[%s1726 + $0x50] sm:$0xff]
        %v1738 = vld [vmem:[%s1726 + $0x58] sm:$0xff]
        %v1739 = vld [vmem:[%s1726 + $0x60] sm:$0xff]
        %v1740 = vld [vmem:[%s1726 + $0x68] sm:$0xff]
        %v1741 = vld [vmem:[%s1726 + $0x70] sm:$0xff]
        %v1742 = vld [vmem:[%s1726 + $0x78] sm:$0xff]
        %1743 = vxpose.xlu0.b32.start [1/16] %v1727, 128
        %1744 = vxpose.xlu0.b32.cont [2/16] %v1728, 128
        %1745 = vxpose.xlu0.b32.cont [3/16] %v1729, 128
        %1746 = vxpose.xlu0.b32.cont [4/16] %v1730, 128
        %1747 = vxpose.xlu0.b32.cont [5/16] %v1731, 128
        %1748 = vxpose.xlu0.b32.cont [6/16] %v1732, 128
        %1749 = vxpose.xlu0.b32.cont [7/16] %v1733, 128
        %1750 = vxpose.xlu0.b32.cont [8/16] %v1734, 128
        %1751 = vxpose.xlu0.b32.cont [9/16] %v1735, 128
        %1752 = vxpose.xlu0.b32.cont [10/16] %v1736, 128
        %1753 = vxpose.xlu0.b32.cont [11/16] %v1737, 128
        %1754 = vxpose.xlu0.b32.cont [12/16] %v1738, 128
        %1755 = vxpose.xlu0.b32.cont [13/16] %v1739, 128
        %1756 = vxpose.xlu0.b32.cont [14/16] %v1740, 128
        %1757 = vxpose.xlu0.b32.cont [15/16] %v1741, 128
        %1758 = vxpose.xlu0.b32.end [16/16] %v1742, 128
        %v1759 = vpop.trf.xlu0
        %v1760 = vpop.trf.xlu0
        %v1761 = vpop.trf.xlu0
        %v1762 = vpop.trf.xlu0
        %v1763 = vpop.trf.xlu0
        %v1764 = vpop.trf.xlu0
        %v1765 = vpop.trf.xlu0
        %v1766 = vpop.trf.xlu0
        %v1767 = vpop.trf.xlu0
        %v1768 = vpop.trf.xlu0
        %v1769 = vpop.trf.xlu0
        %v1770 = vpop.trf.xlu0
        %v1771 = vpop.trf.xlu0
        %v1772 = vpop.trf.xlu0
        %v1773 = vpop.trf.xlu0
        %v1774 = vpop.trf.xlu0
        %v1775 = vld [vmem:[#allocation5] sm:$0xff]
        %v1776 = vld [vmem:[#allocation5 + $0x8] sm:$0xff]
        %v1777 = vld [vmem:[#allocation5 + $0x10] sm:$0xff]
        %v1778 = vld [vmem:[#allocation5 + $0x18] sm:$0xff]
        %v1779 = vld [vmem:[#allocation8] sm:$0xff]
        %v1780 = vld [vmem:[#allocation8 + $0x8] sm:$0xff]
        %v1781 = vld [vmem:[#allocation8 + $0x10] sm:$0xff]
        %v1782 = vld [vmem:[#allocation8 + $0x18] sm:$0xff]
        %v1783 = vlaneseq
        %v1784 = vshrl.u32 %v1783, 7
        %v1785 = vsub.s32 0, %v1784
        %v1786 = vrot.slane %v1759, %v1785
        %1788 = vbcast.lane.b32.xlu0 %v1786, 256
        %v1789 = vpop.permute.xlu0 %1788
        %s1791 = sor.u32 256, 8
        %1792 = vbcast.lane.b32.xlu0 %v1786, %s1791
        %v1793 = vpop.permute.xlu0 %1792
        %s1795 = sor.u32 256, 16
        %1796 = vbcast.lane.b32.xlu0 %v1786, %s1795
        %v1797 = vpop.permute.xlu0 %1796
        %s1799 = sor.u32 256, 24
        %1800 = vbcast.lane.b32.xlu0 %v1786, %s1799
        %v1801 = vpop.permute.xlu0 %1800
        %s1803 = sor.u32 256, 32
        %1804 = vbcast.lane.b32.xlu0 %v1786, %s1803
        %v1805 = vpop.permute.xlu0 %1804
        %s1807 = sor.u32 256, 40
        %1808 = vbcast.lane.b32.xlu0 %v1786, %s1807
        %v1809 = vpop.permute.xlu0 %1808
        %s1811 = sor.u32 256, 48
        %1812 = vbcast.lane.b32.xlu0 %v1786, %s1811
        %v1813 = vpop.permute.xlu0 %1812
        %s1815 = sor.u32 256, 56
        %1816 = vbcast.lane.b32.xlu0 %v1786, %s1815
        %v1817 = vpop.permute.xlu0 %1816
        %s1819 = sor.u32 256, 64
        %1820 = vbcast.lane.b32.xlu0 %v1786, %s1819
        %v1821 = vpop.permute.xlu0 %1820
        %s1823 = sor.u32 256, 72
        %1824 = vbcast.lane.b32.xlu0 %v1786, %s1823
        %v1825 = vpop.permute.xlu0 %1824
        %s1827 = sor.u32 256, 80
        %1828 = vbcast.lane.b32.xlu0 %v1786, %s1827
        %v1829 = vpop.permute.xlu0 %1828
        %s1831 = sor.u32 256, 88
        %1832 = vbcast.lane.b32.xlu0 %v1786, %s1831
        %v1833 = vpop.permute.xlu0 %1832
        %s1835 = sor.u32 256, 96
        %1836 = vbcast.lane.b32.xlu0 %v1786, %s1835
        %v1837 = vpop.permute.xlu0 %1836
        %s1839 = sor.u32 256, 104
        %1840 = vbcast.lane.b32.xlu0 %v1786, %s1839
        %v1841 = vpop.permute.xlu0 %1840
        %s1843 = sor.u32 256, 112
        %1844 = vbcast.lane.b32.xlu0 %v1786, %s1843
        %v1845 = vpop.permute.xlu0 %1844
        %s1847 = sor.u32 256, 120
        %1848 = vbcast.lane.b32.xlu0 %v1786, %s1847
        %v1849 = vpop.permute.xlu0 %1848
        %v1850 = vlaneseq
        %v1851 = vshrl.u32 %v1850, 7
        %v1852 = vsub.s32 1, %v1851
        %v1853 = vrot.slane %v1759, %v1852
        %1855 = vbcast.lane.b32.xlu0 %v1853, 256
        %v1856 = vpop.permute.xlu0 %1855
        %s1858 = sor.u32 256, 8
        %1859 = vbcast.lane.b32.xlu0 %v1853, %s1858
        %v1860 = vpop.permute.xlu0 %1859
        %s1862 = sor.u32 256, 16
        %1863 = vbcast.lane.b32.xlu0 %v1853, %s1862
        %v1864 = vpop.permute.xlu0 %1863
        %s1866 = sor.u32 256, 24
        %1867 = vbcast.lane.b32.xlu0 %v1853, %s1866
        %v1868 = vpop.permute.xlu0 %1867
        %s1870 = sor.u32 256, 32
        %1871 = vbcast.lane.b32.xlu0 %v1853, %s1870
        %v1872 = vpop.permute.xlu0 %1871
        %s1874 = sor.u32 256, 40
        %1875 = vbcast.lane.b32.xlu0 %v1853, %s1874
        %v1876 = vpop.permute.xlu0 %1875
        %s1878 = sor.u32 256, 48
        %1879 = vbcast.lane.b32.xlu0 %v1853, %s1878
        %v1880 = vpop.permute.xlu0 %1879
        %s1882 = sor.u32 256, 56
        %1883 = vbcast.lane.b32.xlu0 %v1853, %s1882
        %v1884 = vpop.permute.xlu0 %1883
        %s1886 = sor.u32 256, 64
        %1887 = vbcast.lane.b32.xlu0 %v1853, %s1886
        %v1888 = vpop.permute.xlu0 %1887
        %s1890 = sor.u32 256, 72
        %1891 = vbcast.lane.b32.xlu0 %v1853, %s1890
        %v1892 = vpop.permute.xlu0 %1891
        %s1894 = sor.u32 256, 80
        %1895 = vbcast.lane.b32.xlu0 %v1853, %s1894
        %v1896 = vpop.permute.xlu0 %1895
        %s1898 = sor.u32 256, 88
        %1899 = vbcast.lane.b32.xlu0 %v1853, %s1898
        %v1900 = vpop.permute.xlu0 %1899
        %s1902 = sor.u32 256, 96
        %1903 = vbcast.lane.b32.xlu0 %v1853, %s1902
        %v1904 = vpop.permute.xlu0 %1903
        %s1906 = sor.u32 256, 104
        %1907 = vbcast.lane.b32.xlu0 %v1853, %s1906
        %v1908 = vpop.permute.xlu0 %1907
        %s1910 = sor.u32 256, 112
        %1911 = vbcast.lane.b32.xlu0 %v1853, %s1910
        %v1912 = vpop.permute.xlu0 %1911
        %s1914 = sor.u32 256, 120
        %1915 = vbcast.lane.b32.xlu0 %v1853, %s1914
        %v1916 = vpop.permute.xlu0 %1915
        %v1917 = vlaneseq
        %v1918 = vshrl.u32 %v1917, 7
        %v1919 = vsub.s32 2, %v1918
        %v1920 = vrot.slane %v1759, %v1919
        %1922 = vbcast.lane.b32.xlu0 %v1920, 256
        %v1923 = vpop.permute.xlu0 %1922
        %s1925 = sor.u32 256, 8
        %1926 = vbcast.lane.b32.xlu0 %v1920, %s1925
        %v1927 = vpop.permute.xlu0 %1926
        %s1929 = sor.u32 256, 16
        %1930 = vbcast.lane.b32.xlu0 %v1920, %s1929
        %v1931 = vpop.permute.xlu0 %1930
        %s1933 = sor.u32 256, 24
        %1934 = vbcast.lane.b32.xlu0 %v1920, %s1933
        %v1935 = vpop.permute.xlu0 %1934
        %s1937 = sor.u32 256, 32
        %1938 = vbcast.lane.b32.xlu0 %v1920, %s1937
        %v1939 = vpop.permute.xlu0 %1938
        %s1941 = sor.u32 256, 40
        %1942 = vbcast.lane.b32.xlu0 %v1920, %s1941
        %v1943 = vpop.permute.xlu0 %1942
        %s1945 = sor.u32 256, 48
        %1946 = vbcast.lane.b32.xlu0 %v1920, %s1945
        %v1947 = vpop.permute.xlu0 %1946
        %s1949 = sor.u32 256, 56
        %1950 = vbcast.lane.b32.xlu0 %v1920, %s1949
        %v1951 = vpop.permute.xlu0 %1950
        %s1953 = sor.u32 256, 64
        %1954 = vbcast.lane.b32.xlu0 %v1920, %s1953
        %v1955 = vpop.permute.xlu0 %1954
        %s1957 = sor.u32 256, 72
        %1958 = vbcast.lane.b32.xlu0 %v1920, %s1957
        %v1959 = vpop.permute.xlu0 %1958
        %s1961 = sor.u32 256, 80
        %1962 = vbcast.lane.b32.xlu0 %v1920, %s1961
        %v1963 = vpop.permute.xlu0 %1962
        %s1965 = sor.u32 256, 88
        %1966 = vbcast.lane.b32.xlu0 %v1920, %s1965
        %v1967 = vpop.permute.xlu0 %1966
        %s1969 = sor.u32 256, 96
        %1970 = vbcast.lane.b32.xlu0 %v1920, %s1969
        %v1971 = vpop.permute.xlu0 %1970
        %s1973 = sor.u32 256, 104
        %1974 = vbcast.lane.b32.xlu0 %v1920, %s1973
        %v1975 = vpop.permute.xlu0 %1974
        %s1977 = sor.u32 256, 112
        %1978 = vbcast.lane.b32.xlu0 %v1920, %s1977
        %v1979 = vpop.permute.xlu0 %1978
        %s1981 = sor.u32 256, 120
        %1982 = vbcast.lane.b32.xlu0 %v1920, %s1981
        %v1983 = vpop.permute.xlu0 %1982
        %v1984 = vlaneseq
        %v1985 = vshrl.u32 %v1984, 7
        %v1986 = vsub.s32 3, %v1985
        %v1987 = vrot.slane %v1759, %v1986
        %1989 = vbcast.lane.b32.xlu0 %v1987, 256
        %v1990 = vpop.permute.xlu0 %1989
        %s1992 = sor.u32 256, 8
        %1993 = vbcast.lane.b32.xlu0 %v1987, %s1992
        %v1994 = vpop.permute.xlu0 %1993
        %s1996 = sor.u32 256, 16
        %1997 = vbcast.lane.b32.xlu0 %v1987, %s1996
        %v1998 = vpop.permute.xlu0 %1997
        %s2000 = sor.u32 256, 24
        %2001 = vbcast.lane.b32.xlu0 %v1987, %s2000
        %v2002 = vpop.permute.xlu0 %2001
        %s2004 = sor.u32 256, 32
        %2005 = vbcast.lane.b32.xlu0 %v1987, %s2004
        %v2006 = vpop.permute.xlu0 %2005
        %s2008 = sor.u32 256, 40
        %2009 = vbcast.lane.b32.xlu0 %v1987, %s2008
        %v2010 = vpop.permute.xlu0 %2009
        %s2012 = sor.u32 256, 48
        %2013 = vbcast.lane.b32.xlu0 %v1987, %s2012
        %v2014 = vpop.permute.xlu0 %2013
        %s2016 = sor.u32 256, 56
        %2017 = vbcast.lane.b32.xlu0 %v1987, %s2016
        %v2018 = vpop.permute.xlu0 %2017
        %s2020 = sor.u32 256, 64
        %2021 = vbcast.lane.b32.xlu0 %v1987, %s2020
        %v2022 = vpop.permute.xlu0 %2021
        %s2024 = sor.u32 256, 72
        %2025 = vbcast.lane.b32.xlu0 %v1987, %s2024
        %v2026 = vpop.permute.xlu0 %2025
        %s2028 = sor.u32 256, 80
        %2029 = vbcast.lane.b32.xlu0 %v1987, %s2028
        %v2030 = vpop.permute.xlu0 %2029
        %s2032 = sor.u32 256, 88
        %2033 = vbcast.lane.b32.xlu0 %v1987, %s2032
        %v2034 = vpop.permute.xlu0 %2033
        %s2036 = sor.u32 256, 96
        %2037 = vbcast.lane.b32.xlu0 %v1987, %s2036
        %v2038 = vpop.permute.xlu0 %2037
        %s2040 = sor.u32 256, 104
        %2041 = vbcast.lane.b32.xlu0 %v1987, %s2040
        %v2042 = vpop.permute.xlu0 %2041
        %s2044 = sor.u32 256, 112
        %2045 = vbcast.lane.b32.xlu0 %v1987, %s2044
        %v2046 = vpop.permute.xlu0 %2045
        %s2048 = sor.u32 256, 120
        %2049 = vbcast.lane.b32.xlu0 %v1987, %s2048
        %v2050 = vpop.permute.xlu0 %2049
        %v2051 = vlaneseq
        %v2052 = vshrl.u32 %v2051, 7
        %v2053 = vsub.s32 4, %v2052
        %v2054 = vrot.slane %v1759, %v2053
        %2056 = vbcast.lane.b32.xlu0 %v2054, 256
        %v2057 = vpop.permute.xlu0 %2056
        %s2059 = sor.u32 256, 8
        %2060 = vbcast.lane.b32.xlu0 %v2054, %s2059
        %v2061 = vpop.permute.xlu0 %2060
        %s2063 = sor.u32 256, 16
        %2064 = vbcast.lane.b32.xlu0 %v2054, %s2063
        %v2065 = vpop.permute.xlu0 %2064
        %s2067 = sor.u32 256, 24
        %2068 = vbcast.lane.b32.xlu0 %v2054, %s2067
        %v2069 = vpop.permute.xlu0 %2068
        %s2071 = sor.u32 256, 32
        %2072 = vbcast.lane.b32.xlu0 %v2054, %s2071
        %v2073 = vpop.permute.xlu0 %2072
        %s2075 = sor.u32 256, 40
        %2076 = vbcast.lane.b32.xlu0 %v2054, %s2075
        %v2077 = vpop.permute.xlu0 %2076
        %s2079 = sor.u32 256, 48
        %2080 = vbcast.lane.b32.xlu0 %v2054, %s2079
        %v2081 = vpop.permute.xlu0 %2080
        %s2083 = sor.u32 256, 56
        %2084 = vbcast.lane.b32.xlu0 %v2054, %s2083
        %v2085 = vpop.permute.xlu0 %2084
        %s2087 = sor.u32 256, 64
        %2088 = vbcast.lane.b32.xlu0 %v2054, %s2087
        %v2089 = vpop.permute.xlu0 %2088
        %s2091 = sor.u32 256, 72
        %2092 = vbcast.lane.b32.xlu0 %v2054, %s2091
        %v2093 = vpop.permute.xlu0 %2092
        %s2095 = sor.u32 256, 80
        %2096 = vbcast.lane.b32.xlu0 %v2054, %s2095
        %v2097 = vpop.permute.xlu0 %2096
        %s2099 = sor.u32 256, 88
        %2100 = vbcast.lane.b32.xlu0 %v2054, %s2099
        %v2101 = vpop.permute.xlu0 %2100
        %s2103 = sor.u32 256, 96
        %2104 = vbcast.lane.b32.xlu0 %v2054, %s2103
        %v2105 = vpop.permute.xlu0 %2104
        %s2107 = sor.u32 256, 104
        %2108 = vbcast.lane.b32.xlu0 %v2054, %s2107
        %v2109 = vpop.permute.xlu0 %2108
        %s2111 = sor.u32 256, 112
        %2112 = vbcast.lane.b32.xlu0 %v2054, %s2111
        %v2113 = vpop.permute.xlu0 %2112
        %s2115 = sor.u32 256, 120
        %2116 = vbcast.lane.b32.xlu0 %v2054, %s2115
        %v2117 = vpop.permute.xlu0 %2116
        %v2118 = vlaneseq
        %v2119 = vshrl.u32 %v2118, 7
        %v2120 = vsub.s32 5, %v2119
        %v2121 = vrot.slane %v1759, %v2120
        %2123 = vbcast.lane.b32.xlu0 %v2121, 256
        %v2124 = vpop.permute.xlu0 %2123
        %s2126 = sor.u32 256, 8
        %2127 = vbcast.lane.b32.xlu0 %v2121, %s2126
        %v2128 = vpop.permute.xlu0 %2127
        %s2130 = sor.u32 256, 16
        %2131 = vbcast.lane.b32.xlu0 %v2121, %s2130
        %v2132 = vpop.permute.xlu0 %2131
        %s2134 = sor.u32 256, 24
        %2135 = vbcast.lane.b32.xlu0 %v2121, %s2134
        %v2136 = vpop.permute.xlu0 %2135
        %s2138 = sor.u32 256, 32
        %2139 = vbcast.lane.b32.xlu0 %v2121, %s2138
        %v2140 = vpop.permute.xlu0 %2139
        %s2142 = sor.u32 256, 40
        %2143 = vbcast.lane.b32.xlu0 %v2121, %s2142
        %v2144 = vpop.permute.xlu0 %2143
        %s2146 = sor.u32 256, 48
        %2147 = vbcast.lane.b32.xlu0 %v2121, %s2146
        %v2148 = vpop.permute.xlu0 %2147
        %s2150 = sor.u32 256, 56
        %2151 = vbcast.lane.b32.xlu0 %v2121, %s2150
        %v2152 = vpop.permute.xlu0 %2151
        %s2154 = sor.u32 256, 64
        %2155 = vbcast.lane.b32.xlu0 %v2121, %s2154
        %v2156 = vpop.permute.xlu0 %2155
        %s2158 = sor.u32 256, 72
        %2159 = vbcast.lane.b32.xlu0 %v2121, %s2158
        %v2160 = vpop.permute.xlu0 %2159
        %s2162 = sor.u32 256, 80
        %2163 = vbcast.lane.b32.xlu0 %v2121, %s2162
        %v2164 = vpop.permute.xlu0 %2163
        %s2166 = sor.u32 256, 88
        %2167 = vbcast.lane.b32.xlu0 %v2121, %s2166
        %v2168 = vpop.permute.xlu0 %2167
        %s2170 = sor.u32 256, 96
        %2171 = vbcast.lane.b32.xlu0 %v2121, %s2170
        %v2172 = vpop.permute.xlu0 %2171
        %s2174 = sor.u32 256, 104
        %2175 = vbcast.lane.b32.xlu0 %v2121, %s2174
        %v2176 = vpop.permute.xlu0 %2175
        %s2178 = sor.u32 256, 112
        %2179 = vbcast.lane.b32.xlu0 %v2121, %s2178
        %v2180 = vpop.permute.xlu0 %2179
        %s2182 = sor.u32 256, 120
        %2183 = vbcast.lane.b32.xlu0 %v2121, %s2182
        %v2184 = vpop.permute.xlu0 %2183
        %v2185 = vlaneseq
        %v2186 = vshrl.u32 %v2185, 7
        %v2187 = vsub.s32 6, %v2186
        %v2188 = vrot.slane %v1759, %v2187
        %2190 = vbcast.lane.b32.xlu0 %v2188, 256
        %v2191 = vpop.permute.xlu0 %2190
        %s2193 = sor.u32 256, 8
        %2194 = vbcast.lane.b32.xlu0 %v2188, %s2193
        %v2195 = vpop.permute.xlu0 %2194
        %s2197 = sor.u32 256, 16
        %2198 = vbcast.lane.b32.xlu0 %v2188, %s2197
        %v2199 = vpop.permute.xlu0 %2198
        %s2201 = sor.u32 256, 24
        %2202 = vbcast.lane.b32.xlu0 %v2188, %s2201
        %v2203 = vpop.permute.xlu0 %2202
        %s2205 = sor.u32 256, 32
        %2206 = vbcast.lane.b32.xlu0 %v2188, %s2205
        %v2207 = vpop.permute.xlu0 %2206
        %s2209 = sor.u32 256, 40
        %2210 = vbcast.lane.b32.xlu0 %v2188, %s2209
        %v2211 = vpop.permute.xlu0 %2210
        %s2213 = sor.u32 256, 48
        %2214 = vbcast.lane.b32.xlu0 %v2188, %s2213
        %v2215 = vpop.permute.xlu0 %2214
        %s2217 = sor.u32 256, 56
        %2218 = vbcast.lane.b32.xlu0 %v2188, %s2217
        %v2219 = vpop.permute.xlu0 %2218
        %s2221 = sor.u32 256, 64
        %2222 = vbcast.lane.b32.xlu0 %v2188, %s2221
        %v2223 = vpop.permute.xlu0 %2222
        %s2225 = sor.u32 256, 72
        %2226 = vbcast.lane.b32.xlu0 %v2188, %s2225
        %v2227 = vpop.permute.xlu0 %2226
        %s2229 = sor.u32 256, 80
        %2230 = vbcast.lane.b32.xlu0 %v2188, %s2229
        %v2231 = vpop.permute.xlu0 %2230
        %s2233 = sor.u32 256, 88
        %2234 = vbcast.lane.b32.xlu0 %v2188, %s2233
        %v2235 = vpop.permute.xlu0 %2234
        %s2237 = sor.u32 256, 96
        %2238 = vbcast.lane.b32.xlu0 %v2188, %s2237
        %v2239 = vpop.permute.xlu0 %2238
        %s2241 = sor.u32 256, 104
        %2242 = vbcast.lane.b32.xlu0 %v2188, %s2241
        %v2243 = vpop.permute.xlu0 %2242
        %s2245 = sor.u32 256, 112
        %2246 = vbcast.lane.b32.xlu0 %v2188, %s2245
        %v2247 = vpop.permute.xlu0 %2246
        %s2249 = sor.u32 256, 120
        %2250 = vbcast.lane.b32.xlu0 %v2188, %s2249
        %v2251 = vpop.permute.xlu0 %2250
        %v2252 = vlaneseq
        %v2253 = vshrl.u32 %v2252, 7
        %v2254 = vsub.s32 7, %v2253
        %v2255 = vrot.slane %v1759, %v2254
        %2257 = vbcast.lane.b32.xlu0 %v2255, 256
        %v2258 = vpop.permute.xlu0 %2257
        %s2260 = sor.u32 256, 8
        %2261 = vbcast.lane.b32.xlu0 %v2255, %s2260
        %v2262 = vpop.permute.xlu0 %2261
        %s2264 = sor.u32 256, 16
        %2265 = vbcast.lane.b32.xlu0 %v2255, %s2264
        %v2266 = vpop.permute.xlu0 %2265
        %s2268 = sor.u32 256, 24
        %2269 = vbcast.lane.b32.xlu0 %v2255, %s2268
        %v2270 = vpop.permute.xlu0 %2269
        %s2272 = sor.u32 256, 32
        %2273 = vbcast.lane.b32.xlu0 %v2255, %s2272
        %v2274 = vpop.permute.xlu0 %2273
        %s2276 = sor.u32 256, 40
        %2277 = vbcast.lane.b32.xlu0 %v2255, %s2276
        %v2278 = vpop.permute.xlu0 %2277
        %s2280 = sor.u32 256, 48
        %2281 = vbcast.lane.b32.xlu0 %v2255, %s2280
        %v2282 = vpop.permute.xlu0 %2281
        %s2284 = sor.u32 256, 56
        %2285 = vbcast.lane.b32.xlu0 %v2255, %s2284
        %v2286 = vpop.permute.xlu0 %2285
        %s2288 = sor.u32 256, 64
        %2289 = vbcast.lane.b32.xlu0 %v2255, %s2288
        %v2290 = vpop.permute.xlu0 %2289
        %s2292 = sor.u32 256, 72
        %2293 = vbcast.lane.b32.xlu0 %v2255, %s2292
        %v2294 = vpop.permute.xlu0 %2293
        %s2296 = sor.u32 256, 80
        %2297 = vbcast.lane.b32.xlu0 %v2255, %s2296
        %v2298 = vpop.permute.xlu0 %2297
        %s2300 = sor.u32 256, 88
        %2301 = vbcast.lane.b32.xlu0 %v2255, %s2300
        %v2302 = vpop.permute.xlu0 %2301
        %s2304 = sor.u32 256, 96
        %2305 = vbcast.lane.b32.xlu0 %v2255, %s2304
        %v2306 = vpop.permute.xlu0 %2305
        %s2308 = sor.u32 256, 104
        %2309 = vbcast.lane.b32.xlu0 %v2255, %s2308
        %v2310 = vpop.permute.xlu0 %2309
        %s2312 = sor.u32 256, 112
        %2313 = vbcast.lane.b32.xlu0 %v2255, %s2312
        %v2314 = vpop.permute.xlu0 %2313
        %s2316 = sor.u32 256, 120
        %2317 = vbcast.lane.b32.xlu0 %v2255, %s2316
        %v2318 = vpop.permute.xlu0 %2317
        %v2319 = vpack.c.bf16 %v1793, %v1789
        %v2320 = vpack.c.bf16 %v1801, %v1797
        %v2321 = vpack.c.bf16 %v1809, %v1805
        %v2322 = vpack.c.bf16 %v1817, %v1813
        %v2323 = vpack.c.bf16 %v1825, %v1821
        %v2324 = vpack.c.bf16 %v1833, %v1829
        %v2325 = vpack.c.bf16 %v1841, %v1837
        %v2326 = vpack.c.bf16 %v1849, %v1845
        %v2327 = vpack.c.bf16 %v1860, %v1856
        %v2328 = vpack.c.bf16 %v1868, %v1864
        %v2329 = vpack.c.bf16 %v1876, %v1872
        %v2330 = vpack.c.bf16 %v1884, %v1880
        %v2331 = vpack.c.bf16 %v1892, %v1888
        %v2332 = vpack.c.bf16 %v1900, %v1896
        %v2333 = vpack.c.bf16 %v1908, %v1904
        %v2334 = vpack.c.bf16 %v1916, %v1912
        %v2335 = vpack.c.bf16 %v1927, %v1923
        %v2336 = vpack.c.bf16 %v1935, %v1931
        %v2337 = vpack.c.bf16 %v1943, %v1939
        %v2338 = vpack.c.bf16 %v1951, %v1947
        %v2339 = vpack.c.bf16 %v1959, %v1955
        %v2340 = vpack.c.bf16 %v1967, %v1963
        %v2341 = vpack.c.bf16 %v1975, %v1971
        %v2342 = vpack.c.bf16 %v1983, %v1979
        %v2343 = vpack.c.bf16 %v1994, %v1990
        %v2344 = vpack.c.bf16 %v2002, %v1998
        %v2345 = vpack.c.bf16 %v2010, %v2006
        %v2346 = vpack.c.bf16 %v2018, %v2014
        %v2347 = vpack.c.bf16 %v2026, %v2022
        %v2348 = vpack.c.bf16 %v2034, %v2030
        %v2349 = vpack.c.bf16 %v2042, %v2038
        %v2350 = vpack.c.bf16 %v2050, %v2046
        %v2351 = vpack.c.bf16 %v2061, %v2057
        %v2352 = vpack.c.bf16 %v2069, %v2065
        %v2353 = vpack.c.bf16 %v2077, %v2073
        %v2354 = vpack.c.bf16 %v2085, %v2081
        %v2355 = vpack.c.bf16 %v2093, %v2089
        %v2356 = vpack.c.bf16 %v2101, %v2097
        %v2357 = vpack.c.bf16 %v2109, %v2105
        %v2358 = vpack.c.bf16 %v2117, %v2113
        %v2359 = vpack.c.bf16 %v2128, %v2124
        %v2360 = vpack.c.bf16 %v2136, %v2132
        %v2361 = vpack.c.bf16 %v2144, %v2140
        %v2362 = vpack.c.bf16 %v2152, %v2148
        %v2363 = vpack.c.bf16 %v2160, %v2156
        %v2364 = vpack.c.bf16 %v2168, %v2164
        %v2365 = vpack.c.bf16 %v2176, %v2172
        %v2366 = vpack.c.bf16 %v2184, %v2180
        %v2367 = vpack.c.bf16 %v2195, %v2191
        %v2368 = vpack.c.bf16 %v2203, %v2199
        %v2369 = vpack.c.bf16 %v2211, %v2207
        %v2370 = vpack.c.bf16 %v2219, %v2215
        %v2371 = vpack.c.bf16 %v2227, %v2223
        %v2372 = vpack.c.bf16 %v2235, %v2231
        %v2373 = vpack.c.bf16 %v2243, %v2239
        %v2374 = vpack.c.bf16 %v2251, %v2247
        %v2375 = vpack.c.bf16 %v2262, %v2258
        %v2376 = vpack.c.bf16 %v2270, %v2266
        %v2377 = vpack.c.bf16 %v2278, %v2274
        %v2378 = vpack.c.bf16 %v2286, %v2282
        %v2379 = vpack.c.bf16 %v2294, %v2290
        %v2380 = vpack.c.bf16 %v2302, %v2298
        %v2381 = vpack.c.bf16 %v2310, %v2306
        %v2382 = vpack.c.bf16 %v2318, %v2314
        %v2384 = vcombine.high %v1775, %v1775
        %v2386 = vunpack.c.l.s4 1966171168
        %v2387 = vunpack.c.0.s8 %v2386
        %v2388 = vlaneseq
        %v2389 = vshrl.u32 %v2388, 7
        %v2390 = vsub.s32 %v2387, %v2389
        %v2391 = vrot.slane %v1775, %v2390
        %v2393 = vunpack.c.l.s4 1966171168
        %v2394 = vunpack.c.0.s8 %v2393
        %v2395 = vlaneseq
        %v2396 = vshrl.u32 %v2395, 7
        %v2397 = vsub.s32 %v2394, %v2396
        %v2398 = vrot.slane %v2384, %v2397
        %v2399 = vcombine.high %v2391, %v2391
        %v2400 = vcombine.high %v2398, %v2398
        %v2402 = vunpack.c.l.s4 1966171168
        %v2403 = vunpack.c.0.s8 %v2402
        %v2404 = vlaneseq
        %v2405 = vshrl.u32 %v2404, 7
        %v2406 = vsub.s32 %v2403, %v2405
        %v2407 = vrot.slane %v2391, %v2406
        %v2409 = vunpack.c.l.s4 1966171168
        %v2410 = vunpack.c.0.s8 %v2409
        %v2411 = vlaneseq
        %v2412 = vshrl.u32 %v2411, 7
        %v2413 = vsub.s32 %v2410, %v2412
        %v2414 = vrot.slane %v2398, %v2413
        %v2416 = vunpack.c.l.s4 1966171168
        %v2417 = vunpack.c.0.s8 %v2416
        %v2418 = vlaneseq
        %v2419 = vshrl.u32 %v2418, 7
        %v2420 = vsub.s32 %v2417, %v2419
        %v2421 = vrot.slane %v2399, %v2420
        %v2423 = vunpack.c.l.s4 1966171168
        %v2424 = vunpack.c.0.s8 %v2423
        %v2425 = vlaneseq
        %v2426 = vshrl.u32 %v2425, 7
        %v2427 = vsub.s32 %v2424, %v2426
        %v2428 = vrot.slane %v2400, %v2427
        %v2429 = vcombine.high %v2407, %v2407
        %v2430 = vcombine.high %v2414, %v2414
        %v2431 = vcombine.high %v2421, %v2421
        %v2432 = vcombine.high %v2428, %v2428
        %v2441 = vpack.c.bf16 %v2407, %v2407
        %v2442 = vpack.c.bf16 %v2421, %v2421
        %v2443 = vpack.c.bf16 %v2429, %v2429
        %v2444 = vpack.c.bf16 %v2431, %v2431
        %v2445 = vpack.c.bf16 %v2414, %v2414
        %v2446 = vpack.c.bf16 %v2428, %v2428
        %v2447 = vpack.c.bf16 %v2430, %v2430
        %v2448 = vpack.c.bf16 %v2432, %v2432
        %v2450 = vcombine.high %v1779, %v1779
        %v2452 = vunpack.c.l.s4 1966171168
        %v2453 = vunpack.c.0.s8 %v2452
        %v2454 = vlaneseq
        %v2455 = vshrl.u32 %v2454, 7
        %v2456 = vsub.s32 %v2453, %v2455
        %v2457 = vrot.slane %v1779, %v2456
        %v2459 = vunpack.c.l.s4 1966171168
        %v2460 = vunpack.c.0.s8 %v2459
        %v2461 = vlaneseq
        %v2462 = vshrl.u32 %v2461, 7
        %v2463 = vsub.s32 %v2460, %v2462
        %v2464 = vrot.slane %v2450, %v2463
        %v2465 = vcombine.high %v2457, %v2457
        %v2466 = vcombine.high %v2464, %v2464
        %v2468 = vunpack.c.l.s4 1966171168
        %v2469 = vunpack.c.0.s8 %v2468
        %v2470 = vlaneseq
        %v2471 = vshrl.u32 %v2470, 7
        %v2472 = vsub.s32 %v2469, %v2471
        %v2473 = vrot.slane %v2457, %v2472
        %v2475 = vunpack.c.l.s4 1966171168
        %v2476 = vunpack.c.0.s8 %v2475
        %v2477 = vlaneseq
        %v2478 = vshrl.u32 %v2477, 7
        %v2479 = vsub.s32 %v2476, %v2478
        %v2480 = vrot.slane %v2464, %v2479
        %v2482 = vunpack.c.l.s4 1966171168
        %v2483 = vunpack.c.0.s8 %v2482
        %v2484 = vlaneseq
        %v2485 = vshrl.u32 %v2484, 7
        %v2486 = vsub.s32 %v2483, %v2485
        %v2487 = vrot.slane %v2465, %v2486
        %v2489 = vunpack.c.l.s4 1966171168
        %v2490 = vunpack.c.0.s8 %v2489
        %v2491 = vlaneseq
        %v2492 = vshrl.u32 %v2491, 7
        %v2493 = vsub.s32 %v2490, %v2492
        %v2494 = vrot.slane %v2466, %v2493
        %v2495 = vcombine.high %v2473, %v2473
        %v2496 = vcombine.high %v2480, %v2480
        %v2497 = vcombine.high %v2487, %v2487
        %v2498 = vcombine.high %v2494, %v2494
        %v2507 = vpack.c.bf16 %v2473, %v2473
        %v2508 = vpack.c.bf16 %v2487, %v2487
        %v2509 = vpack.c.bf16 %v2495, %v2495
        %v2510 = vpack.c.bf16 %v2497, %v2497
        %v2511 = vpack.c.bf16 %v2480, %v2480
        %v2512 = vpack.c.bf16 %v2494, %v2494
        %v2513 = vpack.c.bf16 %v2496, %v2496
        %v2514 = vpack.c.bf16 %v2498, %v2498
        %v2516 = vpack.i.b16 %v2441, %v2441
        %v2518 = vlaneseq
        %v2519 = vshrl.u32 %v2518, 7
        %v2520 = vsub.s32 0, %v2519
        %v2521 = vrot.slane %v2516, %v2520
        %v2523 = vpack.i.b16 %v2442, %v2442
        %v2525 = vlaneseq
        %v2526 = vshrl.u32 %v2525, 7
        %v2527 = vsub.s32 0, %v2526
        %v2528 = vrot.slane %v2523, %v2527
        %v2530 = vpack.i.b16 %v2443, %v2443
        %v2532 = vlaneseq
        %v2533 = vshrl.u32 %v2532, 7
        %v2534 = vsub.s32 0, %v2533
        %v2535 = vrot.slane %v2530, %v2534
        %v2537 = vpack.i.b16 %v2444, %v2444
        %v2539 = vlaneseq
        %v2540 = vshrl.u32 %v2539, 7
        %v2541 = vsub.s32 0, %v2540
        %v2542 = vrot.slane %v2537, %v2541
        %v2544 = vpack.i.b16 %v2445, %v2445
        %v2546 = vlaneseq
        %v2547 = vshrl.u32 %v2546, 7
        %v2548 = vsub.s32 0, %v2547
        %v2549 = vrot.slane %v2544, %v2548
        %v2551 = vpack.i.b16 %v2446, %v2446
        %v2553 = vlaneseq
        %v2554 = vshrl.u32 %v2553, 7
        %v2555 = vsub.s32 0, %v2554
        %v2556 = vrot.slane %v2551, %v2555
        %v2558 = vpack.i.b16 %v2447, %v2447
        %v2560 = vlaneseq
        %v2561 = vshrl.u32 %v2560, 7
        %v2562 = vsub.s32 0, %v2561
        %v2563 = vrot.slane %v2558, %v2562
        %v2565 = vpack.i.b16 %v2448, %v2448
        %v2567 = vlaneseq
        %v2568 = vshrl.u32 %v2567, 7
        %v2569 = vsub.s32 0, %v2568
        %v2570 = vrot.slane %v2565, %v2569
        %v2571 = vadd.bf16 %v2319, %v2521
        %v2572 = vadd.bf16 %v2320, %v2521
        %v2573 = vadd.bf16 %v2321, %v2521
        %v2574 = vadd.bf16 %v2322, %v2521
        %v2575 = vadd.bf16 %v2323, %v2521
        %v2576 = vadd.bf16 %v2324, %v2521
        %v2577 = vadd.bf16 %v2325, %v2521
        %v2578 = vadd.bf16 %v2326, %v2521
        %v2579 = vadd.bf16 %v2327, %v2528
        %v2580 = vadd.bf16 %v2328, %v2528
        %v2581 = vadd.bf16 %v2329, %v2528
        %v2582 = vadd.bf16 %v2330, %v2528
        %v2583 = vadd.bf16 %v2331, %v2528
        %v2584 = vadd.bf16 %v2332, %v2528
        %v2585 = vadd.bf16 %v2333, %v2528
        %v2586 = vadd.bf16 %v2334, %v2528
        %v2587 = vadd.bf16 %v2335, %v2535
        %v2588 = vadd.bf16 %v2336, %v2535
        %v2589 = vadd.bf16 %v2337, %v2535
        %v2590 = vadd.bf16 %v2338, %v2535
        %v2591 = vadd.bf16 %v2339, %v2535
        %v2592 = vadd.bf16 %v2340, %v2535
        %v2593 = vadd.bf16 %v2341, %v2535
        %v2594 = vadd.bf16 %v2342, %v2535
        %v2595 = vadd.bf16 %v2343, %v2542
        %v2596 = vadd.bf16 %v2344, %v2542
        %v2597 = vadd.bf16 %v2345, %v2542
        %v2598 = vadd.bf16 %v2346, %v2542
        %v2599 = vadd.bf16 %v2347, %v2542
        %v2600 = vadd.bf16 %v2348, %v2542
        %v2601 = vadd.bf16 %v2349, %v2542
        %v2602 = vadd.bf16 %v2350, %v2542
        %v2603 = vadd.bf16 %v2351, %v2549
        %v2604 = vadd.bf16 %v2352, %v2549
        %v2605 = vadd.bf16 %v2353, %v2549
        %v2606 = vadd.bf16 %v2354, %v2549
        %v2607 = vadd.bf16 %v2355, %v2549
        %v2608 = vadd.bf16 %v2356, %v2549
        %v2609 = vadd.bf16 %v2357, %v2549
        %v2610 = vadd.bf16 %v2358, %v2549
        %v2611 = vadd.bf16 %v2359, %v2556
        %v2612 = vadd.bf16 %v2360, %v2556
        %v2613 = vadd.bf16 %v2361, %v2556
        %v2614 = vadd.bf16 %v2362, %v2556
        %v2615 = vadd.bf16 %v2363, %v2556
        %v2616 = vadd.bf16 %v2364, %v2556
        %v2617 = vadd.bf16 %v2365, %v2556
        %v2618 = vadd.bf16 %v2366, %v2556
        %v2619 = vadd.bf16 %v2367, %v2563
        %v2620 = vadd.bf16 %v2368, %v2563
        %v2621 = vadd.bf16 %v2369, %v2563
        %v2622 = vadd.bf16 %v2370, %v2563
        %v2623 = vadd.bf16 %v2371, %v2563
        %v2624 = vadd.bf16 %v2372, %v2563
        %v2625 = vadd.bf16 %v2373, %v2563
        %v2626 = vadd.bf16 %v2374, %v2563
        %v2627 = vadd.bf16 %v2375, %v2570
        %v2628 = vadd.bf16 %v2376, %v2570
        %v2629 = vadd.bf16 %v2377, %v2570
        %v2630 = vadd.bf16 %v2378, %v2570
        %v2631 = vadd.bf16 %v2379, %v2570
        %v2632 = vadd.bf16 %v2380, %v2570
        %v2633 = vadd.bf16 %v2381, %v2570
        %v2634 = vadd.bf16 %v2382, %v2570
        %v2635 = vmax.bf16 %v2571, 0
        %v2636 = vmax.bf16 %v2572, 0
        %v2637 = vmax.bf16 %v2573, 0
        %v2638 = vmax.bf16 %v2574, 0
        %v2639 = vmax.bf16 %v2575, 0
        %v2640 = vmax.bf16 %v2576, 0
        %v2641 = vmax.bf16 %v2577, 0
        %v2642 = vmax.bf16 %v2578, 0
        %v2643 = vmax.bf16 %v2579, 0
        %v2644 = vmax.bf16 %v2580, 0
        %v2645 = vmax.bf16 %v2581, 0
        %v2646 = vmax.bf16 %v2582, 0
        %v2647 = vmax.bf16 %v2583, 0
        %v2648 = vmax.bf16 %v2584, 0
        %v2649 = vmax.bf16 %v2585, 0
        %v2650 = vmax.bf16 %v2586, 0
        %v2651 = vmax.bf16 %v2587, 0
        %v2652 = vmax.bf16 %v2588, 0
        %v2653 = vmax.bf16 %v2589, 0
        %v2654 = vmax.bf16 %v2590, 0
        %v2655 = vmax.bf16 %v2591, 0
        %v2656 = vmax.bf16 %v2592, 0
        %v2657 = vmax.bf16 %v2593, 0
        %v2658 = vmax.bf16 %v2594, 0
        %v2659 = vmax.bf16 %v2595, 0
        %v2660 = vmax.bf16 %v2596, 0
        %v2661 = vmax.bf16 %v2597, 0
        %v2662 = vmax.bf16 %v2598, 0
        %v2663 = vmax.bf16 %v2599, 0
        %v2664 = vmax.bf16 %v2600, 0
        %v2665 = vmax.bf16 %v2601, 0
        %v2666 = vmax.bf16 %v2602, 0
        %v2667 = vmax.bf16 %v2603, 0
        %v2668 = vmax.bf16 %v2604, 0
        %v2669 = vmax.bf16 %v2605, 0
        %v2670 = vmax.bf16 %v2606, 0
        %v2671 = vmax.bf16 %v2607, 0
        %v2672 = vmax.bf16 %v2608, 0
        %v2673 = vmax.bf16 %v2609, 0
        %v2674 = vmax.bf16 %v2610, 0
        %v2675 = vmax.bf16 %v2611, 0
        %v2676 = vmax.bf16 %v2612, 0
        %v2677 = vmax.bf16 %v2613, 0
        %v2678 = vmax.bf16 %v2614, 0
        %v2679 = vmax.bf16 %v2615, 0
        %v2680 = vmax.bf16 %v2616, 0
        %v2681 = vmax.bf16 %v2617, 0
        %v2682 = vmax.bf16 %v2618, 0
        %v2683 = vmax.bf16 %v2619, 0
        %v2684 = vmax.bf16 %v2620, 0
        %v2685 = vmax.bf16 %v2621, 0
        %v2686 = vmax.bf16 %v2622, 0
        %v2687 = vmax.bf16 %v2623, 0
        %v2688 = vmax.bf16 %v2624, 0
        %v2689 = vmax.bf16 %v2625, 0
        %v2690 = vmax.bf16 %v2626, 0
        %v2691 = vmax.bf16 %v2627, 0
        %v2692 = vmax.bf16 %v2628, 0
        %v2693 = vmax.bf16 %v2629, 0
        %v2694 = vmax.bf16 %v2630, 0
        %v2695 = vmax.bf16 %v2631, 0
        %v2696 = vmax.bf16 %v2632, 0
        %v2697 = vmax.bf16 %v2633, 0
        %v2698 = vmax.bf16 %v2634, 0
        %s2700 = vtos %v2507
        %v2701 = vstv %s2700
        %v2702 = vpack.i.b16 %v2701, %v2701
        %s2705 = vtos %v2508
        %v2706 = vstv %s2705
        %v2707 = vpack.i.b16 %v2706, %v2706
        %s2710 = vtos %v2509
        %v2711 = vstv %s2710
        %v2712 = vpack.i.b16 %v2711, %v2711
        %s2715 = vtos %v2510
        %v2716 = vstv %s2715
        %v2717 = vpack.i.b16 %v2716, %v2716
        %s2720 = vtos %v2511
        %v2721 = vstv %s2720
        %v2722 = vpack.i.b16 %v2721, %v2721
        %s2725 = vtos %v2512
        %v2726 = vstv %s2725
        %v2727 = vpack.i.b16 %v2726, %v2726
        %s2730 = vtos %v2513
        %v2731 = vstv %s2730
        %v2732 = vpack.i.b16 %v2731, %v2731
        %s2735 = vtos %v2514
        %v2736 = vstv %s2735
        %v2737 = vpack.i.b16 %v2736, %v2736
        %v2739 = vmul.bf16 %v2635, %v2702
        %v2740 = vmul.bf16 %v2636, %v2702
        %v2741 = vmul.bf16 %v2637, %v2702
        %v2742 = vmul.bf16 %v2638, %v2702
        %v2743 = vmul.bf16 %v2639, %v2702
        %v2744 = vmul.bf16 %v2640, %v2702
        %v2745 = vmul.bf16 %v2641, %v2702
        %v2746 = vmul.bf16 %v2642, %v2702
        %v2747 = vmul.bf16 %v2643, %v2707
        %v2748 = vmul.bf16 %v2644, %v2707
        %v2749 = vmul.bf16 %v2645, %v2707
        %v2750 = vmul.bf16 %v2646, %v2707
        %v2751 = vmul.bf16 %v2647, %v2707
        %v2752 = vmul.bf16 %v2648, %v2707
        %v2753 = vmul.bf16 %v2649, %v2707
        %v2754 = vmul.bf16 %v2650, %v2707
        %v2755 = vmul.bf16 %v2651, %v2712
        %v2756 = vmul.bf16 %v2652, %v2712
        %v2757 = vmul.bf16 %v2653, %v2712
        %v2758 = vmul.bf16 %v2654, %v2712
        %v2759 = vmul.bf16 %v2655, %v2712
        %v2760 = vmul.bf16 %v2656, %v2712
        %v2761 = vmul.bf16 %v2657, %v2712
        %v2762 = vmul.bf16 %v2658, %v2712
        %v2763 = vmul.bf16 %v2659, %v2717
        %v2764 = vmul.bf16 %v2660, %v2717
        %v2765 = vmul.bf16 %v2661, %v2717
        %v2766 = vmul.bf16 %v2662, %v2717
        %v2767 = vmul.bf16 %v2663, %v2717
        %v2768 = vmul.bf16 %v2664, %v2717
        %v2769 = vmul.bf16 %v2665, %v2717
        %v2770 = vmul.bf16 %v2666, %v2717
        %v2771 = vmul.bf16 %v2667, %v2722
        %v2772 = vmul.bf16 %v2668, %v2722
        %v2773 = vmul.bf16 %v2669, %v2722
        %v2774 = vmul.bf16 %v2670, %v2722
        %v2775 = vmul.bf16 %v2671, %v2722
        %v2776 = vmul.bf16 %v2672, %v2722
        %v2777 = vmul.bf16 %v2673, %v2722
        %v2778 = vmul.bf16 %v2674, %v2722
        %v2779 = vmul.bf16 %v2675, %v2727
        %v2780 = vmul.bf16 %v2676, %v2727
        %v2781 = vmul.bf16 %v2677, %v2727
        %v2782 = vmul.bf16 %v2678, %v2727
        %v2783 = vmul.bf16 %v2679, %v2727
        %v2784 = vmul.bf16 %v2680, %v2727
        %v2785 = vmul.bf16 %v2681, %v2727
        %v2786 = vmul.bf16 %v2682, %v2727
        %v2787 = vmul.bf16 %v2683, %v2732
        %v2788 = vmul.bf16 %v2684, %v2732
        %v2789 = vmul.bf16 %v2685, %v2732
        %v2790 = vmul.bf16 %v2686, %v2732
        %v2791 = vmul.bf16 %v2687, %v2732
        %v2792 = vmul.bf16 %v2688, %v2732
        %v2793 = vmul.bf16 %v2689, %v2732
        %v2794 = vmul.bf16 %v2690, %v2732
        %v2795 = vmul.bf16 %v2691, %v2737
        %v2796 = vmul.bf16 %v2692, %v2737
        %v2797 = vmul.bf16 %v2693, %v2737
        %v2798 = vmul.bf16 %v2694, %v2737
        %v2799 = vmul.bf16 %v2695, %v2737
        %v2800 = vmul.bf16 %v2696, %v2737
        %v2801 = vmul.bf16 %v2697, %v2737
        %v2802 = vmul.bf16 %v2698, %v2737
        %v2803 = vunpack.c.l.bf16 %v2739
        %v2804 = vunpack.c.h.bf16 %v2739
        %v2805 = vunpack.c.l.bf16 %v2740
        %v2806 = vunpack.c.h.bf16 %v2740
        %v2807 = vunpack.c.l.bf16 %v2741
        %v2808 = vunpack.c.h.bf16 %v2741
        %v2809 = vunpack.c.l.bf16 %v2742
        %v2810 = vunpack.c.h.bf16 %v2742
        %v2811 = vunpack.c.l.bf16 %v2743
        %v2812 = vunpack.c.h.bf16 %v2743
        %v2813 = vunpack.c.l.bf16 %v2744
        %v2814 = vunpack.c.h.bf16 %v2744
        %v2815 = vunpack.c.l.bf16 %v2745
        %v2816 = vunpack.c.h.bf16 %v2745
        %v2817 = vunpack.c.l.bf16 %v2746
        %v2818 = vunpack.c.h.bf16 %v2746
        %v2819 = vunpack.c.l.bf16 %v2747
        %v2820 = vunpack.c.h.bf16 %v2747
        %v2821 = vunpack.c.l.bf16 %v2748
        %v2822 = vunpack.c.h.bf16 %v2748
        %v2823 = vunpack.c.l.bf16 %v2749
        %v2824 = vunpack.c.h.bf16 %v2749
        %v2825 = vunpack.c.l.bf16 %v2750
        %v2826 = vunpack.c.h.bf16 %v2750
        %v2827 = vunpack.c.l.bf16 %v2751
        %v2828 = vunpack.c.h.bf16 %v2751
        %v2829 = vunpack.c.l.bf16 %v2752
        %v2830 = vunpack.c.h.bf16 %v2752
        %v2831 = vunpack.c.l.bf16 %v2753
        %v2832 = vunpack.c.h.bf16 %v2753
        %v2833 = vunpack.c.l.bf16 %v2754
        %v2834 = vunpack.c.h.bf16 %v2754
        %v2835 = vunpack.c.l.bf16 %v2755
        %v2836 = vunpack.c.h.bf16 %v2755
        %v2837 = vunpack.c.l.bf16 %v2756
        %v2838 = vunpack.c.h.bf16 %v2756
        %v2839 = vunpack.c.l.bf16 %v2757
        %v2840 = vunpack.c.h.bf16 %v2757
        %v2841 = vunpack.c.l.bf16 %v2758
        %v2842 = vunpack.c.h.bf16 %v2758
        %v2843 = vunpack.c.l.bf16 %v2759
        %v2844 = vunpack.c.h.bf16 %v2759
        %v2845 = vunpack.c.l.bf16 %v2760
        %v2846 = vunpack.c.h.bf16 %v2760
        %v2847 = vunpack.c.l.bf16 %v2761
        %v2848 = vunpack.c.h.bf16 %v2761
        %v2849 = vunpack.c.l.bf16 %v2762
        %v2850 = vunpack.c.h.bf16 %v2762
        %v2851 = vunpack.c.l.bf16 %v2763
        %v2852 = vunpack.c.h.bf16 %v2763
        %v2853 = vunpack.c.l.bf16 %v2764
        %v2854 = vunpack.c.h.bf16 %v2764
        %v2855 = vunpack.c.l.bf16 %v2765
        %v2856 = vunpack.c.h.bf16 %v2765
        %v2857 = vunpack.c.l.bf16 %v2766
        %v2858 = vunpack.c.h.bf16 %v2766
        %v2859 = vunpack.c.l.bf16 %v2767
        %v2860 = vunpack.c.h.bf16 %v2767
        %v2861 = vunpack.c.l.bf16 %v2768
        %v2862 = vunpack.c.h.bf16 %v2768
        %v2863 = vunpack.c.l.bf16 %v2769
        %v2864 = vunpack.c.h.bf16 %v2769
        %v2865 = vunpack.c.l.bf16 %v2770
        %v2866 = vunpack.c.h.bf16 %v2770
        %v2867 = vunpack.c.l.bf16 %v2771
        %v2868 = vunpack.c.h.bf16 %v2771
        %v2869 = vunpack.c.l.bf16 %v2772
        %v2870 = vunpack.c.h.bf16 %v2772
        %v2871 = vunpack.c.l.bf16 %v2773
        %v2872 = vunpack.c.h.bf16 %v2773
        %v2873 = vunpack.c.l.bf16 %v2774
        %v2874 = vunpack.c.h.bf16 %v2774
        %v2875 = vunpack.c.l.bf16 %v2775
        %v2876 = vunpack.c.h.bf16 %v2775
        %v2877 = vunpack.c.l.bf16 %v2776
        %v2878 = vunpack.c.h.bf16 %v2776
        %v2879 = vunpack.c.l.bf16 %v2777
        %v2880 = vunpack.c.h.bf16 %v2777
        %v2881 = vunpack.c.l.bf16 %v2778
        %v2882 = vunpack.c.h.bf16 %v2778
        %v2883 = vunpack.c.l.bf16 %v2779
        %v2884 = vunpack.c.h.bf16 %v2779
        %v2885 = vunpack.c.l.bf16 %v2780
        %v2886 = vunpack.c.h.bf16 %v2780
        %v2887 = vunpack.c.l.bf16 %v2781
        %v2888 = vunpack.c.h.bf16 %v2781
        %v2889 = vunpack.c.l.bf16 %v2782
        %v2890 = vunpack.c.h.bf16 %v2782
        %v2891 = vunpack.c.l.bf16 %v2783
        %v2892 = vunpack.c.h.bf16 %v2783
        %v2893 = vunpack.c.l.bf16 %v2784
        %v2894 = vunpack.c.h.bf16 %v2784
        %v2895 = vunpack.c.l.bf16 %v2785
        %v2896 = vunpack.c.h.bf16 %v2785
        %v2897 = vunpack.c.l.bf16 %v2786
        %v2898 = vunpack.c.h.bf16 %v2786
        %v2899 = vunpack.c.l.bf16 %v2787
        %v2900 = vunpack.c.h.bf16 %v2787
        %v2901 = vunpack.c.l.bf16 %v2788
        %v2902 = vunpack.c.h.bf16 %v2788
        %v2903 = vunpack.c.l.bf16 %v2789
        %v2904 = vunpack.c.h.bf16 %v2789
        %v2905 = vunpack.c.l.bf16 %v2790
        %v2906 = vunpack.c.h.bf16 %v2790
        %v2907 = vunpack.c.l.bf16 %v2791
        %v2908 = vunpack.c.h.bf16 %v2791
        %v2909 = vunpack.c.l.bf16 %v2792
        %v2910 = vunpack.c.h.bf16 %v2792
        %v2911 = vunpack.c.l.bf16 %v2793
        %v2912 = vunpack.c.h.bf16 %v2793
        %v2913 = vunpack.c.l.bf16 %v2794
        %v2914 = vunpack.c.h.bf16 %v2794
        %v2915 = vunpack.c.l.bf16 %v2795
        %v2916 = vunpack.c.h.bf16 %v2795
        %v2917 = vunpack.c.l.bf16 %v2796
        %v2918 = vunpack.c.h.bf16 %v2796
        %v2919 = vunpack.c.l.bf16 %v2797
        %v2920 = vunpack.c.h.bf16 %v2797
        %v2921 = vunpack.c.l.bf16 %v2798
        %v2922 = vunpack.c.h.bf16 %v2798
        %v2923 = vunpack.c.l.bf16 %v2799
        %v2924 = vunpack.c.h.bf16 %v2799
        %v2925 = vunpack.c.l.bf16 %v2800
        %v2926 = vunpack.c.h.bf16 %v2800
        %v2927 = vunpack.c.l.bf16 %v2801
        %v2928 = vunpack.c.h.bf16 %v2801
        %v2929 = vunpack.c.l.bf16 %v2802
        %v2930 = vunpack.c.h.bf16 %v2802
        %v2931 = vadd.f32 %v2803, %v2819
        %v2932 = vadd.f32 %v2931, %v2835
        %v2933 = vadd.f32 %v2932, %v2851
        %v2934 = vadd.f32 %v2933, %v2867
        %v2935 = vadd.f32 %v2934, %v2883
        %v2936 = vadd.f32 %v2935, %v2899
        %v2937 = vadd.f32 %v2936, %v2915
        %v2938 = vadd.f32 %v2804, %v2820
        %v2939 = vadd.f32 %v2938, %v2836
        %v2940 = vadd.f32 %v2939, %v2852
        %v2941 = vadd.f32 %v2940, %v2868
        %v2942 = vadd.f32 %v2941, %v2884
        %v2943 = vadd.f32 %v2942, %v2900
        %v2944 = vadd.f32 %v2943, %v2916
        %v2945 = vadd.f32 %v2805, %v2821
        %v2946 = vadd.f32 %v2945, %v2837
        %v2947 = vadd.f32 %v2946, %v2853
        %v2948 = vadd.f32 %v2947, %v2869
        %v2949 = vadd.f32 %v2948, %v2885
        %v2950 = vadd.f32 %v2949, %v2901
        %v2951 = vadd.f32 %v2950, %v2917
        %v2952 = vadd.f32 %v2806, %v2822
        %v2953 = vadd.f32 %v2952, %v2838
        %v2954 = vadd.f32 %v2953, %v2854
        %v2955 = vadd.f32 %v2954, %v2870
        %v2956 = vadd.f32 %v2955, %v2886
        %v2957 = vadd.f32 %v2956, %v2902
        %v2958 = vadd.f32 %v2957, %v2918
        %v2959 = vadd.f32 %v2807, %v2823
        %v2960 = vadd.f32 %v2959, %v2839
        %v2961 = vadd.f32 %v2960, %v2855
        %v2962 = vadd.f32 %v2961, %v2871
        %v2963 = vadd.f32 %v2962, %v2887
        %v2964 = vadd.f32 %v2963, %v2903
        %v2965 = vadd.f32 %v2964, %v2919
        %v2966 = vadd.f32 %v2808, %v2824
        %v2967 = vadd.f32 %v2966, %v2840
        %v2968 = vadd.f32 %v2967, %v2856
        %v2969 = vadd.f32 %v2968, %v2872
        %v2970 = vadd.f32 %v2969, %v2888
        %v2971 = vadd.f32 %v2970, %v2904
        %v2972 = vadd.f32 %v2971, %v2920
        %v2973 = vadd.f32 %v2809, %v2825
        %v2974 = vadd.f32 %v2973, %v2841
        %v2975 = vadd.f32 %v2974, %v2857
        %v2976 = vadd.f32 %v2975, %v2873
        %v2977 = vadd.f32 %v2976, %v2889
        %v2978 = vadd.f32 %v2977, %v2905
        %v2979 = vadd.f32 %v2978, %v2921
        %v2980 = vadd.f32 %v2810, %v2826
        %v2981 = vadd.f32 %v2980, %v2842
        %v2982 = vadd.f32 %v2981, %v2858
        %v2983 = vadd.f32 %v2982, %v2874
        %v2984 = vadd.f32 %v2983, %v2890
        %v2985 = vadd.f32 %v2984, %v2906
        %v2986 = vadd.f32 %v2985, %v2922
        %v2987 = vadd.f32 %v2811, %v2827
        %v2988 = vadd.f32 %v2987, %v2843
        %v2989 = vadd.f32 %v2988, %v2859
        %v2990 = vadd.f32 %v2989, %v2875
        %v2991 = vadd.f32 %v2990, %v2891
        %v2992 = vadd.f32 %v2991, %v2907
        %v2993 = vadd.f32 %v2992, %v2923
        %v2994 = vadd.f32 %v2812, %v2828
        %v2995 = vadd.f32 %v2994, %v2844
        %v2996 = vadd.f32 %v2995, %v2860
        %v2997 = vadd.f32 %v2996, %v2876
        %v2998 = vadd.f32 %v2997, %v2892
        %v2999 = vadd.f32 %v2998, %v2908
        %v3000 = vadd.f32 %v2999, %v2924
        %v3001 = vadd.f32 %v2813, %v2829
        %v3002 = vadd.f32 %v3001, %v2845
        %v3003 = vadd.f32 %v3002, %v2861
        %v3004 = vadd.f32 %v3003, %v2877
        %v3005 = vadd.f32 %v3004, %v2893
        %v3006 = vadd.f32 %v3005, %v2909
        %v3007 = vadd.f32 %v3006, %v2925
        %v3008 = vadd.f32 %v2814, %v2830
        %v3009 = vadd.f32 %v3008, %v2846
        %v3010 = vadd.f32 %v3009, %v2862
        %v3011 = vadd.f32 %v3010, %v2878
        %v3012 = vadd.f32 %v3011, %v2894
        %v3013 = vadd.f32 %v3012, %v2910
        %v3014 = vadd.f32 %v3013, %v2926
        %v3015 = vadd.f32 %v2815, %v2831
        %v3016 = vadd.f32 %v3015, %v2847
        %v3017 = vadd.f32 %v3016, %v2863
        %v3018 = vadd.f32 %v3017, %v2879
        %v3019 = vadd.f32 %v3018, %v2895
        %v3020 = vadd.f32 %v3019, %v2911
        %v3021 = vadd.f32 %v3020, %v2927
        %v3022 = vadd.f32 %v2816, %v2832
        %v3023 = vadd.f32 %v3022, %v2848
        %v3024 = vadd.f32 %v3023, %v2864
        %v3025 = vadd.f32 %v3024, %v2880
        %v3026 = vadd.f32 %v3025, %v2896
        %v3027 = vadd.f32 %v3026, %v2912
        %v3028 = vadd.f32 %v3027, %v2928
        %v3029 = vadd.f32 %v2817, %v2833
        %v3030 = vadd.f32 %v3029, %v2849
        %v3031 = vadd.f32 %v3030, %v2865
        %v3032 = vadd.f32 %v3031, %v2881
        %v3033 = vadd.f32 %v3032, %v2897
        %v3034 = vadd.f32 %v3033, %v2913
        %v3035 = vadd.f32 %v3034, %v2929
        %v3036 = vadd.f32 %v2818, %v2834
        %v3037 = vadd.f32 %v3036, %v2850
        %v3038 = vadd.f32 %v3037, %v2866
        %v3039 = vadd.f32 %v3038, %v2882
        %v3040 = vadd.f32 %v3039, %v2898
        %v3041 = vadd.f32 %v3040, %v2914
        %v3042 = vadd.f32 %v3041, %v2930
        %v3043 = vpack.c.bf16 %v2944, %v2937
        %v3044 = vpack.c.bf16 %v2958, %v2951
        %v3045 = vpack.c.bf16 %v2972, %v2965
        %v3046 = vpack.c.bf16 %v2986, %v2979
        %v3047 = vpack.c.bf16 %v3000, %v2993
        %v3048 = vpack.c.bf16 %v3014, %v3007
        %v3049 = vpack.c.bf16 %v3028, %v3021
        %v3050 = vpack.c.bf16 %v3042, %v3035
        %v3051 = vunpack.c.l.bf16 %v3043
        %v3052 = vunpack.c.h.bf16 %v3043
        %v3053 = vunpack.c.l.bf16 %v3044
        %v3054 = vunpack.c.h.bf16 %v3044
        %v3055 = vunpack.c.l.bf16 %v3045
        %v3056 = vunpack.c.h.bf16 %v3045
        %v3057 = vunpack.c.l.bf16 %v3046
        %v3058 = vunpack.c.h.bf16 %v3046
        %v3059 = vunpack.c.l.bf16 %v3047
        %v3060 = vunpack.c.h.bf16 %v3047
        %v3061 = vunpack.c.l.bf16 %v3048
        %v3062 = vunpack.c.h.bf16 %v3048
        %v3063 = vunpack.c.l.bf16 %v3049
        %v3064 = vunpack.c.h.bf16 %v3049
        %v3065 = vunpack.c.l.bf16 %v3050
        %v3066 = vunpack.c.h.bf16 %v3050
        %v3067 = vadd.f32 %v3051, 0.0
        %v3068 = vadd.f32 %v3052, 0.0
        %v3069 = vadd.f32 %v3053, 0.0
        %v3070 = vadd.f32 %v3054, 0.0
        %v3071 = vadd.f32 %v3055, 0.0
        %v3072 = vadd.f32 %v3056, 0.0
        %v3073 = vadd.f32 %v3057, 0.0
        %v3074 = vadd.f32 %v3058, 0.0
        %v3075 = vadd.f32 %v3059, 0.0
        %v3076 = vadd.f32 %v3060, 0.0
        %v3077 = vadd.f32 %v3061, 0.0
        %v3078 = vadd.f32 %v3062, 0.0
        %v3079 = vadd.f32 %v3063, 0.0
        %v3080 = vadd.f32 %v3064, 0.0
        %v3081 = vadd.f32 %v3065, 0.0
        %v3082 = vadd.f32 %v3066, 0.0
        %v3083 = vlaneseq
        %v3084 = vshrl.u32 %v3083, 7
        %v3085 = vsub.s32 0, %v3084
        %v3086 = vrot.slane %v1760, %v3085
        %3088 = vbcast.lane.b32.xlu0 %v3086, 256
        %v3089 = vpop.permute.xlu0 %3088
        %s3091 = sor.u32 256, 8
        %3092 = vbcast.lane.b32.xlu0 %v3086, %s3091
        %v3093 = vpop.permute.xlu0 %3092
        %s3095 = sor.u32 256, 16
        %3096 = vbcast.lane.b32.xlu0 %v3086, %s3095
        %v3097 = vpop.permute.xlu0 %3096
        %s3099 = sor.u32 256, 24
        %3100 = vbcast.lane.b32.xlu0 %v3086, %s3099
        %v3101 = vpop.permute.xlu0 %3100
        %s3103 = sor.u32 256, 32
        %3104 = vbcast.lane.b32.xlu0 %v3086, %s3103
        %v3105 = vpop.permute.xlu0 %3104
        %s3107 = sor.u32 256, 40
        %3108 = vbcast.lane.b32.xlu0 %v3086, %s3107
        %v3109 = vpop.permute.xlu0 %3108
        %s3111 = sor.u32 256, 48
        %3112 = vbcast.lane.b32.xlu0 %v3086, %s3111
        %v3113 = vpop.permute.xlu0 %3112
        %s3115 = sor.u32 256, 56
        %3116 = vbcast.lane.b32.xlu0 %v3086, %s3115
        %v3117 = vpop.permute.xlu0 %3116
        %s3119 = sor.u32 256, 64
        %3120 = vbcast.lane.b32.xlu0 %v3086, %s3119
        %v3121 = vpop.permute.xlu0 %3120
        %s3123 = sor.u32 256, 72
        %3124 = vbcast.lane.b32.xlu0 %v3086, %s3123
        %v3125 = vpop.permute.xlu0 %3124
        %s3127 = sor.u32 256, 80
        %3128 = vbcast.lane.b32.xlu0 %v3086, %s3127
        %v3129 = vpop.permute.xlu0 %3128
        %s3131 = sor.u32 256, 88
        %3132 = vbcast.lane.b32.xlu0 %v3086, %s3131
        %v3133 = vpop.permute.xlu0 %3132
        %s3135 = sor.u32 256, 96
        %3136 = vbcast.lane.b32.xlu0 %v3086, %s3135
        %v3137 = vpop.permute.xlu0 %3136
        %s3139 = sor.u32 256, 104
        %3140 = vbcast.lane.b32.xlu0 %v3086, %s3139
        %v3141 = vpop.permute.xlu0 %3140
        %s3143 = sor.u32 256, 112
        %3144 = vbcast.lane.b32.xlu0 %v3086, %s3143
        %v3145 = vpop.permute.xlu0 %3144
        %s3147 = sor.u32 256, 120
        %3148 = vbcast.lane.b32.xlu0 %v3086, %s3147
        %v3149 = vpop.permute.xlu0 %3148
        %v3150 = vlaneseq
        %v3151 = vshrl.u32 %v3150, 7
        %v3152 = vsub.s32 1, %v3151
        %v3153 = vrot.slane %v1760, %v3152
        %3155 = vbcast.lane.b32.xlu0 %v3153, 256
        %v3156 = vpop.permute.xlu0 %3155
        %s3158 = sor.u32 256, 8
        %3159 = vbcast.lane.b32.xlu0 %v3153, %s3158
        %v3160 = vpop.permute.xlu0 %3159
        %s3162 = sor.u32 256, 16
        %3163 = vbcast.lane.b32.xlu0 %v3153, %s3162
        %v3164 = vpop.permute.xlu0 %3163
        %s3166 = sor.u32 256, 24
        %3167 = vbcast.lane.b32.xlu0 %v3153, %s3166
        %v3168 = vpop.permute.xlu0 %3167
        %s3170 = sor.u32 256, 32
        %3171 = vbcast.lane.b32.xlu0 %v3153, %s3170
        %v3172 = vpop.permute.xlu0 %3171
        %s3174 = sor.u32 256, 40
        %3175 = vbcast.lane.b32.xlu0 %v3153, %s3174
        %v3176 = vpop.permute.xlu0 %3175
        %s3178 = sor.u32 256, 48
        %3179 = vbcast.lane.b32.xlu0 %v3153, %s3178
        %v3180 = vpop.permute.xlu0 %3179
        %s3182 = sor.u32 256, 56
        %3183 = vbcast.lane.b32.xlu0 %v3153, %s3182
        %v3184 = vpop.permute.xlu0 %3183
        %s3186 = sor.u32 256, 64
        %3187 = vbcast.lane.b32.xlu0 %v3153, %s3186
        %v3188 = vpop.permute.xlu0 %3187
        %s3190 = sor.u32 256, 72
        %3191 = vbcast.lane.b32.xlu0 %v3153, %s3190
        %v3192 = vpop.permute.xlu0 %3191
        %s3194 = sor.u32 256, 80
        %3195 = vbcast.lane.b32.xlu0 %v3153, %s3194
        %v3196 = vpop.permute.xlu0 %3195
        %s3198 = sor.u32 256, 88
        %3199 = vbcast.lane.b32.xlu0 %v3153, %s3198
        %v3200 = vpop.permute.xlu0 %3199
        %s3202 = sor.u32 256, 96
        %3203 = vbcast.lane.b32.xlu0 %v3153, %s3202
        %v3204 = vpop.permute.xlu0 %3203
        %s3206 = sor.u32 256, 104
        %3207 = vbcast.lane.b32.xlu0 %v3153, %s3206
        %v3208 = vpop.permute.xlu0 %3207
        %s3210 = sor.u32 256, 112
        %3211 = vbcast.lane.b32.xlu0 %v3153, %s3210
        %v3212 = vpop.permute.xlu0 %3211
        %s3214 = sor.u32 256, 120
        %3215 = vbcast.lane.b32.xlu0 %v3153, %s3214
        %v3216 = vpop.permute.xlu0 %3215
        %v3217 = vlaneseq
        %v3218 = vshrl.u32 %v3217, 7
        %v3219 = vsub.s32 2, %v3218
        %v3220 = vrot.slane %v1760, %v3219
        %3222 = vbcast.lane.b32.xlu0 %v3220, 256
        %v3223 = vpop.permute.xlu0 %3222
        %s3225 = sor.u32 256, 8
        %3226 = vbcast.lane.b32.xlu0 %v3220, %s3225
        %v3227 = vpop.permute.xlu0 %3226
        %s3229 = sor.u32 256, 16
        %3230 = vbcast.lane.b32.xlu0 %v3220, %s3229
        %v3231 = vpop.permute.xlu0 %3230
        %s3233 = sor.u32 256, 24
        %3234 = vbcast.lane.b32.xlu0 %v3220, %s3233
        %v3235 = vpop.permute.xlu0 %3234
        %s3237 = sor.u32 256, 32
        %3238 = vbcast.lane.b32.xlu0 %v3220, %s3237
        %v3239 = vpop.permute.xlu0 %3238
        %s3241 = sor.u32 256, 40
        %3242 = vbcast.lane.b32.xlu0 %v3220, %s3241
        %v3243 = vpop.permute.xlu0 %3242
        %s3245 = sor.u32 256, 48
        %3246 = vbcast.lane.b32.xlu0 %v3220, %s3245
        %v3247 = vpop.permute.xlu0 %3246
        %s3249 = sor.u32 256, 56
        %3250 = vbcast.lane.b32.xlu0 %v3220, %s3249
        %v3251 = vpop.permute.xlu0 %3250
        %s3253 = sor.u32 256, 64
        %3254 = vbcast.lane.b32.xlu0 %v3220, %s3253
        %v3255 = vpop.permute.xlu0 %3254
        %s3257 = sor.u32 256, 72
        %3258 = vbcast.lane.b32.xlu0 %v3220, %s3257
        %v3259 = vpop.permute.xlu0 %3258
        %s3261 = sor.u32 256, 80
        %3262 = vbcast.lane.b32.xlu0 %v3220, %s3261
        %v3263 = vpop.permute.xlu0 %3262
        %s3265 = sor.u32 256, 88
        %3266 = vbcast.lane.b32.xlu0 %v3220, %s3265
        %v3267 = vpop.permute.xlu0 %3266
        %s3269 = sor.u32 256, 96
        %3270 = vbcast.lane.b32.xlu0 %v3220, %s3269
        %v3271 = vpop.permute.xlu0 %3270
        %s3273 = sor.u32 256, 104
        %3274 = vbcast.lane.b32.xlu0 %v3220, %s3273
        %v3275 = vpop.permute.xlu0 %3274
        %s3277 = sor.u32 256, 112
        %3278 = vbcast.lane.b32.xlu0 %v3220, %s3277
        %v3279 = vpop.permute.xlu0 %3278
        %s3281 = sor.u32 256, 120
        %3282 = vbcast.lane.b32.xlu0 %v3220, %s3281
        %v3283 = vpop.permute.xlu0 %3282
        %v3284 = vlaneseq
        %v3285 = vshrl.u32 %v3284, 7
        %v3286 = vsub.s32 3, %v3285
        %v3287 = vrot.slane %v1760, %v3286
        %3289 = vbcast.lane.b32.xlu0 %v3287, 256
        %v3290 = vpop.permute.xlu0 %3289
        %s3292 = sor.u32 256, 8
        %3293 = vbcast.lane.b32.xlu0 %v3287, %s3292
        %v3294 = vpop.permute.xlu0 %3293
        %s3296 = sor.u32 256, 16
        %3297 = vbcast.lane.b32.xlu0 %v3287, %s3296
        %v3298 = vpop.permute.xlu0 %3297
        %s3300 = sor.u32 256, 24
        %3301 = vbcast.lane.b32.xlu0 %v3287, %s3300
        %v3302 = vpop.permute.xlu0 %3301
        %s3304 = sor.u32 256, 32
        %3305 = vbcast.lane.b32.xlu0 %v3287, %s3304
        %v3306 = vpop.permute.xlu0 %3305
        %s3308 = sor.u32 256, 40
        %3309 = vbcast.lane.b32.xlu0 %v3287, %s3308
        %v3310 = vpop.permute.xlu0 %3309
        %s3312 = sor.u32 256, 48
        %3313 = vbcast.lane.b32.xlu0 %v3287, %s3312
        %v3314 = vpop.permute.xlu0 %3313
        %s3316 = sor.u32 256, 56
        %3317 = vbcast.lane.b32.xlu0 %v3287, %s3316
        %v3318 = vpop.permute.xlu0 %3317
        %s3320 = sor.u32 256, 64
        %3321 = vbcast.lane.b32.xlu0 %v3287, %s3320
        %v3322 = vpop.permute.xlu0 %3321
        %s3324 = sor.u32 256, 72
        %3325 = vbcast.lane.b32.xlu0 %v3287, %s3324
        %v3326 = vpop.permute.xlu0 %3325
        %s3328 = sor.u32 256, 80
        %3329 = vbcast.lane.b32.xlu0 %v3287, %s3328
        %v3330 = vpop.permute.xlu0 %3329
        %s3332 = sor.u32 256, 88
        %3333 = vbcast.lane.b32.xlu0 %v3287, %s3332
        %v3334 = vpop.permute.xlu0 %3333
        %s3336 = sor.u32 256, 96
        %3337 = vbcast.lane.b32.xlu0 %v3287, %s3336
        %v3338 = vpop.permute.xlu0 %3337
        %s3340 = sor.u32 256, 104
        %3341 = vbcast.lane.b32.xlu0 %v3287, %s3340
        %v3342 = vpop.permute.xlu0 %3341
        %s3344 = sor.u32 256, 112
        %3345 = vbcast.lane.b32.xlu0 %v3287, %s3344
        %v3346 = vpop.permute.xlu0 %3345
        %s3348 = sor.u32 256, 120
        %3349 = vbcast.lane.b32.xlu0 %v3287, %s3348
        %v3350 = vpop.permute.xlu0 %3349
        %v3351 = vlaneseq
        %v3352 = vshrl.u32 %v3351, 7
        %v3353 = vsub.s32 4, %v3352
        %v3354 = vrot.slane %v1760, %v3353
        %3356 = vbcast.lane.b32.xlu0 %v3354, 256
        %v3357 = vpop.permute.xlu0 %3356
        %s3359 = sor.u32 256, 8
        %3360 = vbcast.lane.b32.xlu0 %v3354, %s3359
        %v3361 = vpop.permute.xlu0 %3360
        %s3363 = sor.u32 256, 16
        %3364 = vbcast.lane.b32.xlu0 %v3354, %s3363
        %v3365 = vpop.permute.xlu0 %3364
        %s3367 = sor.u32 256, 24
        %3368 = vbcast.lane.b32.xlu0 %v3354, %s3367
        %v3369 = vpop.permute.xlu0 %3368
        %s3371 = sor.u32 256, 32
        %3372 = vbcast.lane.b32.xlu0 %v3354, %s3371
        %v3373 = vpop.permute.xlu0 %3372
        %s3375 = sor.u32 256, 40
        %3376 = vbcast.lane.b32.xlu0 %v3354, %s3375
        %v3377 = vpop.permute.xlu0 %3376
        %s3379 = sor.u32 256, 48
        %3380 = vbcast.lane.b32.xlu0 %v3354, %s3379
        %v3381 = vpop.permute.xlu0 %3380
        %s3383 = sor.u32 256, 56
        %3384 = vbcast.lane.b32.xlu0 %v3354, %s3383
        %v3385 = vpop.permute.xlu0 %3384
        %s3387 = sor.u32 256, 64
        %3388 = vbcast.lane.b32.xlu0 %v3354, %s3387
        %v3389 = vpop.permute.xlu0 %3388
        %s3391 = sor.u32 256, 72
        %3392 = vbcast.lane.b32.xlu0 %v3354, %s3391
        %v3393 = vpop.permute.xlu0 %3392
        %s3395 = sor.u32 256, 80
        %3396 = vbcast.lane.b32.xlu0 %v3354, %s3395
        %v3397 = vpop.permute.xlu0 %3396
        %s3399 = sor.u32 256, 88
        %3400 = vbcast.lane.b32.xlu0 %v3354, %s3399
        %v3401 = vpop.permute.xlu0 %3400
        %s3403 = sor.u32 256, 96
        %3404 = vbcast.lane.b32.xlu0 %v3354, %s3403
        %v3405 = vpop.permute.xlu0 %3404
        %s3407 = sor.u32 256, 104
        %3408 = vbcast.lane.b32.xlu0 %v3354, %s3407
        %v3409 = vpop.permute.xlu0 %3408
        %s3411 = sor.u32 256, 112
        %3412 = vbcast.lane.b32.xlu0 %v3354, %s3411
        %v3413 = vpop.permute.xlu0 %3412
        %s3415 = sor.u32 256, 120
        %3416 = vbcast.lane.b32.xlu0 %v3354, %s3415
        %v3417 = vpop.permute.xlu0 %3416
        %v3418 = vlaneseq
        %v3419 = vshrl.u32 %v3418, 7
        %v3420 = vsub.s32 5, %v3419
        %v3421 = vrot.slane %v1760, %v3420
        %3423 = vbcast.lane.b32.xlu0 %v3421, 256
        %v3424 = vpop.permute.xlu0 %3423
        %s3426 = sor.u32 256, 8
        %3427 = vbcast.lane.b32.xlu0 %v3421, %s3426
        %v3428 = vpop.permute.xlu0 %3427
        %s3430 = sor.u32 256, 16
        %3431 = vbcast.lane.b32.xlu0 %v3421, %s3430
        %v3432 = vpop.permute.xlu0 %3431
        %s3434 = sor.u32 256, 24
        %3435 = vbcast.lane.b32.xlu0 %v3421, %s3434
        %v3436 = vpop.permute.xlu0 %3435
        %s3438 = sor.u32 256, 32
        %3439 = vbcast.lane.b32.xlu0 %v3421, %s3438
        %v3440 = vpop.permute.xlu0 %3439
        %s3442 = sor.u32 256, 40
        %3443 = vbcast.lane.b32.xlu0 %v3421, %s3442
        %v3444 = vpop.permute.xlu0 %3443
        %s3446 = sor.u32 256, 48
        %3447 = vbcast.lane.b32.xlu0 %v3421, %s3446
        %v3448 = vpop.permute.xlu0 %3447
        %s3450 = sor.u32 256, 56
        %3451 = vbcast.lane.b32.xlu0 %v3421, %s3450
        %v3452 = vpop.permute.xlu0 %3451
        %s3454 = sor.u32 256, 64
        %3455 = vbcast.lane.b32.xlu0 %v3421, %s3454
        %v3456 = vpop.permute.xlu0 %3455
        %s3458 = sor.u32 256, 72
        %3459 = vbcast.lane.b32.xlu0 %v3421, %s3458
        %v3460 = vpop.permute.xlu0 %3459
        %s3462 = sor.u32 256, 80
        %3463 = vbcast.lane.b32.xlu0 %v3421, %s3462
        %v3464 = vpop.permute.xlu0 %3463
        %s3466 = sor.u32 256, 88
        %3467 = vbcast.lane.b32.xlu0 %v3421, %s3466
        %v3468 = vpop.permute.xlu0 %3467
        %s3470 = sor.u32 256, 96
        %3471 = vbcast.lane.b32.xlu0 %v3421, %s3470
        %v3472 = vpop.permute.xlu0 %3471
        %s3474 = sor.u32 256, 104
        %3475 = vbcast.lane.b32.xlu0 %v3421, %s3474
        %v3476 = vpop.permute.xlu0 %3475
        %s3478 = sor.u32 256, 112
        %3479 = vbcast.lane.b32.xlu0 %v3421, %s3478
        %v3480 = vpop.permute.xlu0 %3479
        %s3482 = sor.u32 256, 120
        %3483 = vbcast.lane.b32.xlu0 %v3421, %s3482
        %v3484 = vpop.permute.xlu0 %3483
        %v3485 = vlaneseq
        %v3486 = vshrl.u32 %v3485, 7
        %v3487 = vsub.s32 6, %v3486
        %v3488 = vrot.slane %v1760, %v3487
        %3490 = vbcast.lane.b32.xlu0 %v3488, 256
        %v3491 = vpop.permute.xlu0 %3490
        %s3493 = sor.u32 256, 8
        %3494 = vbcast.lane.b32.xlu0 %v3488, %s3493
        %v3495 = vpop.permute.xlu0 %3494
        %s3497 = sor.u32 256, 16
        %3498 = vbcast.lane.b32.xlu0 %v3488, %s3497
        %v3499 = vpop.permute.xlu0 %3498
        %s3501 = sor.u32 256, 24
        %3502 = vbcast.lane.b32.xlu0 %v3488, %s3501
        %v3503 = vpop.permute.xlu0 %3502
        %s3505 = sor.u32 256, 32
        %3506 = vbcast.lane.b32.xlu0 %v3488, %s3505
        %v3507 = vpop.permute.xlu0 %3506
        %s3509 = sor.u32 256, 40
        %3510 = vbcast.lane.b32.xlu0 %v3488, %s3509
        %v3511 = vpop.permute.xlu0 %3510
        %s3513 = sor.u32 256, 48
        %3514 = vbcast.lane.b32.xlu0 %v3488, %s3513
        %v3515 = vpop.permute.xlu0 %3514
        %s3517 = sor.u32 256, 56
        %3518 = vbcast.lane.b32.xlu0 %v3488, %s3517
        %v3519 = vpop.permute.xlu0 %3518
        %s3521 = sor.u32 256, 64
        %3522 = vbcast.lane.b32.xlu0 %v3488, %s3521
        %v3523 = vpop.permute.xlu0 %3522
        %s3525 = sor.u32 256, 72
        %3526 = vbcast.lane.b32.xlu0 %v3488, %s3525
        %v3527 = vpop.permute.xlu0 %3526
        %s3529 = sor.u32 256, 80
        %3530 = vbcast.lane.b32.xlu0 %v3488, %s3529
        %v3531 = vpop.permute.xlu0 %3530
        %s3533 = sor.u32 256, 88
        %3534 = vbcast.lane.b32.xlu0 %v3488, %s3533
        %v3535 = vpop.permute.xlu0 %3534
        %s3537 = sor.u32 256, 96
        %3538 = vbcast.lane.b32.xlu0 %v3488, %s3537
        %v3539 = vpop.permute.xlu0 %3538
        %s3541 = sor.u32 256, 104
        %3542 = vbcast.lane.b32.xlu0 %v3488, %s3541
        %v3543 = vpop.permute.xlu0 %3542
        %s3545 = sor.u32 256, 112
        %3546 = vbcast.lane.b32.xlu0 %v3488, %s3545
        %v3547 = vpop.permute.xlu0 %3546
        %s3549 = sor.u32 256, 120
        %3550 = vbcast.lane.b32.xlu0 %v3488, %s3549
        %v3551 = vpop.permute.xlu0 %3550
        %v3552 = vlaneseq
        %v3553 = vshrl.u32 %v3552, 7
        %v3554 = vsub.s32 7, %v3553
        %v3555 = vrot.slane %v1760, %v3554
        %3557 = vbcast.lane.b32.xlu0 %v3555, 256
        %v3558 = vpop.permute.xlu0 %3557
        %s3560 = sor.u32 256, 8
        %3561 = vbcast.lane.b32.xlu0 %v3555, %s3560
        %v3562 = vpop.permute.xlu0 %3561
        %s3564 = sor.u32 256, 16
        %3565 = vbcast.lane.b32.xlu0 %v3555, %s3564
        %v3566 = vpop.permute.xlu0 %3565
        %s3568 = sor.u32 256, 24
        %3569 = vbcast.lane.b32.xlu0 %v3555, %s3568
        %v3570 = vpop.permute.xlu0 %3569
        %s3572 = sor.u32 256, 32
        %3573 = vbcast.lane.b32.xlu0 %v3555, %s3572
        %v3574 = vpop.permute.xlu0 %3573
        %s3576 = sor.u32 256, 40
        %3577 = vbcast.lane.b32.xlu0 %v3555, %s3576
        %v3578 = vpop.permute.xlu0 %3577
        %s3580 = sor.u32 256, 48
        %3581 = vbcast.lane.b32.xlu0 %v3555, %s3580
        %v3582 = vpop.permute.xlu0 %3581
        %s3584 = sor.u32 256, 56
        %3585 = vbcast.lane.b32.xlu0 %v3555, %s3584
        %v3586 = vpop.permute.xlu0 %3585
        %s3588 = sor.u32 256, 64
        %3589 = vbcast.lane.b32.xlu0 %v3555, %s3588
        %v3590 = vpop.permute.xlu0 %3589
        %s3592 = sor.u32 256, 72
        %3593 = vbcast.lane.b32.xlu0 %v3555, %s3592
        %v3594 = vpop.permute.xlu0 %3593
        %s3596 = sor.u32 256, 80
        %3597 = vbcast.lane.b32.xlu0 %v3555, %s3596
        %v3598 = vpop.permute.xlu0 %3597
        %s3600 = sor.u32 256, 88
        %3601 = vbcast.lane.b32.xlu0 %v3555, %s3600
        %v3602 = vpop.permute.xlu0 %3601
        %s3604 = sor.u32 256, 96
        %3605 = vbcast.lane.b32.xlu0 %v3555, %s3604
        %v3606 = vpop.permute.xlu0 %3605
        %s3608 = sor.u32 256, 104
        %3609 = vbcast.lane.b32.xlu0 %v3555, %s3608
        %v3610 = vpop.permute.xlu0 %3609
        %s3612 = sor.u32 256, 112
        %3613 = vbcast.lane.b32.xlu0 %v3555, %s3612
        %v3614 = vpop.permute.xlu0 %3613
        %s3616 = sor.u32 256, 120
        %3617 = vbcast.lane.b32.xlu0 %v3555, %s3616
        %v3618 = vpop.permute.xlu0 %3617
        %v3619 = vpack.c.bf16 %v3093, %v3089
        %v3620 = vpack.c.bf16 %v3101, %v3097
        %v3621 = vpack.c.bf16 %v3109, %v3105
        %v3622 = vpack.c.bf16 %v3117, %v3113
        %v3623 = vpack.c.bf16 %v3125, %v3121
        %v3624 = vpack.c.bf16 %v3133, %v3129
        %v3625 = vpack.c.bf16 %v3141, %v3137
        %v3626 = vpack.c.bf16 %v3149, %v3145
        %v3627 = vpack.c.bf16 %v3160, %v3156
        %v3628 = vpack.c.bf16 %v3168, %v3164
        %v3629 = vpack.c.bf16 %v3176, %v3172
        %v3630 = vpack.c.bf16 %v3184, %v3180
        %v3631 = vpack.c.bf16 %v3192, %v3188
        %v3632 = vpack.c.bf16 %v3200, %v3196
        %v3633 = vpack.c.bf16 %v3208, %v3204
        %v3634 = vpack.c.bf16 %v3216, %v3212
        %v3635 = vpack.c.bf16 %v3227, %v3223
        %v3636 = vpack.c.bf16 %v3235, %v3231
        %v3637 = vpack.c.bf16 %v3243, %v3239
        %v3638 = vpack.c.bf16 %v3251, %v3247
        %v3639 = vpack.c.bf16 %v3259, %v3255
        %v3640 = vpack.c.bf16 %v3267, %v3263
        %v3641 = vpack.c.bf16 %v3275, %v3271
        %v3642 = vpack.c.bf16 %v3283, %v3279
        %v3643 = vpack.c.bf16 %v3294, %v3290
        %v3644 = vpack.c.bf16 %v3302, %v3298
        %v3645 = vpack.c.bf16 %v3310, %v3306
        %v3646 = vpack.c.bf16 %v3318, %v3314
        %v3647 = vpack.c.bf16 %v3326, %v3322
        %v3648 = vpack.c.bf16 %v3334, %v3330
        %v3649 = vpack.c.bf16 %v3342, %v3338
        %v3650 = vpack.c.bf16 %v3350, %v3346
        %v3651 = vpack.c.bf16 %v3361, %v3357
        %v3652 = vpack.c.bf16 %v3369, %v3365
        %v3653 = vpack.c.bf16 %v3377, %v3373
        %v3654 = vpack.c.bf16 %v3385, %v3381
        %v3655 = vpack.c.bf16 %v3393, %v3389
        %v3656 = vpack.c.bf16 %v3401, %v3397
        %v3657 = vpack.c.bf16 %v3409, %v3405
        %v3658 = vpack.c.bf16 %v3417, %v3413
        %v3659 = vpack.c.bf16 %v3428, %v3424
        %v3660 = vpack.c.bf16 %v3436, %v3432
        %v3661 = vpack.c.bf16 %v3444, %v3440
        %v3662 = vpack.c.bf16 %v3452, %v3448
        %v3663 = vpack.c.bf16 %v3460, %v3456
        %v3664 = vpack.c.bf16 %v3468, %v3464
        %v3665 = vpack.c.bf16 %v3476, %v3472
        %v3666 = vpack.c.bf16 %v3484, %v3480
        %v3667 = vpack.c.bf16 %v3495, %v3491
        %v3668 = vpack.c.bf16 %v3503, %v3499
        %v3669 = vpack.c.bf16 %v3511, %v3507
        %v3670 = vpack.c.bf16 %v3519, %v3515
        %v3671 = vpack.c.bf16 %v3527, %v3523
        %v3672 = vpack.c.bf16 %v3535, %v3531
        %v3673 = vpack.c.bf16 %v3543, %v3539
        %v3674 = vpack.c.bf16 %v3551, %v3547
        %v3675 = vpack.c.bf16 %v3562, %v3558
        %v3676 = vpack.c.bf16 %v3570, %v3566
        %v3677 = vpack.c.bf16 %v3578, %v3574
        %v3678 = vpack.c.bf16 %v3586, %v3582
        %v3679 = vpack.c.bf16 %v3594, %v3590
        %v3680 = vpack.c.bf16 %v3602, %v3598
        %v3681 = vpack.c.bf16 %v3610, %v3606
        %v3682 = vpack.c.bf16 %v3618, %v3614
        %v3684 = vcombine.high %v1776, %v1776
        %v3686 = vunpack.c.l.s4 1966171168
        %v3687 = vunpack.c.0.s8 %v3686
        %v3688 = vlaneseq
        %v3689 = vshrl.u32 %v3688, 7
        %v3690 = vsub.s32 %v3687, %v3689
        %v3691 = vrot.slane %v1776, %v3690
        %v3693 = vunpack.c.l.s4 1966171168
        %v3694 = vunpack.c.0.s8 %v3693
        %v3695 = vlaneseq
        %v3696 = vshrl.u32 %v3695, 7
        %v3697 = vsub.s32 %v3694, %v3696
        %v3698 = vrot.slane %v3684, %v3697
        %v3699 = vcombine.high %v3691, %v3691
        %v3700 = vcombine.high %v3698, %v3698
        %v3702 = vunpack.c.l.s4 1966171168
        %v3703 = vunpack.c.0.s8 %v3702
        %v3704 = vlaneseq
        %v3705 = vshrl.u32 %v3704, 7
        %v3706 = vsub.s32 %v3703, %v3705
        %v3707 = vrot.slane %v3691, %v3706
        %v3709 = vunpack.c.l.s4 1966171168
        %v3710 = vunpack.c.0.s8 %v3709
        %v3711 = vlaneseq
        %v3712 = vshrl.u32 %v3711, 7
        %v3713 = vsub.s32 %v3710, %v3712
        %v3714 = vrot.slane %v3698, %v3713
        %v3716 = vunpack.c.l.s4 1966171168
        %v3717 = vunpack.c.0.s8 %v3716
        %v3718 = vlaneseq
        %v3719 = vshrl.u32 %v3718, 7
        %v3720 = vsub.s32 %v3717, %v3719
        %v3721 = vrot.slane %v3699, %v3720
        %v3723 = vunpack.c.l.s4 1966171168
        %v3724 = vunpack.c.0.s8 %v3723
        %v3725 = vlaneseq
        %v3726 = vshrl.u32 %v3725, 7
        %v3727 = vsub.s32 %v3724, %v3726
        %v3728 = vrot.slane %v3700, %v3727
        %v3729 = vcombine.high %v3707, %v3707
        %v3730 = vcombine.high %v3714, %v3714
        %v3731 = vcombine.high %v3721, %v3721
        %v3732 = vcombine.high %v3728, %v3728
        %v3741 = vpack.c.bf16 %v3707, %v3707
        %v3742 = vpack.c.bf16 %v3721, %v3721
        %v3743 = vpack.c.bf16 %v3729, %v3729
        %v3744 = vpack.c.bf16 %v3731, %v3731
        %v3745 = vpack.c.bf16 %v3714, %v3714
        %v3746 = vpack.c.bf16 %v3728, %v3728
        %v3747 = vpack.c.bf16 %v3730, %v3730
        %v3748 = vpack.c.bf16 %v3732, %v3732
        %v3750 = vcombine.high %v1780, %v1780
        %v3752 = vunpack.c.l.s4 1966171168
        %v3753 = vunpack.c.0.s8 %v3752
        %v3754 = vlaneseq
        %v3755 = vshrl.u32 %v3754, 7
        %v3756 = vsub.s32 %v3753, %v3755
        %v3757 = vrot.slane %v1780, %v3756
        %v3759 = vunpack.c.l.s4 1966171168
        %v3760 = vunpack.c.0.s8 %v3759
        %v3761 = vlaneseq
        %v3762 = vshrl.u32 %v3761, 7
        %v3763 = vsub.s32 %v3760, %v3762
        %v3764 = vrot.slane %v3750, %v3763
        %v3765 = vcombine.high %v3757, %v3757
        %v3766 = vcombine.high %v3764, %v3764
        %v3768 = vunpack.c.l.s4 1966171168
        %v3769 = vunpack.c.0.s8 %v3768
        %v3770 = vlaneseq
        %v3771 = vshrl.u32 %v3770, 7
        %v3772 = vsub.s32 %v3769, %v3771
        %v3773 = vrot.slane %v3757, %v3772
        %v3775 = vunpack.c.l.s4 1966171168
        %v3776 = vunpack.c.0.s8 %v3775
        %v3777 = vlaneseq
        %v3778 = vshrl.u32 %v3777, 7
        %v3779 = vsub.s32 %v3776, %v3778
        %v3780 = vrot.slane %v3764, %v3779
        %v3782 = vunpack.c.l.s4 1966171168
        %v3783 = vunpack.c.0.s8 %v3782
        %v3784 = vlaneseq
        %v3785 = vshrl.u32 %v3784, 7
        %v3786 = vsub.s32 %v3783, %v3785
        %v3787 = vrot.slane %v3765, %v3786
        %v3789 = vunpack.c.l.s4 1966171168
        %v3790 = vunpack.c.0.s8 %v3789
        %v3791 = vlaneseq
        %v3792 = vshrl.u32 %v3791, 7
        %v3793 = vsub.s32 %v3790, %v3792
        %v3794 = vrot.slane %v3766, %v3793
        %v3795 = vcombine.high %v3773, %v3773
        %v3796 = vcombine.high %v3780, %v3780
        %v3797 = vcombine.high %v3787, %v3787
        %v3798 = vcombine.high %v3794, %v3794
        %v3807 = vpack.c.bf16 %v3773, %v3773
        %v3808 = vpack.c.bf16 %v3787, %v3787
        %v3809 = vpack.c.bf16 %v3795, %v3795
        %v3810 = vpack.c.bf16 %v3797, %v3797
        %v3811 = vpack.c.bf16 %v3780, %v3780
        %v3812 = vpack.c.bf16 %v3794, %v3794
        %v3813 = vpack.c.bf16 %v3796, %v3796
        %v3814 = vpack.c.bf16 %v3798, %v3798
        %v3816 = vpack.i.b16 %v3741, %v3741
        %v3818 = vlaneseq
        %v3819 = vshrl.u32 %v3818, 7
        %v3820 = vsub.s32 0, %v3819
        %v3821 = vrot.slane %v3816, %v3820
        %v3823 = vpack.i.b16 %v3742, %v3742
        %v3825 = vlaneseq
        %v3826 = vshrl.u32 %v3825, 7
        %v3827 = vsub.s32 0, %v3826
        %v3828 = vrot.slane %v3823, %v3827
        %v3830 = vpack.i.b16 %v3743, %v3743
        %v3832 = vlaneseq
        %v3833 = vshrl.u32 %v3832, 7
        %v3834 = vsub.s32 0, %v3833
        %v3835 = vrot.slane %v3830, %v3834
        %v3837 = vpack.i.b16 %v3744, %v3744
        %v3839 = vlaneseq
        %v3840 = vshrl.u32 %v3839, 7
        %v3841 = vsub.s32 0, %v3840
        %v3842 = vrot.slane %v3837, %v3841
        %v3844 = vpack.i.b16 %v3745, %v3745
        %v3846 = vlaneseq
        %v3847 = vshrl.u32 %v3846, 7
        %v3848 = vsub.s32 0, %v3847
        %v3849 = vrot.slane %v3844, %v3848
        %v3851 = vpack.i.b16 %v3746, %v3746
        %v3853 = vlaneseq
        %v3854 = vshrl.u32 %v3853, 7
        %v3855 = vsub.s32 0, %v3854
        %v3856 = vrot.slane %v3851, %v3855
        %v3858 = vpack.i.b16 %v3747, %v3747
        %v3860 = vlaneseq
        %v3861 = vshrl.u32 %v3860, 7
        %v3862 = vsub.s32 0, %v3861
        %v3863 = vrot.slane %v3858, %v3862
        %v3865 = vpack.i.b16 %v3748, %v3748
        %v3867 = vlaneseq
        %v3868 = vshrl.u32 %v3867, 7
        %v3869 = vsub.s32 0, %v3868
        %v3870 = vrot.slane %v3865, %v3869
        %v3871 = vadd.bf16 %v3619, %v3821
        %v3872 = vadd.bf16 %v3620, %v3821
        %v3873 = vadd.bf16 %v3621, %v3821
        %v3874 = vadd.bf16 %v3622, %v3821
        %v3875 = vadd.bf16 %v3623, %v3821
        %v3876 = vadd.bf16 %v3624, %v3821
        %v3877 = vadd.bf16 %v3625, %v3821
        %v3878 = vadd.bf16 %v3626, %v3821
        %v3879 = vadd.bf16 %v3627, %v3828
        %v3880 = vadd.bf16 %v3628, %v3828
        %v3881 = vadd.bf16 %v3629, %v3828
        %v3882 = vadd.bf16 %v3630, %v3828
        %v3883 = vadd.bf16 %v3631, %v3828
        %v3884 = vadd.bf16 %v3632, %v3828
        %v3885 = vadd.bf16 %v3633, %v3828
        %v3886 = vadd.bf16 %v3634, %v3828
        %v3887 = vadd.bf16 %v3635, %v3835
        %v3888 = vadd.bf16 %v3636, %v3835
        %v3889 = vadd.bf16 %v3637, %v3835
        %v3890 = vadd.bf16 %v3638, %v3835
        %v3891 = vadd.bf16 %v3639, %v3835
        %v3892 = vadd.bf16 %v3640, %v3835
        %v3893 = vadd.bf16 %v3641, %v3835
        %v3894 = vadd.bf16 %v3642, %v3835
        %v3895 = vadd.bf16 %v3643, %v3842
        %v3896 = vadd.bf16 %v3644, %v3842
        %v3897 = vadd.bf16 %v3645, %v3842
        %v3898 = vadd.bf16 %v3646, %v3842
        %v3899 = vadd.bf16 %v3647, %v3842
        %v3900 = vadd.bf16 %v3648, %v3842
        %v3901 = vadd.bf16 %v3649, %v3842
        %v3902 = vadd.bf16 %v3650, %v3842
        %v3903 = vadd.bf16 %v3651, %v3849
        %v3904 = vadd.bf16 %v3652, %v3849
        %v3905 = vadd.bf16 %v3653, %v3849
        %v3906 = vadd.bf16 %v3654, %v3849
        %v3907 = vadd.bf16 %v3655, %v3849
        %v3908 = vadd.bf16 %v3656, %v3849
        %v3909 = vadd.bf16 %v3657, %v3849
        %v3910 = vadd.bf16 %v3658, %v3849
        %v3911 = vadd.bf16 %v3659, %v3856
        %v3912 = vadd.bf16 %v3660, %v3856
        %v3913 = vadd.bf16 %v3661, %v3856
        %v3914 = vadd.bf16 %v3662, %v3856
        %v3915 = vadd.bf16 %v3663, %v3856
        %v3916 = vadd.bf16 %v3664, %v3856
        %v3917 = vadd.bf16 %v3665, %v3856
        %v3918 = vadd.bf16 %v3666, %v3856
        %v3919 = vadd.bf16 %v3667, %v3863
        %v3920 = vadd.bf16 %v3668, %v3863
        %v3921 = vadd.bf16 %v3669, %v3863
        %v3922 = vadd.bf16 %v3670, %v3863
        %v3923 = vadd.bf16 %v3671, %v3863
        %v3924 = vadd.bf16 %v3672, %v3863
        %v3925 = vadd.bf16 %v3673, %v3863
        %v3926 = vadd.bf16 %v3674, %v3863
        %v3927 = vadd.bf16 %v3675, %v3870
        %v3928 = vadd.bf16 %v3676, %v3870
        %v3929 = vadd.bf16 %v3677, %v3870
        %v3930 = vadd.bf16 %v3678, %v3870
        %v3931 = vadd.bf16 %v3679, %v3870
        %v3932 = vadd.bf16 %v3680, %v3870
        %v3933 = vadd.bf16 %v3681, %v3870
        %v3934 = vadd.bf16 %v3682, %v3870
        %v3935 = vmax.bf16 %v3871, 0
        %v3936 = vmax.bf16 %v3872, 0
        %v3937 = vmax.bf16 %v3873, 0
        %v3938 = vmax.bf16 %v3874, 0
        %v3939 = vmax.bf16 %v3875, 0
        %v3940 = vmax.bf16 %v3876, 0
        %v3941 = vmax.bf16 %v3877, 0
        %v3942 = vmax.bf16 %v3878, 0
        %v3943 = vmax.bf16 %v3879, 0
        %v3944 = vmax.bf16 %v3880, 0
        %v3945 = vmax.bf16 %v3881, 0
        %v3946 = vmax.bf16 %v3882, 0
        %v3947 = vmax.bf16 %v3883, 0
        %v3948 = vmax.bf16 %v3884, 0
        %v3949 = vmax.bf16 %v3885, 0
        %v3950 = vmax.bf16 %v3886, 0
        %v3951 = vmax.bf16 %v3887, 0
        %v3952 = vmax.bf16 %v3888, 0
        %v3953 = vmax.bf16 %v3889, 0
        %v3954 = vmax.bf16 %v3890, 0
        %v3955 = vmax.bf16 %v3891, 0
        %v3956 = vmax.bf16 %v3892, 0
        %v3957 = vmax.bf16 %v3893, 0
        %v3958 = vmax.bf16 %v3894, 0
        %v3959 = vmax.bf16 %v3895, 0
        %v3960 = vmax.bf16 %v3896, 0
        %v3961 = vmax.bf16 %v3897, 0
        %v3962 = vmax.bf16 %v3898, 0
        %v3963 = vmax.bf16 %v3899, 0
        %v3964 = vmax.bf16 %v3900, 0
        %v3965 = vmax.bf16 %v3901, 0
        %v3966 = vmax.bf16 %v3902, 0
        %v3967 = vmax.bf16 %v3903, 0
        %v3968 = vmax.bf16 %v3904, 0
        %v3969 = vmax.bf16 %v3905, 0
        %v3970 = vmax.bf16 %v3906, 0
        %v3971 = vmax.bf16 %v3907, 0
        %v3972 = vmax.bf16 %v3908, 0
        %v3973 = vmax.bf16 %v3909, 0
        %v3974 = vmax.bf16 %v3910, 0
        %v3975 = vmax.bf16 %v3911, 0
        %v3976 = vmax.bf16 %v3912, 0
        %v3977 = vmax.bf16 %v3913, 0
        %v3978 = vmax.bf16 %v3914, 0
        %v3979 = vmax.bf16 %v3915, 0
        %v3980 = vmax.bf16 %v3916, 0
        %v3981 = vmax.bf16 %v3917, 0
        %v3982 = vmax.bf16 %v3918, 0
        %v3983 = vmax.bf16 %v3919, 0
        %v3984 = vmax.bf16 %v3920, 0
        %v3985 = vmax.bf16 %v3921, 0
        %v3986 = vmax.bf16 %v3922, 0
        %v3987 = vmax.bf16 %v3923, 0
        %v3988 = vmax.bf16 %v3924, 0
        %v3989 = vmax.bf16 %v3925, 0
        %v3990 = vmax.bf16 %v3926, 0
        %v3991 = vmax.bf16 %v3927, 0
        %v3992 = vmax.bf16 %v3928, 0
        %v3993 = vmax.bf16 %v3929, 0
        %v3994 = vmax.bf16 %v3930, 0
        %v3995 = vmax.bf16 %v3931, 0
        %v3996 = vmax.bf16 %v3932, 0
        %v3997 = vmax.bf16 %v3933, 0
        %v3998 = vmax.bf16 %v3934, 0
        %s4000 = vtos %v3807
        %v4001 = vstv %s4000
        %v4002 = vpack.i.b16 %v4001, %v4001
        %s4005 = vtos %v3808
        %v4006 = vstv %s4005
        %v4007 = vpack.i.b16 %v4006, %v4006
        %s4010 = vtos %v3809
        %v4011 = vstv %s4010
        %v4012 = vpack.i.b16 %v4011, %v4011
        %s4015 = vtos %v3810
        %v4016 = vstv %s4015
        %v4017 = vpack.i.b16 %v4016, %v4016
        %s4020 = vtos %v3811
        %v4021 = vstv %s4020
        %v4022 = vpack.i.b16 %v4021, %v4021
        %s4025 = vtos %v3812
        %v4026 = vstv %s4025
        %v4027 = vpack.i.b16 %v4026, %v4026
        %s4030 = vtos %v3813
        %v4031 = vstv %s4030
        %v4032 = vpack.i.b16 %v4031, %v4031
        %s4035 = vtos %v3814
        %v4036 = vstv %s4035
        %v4037 = vpack.i.b16 %v4036, %v4036
        %v4039 = vmul.bf16 %v3935, %v4002
        %v4040 = vmul.bf16 %v3936, %v4002
        %v4041 = vmul.bf16 %v3937, %v4002
        %v4042 = vmul.bf16 %v3938, %v4002
        %v4043 = vmul.bf16 %v3939, %v4002
        %v4044 = vmul.bf16 %v3940, %v4002
        %v4045 = vmul.bf16 %v3941, %v4002
        %v4046 = vmul.bf16 %v3942, %v4002
        %v4047 = vmul.bf16 %v3943, %v4007
        %v4048 = vmul.bf16 %v3944, %v4007
        %v4049 = vmul.bf16 %v3945, %v4007
        %v4050 = vmul.bf16 %v3946, %v4007
        %v4051 = vmul.bf16 %v3947, %v4007
        %v4052 = vmul.bf16 %v3948, %v4007
        %v4053 = vmul.bf16 %v3949, %v4007
        %v4054 = vmul.bf16 %v3950, %v4007
        %v4055 = vmul.bf16 %v3951, %v4012
        %v4056 = vmul.bf16 %v3952, %v4012
        %v4057 = vmul.bf16 %v3953, %v4012
        %v4058 = vmul.bf16 %v3954, %v4012
        %v4059 = vmul.bf16 %v3955, %v4012
        %v4060 = vmul.bf16 %v3956, %v4012
        %v4061 = vmul.bf16 %v3957, %v4012
        %v4062 = vmul.bf16 %v3958, %v4012
        %v4063 = vmul.bf16 %v3959, %v4017
        %v4064 = vmul.bf16 %v3960, %v4017
        %v4065 = vmul.bf16 %v3961, %v4017
        %v4066 = vmul.bf16 %v3962, %v4017
        %v4067 = vmul.bf16 %v3963, %v4017
        %v4068 = vmul.bf16 %v3964, %v4017
        %v4069 = vmul.bf16 %v3965, %v4017
        %v4070 = vmul.bf16 %v3966, %v4017
        %v4071 = vmul.bf16 %v3967, %v4022
        %v4072 = vmul.bf16 %v3968, %v4022
        %v4073 = vmul.bf16 %v3969, %v4022
        %v4074 = vmul.bf16 %v3970, %v4022
        %v4075 = vmul.bf16 %v3971, %v4022
        %v4076 = vmul.bf16 %v3972, %v4022
        %v4077 = vmul.bf16 %v3973, %v4022
        %v4078 = vmul.bf16 %v3974, %v4022
        %v4079 = vmul.bf16 %v3975, %v4027
        %v4080 = vmul.bf16 %v3976, %v4027
        %v4081 = vmul.bf16 %v3977, %v4027
        %v4082 = vmul.bf16 %v3978, %v4027
        %v4083 = vmul.bf16 %v3979, %v4027
        %v4084 = vmul.bf16 %v3980, %v4027
        %v4085 = vmul.bf16 %v3981, %v4027
        %v4086 = vmul.bf16 %v3982, %v4027
        %v4087 = vmul.bf16 %v3983, %v4032
        %v4088 = vmul.bf16 %v3984, %v4032
        %v4089 = vmul.bf16 %v3985, %v4032
        %v4090 = vmul.bf16 %v3986, %v4032
        %v4091 = vmul.bf16 %v3987, %v4032
        %v4092 = vmul.bf16 %v3988, %v4032
        %v4093 = vmul.bf16 %v3989, %v4032
        %v4094 = vmul.bf16 %v3990, %v4032
        %v4095 = vmul.bf16 %v3991, %v4037
        %v4096 = vmul.bf16 %v3992, %v4037
        %v4097 = vmul.bf16 %v3993, %v4037
        %v4098 = vmul.bf16 %v3994, %v4037
        %v4099 = vmul.bf16 %v3995, %v4037
        %v4100 = vmul.bf16 %v3996, %v4037
        %v4101 = vmul.bf16 %v3997, %v4037
        %v4102 = vmul.bf16 %v3998, %v4037
        %v4103 = vunpack.c.l.bf16 %v4039
        %v4104 = vunpack.c.h.bf16 %v4039
        %v4105 = vunpack.c.l.bf16 %v4040
        %v4106 = vunpack.c.h.bf16 %v4040
        %v4107 = vunpack.c.l.bf16 %v4041
        %v4108 = vunpack.c.h.bf16 %v4041
        %v4109 = vunpack.c.l.bf16 %v4042
        %v4110 = vunpack.c.h.bf16 %v4042
        %v4111 = vunpack.c.l.bf16 %v4043
        %v4112 = vunpack.c.h.bf16 %v4043
        %v4113 = vunpack.c.l.bf16 %v4044
        %v4114 = vunpack.c.h.bf16 %v4044
        %v4115 = vunpack.c.l.bf16 %v4045
        %v4116 = vunpack.c.h.bf16 %v4045
        %v4117 = vunpack.c.l.bf16 %v4046
        %v4118 = vunpack.c.h.bf16 %v4046
        %v4119 = vunpack.c.l.bf16 %v4047
        %v4120 = vunpack.c.h.bf16 %v4047
        %v4121 = vunpack.c.l.bf16 %v4048
        %v4122 = vunpack.c.h.bf16 %v4048
        %v4123 = vunpack.c.l.bf16 %v4049
        %v4124 = vunpack.c.h.bf16 %v4049
        %v4125 = vunpack.c.l.bf16 %v4050
        %v4126 = vunpack.c.h.bf16 %v4050
        %v4127 = vunpack.c.l.bf16 %v4051
        %v4128 = vunpack.c.h.bf16 %v4051
        %v4129 = vunpack.c.l.bf16 %v4052
        %v4130 = vunpack.c.h.bf16 %v4052
        %v4131 = vunpack.c.l.bf16 %v4053
        %v4132 = vunpack.c.h.bf16 %v4053
        %v4133 = vunpack.c.l.bf16 %v4054
        %v4134 = vunpack.c.h.bf16 %v4054
        %v4135 = vunpack.c.l.bf16 %v4055
        %v4136 = vunpack.c.h.bf16 %v4055
        %v4137 = vunpack.c.l.bf16 %v4056
        %v4138 = vunpack.c.h.bf16 %v4056
        %v4139 = vunpack.c.l.bf16 %v4057
        %v4140 = vunpack.c.h.bf16 %v4057
        %v4141 = vunpack.c.l.bf16 %v4058
        %v4142 = vunpack.c.h.bf16 %v4058
        %v4143 = vunpack.c.l.bf16 %v4059
        %v4144 = vunpack.c.h.bf16 %v4059
        %v4145 = vunpack.c.l.bf16 %v4060
        %v4146 = vunpack.c.h.bf16 %v4060
        %v4147 = vunpack.c.l.bf16 %v4061
        %v4148 = vunpack.c.h.bf16 %v4061
        %v4149 = vunpack.c.l.bf16 %v4062
        %v4150 = vunpack.c.h.bf16 %v4062
        %v4151 = vunpack.c.l.bf16 %v4063
        %v4152 = vunpack.c.h.bf16 %v4063
        %v4153 = vunpack.c.l.bf16 %v4064
        %v4154 = vunpack.c.h.bf16 %v4064
        %v4155 = vunpack.c.l.bf16 %v4065
        %v4156 = vunpack.c.h.bf16 %v4065
        %v4157 = vunpack.c.l.bf16 %v4066
        %v4158 = vunpack.c.h.bf16 %v4066
        %v4159 = vunpack.c.l.bf16 %v4067
        %v4160 = vunpack.c.h.bf16 %v4067
        %v4161 = vunpack.c.l.bf16 %v4068
        %v4162 = vunpack.c.h.bf16 %v4068
        %v4163 = vunpack.c.l.bf16 %v4069
        %v4164 = vunpack.c.h.bf16 %v4069
        %v4165 = vunpack.c.l.bf16 %v4070
        %v4166 = vunpack.c.h.bf16 %v4070
        %v4167 = vunpack.c.l.bf16 %v4071
        %v4168 = vunpack.c.h.bf16 %v4071
        %v4169 = vunpack.c.l.bf16 %v4072
        %v4170 = vunpack.c.h.bf16 %v4072
        %v4171 = vunpack.c.l.bf16 %v4073
        %v4172 = vunpack.c.h.bf16 %v4073
        %v4173 = vunpack.c.l.bf16 %v4074
        %v4174 = vunpack.c.h.bf16 %v4074
        %v4175 = vunpack.c.l.bf16 %v4075
        %v4176 = vunpack.c.h.bf16 %v4075
        %v4177 = vunpack.c.l.bf16 %v4076
        %v4178 = vunpack.c.h.bf16 %v4076
        %v4179 = vunpack.c.l.bf16 %v4077
        %v4180 = vunpack.c.h.bf16 %v4077
        %v4181 = vunpack.c.l.bf16 %v4078
        %v4182 = vunpack.c.h.bf16 %v4078
        %v4183 = vunpack.c.l.bf16 %v4079
        %v4184 = vunpack.c.h.bf16 %v4079
        %v4185 = vunpack.c.l.bf16 %v4080
        %v4186 = vunpack.c.h.bf16 %v4080
        %v4187 = vunpack.c.l.bf16 %v4081
        %v4188 = vunpack.c.h.bf16 %v4081
        %v4189 = vunpack.c.l.bf16 %v4082
        %v4190 = vunpack.c.h.bf16 %v4082
        %v4191 = vunpack.c.l.bf16 %v4083
        %v4192 = vunpack.c.h.bf16 %v4083
        %v4193 = vunpack.c.l.bf16 %v4084
        %v4194 = vunpack.c.h.bf16 %v4084
        %v4195 = vunpack.c.l.bf16 %v4085
        %v4196 = vunpack.c.h.bf16 %v4085
        %v4197 = vunpack.c.l.bf16 %v4086
        %v4198 = vunpack.c.h.bf16 %v4086
        %v4199 = vunpack.c.l.bf16 %v4087
        %v4200 = vunpack.c.h.bf16 %v4087
        %v4201 = vunpack.c.l.bf16 %v4088
        %v4202 = vunpack.c.h.bf16 %v4088
        %v4203 = vunpack.c.l.bf16 %v4089
        %v4204 = vunpack.c.h.bf16 %v4089
        %v4205 = vunpack.c.l.bf16 %v4090
        %v4206 = vunpack.c.h.bf16 %v4090
        %v4207 = vunpack.c.l.bf16 %v4091
        %v4208 = vunpack.c.h.bf16 %v4091
        %v4209 = vunpack.c.l.bf16 %v4092
        %v4210 = vunpack.c.h.bf16 %v4092
        %v4211 = vunpack.c.l.bf16 %v4093
        %v4212 = vunpack.c.h.bf16 %v4093
        %v4213 = vunpack.c.l.bf16 %v4094
        %v4214 = vunpack.c.h.bf16 %v4094
        %v4215 = vunpack.c.l.bf16 %v4095
        %v4216 = vunpack.c.h.bf16 %v4095
        %v4217 = vunpack.c.l.bf16 %v4096
        %v4218 = vunpack.c.h.bf16 %v4096
        %v4219 = vunpack.c.l.bf16 %v4097
        %v4220 = vunpack.c.h.bf16 %v4097
        %v4221 = vunpack.c.l.bf16 %v4098
        %v4222 = vunpack.c.h.bf16 %v4098
        %v4223 = vunpack.c.l.bf16 %v4099
        %v4224 = vunpack.c.h.bf16 %v4099
        %v4225 = vunpack.c.l.bf16 %v4100
        %v4226 = vunpack.c.h.bf16 %v4100
        %v4227 = vunpack.c.l.bf16 %v4101
        %v4228 = vunpack.c.h.bf16 %v4101
        %v4229 = vunpack.c.l.bf16 %v4102
        %v4230 = vunpack.c.h.bf16 %v4102
        %v4231 = vadd.f32 %v4103, %v4119
        %v4232 = vadd.f32 %v4231, %v4135
        %v4233 = vadd.f32 %v4232, %v4151
        %v4234 = vadd.f32 %v4233, %v4167
        %v4235 = vadd.f32 %v4234, %v4183
        %v4236 = vadd.f32 %v4235, %v4199
        %v4237 = vadd.f32 %v4236, %v4215
        %v4238 = vadd.f32 %v4104, %v4120
        %v4239 = vadd.f32 %v4238, %v4136
        %v4240 = vadd.f32 %v4239, %v4152
        %v4241 = vadd.f32 %v4240, %v4168
        %v4242 = vadd.f32 %v4241, %v4184
        %v4243 = vadd.f32 %v4242, %v4200
        %v4244 = vadd.f32 %v4243, %v4216
        %v4245 = vadd.f32 %v4105, %v4121
        %v4246 = vadd.f32 %v4245, %v4137
        %v4247 = vadd.f32 %v4246, %v4153
        %v4248 = vadd.f32 %v4247, %v4169
        %v4249 = vadd.f32 %v4248, %v4185
        %v4250 = vadd.f32 %v4249, %v4201
        %v4251 = vadd.f32 %v4250, %v4217
        %v4252 = vadd.f32 %v4106, %v4122
        %v4253 = vadd.f32 %v4252, %v4138
        %v4254 = vadd.f32 %v4253, %v4154
        %v4255 = vadd.f32 %v4254, %v4170
        %v4256 = vadd.f32 %v4255, %v4186
        %v4257 = vadd.f32 %v4256, %v4202
        %v4258 = vadd.f32 %v4257, %v4218
        %v4259 = vadd.f32 %v4107, %v4123
        %v4260 = vadd.f32 %v4259, %v4139
        %v4261 = vadd.f32 %v4260, %v4155
        %v4262 = vadd.f32 %v4261, %v4171
        %v4263 = vadd.f32 %v4262, %v4187
        %v4264 = vadd.f32 %v4263, %v4203
        %v4265 = vadd.f32 %v4264, %v4219
        %v4266 = vadd.f32 %v4108, %v4124
        %v4267 = vadd.f32 %v4266, %v4140
        %v4268 = vadd.f32 %v4267, %v4156
        %v4269 = vadd.f32 %v4268, %v4172
        %v4270 = vadd.f32 %v4269, %v4188
        %v4271 = vadd.f32 %v4270, %v4204
        %v4272 = vadd.f32 %v4271, %v4220
        %v4273 = vadd.f32 %v4109, %v4125
        %v4274 = vadd.f32 %v4273, %v4141
        %v4275 = vadd.f32 %v4274, %v4157
        %v4276 = vadd.f32 %v4275, %v4173
        %v4277 = vadd.f32 %v4276, %v4189
        %v4278 = vadd.f32 %v4277, %v4205
        %v4279 = vadd.f32 %v4278, %v4221
        %v4280 = vadd.f32 %v4110, %v4126
        %v4281 = vadd.f32 %v4280, %v4142
        %v4282 = vadd.f32 %v4281, %v4158
        %v4283 = vadd.f32 %v4282, %v4174
        %v4284 = vadd.f32 %v4283, %v4190
        %v4285 = vadd.f32 %v4284, %v4206
        %v4286 = vadd.f32 %v4285, %v4222
        %v4287 = vadd.f32 %v4111, %v4127
        %v4288 = vadd.f32 %v4287, %v4143
        %v4289 = vadd.f32 %v4288, %v4159
        %v4290 = vadd.f32 %v4289, %v4175
        %v4291 = vadd.f32 %v4290, %v4191
        %v4292 = vadd.f32 %v4291, %v4207
        %v4293 = vadd.f32 %v4292, %v4223
        %v4294 = vadd.f32 %v4112, %v4128
        %v4295 = vadd.f32 %v4294, %v4144
        %v4296 = vadd.f32 %v4295, %v4160
        %v4297 = vadd.f32 %v4296, %v4176
        %v4298 = vadd.f32 %v4297, %v4192
        %v4299 = vadd.f32 %v4298, %v4208
        %v4300 = vadd.f32 %v4299, %v4224
        %v4301 = vadd.f32 %v4113, %v4129
        %v4302 = vadd.f32 %v4301, %v4145
        %v4303 = vadd.f32 %v4302, %v4161
        %v4304 = vadd.f32 %v4303, %v4177
        %v4305 = vadd.f32 %v4304, %v4193
        %v4306 = vadd.f32 %v4305, %v4209
        %v4307 = vadd.f32 %v4306, %v4225
        %v4308 = vadd.f32 %v4114, %v4130
        %v4309 = vadd.f32 %v4308, %v4146
        %v4310 = vadd.f32 %v4309, %v4162
        %v4311 = vadd.f32 %v4310, %v4178
        %v4312 = vadd.f32 %v4311, %v4194
        %v4313 = vadd.f32 %v4312, %v4210
        %v4314 = vadd.f32 %v4313, %v4226
        %v4315 = vadd.f32 %v4115, %v4131
        %v4316 = vadd.f32 %v4315, %v4147
        %v4317 = vadd.f32 %v4316, %v4163
        %v4318 = vadd.f32 %v4317, %v4179
        %v4319 = vadd.f32 %v4318, %v4195
        %v4320 = vadd.f32 %v4319, %v4211
        %v4321 = vadd.f32 %v4320, %v4227
        %v4322 = vadd.f32 %v4116, %v4132
        %v4323 = vadd.f32 %v4322, %v4148
        %v4324 = vadd.f32 %v4323, %v4164
        %v4325 = vadd.f32 %v4324, %v4180
        %v4326 = vadd.f32 %v4325, %v4196
        %v4327 = vadd.f32 %v4326, %v4212
        %v4328 = vadd.f32 %v4327, %v4228
        %v4329 = vadd.f32 %v4117, %v4133
        %v4330 = vadd.f32 %v4329, %v4149
        %v4331 = vadd.f32 %v4330, %v4165
        %v4332 = vadd.f32 %v4331, %v4181
        %v4333 = vadd.f32 %v4332, %v4197
        %v4334 = vadd.f32 %v4333, %v4213
        %v4335 = vadd.f32 %v4334, %v4229
        %v4336 = vadd.f32 %v4118, %v4134
        %v4337 = vadd.f32 %v4336, %v4150
        %v4338 = vadd.f32 %v4337, %v4166
        %v4339 = vadd.f32 %v4338, %v4182
        %v4340 = vadd.f32 %v4339, %v4198
        %v4341 = vadd.f32 %v4340, %v4214
        %v4342 = vadd.f32 %v4341, %v4230
        %v4343 = vpack.c.bf16 %v4244, %v4237
        %v4344 = vpack.c.bf16 %v4258, %v4251
        %v4345 = vpack.c.bf16 %v4272, %v4265
        %v4346 = vpack.c.bf16 %v4286, %v4279
        %v4347 = vpack.c.bf16 %v4300, %v4293
        %v4348 = vpack.c.bf16 %v4314, %v4307
        %v4349 = vpack.c.bf16 %v4328, %v4321
        %v4350 = vpack.c.bf16 %v4342, %v4335
        %v4351 = vunpack.c.l.bf16 %v4343
        %v4352 = vunpack.c.h.bf16 %v4343
        %v4353 = vunpack.c.l.bf16 %v4344
        %v4354 = vunpack.c.h.bf16 %v4344
        %v4355 = vunpack.c.l.bf16 %v4345
        %v4356 = vunpack.c.h.bf16 %v4345
        %v4357 = vunpack.c.l.bf16 %v4346
        %v4358 = vunpack.c.h.bf16 %v4346
        %v4359 = vunpack.c.l.bf16 %v4347
        %v4360 = vunpack.c.h.bf16 %v4347
        %v4361 = vunpack.c.l.bf16 %v4348
        %v4362 = vunpack.c.h.bf16 %v4348
        %v4363 = vunpack.c.l.bf16 %v4349
        %v4364 = vunpack.c.h.bf16 %v4349
        %v4365 = vunpack.c.l.bf16 %v4350
        %v4366 = vunpack.c.h.bf16 %v4350
        %v4367 = vadd.f32 %v3067, %v4351
        %v4368 = vadd.f32 %v3068, %v4352
        %v4369 = vadd.f32 %v3069, %v4353
        %v4370 = vadd.f32 %v3070, %v4354
        %v4371 = vadd.f32 %v3071, %v4355
        %v4372 = vadd.f32 %v3072, %v4356
        %v4373 = vadd.f32 %v3073, %v4357
        %v4374 = vadd.f32 %v3074, %v4358
        %v4375 = vadd.f32 %v3075, %v4359
        %v4376 = vadd.f32 %v3076, %v4360
        %v4377 = vadd.f32 %v3077, %v4361
        %v4378 = vadd.f32 %v3078, %v4362
        %v4379 = vadd.f32 %v3079, %v4363
        %v4380 = vadd.f32 %v3080, %v4364
        %v4381 = vadd.f32 %v3081, %v4365
        %v4382 = vadd.f32 %v3082, %v4366
        %v4383 = vlaneseq
        %v4384 = vshrl.u32 %v4383, 7
        %v4385 = vsub.s32 0, %v4384
        %v4386 = vrot.slane %v1761, %v4385
        %4388 = vbcast.lane.b32.xlu0 %v4386, 256
        %v4389 = vpop.permute.xlu0 %4388
        %s4391 = sor.u32 256, 8
        %4392 = vbcast.lane.b32.xlu0 %v4386, %s4391
        %v4393 = vpop.permute.xlu0 %4392
        %s4395 = sor.u32 256, 16
        %4396 = vbcast.lane.b32.xlu0 %v4386, %s4395
        %v4397 = vpop.permute.xlu0 %4396
        %s4399 = sor.u32 256, 24
        %4400 = vbcast.lane.b32.xlu0 %v4386, %s4399
        %v4401 = vpop.permute.xlu0 %4400
        %s4403 = sor.u32 256, 32
        %4404 = vbcast.lane.b32.xlu0 %v4386, %s4403
        %v4405 = vpop.permute.xlu0 %4404
        %s4407 = sor.u32 256, 40
        %4408 = vbcast.lane.b32.xlu0 %v4386, %s4407
        %v4409 = vpop.permute.xlu0 %4408
        %s4411 = sor.u32 256, 48
        %4412 = vbcast.lane.b32.xlu0 %v4386, %s4411
        %v4413 = vpop.permute.xlu0 %4412
        %s4415 = sor.u32 256, 56
        %4416 = vbcast.lane.b32.xlu0 %v4386, %s4415
        %v4417 = vpop.permute.xlu0 %4416
        %s4419 = sor.u32 256, 64
        %4420 = vbcast.lane.b32.xlu0 %v4386, %s4419
        %v4421 = vpop.permute.xlu0 %4420
        %s4423 = sor.u32 256, 72
        %4424 = vbcast.lane.b32.xlu0 %v4386, %s4423
        %v4425 = vpop.permute.xlu0 %4424
        %s4427 = sor.u32 256, 80
        %4428 = vbcast.lane.b32.xlu0 %v4386, %s4427
        %v4429 = vpop.permute.xlu0 %4428
        %s4431 = sor.u32 256, 88
        %4432 = vbcast.lane.b32.xlu0 %v4386, %s4431
        %v4433 = vpop.permute.xlu0 %4432
        %s4435 = sor.u32 256, 96
        %4436 = vbcast.lane.b32.xlu0 %v4386, %s4435
        %v4437 = vpop.permute.xlu0 %4436
        %s4439 = sor.u32 256, 104
        %4440 = vbcast.lane.b32.xlu0 %v4386, %s4439
        %v4441 = vpop.permute.xlu0 %4440
        %s4443 = sor.u32 256, 112
        %4444 = vbcast.lane.b32.xlu0 %v4386, %s4443
        %v4445 = vpop.permute.xlu0 %4444
        %s4447 = sor.u32 256, 120
        %4448 = vbcast.lane.b32.xlu0 %v4386, %s4447
        %v4449 = vpop.permute.xlu0 %4448
        %v4450 = vlaneseq
        %v4451 = vshrl.u32 %v4450, 7
        %v4452 = vsub.s32 1, %v4451
        %v4453 = vrot.slane %v1761, %v4452
        %4455 = vbcast.lane.b32.xlu0 %v4453, 256
        %v4456 = vpop.permute.xlu0 %4455
        %s4458 = sor.u32 256, 8
        %4459 = vbcast.lane.b32.xlu0 %v4453, %s4458
        %v4460 = vpop.permute.xlu0 %4459
        %s4462 = sor.u32 256, 16
        %4463 = vbcast.lane.b32.xlu0 %v4453, %s4462
        %v4464 = vpop.permute.xlu0 %4463
        %s4466 = sor.u32 256, 24
        %4467 = vbcast.lane.b32.xlu0 %v4453, %s4466
        %v4468 = vpop.permute.xlu0 %4467
        %s4470 = sor.u32 256, 32
        %4471 = vbcast.lane.b32.xlu0 %v4453, %s4470
        %v4472 = vpop.permute.xlu0 %4471
        %s4474 = sor.u32 256, 40
        %4475 = vbcast.lane.b32.xlu0 %v4453, %s4474
        %v4476 = vpop.permute.xlu0 %4475
        %s4478 = sor.u32 256, 48
        %4479 = vbcast.lane.b32.xlu0 %v4453, %s4478
        %v4480 = vpop.permute.xlu0 %4479
        %s4482 = sor.u32 256, 56
        %4483 = vbcast.lane.b32.xlu0 %v4453, %s4482
        %v4484 = vpop.permute.xlu0 %4483
        %s4486 = sor.u32 256, 64
        %4487 = vbcast.lane.b32.xlu0 %v4453, %s4486
        %v4488 = vpop.permute.xlu0 %4487
        %s4490 = sor.u32 256, 72
        %4491 = vbcast.lane.b32.xlu0 %v4453, %s4490
        %v4492 = vpop.permute.xlu0 %4491
        %s4494 = sor.u32 256, 80
        %4495 = vbcast.lane.b32.xlu0 %v4453, %s4494
        %v4496 = vpop.permute.xlu0 %4495
        %s4498 = sor.u32 256, 88
        %4499 = vbcast.lane.b32.xlu0 %v4453, %s4498
        %v4500 = vpop.permute.xlu0 %4499
        %s4502 = sor.u32 256, 96
        %4503 = vbcast.lane.b32.xlu0 %v4453, %s4502
        %v4504 = vpop.permute.xlu0 %4503
        %s4506 = sor.u32 256, 104
        %4507 = vbcast.lane.b32.xlu0 %v4453, %s4506
        %v4508 = vpop.permute.xlu0 %4507
        %s4510 = sor.u32 256, 112
        %4511 = vbcast.lane.b32.xlu0 %v4453, %s4510
        %v4512 = vpop.permute.xlu0 %4511
        %s4514 = sor.u32 256, 120
        %4515 = vbcast.lane.b32.xlu0 %v4453, %s4514
        %v4516 = vpop.permute.xlu0 %4515
        %v4517 = vlaneseq
        %v4518 = vshrl.u32 %v4517, 7
        %v4519 = vsub.s32 2, %v4518
        %v4520 = vrot.slane %v1761, %v4519
        %4522 = vbcast.lane.b32.xlu0 %v4520, 256
        %v4523 = vpop.permute.xlu0 %4522
        %s4525 = sor.u32 256, 8
        %4526 = vbcast.lane.b32.xlu0 %v4520, %s4525
        %v4527 = vpop.permute.xlu0 %4526
        %s4529 = sor.u32 256, 16
        %4530 = vbcast.lane.b32.xlu0 %v4520, %s4529
        %v4531 = vpop.permute.xlu0 %4530
        %s4533 = sor.u32 256, 24
        %4534 = vbcast.lane.b32.xlu0 %v4520, %s4533
        %v4535 = vpop.permute.xlu0 %4534
        %s4537 = sor.u32 256, 32
        %4538 = vbcast.lane.b32.xlu0 %v4520, %s4537
        %v4539 = vpop.permute.xlu0 %4538
        %s4541 = sor.u32 256, 40
        %4542 = vbcast.lane.b32.xlu0 %v4520, %s4541
        %v4543 = vpop.permute.xlu0 %4542
        %s4545 = sor.u32 256, 48
        %4546 = vbcast.lane.b32.xlu0 %v4520, %s4545
        %v4547 = vpop.permute.xlu0 %4546
        %s4549 = sor.u32 256, 56
        %4550 = vbcast.lane.b32.xlu0 %v4520, %s4549
        %v4551 = vpop.permute.xlu0 %4550
        %s4553 = sor.u32 256, 64
        %4554 = vbcast.lane.b32.xlu0 %v4520, %s4553
        %v4555 = vpop.permute.xlu0 %4554
        %s4557 = sor.u32 256, 72
        %4558 = vbcast.lane.b32.xlu0 %v4520, %s4557
        %v4559 = vpop.permute.xlu0 %4558
        %s4561 = sor.u32 256, 80
        %4562 = vbcast.lane.b32.xlu0 %v4520, %s4561
        %v4563 = vpop.permute.xlu0 %4562
        %s4565 = sor.u32 256, 88
        %4566 = vbcast.lane.b32.xlu0 %v4520, %s4565
        %v4567 = vpop.permute.xlu0 %4566
        %s4569 = sor.u32 256, 96
        %4570 = vbcast.lane.b32.xlu0 %v4520, %s4569
        %v4571 = vpop.permute.xlu0 %4570
        %s4573 = sor.u32 256, 104
        %4574 = vbcast.lane.b32.xlu0 %v4520, %s4573
        %v4575 = vpop.permute.xlu0 %4574
        %s4577 = sor.u32 256, 112
        %4578 = vbcast.lane.b32.xlu0 %v4520, %s4577
        %v4579 = vpop.permute.xlu0 %4578
        %s4581 = sor.u32 256, 120
        %4582 = vbcast.lane.b32.xlu0 %v4520, %s4581
        %v4583 = vpop.permute.xlu0 %4582
        %v4584 = vlaneseq
        %v4585 = vshrl.u32 %v4584, 7
        %v4586 = vsub.s32 3, %v4585
        %v4587 = vrot.slane %v1761, %v4586
        %4589 = vbcast.lane.b32.xlu0 %v4587, 256
        %v4590 = vpop.permute.xlu0 %4589
        %s4592 = sor.u32 256, 8
        %4593 = vbcast.lane.b32.xlu0 %v4587, %s4592
        %v4594 = vpop.permute.xlu0 %4593
        %s4596 = sor.u32 256, 16
        %4597 = vbcast.lane.b32.xlu0 %v4587, %s4596
        %v4598 = vpop.permute.xlu0 %4597
        %s4600 = sor.u32 256, 24
        %4601 = vbcast.lane.b32.xlu0 %v4587, %s4600
        %v4602 = vpop.permute.xlu0 %4601
        %s4604 = sor.u32 256, 32
        %4605 = vbcast.lane.b32.xlu0 %v4587, %s4604
        %v4606 = vpop.permute.xlu0 %4605
        %s4608 = sor.u32 256, 40
        %4609 = vbcast.lane.b32.xlu0 %v4587, %s4608
        %v4610 = vpop.permute.xlu0 %4609
        %s4612 = sor.u32 256, 48
        %4613 = vbcast.lane.b32.xlu0 %v4587, %s4612
        %v4614 = vpop.permute.xlu0 %4613
        %s4616 = sor.u32 256, 56
        %4617 = vbcast.lane.b32.xlu0 %v4587, %s4616
        %v4618 = vpop.permute.xlu0 %4617
        %s4620 = sor.u32 256, 64
        %4621 = vbcast.lane.b32.xlu0 %v4587, %s4620
        %v4622 = vpop.permute.xlu0 %4621
        %s4624 = sor.u32 256, 72
        %4625 = vbcast.lane.b32.xlu0 %v4587, %s4624
        %v4626 = vpop.permute.xlu0 %4625
        %s4628 = sor.u32 256, 80
        %4629 = vbcast.lane.b32.xlu0 %v4587, %s4628
        %v4630 = vpop.permute.xlu0 %4629
        %s4632 = sor.u32 256, 88
        %4633 = vbcast.lane.b32.xlu0 %v4587, %s4632
        %v4634 = vpop.permute.xlu0 %4633
        %s4636 = sor.u32 256, 96
        %4637 = vbcast.lane.b32.xlu0 %v4587, %s4636
        %v4638 = vpop.permute.xlu0 %4637
        %s4640 = sor.u32 256, 104
        %4641 = vbcast.lane.b32.xlu0 %v4587, %s4640
        %v4642 = vpop.permute.xlu0 %4641
        %s4644 = sor.u32 256, 112
        %4645 = vbcast.lane.b32.xlu0 %v4587, %s4644
        %v4646 = vpop.permute.xlu0 %4645
        %s4648 = sor.u32 256, 120
        %4649 = vbcast.lane.b32.xlu0 %v4587, %s4648
        %v4650 = vpop.permute.xlu0 %4649
        %v4651 = vlaneseq
        %v4652 = vshrl.u32 %v4651, 7
        %v4653 = vsub.s32 4, %v4652
        %v4654 = vrot.slane %v1761, %v4653
        %4656 = vbcast.lane.b32.xlu0 %v4654, 256
        %v4657 = vpop.permute.xlu0 %4656
        %s4659 = sor.u32 256, 8
        %4660 = vbcast.lane.b32.xlu0 %v4654, %s4659
        %v4661 = vpop.permute.xlu0 %4660
        %s4663 = sor.u32 256, 16
        %4664 = vbcast.lane.b32.xlu0 %v4654, %s4663
        %v4665 = vpop.permute.xlu0 %4664
        %s4667 = sor.u32 256, 24
        %4668 = vbcast.lane.b32.xlu0 %v4654, %s4667
        %v4669 = vpop.permute.xlu0 %4668
        %s4671 = sor.u32 256, 32
        %4672 = vbcast.lane.b32.xlu0 %v4654, %s4671
        %v4673 = vpop.permute.xlu0 %4672
        %s4675 = sor.u32 256, 40
        %4676 = vbcast.lane.b32.xlu0 %v4654, %s4675
        %v4677 = vpop.permute.xlu0 %4676
        %s4679 = sor.u32 256, 48
        %4680 = vbcast.lane.b32.xlu0 %v4654, %s4679
        %v4681 = vpop.permute.xlu0 %4680
        %s4683 = sor.u32 256, 56
        %4684 = vbcast.lane.b32.xlu0 %v4654, %s4683
        %v4685 = vpop.permute.xlu0 %4684
        %s4687 = sor.u32 256, 64
        %4688 = vbcast.lane.b32.xlu0 %v4654, %s4687
        %v4689 = vpop.permute.xlu0 %4688
        %s4691 = sor.u32 256, 72
        %4692 = vbcast.lane.b32.xlu0 %v4654, %s4691
        %v4693 = vpop.permute.xlu0 %4692
        %s4695 = sor.u32 256, 80
        %4696 = vbcast.lane.b32.xlu0 %v4654, %s4695
        %v4697 = vpop.permute.xlu0 %4696
        %s4699 = sor.u32 256, 88
        %4700 = vbcast.lane.b32.xlu0 %v4654, %s4699
        %v4701 = vpop.permute.xlu0 %4700
        %s4703 = sor.u32 256, 96
        %4704 = vbcast.lane.b32.xlu0 %v4654, %s4703
        %v4705 = vpop.permute.xlu0 %4704
        %s4707 = sor.u32 256, 104
        %4708 = vbcast.lane.b32.xlu0 %v4654, %s4707
        %v4709 = vpop.permute.xlu0 %4708
        %s4711 = sor.u32 256, 112
        %4712 = vbcast.lane.b32.xlu0 %v4654, %s4711
        %v4713 = vpop.permute.xlu0 %4712
        %s4715 = sor.u32 256, 120
        %4716 = vbcast.lane.b32.xlu0 %v4654, %s4715
        %v4717 = vpop.permute.xlu0 %4716
        %v4718 = vlaneseq
        %v4719 = vshrl.u32 %v4718, 7
        %v4720 = vsub.s32 5, %v4719
        %v4721 = vrot.slane %v1761, %v4720
        %4723 = vbcast.lane.b32.xlu0 %v4721, 256
        %v4724 = vpop.permute.xlu0 %4723
        %s4726 = sor.u32 256, 8
        %4727 = vbcast.lane.b32.xlu0 %v4721, %s4726
        %v4728 = vpop.permute.xlu0 %4727
        %s4730 = sor.u32 256, 16
        %4731 = vbcast.lane.b32.xlu0 %v4721, %s4730
        %v4732 = vpop.permute.xlu0 %4731
        %s4734 = sor.u32 256, 24
        %4735 = vbcast.lane.b32.xlu0 %v4721, %s4734
        %v4736 = vpop.permute.xlu0 %4735
        %s4738 = sor.u32 256, 32
        %4739 = vbcast.lane.b32.xlu0 %v4721, %s4738
        %v4740 = vpop.permute.xlu0 %4739
        %s4742 = sor.u32 256, 40
        %4743 = vbcast.lane.b32.xlu0 %v4721, %s4742
        %v4744 = vpop.permute.xlu0 %4743
        %s4746 = sor.u32 256, 48
        %4747 = vbcast.lane.b32.xlu0 %v4721, %s4746
        %v4748 = vpop.permute.xlu0 %4747
        %s4750 = sor.u32 256, 56
        %4751 = vbcast.lane.b32.xlu0 %v4721, %s4750
        %v4752 = vpop.permute.xlu0 %4751
        %s4754 = sor.u32 256, 64
        %4755 = vbcast.lane.b32.xlu0 %v4721, %s4754
        %v4756 = vpop.permute.xlu0 %4755
        %s4758 = sor.u32 256, 72
        %4759 = vbcast.lane.b32.xlu0 %v4721, %s4758
        %v4760 = vpop.permute.xlu0 %4759
        %s4762 = sor.u32 256, 80
        %4763 = vbcast.lane.b32.xlu0 %v4721, %s4762
        %v4764 = vpop.permute.xlu0 %4763
        %s4766 = sor.u32 256, 88
        %4767 = vbcast.lane.b32.xlu0 %v4721, %s4766
        %v4768 = vpop.permute.xlu0 %4767
        %s4770 = sor.u32 256, 96
        %4771 = vbcast.lane.b32.xlu0 %v4721, %s4770
        %v4772 = vpop.permute.xlu0 %4771
        %s4774 = sor.u32 256, 104
        %4775 = vbcast.lane.b32.xlu0 %v4721, %s4774
        %v4776 = vpop.permute.xlu0 %4775
        %s4778 = sor.u32 256, 112
        %4779 = vbcast.lane.b32.xlu0 %v4721, %s4778
        %v4780 = vpop.permute.xlu0 %4779
        %s4782 = sor.u32 256, 120
        %4783 = vbcast.lane.b32.xlu0 %v4721, %s4782
        %v4784 = vpop.permute.xlu0 %4783
        %v4785 = vlaneseq
        %v4786 = vshrl.u32 %v4785, 7
        %v4787 = vsub.s32 6, %v4786
        %v4788 = vrot.slane %v1761, %v4787
        %4790 = vbcast.lane.b32.xlu0 %v4788, 256
        %v4791 = vpop.permute.xlu0 %4790
        %s4793 = sor.u32 256, 8
        %4794 = vbcast.lane.b32.xlu0 %v4788, %s4793
        %v4795 = vpop.permute.xlu0 %4794
        %s4797 = sor.u32 256, 16
        %4798 = vbcast.lane.b32.xlu0 %v4788, %s4797
        %v4799 = vpop.permute.xlu0 %4798
        %s4801 = sor.u32 256, 24
        %4802 = vbcast.lane.b32.xlu0 %v4788, %s4801
        %v4803 = vpop.permute.xlu0 %4802
        %s4805 = sor.u32 256, 32
        %4806 = vbcast.lane.b32.xlu0 %v4788, %s4805
        %v4807 = vpop.permute.xlu0 %4806
        %s4809 = sor.u32 256, 40
        %4810 = vbcast.lane.b32.xlu0 %v4788, %s4809
        %v4811 = vpop.permute.xlu0 %4810
        %s4813 = sor.u32 256, 48
        %4814 = vbcast.lane.b32.xlu0 %v4788, %s4813
        %v4815 = vpop.permute.xlu0 %4814
        %s4817 = sor.u32 256, 56
        %4818 = vbcast.lane.b32.xlu0 %v4788, %s4817
        %v4819 = vpop.permute.xlu0 %4818
        %s4821 = sor.u32 256, 64
        %4822 = vbcast.lane.b32.xlu0 %v4788, %s4821
        %v4823 = vpop.permute.xlu0 %4822
        %s4825 = sor.u32 256, 72
        %4826 = vbcast.lane.b32.xlu0 %v4788, %s4825
        %v4827 = vpop.permute.xlu0 %4826
        %s4829 = sor.u32 256, 80
        %4830 = vbcast.lane.b32.xlu0 %v4788, %s4829
        %v4831 = vpop.permute.xlu0 %4830
        %s4833 = sor.u32 256, 88
        %4834 = vbcast.lane.b32.xlu0 %v4788, %s4833
        %v4835 = vpop.permute.xlu0 %4834
        %s4837 = sor.u32 256, 96
        %4838 = vbcast.lane.b32.xlu0 %v4788, %s4837
        %v4839 = vpop.permute.xlu0 %4838
        %s4841 = sor.u32 256, 104
        %4842 = vbcast.lane.b32.xlu0 %v4788, %s4841
        %v4843 = vpop.permute.xlu0 %4842
        %s4845 = sor.u32 256, 112
        %4846 = vbcast.lane.b32.xlu0 %v4788, %s4845
        %v4847 = vpop.permute.xlu0 %4846
        %s4849 = sor.u32 256, 120
        %4850 = vbcast.lane.b32.xlu0 %v4788, %s4849
        %v4851 = vpop.permute.xlu0 %4850
        %v4852 = vlaneseq
        %v4853 = vshrl.u32 %v4852, 7
        %v4854 = vsub.s32 7, %v4853
        %v4855 = vrot.slane %v1761, %v4854
        %4857 = vbcast.lane.b32.xlu0 %v4855, 256
        %v4858 = vpop.permute.xlu0 %4857
        %s4860 = sor.u32 256, 8
        %4861 = vbcast.lane.b32.xlu0 %v4855, %s4860
        %v4862 = vpop.permute.xlu0 %4861
        %s4864 = sor.u32 256, 16
        %4865 = vbcast.lane.b32.xlu0 %v4855, %s4864
        %v4866 = vpop.permute.xlu0 %4865
        %s4868 = sor.u32 256, 24
        %4869 = vbcast.lane.b32.xlu0 %v4855, %s4868
        %v4870 = vpop.permute.xlu0 %4869
        %s4872 = sor.u32 256, 32
        %4873 = vbcast.lane.b32.xlu0 %v4855, %s4872
        %v4874 = vpop.permute.xlu0 %4873
        %s4876 = sor.u32 256, 40
        %4877 = vbcast.lane.b32.xlu0 %v4855, %s4876
        %v4878 = vpop.permute.xlu0 %4877
        %s4880 = sor.u32 256, 48
        %4881 = vbcast.lane.b32.xlu0 %v4855, %s4880
        %v4882 = vpop.permute.xlu0 %4881
        %s4884 = sor.u32 256, 56
        %4885 = vbcast.lane.b32.xlu0 %v4855, %s4884
        %v4886 = vpop.permute.xlu0 %4885
        %s4888 = sor.u32 256, 64
        %4889 = vbcast.lane.b32.xlu0 %v4855, %s4888
        %v4890 = vpop.permute.xlu0 %4889
        %s4892 = sor.u32 256, 72
        %4893 = vbcast.lane.b32.xlu0 %v4855, %s4892
        %v4894 = vpop.permute.xlu0 %4893
        %s4896 = sor.u32 256, 80
        %4897 = vbcast.lane.b32.xlu0 %v4855, %s4896
        %v4898 = vpop.permute.xlu0 %4897
        %s4900 = sor.u32 256, 88
        %4901 = vbcast.lane.b32.xlu0 %v4855, %s4900
        %v4902 = vpop.permute.xlu0 %4901
        %s4904 = sor.u32 256, 96
        %4905 = vbcast.lane.b32.xlu0 %v4855, %s4904
        %v4906 = vpop.permute.xlu0 %4905
        %s4908 = sor.u32 256, 104
        %4909 = vbcast.lane.b32.xlu0 %v4855, %s4908
        %v4910 = vpop.permute.xlu0 %4909
        %s4912 = sor.u32 256, 112
        %4913 = vbcast.lane.b32.xlu0 %v4855, %s4912
        %v4914 = vpop.permute.xlu0 %4913
        %s4916 = sor.u32 256, 120
        %4917 = vbcast.lane.b32.xlu0 %v4855, %s4916
        %v4918 = vpop.permute.xlu0 %4917
        %v4919 = vpack.c.bf16 %v4393, %v4389
        %v4920 = vpack.c.bf16 %v4401, %v4397
        %v4921 = vpack.c.bf16 %v4409, %v4405
        %v4922 = vpack.c.bf16 %v4417, %v4413
        %v4923 = vpack.c.bf16 %v4425, %v4421
        %v4924 = vpack.c.bf16 %v4433, %v4429
        %v4925 = vpack.c.bf16 %v4441, %v4437
        %v4926 = vpack.c.bf16 %v4449, %v4445
        %v4927 = vpack.c.bf16 %v4460, %v4456
        %v4928 = vpack.c.bf16 %v4468, %v4464
        %v4929 = vpack.c.bf16 %v4476, %v4472
        %v4930 = vpack.c.bf16 %v4484, %v4480
        %v4931 = vpack.c.bf16 %v4492, %v4488
        %v4932 = vpack.c.bf16 %v4500, %v4496
        %v4933 = vpack.c.bf16 %v4508, %v4504
        %v4934 = vpack.c.bf16 %v4516, %v4512
        %v4935 = vpack.c.bf16 %v4527, %v4523
        %v4936 = vpack.c.bf16 %v4535, %v4531
        %v4937 = vpack.c.bf16 %v4543, %v4539
        %v4938 = vpack.c.bf16 %v4551, %v4547
        %v4939 = vpack.c.bf16 %v4559, %v4555
        %v4940 = vpack.c.bf16 %v4567, %v4563
        %v4941 = vpack.c.bf16 %v4575, %v4571
        %v4942 = vpack.c.bf16 %v4583, %v4579
        %v4943 = vpack.c.bf16 %v4594, %v4590
        %v4944 = vpack.c.bf16 %v4602, %v4598
        %v4945 = vpack.c.bf16 %v4610, %v4606
        %v4946 = vpack.c.bf16 %v4618, %v4614
        %v4947 = vpack.c.bf16 %v4626, %v4622
        %v4948 = vpack.c.bf16 %v4634, %v4630
        %v4949 = vpack.c.bf16 %v4642, %v4638
        %v4950 = vpack.c.bf16 %v4650, %v4646
        %v4951 = vpack.c.bf16 %v4661, %v4657
        %v4952 = vpack.c.bf16 %v4669, %v4665
        %v4953 = vpack.c.bf16 %v4677, %v4673
        %v4954 = vpack.c.bf16 %v4685, %v4681
        %v4955 = vpack.c.bf16 %v4693, %v4689
        %v4956 = vpack.c.bf16 %v4701, %v4697
        %v4957 = vpack.c.bf16 %v4709, %v4705
        %v4958 = vpack.c.bf16 %v4717, %v4713
        %v4959 = vpack.c.bf16 %v4728, %v4724
        %v4960 = vpack.c.bf16 %v4736, %v4732
        %v4961 = vpack.c.bf16 %v4744, %v4740
        %v4962 = vpack.c.bf16 %v4752, %v4748
        %v4963 = vpack.c.bf16 %v4760, %v4756
        %v4964 = vpack.c.bf16 %v4768, %v4764
        %v4965 = vpack.c.bf16 %v4776, %v4772
        %v4966 = vpack.c.bf16 %v4784, %v4780
        %v4967 = vpack.c.bf16 %v4795, %v4791
        %v4968 = vpack.c.bf16 %v4803, %v4799
        %v4969 = vpack.c.bf16 %v4811, %v4807
        %v4970 = vpack.c.bf16 %v4819, %v4815
        %v4971 = vpack.c.bf16 %v4827, %v4823
        %v4972 = vpack.c.bf16 %v4835, %v4831
        %v4973 = vpack.c.bf16 %v4843, %v4839
        %v4974 = vpack.c.bf16 %v4851, %v4847
        %v4975 = vpack.c.bf16 %v4862, %v4858
        %v4976 = vpack.c.bf16 %v4870, %v4866
        %v4977 = vpack.c.bf16 %v4878, %v4874
        %v4978 = vpack.c.bf16 %v4886, %v4882
        %v4979 = vpack.c.bf16 %v4894, %v4890
        %v4980 = vpack.c.bf16 %v4902, %v4898
        %v4981 = vpack.c.bf16 %v4910, %v4906
        %v4982 = vpack.c.bf16 %v4918, %v4914
        %v4984 = vcombine.high %v1777, %v1777
        %v4986 = vunpack.c.l.s4 1966171168
        %v4987 = vunpack.c.0.s8 %v4986
        %v4988 = vlaneseq
        %v4989 = vshrl.u32 %v4988, 7
        %v4990 = vsub.s32 %v4987, %v4989
        %v4991 = vrot.slane %v1777, %v4990
        %v4993 = vunpack.c.l.s4 1966171168
        %v4994 = vunpack.c.0.s8 %v4993
        %v4995 = vlaneseq
        %v4996 = vshrl.u32 %v4995, 7
        %v4997 = vsub.s32 %v4994, %v4996
        %v4998 = vrot.slane %v4984, %v4997
        %v4999 = vcombine.high %v4991, %v4991
        %v5000 = vcombine.high %v4998, %v4998
        %v5002 = vunpack.c.l.s4 1966171168
        %v5003 = vunpack.c.0.s8 %v5002
        %v5004 = vlaneseq
        %v5005 = vshrl.u32 %v5004, 7
        %v5006 = vsub.s32 %v5003, %v5005
        %v5007 = vrot.slane %v4991, %v5006
        %v5009 = vunpack.c.l.s4 1966171168
        %v5010 = vunpack.c.0.s8 %v5009
        %v5011 = vlaneseq
        %v5012 = vshrl.u32 %v5011, 7
        %v5013 = vsub.s32 %v5010, %v5012
        %v5014 = vrot.slane %v4998, %v5013
        %v5016 = vunpack.c.l.s4 1966171168
        %v5017 = vunpack.c.0.s8 %v5016
        %v5018 = vlaneseq
        %v5019 = vshrl.u32 %v5018, 7
        %v5020 = vsub.s32 %v5017, %v5019
        %v5021 = vrot.slane %v4999, %v5020
        %v5023 = vunpack.c.l.s4 1966171168
        %v5024 = vunpack.c.0.s8 %v5023
        %v5025 = vlaneseq
        %v5026 = vshrl.u32 %v5025, 7
        %v5027 = vsub.s32 %v5024, %v5026
        %v5028 = vrot.slane %v5000, %v5027
        %v5029 = vcombine.high %v5007, %v5007
        %v5030 = vcombine.high %v5014, %v5014
        %v5031 = vcombine.high %v5021, %v5021
        %v5032 = vcombine.high %v5028, %v5028
        %v5041 = vpack.c.bf16 %v5007, %v5007
        %v5042 = vpack.c.bf16 %v5021, %v5021
        %v5043 = vpack.c.bf16 %v5029, %v5029
        %v5044 = vpack.c.bf16 %v5031, %v5031
        %v5045 = vpack.c.bf16 %v5014, %v5014
        %v5046 = vpack.c.bf16 %v5028, %v5028
        %v5047 = vpack.c.bf16 %v5030, %v5030
        %v5048 = vpack.c.bf16 %v5032, %v5032
        %v5050 = vcombine.high %v1781, %v1781
        %v5052 = vunpack.c.l.s4 1966171168
        %v5053 = vunpack.c.0.s8 %v5052
        %v5054 = vlaneseq
        %v5055 = vshrl.u32 %v5054, 7
        %v5056 = vsub.s32 %v5053, %v5055
        %v5057 = vrot.slane %v1781, %v5056
        %v5059 = vunpack.c.l.s4 1966171168
        %v5060 = vunpack.c.0.s8 %v5059
        %v5061 = vlaneseq
        %v5062 = vshrl.u32 %v5061, 7
        %v5063 = vsub.s32 %v5060, %v5062
        %v5064 = vrot.slane %v5050, %v5063
        %v5065 = vcombine.high %v5057, %v5057
        %v5066 = vcombine.high %v5064, %v5064
        %v5068 = vunpack.c.l.s4 1966171168
        %v5069 = vunpack.c.0.s8 %v5068
        %v5070 = vlaneseq
        %v5071 = vshrl.u32 %v5070, 7
        %v5072 = vsub.s32 %v5069, %v5071
        %v5073 = vrot.slane %v5057, %v5072
        %v5075 = vunpack.c.l.s4 1966171168
        %v5076 = vunpack.c.0.s8 %v5075
        %v5077 = vlaneseq
        %v5078 = vshrl.u32 %v5077, 7
        %v5079 = vsub.s32 %v5076, %v5078
        %v5080 = vrot.slane %v5064, %v5079
        %v5082 = vunpack.c.l.s4 1966171168
        %v5083 = vunpack.c.0.s8 %v5082
        %v5084 = vlaneseq
        %v5085 = vshrl.u32 %v5084, 7
        %v5086 = vsub.s32 %v5083, %v5085
        %v5087 = vrot.slane %v5065, %v5086
        %v5089 = vunpack.c.l.s4 1966171168
        %v5090 = vunpack.c.0.s8 %v5089
        %v5091 = vlaneseq
        %v5092 = vshrl.u32 %v5091, 7
        %v5093 = vsub.s32 %v5090, %v5092
        %v5094 = vrot.slane %v5066, %v5093
        %v5095 = vcombine.high %v5073, %v5073
        %v5096 = vcombine.high %v5080, %v5080
        %v5097 = vcombine.high %v5087, %v5087
        %v5098 = vcombine.high %v5094, %v5094
        %v5107 = vpack.c.bf16 %v5073, %v5073
        %v5108 = vpack.c.bf16 %v5087, %v5087
        %v5109 = vpack.c.bf16 %v5095, %v5095
        %v5110 = vpack.c.bf16 %v5097, %v5097
        %v5111 = vpack.c.bf16 %v5080, %v5080
        %v5112 = vpack.c.bf16 %v5094, %v5094
        %v5113 = vpack.c.bf16 %v5096, %v5096
        %v5114 = vpack.c.bf16 %v5098, %v5098
        %v5116 = vpack.i.b16 %v5041, %v5041
        %v5118 = vlaneseq
        %v5119 = vshrl.u32 %v5118, 7
        %v5120 = vsub.s32 0, %v5119
        %v5121 = vrot.slane %v5116, %v5120
        %v5123 = vpack.i.b16 %v5042, %v5042
        %v5125 = vlaneseq
        %v5126 = vshrl.u32 %v5125, 7
        %v5127 = vsub.s32 0, %v5126
        %v5128 = vrot.slane %v5123, %v5127
        %v5130 = vpack.i.b16 %v5043, %v5043
        %v5132 = vlaneseq
        %v5133 = vshrl.u32 %v5132, 7
        %v5134 = vsub.s32 0, %v5133
        %v5135 = vrot.slane %v5130, %v5134
        %v5137 = vpack.i.b16 %v5044, %v5044
        %v5139 = vlaneseq
        %v5140 = vshrl.u32 %v5139, 7
        %v5141 = vsub.s32 0, %v5140
        %v5142 = vrot.slane %v5137, %v5141
        %v5144 = vpack.i.b16 %v5045, %v5045
        %v5146 = vlaneseq
        %v5147 = vshrl.u32 %v5146, 7
        %v5148 = vsub.s32 0, %v5147
        %v5149 = vrot.slane %v5144, %v5148
        %v5151 = vpack.i.b16 %v5046, %v5046
        %v5153 = vlaneseq
        %v5154 = vshrl.u32 %v5153, 7
        %v5155 = vsub.s32 0, %v5154
        %v5156 = vrot.slane %v5151, %v5155
        %v5158 = vpack.i.b16 %v5047, %v5047
        %v5160 = vlaneseq
        %v5161 = vshrl.u32 %v5160, 7
        %v5162 = vsub.s32 0, %v5161
        %v5163 = vrot.slane %v5158, %v5162
        %v5165 = vpack.i.b16 %v5048, %v5048
        %v5167 = vlaneseq
        %v5168 = vshrl.u32 %v5167, 7
        %v5169 = vsub.s32 0, %v5168
        %v5170 = vrot.slane %v5165, %v5169
        %v5171 = vadd.bf16 %v4919, %v5121
        %v5172 = vadd.bf16 %v4920, %v5121
        %v5173 = vadd.bf16 %v4921, %v5121
        %v5174 = vadd.bf16 %v4922, %v5121
        %v5175 = vadd.bf16 %v4923, %v5121
        %v5176 = vadd.bf16 %v4924, %v5121
        %v5177 = vadd.bf16 %v4925, %v5121
        %v5178 = vadd.bf16 %v4926, %v5121
        %v5179 = vadd.bf16 %v4927, %v5128
        %v5180 = vadd.bf16 %v4928, %v5128
        %v5181 = vadd.bf16 %v4929, %v5128
        %v5182 = vadd.bf16 %v4930, %v5128
        %v5183 = vadd.bf16 %v4931, %v5128
        %v5184 = vadd.bf16 %v4932, %v5128
        %v5185 = vadd.bf16 %v4933, %v5128
        %v5186 = vadd.bf16 %v4934, %v5128
        %v5187 = vadd.bf16 %v4935, %v5135
        %v5188 = vadd.bf16 %v4936, %v5135
        %v5189 = vadd.bf16 %v4937, %v5135
        %v5190 = vadd.bf16 %v4938, %v5135
        %v5191 = vadd.bf16 %v4939, %v5135
        %v5192 = vadd.bf16 %v4940, %v5135
        %v5193 = vadd.bf16 %v4941, %v5135
        %v5194 = vadd.bf16 %v4942, %v5135
        %v5195 = vadd.bf16 %v4943, %v5142
        %v5196 = vadd.bf16 %v4944, %v5142
        %v5197 = vadd.bf16 %v4945, %v5142
        %v5198 = vadd.bf16 %v4946, %v5142
        %v5199 = vadd.bf16 %v4947, %v5142
        %v5200 = vadd.bf16 %v4948, %v5142
        %v5201 = vadd.bf16 %v4949, %v5142
        %v5202 = vadd.bf16 %v4950, %v5142
        %v5203 = vadd.bf16 %v4951, %v5149
        %v5204 = vadd.bf16 %v4952, %v5149
        %v5205 = vadd.bf16 %v4953, %v5149
        %v5206 = vadd.bf16 %v4954, %v5149
        %v5207 = vadd.bf16 %v4955, %v5149
        %v5208 = vadd.bf16 %v4956, %v5149
        %v5209 = vadd.bf16 %v4957, %v5149
        %v5210 = vadd.bf16 %v4958, %v5149
        %v5211 = vadd.bf16 %v4959, %v5156
        %v5212 = vadd.bf16 %v4960, %v5156
        %v5213 = vadd.bf16 %v4961, %v5156
        %v5214 = vadd.bf16 %v4962, %v5156
        %v5215 = vadd.bf16 %v4963, %v5156
        %v5216 = vadd.bf16 %v4964, %v5156
        %v5217 = vadd.bf16 %v4965, %v5156
        %v5218 = vadd.bf16 %v4966, %v5156
        %v5219 = vadd.bf16 %v4967, %v5163
        %v5220 = vadd.bf16 %v4968, %v5163
        %v5221 = vadd.bf16 %v4969, %v5163
        %v5222 = vadd.bf16 %v4970, %v5163
        %v5223 = vadd.bf16 %v4971, %v5163
        %v5224 = vadd.bf16 %v4972, %v5163
        %v5225 = vadd.bf16 %v4973, %v5163
        %v5226 = vadd.bf16 %v4974, %v5163
        %v5227 = vadd.bf16 %v4975, %v5170
        %v5228 = vadd.bf16 %v4976, %v5170
        %v5229 = vadd.bf16 %v4977, %v5170
        %v5230 = vadd.bf16 %v4978, %v5170
        %v5231 = vadd.bf16 %v4979, %v5170
        %v5232 = vadd.bf16 %v4980, %v5170
        %v5233 = vadd.bf16 %v4981, %v5170
        %v5234 = vadd.bf16 %v4982, %v5170
        %v5235 = vmax.bf16 %v5171, 0
        %v5236 = vmax.bf16 %v5172, 0
        %v5237 = vmax.bf16 %v5173, 0
        %v5238 = vmax.bf16 %v5174, 0
        %v5239 = vmax.bf16 %v5175, 0
        %v5240 = vmax.bf16 %v5176, 0
        %v5241 = vmax.bf16 %v5177, 0
        %v5242 = vmax.bf16 %v5178, 0
        %v5243 = vmax.bf16 %v5179, 0
        %v5244 = vmax.bf16 %v5180, 0
        %v5245 = vmax.bf16 %v5181, 0
        %v5246 = vmax.bf16 %v5182, 0
        %v5247 = vmax.bf16 %v5183, 0
        %v5248 = vmax.bf16 %v5184, 0
        %v5249 = vmax.bf16 %v5185, 0
        %v5250 = vmax.bf16 %v5186, 0
        %v5251 = vmax.bf16 %v5187, 0
        %v5252 = vmax.bf16 %v5188, 0
        %v5253 = vmax.bf16 %v5189, 0
        %v5254 = vmax.bf16 %v5190, 0
        %v5255 = vmax.bf16 %v5191, 0
        %v5256 = vmax.bf16 %v5192, 0
        %v5257 = vmax.bf16 %v5193, 0
        %v5258 = vmax.bf16 %v5194, 0
        %v5259 = vmax.bf16 %v5195, 0
        %v5260 = vmax.bf16 %v5196, 0
        %v5261 = vmax.bf16 %v5197, 0
        %v5262 = vmax.bf16 %v5198, 0
        %v5263 = vmax.bf16 %v5199, 0
        %v5264 = vmax.bf16 %v5200, 0
        %v5265 = vmax.bf16 %v5201, 0
        %v5266 = vmax.bf16 %v5202, 0
        %v5267 = vmax.bf16 %v5203, 0
        %v5268 = vmax.bf16 %v5204, 0
        %v5269 = vmax.bf16 %v5205, 0
        %v5270 = vmax.bf16 %v5206, 0
        %v5271 = vmax.bf16 %v5207, 0
        %v5272 = vmax.bf16 %v5208, 0
        %v5273 = vmax.bf16 %v5209, 0
        %v5274 = vmax.bf16 %v5210, 0
        %v5275 = vmax.bf16 %v5211, 0
        %v5276 = vmax.bf16 %v5212, 0
        %v5277 = vmax.bf16 %v5213, 0
        %v5278 = vmax.bf16 %v5214, 0
        %v5279 = vmax.bf16 %v5215, 0
        %v5280 = vmax.bf16 %v5216, 0
        %v5281 = vmax.bf16 %v5217, 0
        %v5282 = vmax.bf16 %v5218, 0
        %v5283 = vmax.bf16 %v5219, 0
        %v5284 = vmax.bf16 %v5220, 0
        %v5285 = vmax.bf16 %v5221, 0
        %v5286 = vmax.bf16 %v5222, 0
        %v5287 = vmax.bf16 %v5223, 0
        %v5288 = vmax.bf16 %v5224, 0
        %v5289 = vmax.bf16 %v5225, 0
        %v5290 = vmax.bf16 %v5226, 0
        %v5291 = vmax.bf16 %v5227, 0
        %v5292 = vmax.bf16 %v5228, 0
        %v5293 = vmax.bf16 %v5229, 0
        %v5294 = vmax.bf16 %v5230, 0
        %v5295 = vmax.bf16 %v5231, 0
        %v5296 = vmax.bf16 %v5232, 0
        %v5297 = vmax.bf16 %v5233, 0
        %v5298 = vmax.bf16 %v5234, 0
        %s5300 = vtos %v5107
        %v5301 = vstv %s5300
        %v5302 = vpack.i.b16 %v5301, %v5301
        %s5305 = vtos %v5108
        %v5306 = vstv %s5305
        %v5307 = vpack.i.b16 %v5306, %v5306
        %s5310 = vtos %v5109
        %v5311 = vstv %s5310
        %v5312 = vpack.i.b16 %v5311, %v5311
        %s5315 = vtos %v5110
        %v5316 = vstv %s5315
        %v5317 = vpack.i.b16 %v5316, %v5316
        %s5320 = vtos %v5111
        %v5321 = vstv %s5320
        %v5322 = vpack.i.b16 %v5321, %v5321
        %s5325 = vtos %v5112
        %v5326 = vstv %s5325
        %v5327 = vpack.i.b16 %v5326, %v5326
        %s5330 = vtos %v5113
        %v5331 = vstv %s5330
        %v5332 = vpack.i.b16 %v5331, %v5331
        %s5335 = vtos %v5114
        %v5336 = vstv %s5335
        %v5337 = vpack.i.b16 %v5336, %v5336
        %v5339 = vmul.bf16 %v5235, %v5302
        %v5340 = vmul.bf16 %v5236, %v5302
        %v5341 = vmul.bf16 %v5237, %v5302
        %v5342 = vmul.bf16 %v5238, %v5302
        %v5343 = vmul.bf16 %v5239, %v5302
        %v5344 = vmul.bf16 %v5240, %v5302
        %v5345 = vmul.bf16 %v5241, %v5302
        %v5346 = vmul.bf16 %v5242, %v5302
        %v5347 = vmul.bf16 %v5243, %v5307
        %v5348 = vmul.bf16 %v5244, %v5307
        %v5349 = vmul.bf16 %v5245, %v5307
        %v5350 = vmul.bf16 %v5246, %v5307
        %v5351 = vmul.bf16 %v5247, %v5307
        %v5352 = vmul.bf16 %v5248, %v5307
        %v5353 = vmul.bf16 %v5249, %v5307
        %v5354 = vmul.bf16 %v5250, %v5307
        %v5355 = vmul.bf16 %v5251, %v5312
        %v5356 = vmul.bf16 %v5252, %v5312
        %v5357 = vmul.bf16 %v5253, %v5312
        %v5358 = vmul.bf16 %v5254, %v5312
        %v5359 = vmul.bf16 %v5255, %v5312
        %v5360 = vmul.bf16 %v5256, %v5312
        %v5361 = vmul.bf16 %v5257, %v5312
        %v5362 = vmul.bf16 %v5258, %v5312
        %v5363 = vmul.bf16 %v5259, %v5317
        %v5364 = vmul.bf16 %v5260, %v5317
        %v5365 = vmul.bf16 %v5261, %v5317
        %v5366 = vmul.bf16 %v5262, %v5317
        %v5367 = vmul.bf16 %v5263, %v5317
        %v5368 = vmul.bf16 %v5264, %v5317
        %v5369 = vmul.bf16 %v5265, %v5317
        %v5370 = vmul.bf16 %v5266, %v5317
        %v5371 = vmul.bf16 %v5267, %v5322
        %v5372 = vmul.bf16 %v5268, %v5322
        %v5373 = vmul.bf16 %v5269, %v5322
        %v5374 = vmul.bf16 %v5270, %v5322
        %v5375 = vmul.bf16 %v5271, %v5322
        %v5376 = vmul.bf16 %v5272, %v5322
        %v5377 = vmul.bf16 %v5273, %v5322
        %v5378 = vmul.bf16 %v5274, %v5322
        %v5379 = vmul.bf16 %v5275, %v5327
        %v5380 = vmul.bf16 %v5276, %v5327
        %v5381 = vmul.bf16 %v5277, %v5327
        %v5382 = vmul.bf16 %v5278, %v5327
        %v5383 = vmul.bf16 %v5279, %v5327
        %v5384 = vmul.bf16 %v5280, %v5327
        %v5385 = vmul.bf16 %v5281, %v5327
        %v5386 = vmul.bf16 %v5282, %v5327
        %v5387 = vmul.bf16 %v5283, %v5332
        %v5388 = vmul.bf16 %v5284, %v5332
        %v5389 = vmul.bf16 %v5285, %v5332
        %v5390 = vmul.bf16 %v5286, %v5332
        %v5391 = vmul.bf16 %v5287, %v5332
        %v5392 = vmul.bf16 %v5288, %v5332
        %v5393 = vmul.bf16 %v5289, %v5332
        %v5394 = vmul.bf16 %v5290, %v5332
        %v5395 = vmul.bf16 %v5291, %v5337
        %v5396 = vmul.bf16 %v5292, %v5337
        %v5397 = vmul.bf16 %v5293, %v5337
        %v5398 = vmul.bf16 %v5294, %v5337
        %v5399 = vmul.bf16 %v5295, %v5337
        %v5400 = vmul.bf16 %v5296, %v5337
        %v5401 = vmul.bf16 %v5297, %v5337
        %v5402 = vmul.bf16 %v5298, %v5337
        %v5403 = vunpack.c.l.bf16 %v5339
        %v5404 = vunpack.c.h.bf16 %v5339
        %v5405 = vunpack.c.l.bf16 %v5340
        %v5406 = vunpack.c.h.bf16 %v5340
        %v5407 = vunpack.c.l.bf16 %v5341
        %v5408 = vunpack.c.h.bf16 %v5341
        %v5409 = vunpack.c.l.bf16 %v5342
        %v5410 = vunpack.c.h.bf16 %v5342
        %v5411 = vunpack.c.l.bf16 %v5343
        %v5412 = vunpack.c.h.bf16 %v5343
        %v5413 = vunpack.c.l.bf16 %v5344
        %v5414 = vunpack.c.h.bf16 %v5344
        %v5415 = vunpack.c.l.bf16 %v5345
        %v5416 = vunpack.c.h.bf16 %v5345
        %v5417 = vunpack.c.l.bf16 %v5346
        %v5418 = vunpack.c.h.bf16 %v5346
        %v5419 = vunpack.c.l.bf16 %v5347
        %v5420 = vunpack.c.h.bf16 %v5347
        %v5421 = vunpack.c.l.bf16 %v5348
        %v5422 = vunpack.c.h.bf16 %v5348
        %v5423 = vunpack.c.l.bf16 %v5349
        %v5424 = vunpack.c.h.bf16 %v5349
        %v5425 = vunpack.c.l.bf16 %v5350
        %v5426 = vunpack.c.h.bf16 %v5350
        %v5427 = vunpack.c.l.bf16 %v5351
        %v5428 = vunpack.c.h.bf16 %v5351
        %v5429 = vunpack.c.l.bf16 %v5352
        %v5430 = vunpack.c.h.bf16 %v5352
        %v5431 = vunpack.c.l.bf16 %v5353
        %v5432 = vunpack.c.h.bf16 %v5353
        %v5433 = vunpack.c.l.bf16 %v5354
        %v5434 = vunpack.c.h.bf16 %v5354
        %v5435 = vunpack.c.l.bf16 %v5355
        %v5436 = vunpack.c.h.bf16 %v5355
        %v5437 = vunpack.c.l.bf16 %v5356
        %v5438 = vunpack.c.h.bf16 %v5356
        %v5439 = vunpack.c.l.bf16 %v5357
        %v5440 = vunpack.c.h.bf16 %v5357
        %v5441 = vunpack.c.l.bf16 %v5358
        %v5442 = vunpack.c.h.bf16 %v5358
        %v5443 = vunpack.c.l.bf16 %v5359
        %v5444 = vunpack.c.h.bf16 %v5359
        %v5445 = vunpack.c.l.bf16 %v5360
        %v5446 = vunpack.c.h.bf16 %v5360
        %v5447 = vunpack.c.l.bf16 %v5361
        %v5448 = vunpack.c.h.bf16 %v5361
        %v5449 = vunpack.c.l.bf16 %v5362
        %v5450 = vunpack.c.h.bf16 %v5362
        %v5451 = vunpack.c.l.bf16 %v5363
        %v5452 = vunpack.c.h.bf16 %v5363
        %v5453 = vunpack.c.l.bf16 %v5364
        %v5454 = vunpack.c.h.bf16 %v5364
        %v5455 = vunpack.c.l.bf16 %v5365
        %v5456 = vunpack.c.h.bf16 %v5365
        %v5457 = vunpack.c.l.bf16 %v5366
        %v5458 = vunpack.c.h.bf16 %v5366
        %v5459 = vunpack.c.l.bf16 %v5367
        %v5460 = vunpack.c.h.bf16 %v5367
        %v5461 = vunpack.c.l.bf16 %v5368
        %v5462 = vunpack.c.h.bf16 %v5368
        %v5463 = vunpack.c.l.bf16 %v5369
        %v5464 = vunpack.c.h.bf16 %v5369
        %v5465 = vunpack.c.l.bf16 %v5370
        %v5466 = vunpack.c.h.bf16 %v5370
        %v5467 = vunpack.c.l.bf16 %v5371
        %v5468 = vunpack.c.h.bf16 %v5371
        %v5469 = vunpack.c.l.bf16 %v5372
        %v5470 = vunpack.c.h.bf16 %v5372
        %v5471 = vunpack.c.l.bf16 %v5373
        %v5472 = vunpack.c.h.bf16 %v5373
        %v5473 = vunpack.c.l.bf16 %v5374
        %v5474 = vunpack.c.h.bf16 %v5374
        %v5475 = vunpack.c.l.bf16 %v5375
        %v5476 = vunpack.c.h.bf16 %v5375
        %v5477 = vunpack.c.l.bf16 %v5376
        %v5478 = vunpack.c.h.bf16 %v5376
        %v5479 = vunpack.c.l.bf16 %v5377
        %v5480 = vunpack.c.h.bf16 %v5377
        %v5481 = vunpack.c.l.bf16 %v5378
        %v5482 = vunpack.c.h.bf16 %v5378
        %v5483 = vunpack.c.l.bf16 %v5379
        %v5484 = vunpack.c.h.bf16 %v5379
        %v5485 = vunpack.c.l.bf16 %v5380
        %v5486 = vunpack.c.h.bf16 %v5380
        %v5487 = vunpack.c.l.bf16 %v5381
        %v5488 = vunpack.c.h.bf16 %v5381
        %v5489 = vunpack.c.l.bf16 %v5382
        %v5490 = vunpack.c.h.bf16 %v5382
        %v5491 = vunpack.c.l.bf16 %v5383
        %v5492 = vunpack.c.h.bf16 %v5383
        %v5493 = vunpack.c.l.bf16 %v5384
        %v5494 = vunpack.c.h.bf16 %v5384
        %v5495 = vunpack.c.l.bf16 %v5385
        %v5496 = vunpack.c.h.bf16 %v5385
        %v5497 = vunpack.c.l.bf16 %v5386
        %v5498 = vunpack.c.h.bf16 %v5386
        %v5499 = vunpack.c.l.bf16 %v5387
        %v5500 = vunpack.c.h.bf16 %v5387
        %v5501 = vunpack.c.l.bf16 %v5388
        %v5502 = vunpack.c.h.bf16 %v5388
        %v5503 = vunpack.c.l.bf16 %v5389
        %v5504 = vunpack.c.h.bf16 %v5389
        %v5505 = vunpack.c.l.bf16 %v5390
        %v5506 = vunpack.c.h.bf16 %v5390
        %v5507 = vunpack.c.l.bf16 %v5391
        %v5508 = vunpack.c.h.bf16 %v5391
        %v5509 = vunpack.c.l.bf16 %v5392
        %v5510 = vunpack.c.h.bf16 %v5392
        %v5511 = vunpack.c.l.bf16 %v5393
        %v5512 = vunpack.c.h.bf16 %v5393
        %v5513 = vunpack.c.l.bf16 %v5394
        %v5514 = vunpack.c.h.bf16 %v5394
        %v5515 = vunpack.c.l.bf16 %v5395
        %v5516 = vunpack.c.h.bf16 %v5395
        %v5517 = vunpack.c.l.bf16 %v5396
        %v5518 = vunpack.c.h.bf16 %v5396
        %v5519 = vunpack.c.l.bf16 %v5397
        %v5520 = vunpack.c.h.bf16 %v5397
        %v5521 = vunpack.c.l.bf16 %v5398
        %v5522 = vunpack.c.h.bf16 %v5398
        %v5523 = vunpack.c.l.bf16 %v5399
        %v5524 = vunpack.c.h.bf16 %v5399
        %v5525 = vunpack.c.l.bf16 %v5400
        %v5526 = vunpack.c.h.bf16 %v5400
        %v5527 = vunpack.c.l.bf16 %v5401
        %v5528 = vunpack.c.h.bf16 %v5401
        %v5529 = vunpack.c.l.bf16 %v5402
        %v5530 = vunpack.c.h.bf16 %v5402
        %v5531 = vadd.f32 %v5403, %v5419
        %v5532 = vadd.f32 %v5531, %v5435
        %v5533 = vadd.f32 %v5532, %v5451
        %v5534 = vadd.f32 %v5533, %v5467
        %v5535 = vadd.f32 %v5534, %v5483
        %v5536 = vadd.f32 %v5535, %v5499
        %v5537 = vadd.f32 %v5536, %v5515
        %v5538 = vadd.f32 %v5404, %v5420
        %v5539 = vadd.f32 %v5538, %v5436
        %v5540 = vadd.f32 %v5539, %v5452
        %v5541 = vadd.f32 %v5540, %v5468
        %v5542 = vadd.f32 %v5541, %v5484
        %v5543 = vadd.f32 %v5542, %v5500
        %v5544 = vadd.f32 %v5543, %v5516
        %v5545 = vadd.f32 %v5405, %v5421
        %v5546 = vadd.f32 %v5545, %v5437
        %v5547 = vadd.f32 %v5546, %v5453
        %v5548 = vadd.f32 %v5547, %v5469
        %v5549 = vadd.f32 %v5548, %v5485
        %v5550 = vadd.f32 %v5549, %v5501
        %v5551 = vadd.f32 %v5550, %v5517
        %v5552 = vadd.f32 %v5406, %v5422
        %v5553 = vadd.f32 %v5552, %v5438
        %v5554 = vadd.f32 %v5553, %v5454
        %v5555 = vadd.f32 %v5554, %v5470
        %v5556 = vadd.f32 %v5555, %v5486
        %v5557 = vadd.f32 %v5556, %v5502
        %v5558 = vadd.f32 %v5557, %v5518
        %v5559 = vadd.f32 %v5407, %v5423
        %v5560 = vadd.f32 %v5559, %v5439
        %v5561 = vadd.f32 %v5560, %v5455
        %v5562 = vadd.f32 %v5561, %v5471
        %v5563 = vadd.f32 %v5562, %v5487
        %v5564 = vadd.f32 %v5563, %v5503
        %v5565 = vadd.f32 %v5564, %v5519
        %v5566 = vadd.f32 %v5408, %v5424
        %v5567 = vadd.f32 %v5566, %v5440
        %v5568 = vadd.f32 %v5567, %v5456
        %v5569 = vadd.f32 %v5568, %v5472
        %v5570 = vadd.f32 %v5569, %v5488
        %v5571 = vadd.f32 %v5570, %v5504
        %v5572 = vadd.f32 %v5571, %v5520
        %v5573 = vadd.f32 %v5409, %v5425
        %v5574 = vadd.f32 %v5573, %v5441
        %v5575 = vadd.f32 %v5574, %v5457
        %v5576 = vadd.f32 %v5575, %v5473
        %v5577 = vadd.f32 %v5576, %v5489
        %v5578 = vadd.f32 %v5577, %v5505
        %v5579 = vadd.f32 %v5578, %v5521
        %v5580 = vadd.f32 %v5410, %v5426
        %v5581 = vadd.f32 %v5580, %v5442
        %v5582 = vadd.f32 %v5581, %v5458
        %v5583 = vadd.f32 %v5582, %v5474
        %v5584 = vadd.f32 %v5583, %v5490
        %v5585 = vadd.f32 %v5584, %v5506
        %v5586 = vadd.f32 %v5585, %v5522
        %v5587 = vadd.f32 %v5411, %v5427
        %v5588 = vadd.f32 %v5587, %v5443
        %v5589 = vadd.f32 %v5588, %v5459
        %v5590 = vadd.f32 %v5589, %v5475
        %v5591 = vadd.f32 %v5590, %v5491
        %v5592 = vadd.f32 %v5591, %v5507
        %v5593 = vadd.f32 %v5592, %v5523
        %v5594 = vadd.f32 %v5412, %v5428
        %v5595 = vadd.f32 %v5594, %v5444
        %v5596 = vadd.f32 %v5595, %v5460
        %v5597 = vadd.f32 %v5596, %v5476
        %v5598 = vadd.f32 %v5597, %v5492
        %v5599 = vadd.f32 %v5598, %v5508
        %v5600 = vadd.f32 %v5599, %v5524
        %v5601 = vadd.f32 %v5413, %v5429
        %v5602 = vadd.f32 %v5601, %v5445
        %v5603 = vadd.f32 %v5602, %v5461
        %v5604 = vadd.f32 %v5603, %v5477
        %v5605 = vadd.f32 %v5604, %v5493
        %v5606 = vadd.f32 %v5605, %v5509
        %v5607 = vadd.f32 %v5606, %v5525
        %v5608 = vadd.f32 %v5414, %v5430
        %v5609 = vadd.f32 %v5608, %v5446
        %v5610 = vadd.f32 %v5609, %v5462
        %v5611 = vadd.f32 %v5610, %v5478
        %v5612 = vadd.f32 %v5611, %v5494
        %v5613 = vadd.f32 %v5612, %v5510
        %v5614 = vadd.f32 %v5613, %v5526
        %v5615 = vadd.f32 %v5415, %v5431
        %v5616 = vadd.f32 %v5615, %v5447
        %v5617 = vadd.f32 %v5616, %v5463
        %v5618 = vadd.f32 %v5617, %v5479
        %v5619 = vadd.f32 %v5618, %v5495
        %v5620 = vadd.f32 %v5619, %v5511
        %v5621 = vadd.f32 %v5620, %v5527
        %v5622 = vadd.f32 %v5416, %v5432
        %v5623 = vadd.f32 %v5622, %v5448
        %v5624 = vadd.f32 %v5623, %v5464
        %v5625 = vadd.f32 %v5624, %v5480
        %v5626 = vadd.f32 %v5625, %v5496
        %v5627 = vadd.f32 %v5626, %v5512
        %v5628 = vadd.f32 %v5627, %v5528
        %v5629 = vadd.f32 %v5417, %v5433
        %v5630 = vadd.f32 %v5629, %v5449
        %v5631 = vadd.f32 %v5630, %v5465
        %v5632 = vadd.f32 %v5631, %v5481
        %v5633 = vadd.f32 %v5632, %v5497
        %v5634 = vadd.f32 %v5633, %v5513
        %v5635 = vadd.f32 %v5634, %v5529
        %v5636 = vadd.f32 %v5418, %v5434
        %v5637 = vadd.f32 %v5636, %v5450
        %v5638 = vadd.f32 %v5637, %v5466
        %v5639 = vadd.f32 %v5638, %v5482
        %v5640 = vadd.f32 %v5639, %v5498
        %v5641 = vadd.f32 %v5640, %v5514
        %v5642 = vadd.f32 %v5641, %v5530
        %v5643 = vpack.c.bf16 %v5544, %v5537
        %v5644 = vpack.c.bf16 %v5558, %v5551
        %v5645 = vpack.c.bf16 %v5572, %v5565
        %v5646 = vpack.c.bf16 %v5586, %v5579
        %v5647 = vpack.c.bf16 %v5600, %v5593
        %v5648 = vpack.c.bf16 %v5614, %v5607
        %v5649 = vpack.c.bf16 %v5628, %v5621
        %v5650 = vpack.c.bf16 %v5642, %v5635
        %v5651 = vunpack.c.l.bf16 %v5643
        %v5652 = vunpack.c.h.bf16 %v5643
        %v5653 = vunpack.c.l.bf16 %v5644
        %v5654 = vunpack.c.h.bf16 %v5644
        %v5655 = vunpack.c.l.bf16 %v5645
        %v5656 = vunpack.c.h.bf16 %v5645
        %v5657 = vunpack.c.l.bf16 %v5646
        %v5658 = vunpack.c.h.bf16 %v5646
        %v5659 = vunpack.c.l.bf16 %v5647
        %v5660 = vunpack.c.h.bf16 %v5647
        %v5661 = vunpack.c.l.bf16 %v5648
        %v5662 = vunpack.c.h.bf16 %v5648
        %v5663 = vunpack.c.l.bf16 %v5649
        %v5664 = vunpack.c.h.bf16 %v5649
        %v5665 = vunpack.c.l.bf16 %v5650
        %v5666 = vunpack.c.h.bf16 %v5650
        %v5667 = vadd.f32 %v4367, %v5651
        %v5668 = vadd.f32 %v4368, %v5652
        %v5669 = vadd.f32 %v4369, %v5653
        %v5670 = vadd.f32 %v4370, %v5654
        %v5671 = vadd.f32 %v4371, %v5655
        %v5672 = vadd.f32 %v4372, %v5656
        %v5673 = vadd.f32 %v4373, %v5657
        %v5674 = vadd.f32 %v4374, %v5658
        %v5675 = vadd.f32 %v4375, %v5659
        %v5676 = vadd.f32 %v4376, %v5660
        %v5677 = vadd.f32 %v4377, %v5661
        %v5678 = vadd.f32 %v4378, %v5662
        %v5679 = vadd.f32 %v4379, %v5663
        %v5680 = vadd.f32 %v4380, %v5664
        %v5681 = vadd.f32 %v4381, %v5665
        %v5682 = vadd.f32 %v4382, %v5666
        %v5683 = vlaneseq
        %v5684 = vshrl.u32 %v5683, 7
        %v5685 = vsub.s32 0, %v5684
        %v5686 = vrot.slane %v1762, %v5685
        %5688 = vbcast.lane.b32.xlu0 %v5686, 256
        %v5689 = vpop.permute.xlu0 %5688
        %s5691 = sor.u32 256, 8
        %5692 = vbcast.lane.b32.xlu0 %v5686, %s5691
        %v5693 = vpop.permute.xlu0 %5692
        %s5695 = sor.u32 256, 16
        %5696 = vbcast.lane.b32.xlu0 %v5686, %s5695
        %v5697 = vpop.permute.xlu0 %5696
        %s5699 = sor.u32 256, 24
        %5700 = vbcast.lane.b32.xlu0 %v5686, %s5699
        %v5701 = vpop.permute.xlu0 %5700
        %s5703 = sor.u32 256, 32
        %5704 = vbcast.lane.b32.xlu0 %v5686, %s5703
        %v5705 = vpop.permute.xlu0 %5704
        %s5707 = sor.u32 256, 40
        %5708 = vbcast.lane.b32.xlu0 %v5686, %s5707
        %v5709 = vpop.permute.xlu0 %5708
        %s5711 = sor.u32 256, 48
        %5712 = vbcast.lane.b32.xlu0 %v5686, %s5711
        %v5713 = vpop.permute.xlu0 %5712
        %s5715 = sor.u32 256, 56
        %5716 = vbcast.lane.b32.xlu0 %v5686, %s5715
        %v5717 = vpop.permute.xlu0 %5716
        %s5719 = sor.u32 256, 64
        %5720 = vbcast.lane.b32.xlu0 %v5686, %s5719
        %v5721 = vpop.permute.xlu0 %5720
        %s5723 = sor.u32 256, 72
        %5724 = vbcast.lane.b32.xlu0 %v5686, %s5723
        %v5725 = vpop.permute.xlu0 %5724
        %s5727 = sor.u32 256, 80
        %5728 = vbcast.lane.b32.xlu0 %v5686, %s5727
        %v5729 = vpop.permute.xlu0 %5728
        %s5731 = sor.u32 256, 88
        %5732 = vbcast.lane.b32.xlu0 %v5686, %s5731
        %v5733 = vpop.permute.xlu0 %5732
        %s5735 = sor.u32 256, 96
        %5736 = vbcast.lane.b32.xlu0 %v5686, %s5735
        %v5737 = vpop.permute.xlu0 %5736
        %s5739 = sor.u32 256, 104
        %5740 = vbcast.lane.b32.xlu0 %v5686, %s5739
        %v5741 = vpop.permute.xlu0 %5740
        %s5743 = sor.u32 256, 112
        %5744 = vbcast.lane.b32.xlu0 %v5686, %s5743
        %v5745 = vpop.permute.xlu0 %5744
        %s5747 = sor.u32 256, 120
        %5748 = vbcast.lane.b32.xlu0 %v5686, %s5747
        %v5749 = vpop.permute.xlu0 %5748
        %v5750 = vlaneseq
        %v5751 = vshrl.u32 %v5750, 7
        %v5752 = vsub.s32 1, %v5751
        %v5753 = vrot.slane %v1762, %v5752
        %5755 = vbcast.lane.b32.xlu0 %v5753, 256
        %v5756 = vpop.permute.xlu0 %5755
        %s5758 = sor.u32 256, 8
        %5759 = vbcast.lane.b32.xlu0 %v5753, %s5758
        %v5760 = vpop.permute.xlu0 %5759
        %s5762 = sor.u32 256, 16
        %5763 = vbcast.lane.b32.xlu0 %v5753, %s5762
        %v5764 = vpop.permute.xlu0 %5763
        %s5766 = sor.u32 256, 24
        %5767 = vbcast.lane.b32.xlu0 %v5753, %s5766
        %v5768 = vpop.permute.xlu0 %5767
        %s5770 = sor.u32 256, 32
        %5771 = vbcast.lane.b32.xlu0 %v5753, %s5770
        %v5772 = vpop.permute.xlu0 %5771
        %s5774 = sor.u32 256, 40
        %5775 = vbcast.lane.b32.xlu0 %v5753, %s5774
        %v5776 = vpop.permute.xlu0 %5775
        %s5778 = sor.u32 256, 48
        %5779 = vbcast.lane.b32.xlu0 %v5753, %s5778
        %v5780 = vpop.permute.xlu0 %5779
        %s5782 = sor.u32 256, 56
        %5783 = vbcast.lane.b32.xlu0 %v5753, %s5782
        %v5784 = vpop.permute.xlu0 %5783
        %s5786 = sor.u32 256, 64
        %5787 = vbcast.lane.b32.xlu0 %v5753, %s5786
        %v5788 = vpop.permute.xlu0 %5787
        %s5790 = sor.u32 256, 72
        %5791 = vbcast.lane.b32.xlu0 %v5753, %s5790
        %v5792 = vpop.permute.xlu0 %5791
        %s5794 = sor.u32 256, 80
        %5795 = vbcast.lane.b32.xlu0 %v5753, %s5794
        %v5796 = vpop.permute.xlu0 %5795
        %s5798 = sor.u32 256, 88
        %5799 = vbcast.lane.b32.xlu0 %v5753, %s5798
        %v5800 = vpop.permute.xlu0 %5799
        %s5802 = sor.u32 256, 96
        %5803 = vbcast.lane.b32.xlu0 %v5753, %s5802
        %v5804 = vpop.permute.xlu0 %5803
        %s5806 = sor.u32 256, 104
        %5807 = vbcast.lane.b32.xlu0 %v5753, %s5806
        %v5808 = vpop.permute.xlu0 %5807
        %s5810 = sor.u32 256, 112
        %5811 = vbcast.lane.b32.xlu0 %v5753, %s5810
        %v5812 = vpop.permute.xlu0 %5811
        %s5814 = sor.u32 256, 120
        %5815 = vbcast.lane.b32.xlu0 %v5753, %s5814
        %v5816 = vpop.permute.xlu0 %5815
        %v5817 = vlaneseq
        %v5818 = vshrl.u32 %v5817, 7
        %v5819 = vsub.s32 2, %v5818
        %v5820 = vrot.slane %v1762, %v5819
        %5822 = vbcast.lane.b32.xlu0 %v5820, 256
        %v5823 = vpop.permute.xlu0 %5822
        %s5825 = sor.u32 256, 8
        %5826 = vbcast.lane.b32.xlu0 %v5820, %s5825
        %v5827 = vpop.permute.xlu0 %5826
        %s5829 = sor.u32 256, 16
        %5830 = vbcast.lane.b32.xlu0 %v5820, %s5829
        %v5831 = vpop.permute.xlu0 %5830
        %s5833 = sor.u32 256, 24
        %5834 = vbcast.lane.b32.xlu0 %v5820, %s5833
        %v5835 = vpop.permute.xlu0 %5834
        %s5837 = sor.u32 256, 32
        %5838 = vbcast.lane.b32.xlu0 %v5820, %s5837
        %v5839 = vpop.permute.xlu0 %5838
        %s5841 = sor.u32 256, 40
        %5842 = vbcast.lane.b32.xlu0 %v5820, %s5841
        %v5843 = vpop.permute.xlu0 %5842
        %s5845 = sor.u32 256, 48
        %5846 = vbcast.lane.b32.xlu0 %v5820, %s5845
        %v5847 = vpop.permute.xlu0 %5846
        %s5849 = sor.u32 256, 56
        %5850 = vbcast.lane.b32.xlu0 %v5820, %s5849
        %v5851 = vpop.permute.xlu0 %5850
        %s5853 = sor.u32 256, 64
        %5854 = vbcast.lane.b32.xlu0 %v5820, %s5853
        %v5855 = vpop.permute.xlu0 %5854
        %s5857 = sor.u32 256, 72
        %5858 = vbcast.lane.b32.xlu0 %v5820, %s5857
        %v5859 = vpop.permute.xlu0 %5858
        %s5861 = sor.u32 256, 80
        %5862 = vbcast.lane.b32.xlu0 %v5820, %s5861
        %v5863 = vpop.permute.xlu0 %5862
        %s5865 = sor.u32 256, 88
        %5866 = vbcast.lane.b32.xlu0 %v5820, %s5865
        %v5867 = vpop.permute.xlu0 %5866
        %s5869 = sor.u32 256, 96
        %5870 = vbcast.lane.b32.xlu0 %v5820, %s5869
        %v5871 = vpop.permute.xlu0 %5870
        %s5873 = sor.u32 256, 104
        %5874 = vbcast.lane.b32.xlu0 %v5820, %s5873
        %v5875 = vpop.permute.xlu0 %5874
        %s5877 = sor.u32 256, 112
        %5878 = vbcast.lane.b32.xlu0 %v5820, %s5877
        %v5879 = vpop.permute.xlu0 %5878
        %s5881 = sor.u32 256, 120
        %5882 = vbcast.lane.b32.xlu0 %v5820, %s5881
        %v5883 = vpop.permute.xlu0 %5882
        %v5884 = vlaneseq
        %v5885 = vshrl.u32 %v5884, 7
        %v5886 = vsub.s32 3, %v5885
        %v5887 = vrot.slane %v1762, %v5886
        %5889 = vbcast.lane.b32.xlu0 %v5887, 256
        %v5890 = vpop.permute.xlu0 %5889
        %s5892 = sor.u32 256, 8
        %5893 = vbcast.lane.b32.xlu0 %v5887, %s5892
        %v5894 = vpop.permute.xlu0 %5893
        %s5896 = sor.u32 256, 16
        %5897 = vbcast.lane.b32.xlu0 %v5887, %s5896
        %v5898 = vpop.permute.xlu0 %5897
        %s5900 = sor.u32 256, 24
        %5901 = vbcast.lane.b32.xlu0 %v5887, %s5900
        %v5902 = vpop.permute.xlu0 %5901
        %s5904 = sor.u32 256, 32
        %5905 = vbcast.lane.b32.xlu0 %v5887, %s5904
        %v5906 = vpop.permute.xlu0 %5905
        %s5908 = sor.u32 256, 40
        %5909 = vbcast.lane.b32.xlu0 %v5887, %s5908
        %v5910 = vpop.permute.xlu0 %5909
        %s5912 = sor.u32 256, 48
        %5913 = vbcast.lane.b32.xlu0 %v5887, %s5912
        %v5914 = vpop.permute.xlu0 %5913
        %s5916 = sor.u32 256, 56
        %5917 = vbcast.lane.b32.xlu0 %v5887, %s5916
        %v5918 = vpop.permute.xlu0 %5917
        %s5920 = sor.u32 256, 64
        %5921 = vbcast.lane.b32.xlu0 %v5887, %s5920
        %v5922 = vpop.permute.xlu0 %5921
        %s5924 = sor.u32 256, 72
        %5925 = vbcast.lane.b32.xlu0 %v5887, %s5924
        %v5926 = vpop.permute.xlu0 %5925
        %s5928 = sor.u32 256, 80
        %5929 = vbcast.lane.b32.xlu0 %v5887, %s5928
        %v5930 = vpop.permute.xlu0 %5929
        %s5932 = sor.u32 256, 88
        %5933 = vbcast.lane.b32.xlu0 %v5887, %s5932
        %v5934 = vpop.permute.xlu0 %5933
        %s5936 = sor.u32 256, 96
        %5937 = vbcast.lane.b32.xlu0 %v5887, %s5936
        %v5938 = vpop.permute.xlu0 %5937
        %s5940 = sor.u32 256, 104
        %5941 = vbcast.lane.b32.xlu0 %v5887, %s5940
        %v5942 = vpop.permute.xlu0 %5941
        %s5944 = sor.u32 256, 112
        %5945 = vbcast.lane.b32.xlu0 %v5887, %s5944
        %v5946 = vpop.permute.xlu0 %5945
        %s5948 = sor.u32 256, 120
        %5949 = vbcast.lane.b32.xlu0 %v5887, %s5948
        %v5950 = vpop.permute.xlu0 %5949
        %v5951 = vlaneseq
        %v5952 = vshrl.u32 %v5951, 7
        %v5953 = vsub.s32 4, %v5952
        %v5954 = vrot.slane %v1762, %v5953
        %5956 = vbcast.lane.b32.xlu0 %v5954, 256
        %v5957 = vpop.permute.xlu0 %5956
        %s5959 = sor.u32 256, 8
        %5960 = vbcast.lane.b32.xlu0 %v5954, %s5959
        %v5961 = vpop.permute.xlu0 %5960
        %s5963 = sor.u32 256, 16
        %5964 = vbcast.lane.b32.xlu0 %v5954, %s5963
        %v5965 = vpop.permute.xlu0 %5964
        %s5967 = sor.u32 256, 24
        %5968 = vbcast.lane.b32.xlu0 %v5954, %s5967
        %v5969 = vpop.permute.xlu0 %5968
        %s5971 = sor.u32 256, 32
        %5972 = vbcast.lane.b32.xlu0 %v5954, %s5971
        %v5973 = vpop.permute.xlu0 %5972
        %s5975 = sor.u32 256, 40
        %5976 = vbcast.lane.b32.xlu0 %v5954, %s5975
        %v5977 = vpop.permute.xlu0 %5976
        %s5979 = sor.u32 256, 48
        %5980 = vbcast.lane.b32.xlu0 %v5954, %s5979
        %v5981 = vpop.permute.xlu0 %5980
        %s5983 = sor.u32 256, 56
        %5984 = vbcast.lane.b32.xlu0 %v5954, %s5983
        %v5985 = vpop.permute.xlu0 %5984
        %s5987 = sor.u32 256, 64
        %5988 = vbcast.lane.b32.xlu0 %v5954, %s5987
        %v5989 = vpop.permute.xlu0 %5988
        %s5991 = sor.u32 256, 72
        %5992 = vbcast.lane.b32.xlu0 %v5954, %s5991
        %v5993 = vpop.permute.xlu0 %5992
        %s5995 = sor.u32 256, 80
        %5996 = vbcast.lane.b32.xlu0 %v5954, %s5995
        %v5997 = vpop.permute.xlu0 %5996
        %s5999 = sor.u32 256, 88
        %6000 = vbcast.lane.b32.xlu0 %v5954, %s5999
        %v6001 = vpop.permute.xlu0 %6000
        %s6003 = sor.u32 256, 96
        %6004 = vbcast.lane.b32.xlu0 %v5954, %s6003
        %v6005 = vpop.permute.xlu0 %6004
        %s6007 = sor.u32 256, 104
        %6008 = vbcast.lane.b32.xlu0 %v5954, %s6007
        %v6009 = vpop.permute.xlu0 %6008
        %s6011 = sor.u32 256, 112
        %6012 = vbcast.lane.b32.xlu0 %v5954, %s6011
        %v6013 = vpop.permute.xlu0 %6012
        %s6015 = sor.u32 256, 120
        %6016 = vbcast.lane.b32.xlu0 %v5954, %s6015
        %v6017 = vpop.permute.xlu0 %6016
        %v6018 = vlaneseq
        %v6019 = vshrl.u32 %v6018, 7
        %v6020 = vsub.s32 5, %v6019
        %v6021 = vrot.slane %v1762, %v6020
        %6023 = vbcast.lane.b32.xlu0 %v6021, 256
        %v6024 = vpop.permute.xlu0 %6023
        %s6026 = sor.u32 256, 8
        %6027 = vbcast.lane.b32.xlu0 %v6021, %s6026
        %v6028 = vpop.permute.xlu0 %6027
        %s6030 = sor.u32 256, 16
        %6031 = vbcast.lane.b32.xlu0 %v6021, %s6030
        %v6032 = vpop.permute.xlu0 %6031
        %s6034 = sor.u32 256, 24
        %6035 = vbcast.lane.b32.xlu0 %v6021, %s6034
        %v6036 = vpop.permute.xlu0 %6035
        %s6038 = sor.u32 256, 32
        %6039 = vbcast.lane.b32.xlu0 %v6021, %s6038
        %v6040 = vpop.permute.xlu0 %6039
        %s6042 = sor.u32 256, 40
        %6043 = vbcast.lane.b32.xlu0 %v6021, %s6042
        %v6044 = vpop.permute.xlu0 %6043
        %s6046 = sor.u32 256, 48
        %6047 = vbcast.lane.b32.xlu0 %v6021, %s6046
        %v6048 = vpop.permute.xlu0 %6047
        %s6050 = sor.u32 256, 56
        %6051 = vbcast.lane.b32.xlu0 %v6021, %s6050
        %v6052 = vpop.permute.xlu0 %6051
        %s6054 = sor.u32 256, 64
        %6055 = vbcast.lane.b32.xlu0 %v6021, %s6054
        %v6056 = vpop.permute.xlu0 %6055
        %s6058 = sor.u32 256, 72
        %6059 = vbcast.lane.b32.xlu0 %v6021, %s6058
        %v6060 = vpop.permute.xlu0 %6059
        %s6062 = sor.u32 256, 80
        %6063 = vbcast.lane.b32.xlu0 %v6021, %s6062
        %v6064 = vpop.permute.xlu0 %6063
        %s6066 = sor.u32 256, 88
        %6067 = vbcast.lane.b32.xlu0 %v6021, %s6066
        %v6068 = vpop.permute.xlu0 %6067
        %s6070 = sor.u32 256, 96
        %6071 = vbcast.lane.b32.xlu0 %v6021, %s6070
        %v6072 = vpop.permute.xlu0 %6071
        %s6074 = sor.u32 256, 104
        %6075 = vbcast.lane.b32.xlu0 %v6021, %s6074
        %v6076 = vpop.permute.xlu0 %6075
        %s6078 = sor.u32 256, 112
        %6079 = vbcast.lane.b32.xlu0 %v6021, %s6078
        %v6080 = vpop.permute.xlu0 %6079
        %s6082 = sor.u32 256, 120
        %6083 = vbcast.lane.b32.xlu0 %v6021, %s6082
        %v6084 = vpop.permute.xlu0 %6083
        %v6085 = vlaneseq
        %v6086 = vshrl.u32 %v6085, 7
        %v6087 = vsub.s32 6, %v6086
        %v6088 = vrot.slane %v1762, %v6087
        %6090 = vbcast.lane.b32.xlu0 %v6088, 256
        %v6091 = vpop.permute.xlu0 %6090
        %s6093 = sor.u32 256, 8
        %6094 = vbcast.lane.b32.xlu0 %v6088, %s6093
        %v6095 = vpop.permute.xlu0 %6094
        %s6097 = sor.u32 256, 16
        %6098 = vbcast.lane.b32.xlu0 %v6088, %s6097
        %v6099 = vpop.permute.xlu0 %6098
        %s6101 = sor.u32 256, 24
        %6102 = vbcast.lane.b32.xlu0 %v6088, %s6101
        %v6103 = vpop.permute.xlu0 %6102
        %s6105 = sor.u32 256, 32
        %6106 = vbcast.lane.b32.xlu0 %v6088, %s6105
        %v6107 = vpop.permute.xlu0 %6106
        %s6109 = sor.u32 256, 40
        %6110 = vbcast.lane.b32.xlu0 %v6088, %s6109
        %v6111 = vpop.permute.xlu0 %6110
        %s6113 = sor.u32 256, 48
        %6114 = vbcast.lane.b32.xlu0 %v6088, %s6113
        %v6115 = vpop.permute.xlu0 %6114
        %s6117 = sor.u32 256, 56
        %6118 = vbcast.lane.b32.xlu0 %v6088, %s6117
        %v6119 = vpop.permute.xlu0 %6118
        %s6121 = sor.u32 256, 64
        %6122 = vbcast.lane.b32.xlu0 %v6088, %s6121
        %v6123 = vpop.permute.xlu0 %6122
        %s6125 = sor.u32 256, 72
        %6126 = vbcast.lane.b32.xlu0 %v6088, %s6125
        %v6127 = vpop.permute.xlu0 %6126
        %s6129 = sor.u32 256, 80
        %6130 = vbcast.lane.b32.xlu0 %v6088, %s6129
        %v6131 = vpop.permute.xlu0 %6130
        %s6133 = sor.u32 256, 88
        %6134 = vbcast.lane.b32.xlu0 %v6088, %s6133
        %v6135 = vpop.permute.xlu0 %6134
        %s6137 = sor.u32 256, 96
        %6138 = vbcast.lane.b32.xlu0 %v6088, %s6137
        %v6139 = vpop.permute.xlu0 %6138
        %s6141 = sor.u32 256, 104
        %6142 = vbcast.lane.b32.xlu0 %v6088, %s6141
        %v6143 = vpop.permute.xlu0 %6142
        %s6145 = sor.u32 256, 112
        %6146 = vbcast.lane.b32.xlu0 %v6088, %s6145
        %v6147 = vpop.permute.xlu0 %6146
        %s6149 = sor.u32 256, 120
        %6150 = vbcast.lane.b32.xlu0 %v6088, %s6149
        %v6151 = vpop.permute.xlu0 %6150
        %v6152 = vlaneseq
        %v6153 = vshrl.u32 %v6152, 7
        %v6154 = vsub.s32 7, %v6153
        %v6155 = vrot.slane %v1762, %v6154
        %6157 = vbcast.lane.b32.xlu0 %v6155, 256
        %v6158 = vpop.permute.xlu0 %6157
        %s6160 = sor.u32 256, 8
        %6161 = vbcast.lane.b32.xlu0 %v6155, %s6160
        %v6162 = vpop.permute.xlu0 %6161
        %s6164 = sor.u32 256, 16
        %6165 = vbcast.lane.b32.xlu0 %v6155, %s6164
        %v6166 = vpop.permute.xlu0 %6165
        %s6168 = sor.u32 256, 24
        %6169 = vbcast.lane.b32.xlu0 %v6155, %s6168
        %v6170 = vpop.permute.xlu0 %6169
        %s6172 = sor.u32 256, 32
        %6173 = vbcast.lane.b32.xlu0 %v6155, %s6172
        %v6174 = vpop.permute.xlu0 %6173
        %s6176 = sor.u32 256, 40
        %6177 = vbcast.lane.b32.xlu0 %v6155, %s6176
        %v6178 = vpop.permute.xlu0 %6177
        %s6180 = sor.u32 256, 48
        %6181 = vbcast.lane.b32.xlu0 %v6155, %s6180
        %v6182 = vpop.permute.xlu0 %6181
        %s6184 = sor.u32 256, 56
        %6185 = vbcast.lane.b32.xlu0 %v6155, %s6184
        %v6186 = vpop.permute.xlu0 %6185
        %s6188 = sor.u32 256, 64
        %6189 = vbcast.lane.b32.xlu0 %v6155, %s6188
        %v6190 = vpop.permute.xlu0 %6189
        %s6192 = sor.u32 256, 72
        %6193 = vbcast.lane.b32.xlu0 %v6155, %s6192
        %v6194 = vpop.permute.xlu0 %6193
        %s6196 = sor.u32 256, 80
        %6197 = vbcast.lane.b32.xlu0 %v6155, %s6196
        %v6198 = vpop.permute.xlu0 %6197
        %s6200 = sor.u32 256, 88
        %6201 = vbcast.lane.b32.xlu0 %v6155, %s6200
        %v6202 = vpop.permute.xlu0 %6201
        %s6204 = sor.u32 256, 96
        %6205 = vbcast.lane.b32.xlu0 %v6155, %s6204
        %v6206 = vpop.permute.xlu0 %6205
        %s6208 = sor.u32 256, 104
        %6209 = vbcast.lane.b32.xlu0 %v6155, %s6208
        %v6210 = vpop.permute.xlu0 %6209
        %s6212 = sor.u32 256, 112
        %6213 = vbcast.lane.b32.xlu0 %v6155, %s6212
        %v6214 = vpop.permute.xlu0 %6213
        %s6216 = sor.u32 256, 120
        %6217 = vbcast.lane.b32.xlu0 %v6155, %s6216
        %v6218 = vpop.permute.xlu0 %6217
        %v6219 = vpack.c.bf16 %v5693, %v5689
        %v6220 = vpack.c.bf16 %v5701, %v5697
        %v6221 = vpack.c.bf16 %v5709, %v5705
        %v6222 = vpack.c.bf16 %v5717, %v5713
        %v6223 = vpack.c.bf16 %v5725, %v5721
        %v6224 = vpack.c.bf16 %v5733, %v5729
        %v6225 = vpack.c.bf16 %v5741, %v5737
        %v6226 = vpack.c.bf16 %v5749, %v5745
        %v6227 = vpack.c.bf16 %v5760, %v5756
        %v6228 = vpack.c.bf16 %v5768, %v5764
        %v6229 = vpack.c.bf16 %v5776, %v5772
        %v6230 = vpack.c.bf16 %v5784, %v5780
        %v6231 = vpack.c.bf16 %v5792, %v5788
        %v6232 = vpack.c.bf16 %v5800, %v5796
        %v6233 = vpack.c.bf16 %v5808, %v5804
        %v6234 = vpack.c.bf16 %v5816, %v5812
        %v6235 = vpack.c.bf16 %v5827, %v5823
        %v6236 = vpack.c.bf16 %v5835, %v5831
        %v6237 = vpack.c.bf16 %v5843, %v5839
        %v6238 = vpack.c.bf16 %v5851, %v5847
        %v6239 = vpack.c.bf16 %v5859, %v5855
        %v6240 = vpack.c.bf16 %v5867, %v5863
        %v6241 = vpack.c.bf16 %v5875, %v5871
        %v6242 = vpack.c.bf16 %v5883, %v5879
        %v6243 = vpack.c.bf16 %v5894, %v5890
        %v6244 = vpack.c.bf16 %v5902, %v5898
        %v6245 = vpack.c.bf16 %v5910, %v5906
        %v6246 = vpack.c.bf16 %v5918, %v5914
        %v6247 = vpack.c.bf16 %v5926, %v5922
        %v6248 = vpack.c.bf16 %v5934, %v5930
        %v6249 = vpack.c.bf16 %v5942, %v5938
        %v6250 = vpack.c.bf16 %v5950, %v5946
        %v6251 = vpack.c.bf16 %v5961, %v5957
        %v6252 = vpack.c.bf16 %v5969, %v5965
        %v6253 = vpack.c.bf16 %v5977, %v5973
        %v6254 = vpack.c.bf16 %v5985, %v5981
        %v6255 = vpack.c.bf16 %v5993, %v5989
        %v6256 = vpack.c.bf16 %v6001, %v5997
        %v6257 = vpack.c.bf16 %v6009, %v6005
        %v6258 = vpack.c.bf16 %v6017, %v6013
        %v6259 = vpack.c.bf16 %v6028, %v6024
        %v6260 = vpack.c.bf16 %v6036, %v6032
        %v6261 = vpack.c.bf16 %v6044, %v6040
        %v6262 = vpack.c.bf16 %v6052, %v6048
        %v6263 = vpack.c.bf16 %v6060, %v6056
        %v6264 = vpack.c.bf16 %v6068, %v6064
        %v6265 = vpack.c.bf16 %v6076, %v6072
        %v6266 = vpack.c.bf16 %v6084, %v6080
        %v6267 = vpack.c.bf16 %v6095, %v6091
        %v6268 = vpack.c.bf16 %v6103, %v6099
        %v6269 = vpack.c.bf16 %v6111, %v6107
        %v6270 = vpack.c.bf16 %v6119, %v6115
        %v6271 = vpack.c.bf16 %v6127, %v6123
        %v6272 = vpack.c.bf16 %v6135, %v6131
        %v6273 = vpack.c.bf16 %v6143, %v6139
        %v6274 = vpack.c.bf16 %v6151, %v6147
        %v6275 = vpack.c.bf16 %v6162, %v6158
        %v6276 = vpack.c.bf16 %v6170, %v6166
        %v6277 = vpack.c.bf16 %v6178, %v6174
        %v6278 = vpack.c.bf16 %v6186, %v6182
        %v6279 = vpack.c.bf16 %v6194, %v6190
        %v6280 = vpack.c.bf16 %v6202, %v6198
        %v6281 = vpack.c.bf16 %v6210, %v6206
        %v6282 = vpack.c.bf16 %v6218, %v6214
        %v6284 = vcombine.high %v1778, %v1778
        %v6286 = vunpack.c.l.s4 1966171168
        %v6287 = vunpack.c.0.s8 %v6286
        %v6288 = vlaneseq
        %v6289 = vshrl.u32 %v6288, 7
        %v6290 = vsub.s32 %v6287, %v6289
        %v6291 = vrot.slane %v1778, %v6290
        %v6293 = vunpack.c.l.s4 1966171168
        %v6294 = vunpack.c.0.s8 %v6293
        %v6295 = vlaneseq
        %v6296 = vshrl.u32 %v6295, 7
        %v6297 = vsub.s32 %v6294, %v6296
        %v6298 = vrot.slane %v6284, %v6297
        %v6299 = vcombine.high %v6291, %v6291
        %v6300 = vcombine.high %v6298, %v6298
        %v6302 = vunpack.c.l.s4 1966171168
        %v6303 = vunpack.c.0.s8 %v6302
        %v6304 = vlaneseq
        %v6305 = vshrl.u32 %v6304, 7
        %v6306 = vsub.s32 %v6303, %v6305
        %v6307 = vrot.slane %v6291, %v6306
        %v6309 = vunpack.c.l.s4 1966171168
        %v6310 = vunpack.c.0.s8 %v6309
        %v6311 = vlaneseq
        %v6312 = vshrl.u32 %v6311, 7
        %v6313 = vsub.s32 %v6310, %v6312
        %v6314 = vrot.slane %v6298, %v6313
        %v6316 = vunpack.c.l.s4 1966171168
        %v6317 = vunpack.c.0.s8 %v6316
        %v6318 = vlaneseq
        %v6319 = vshrl.u32 %v6318, 7
        %v6320 = vsub.s32 %v6317, %v6319
        %v6321 = vrot.slane %v6299, %v6320
        %v6323 = vunpack.c.l.s4 1966171168
        %v6324 = vunpack.c.0.s8 %v6323
        %v6325 = vlaneseq
        %v6326 = vshrl.u32 %v6325, 7
        %v6327 = vsub.s32 %v6324, %v6326
        %v6328 = vrot.slane %v6300, %v6327
        %v6329 = vcombine.high %v6307, %v6307
        %v6330 = vcombine.high %v6314, %v6314
        %v6331 = vcombine.high %v6321, %v6321
        %v6332 = vcombine.high %v6328, %v6328
        %v6341 = vpack.c.bf16 %v6307, %v6307
        %v6342 = vpack.c.bf16 %v6321, %v6321
        %v6343 = vpack.c.bf16 %v6329, %v6329
        %v6344 = vpack.c.bf16 %v6331, %v6331
        %v6345 = vpack.c.bf16 %v6314, %v6314
        %v6346 = vpack.c.bf16 %v6328, %v6328
        %v6347 = vpack.c.bf16 %v6330, %v6330
        %v6348 = vpack.c.bf16 %v6332, %v6332
        %v6350 = vcombine.high %v1782, %v1782
        %v6352 = vunpack.c.l.s4 1966171168
        %v6353 = vunpack.c.0.s8 %v6352
        %v6354 = vlaneseq
        %v6355 = vshrl.u32 %v6354, 7
        %v6356 = vsub.s32 %v6353, %v6355
        %v6357 = vrot.slane %v1782, %v6356
        %v6359 = vunpack.c.l.s4 1966171168
        %v6360 = vunpack.c.0.s8 %v6359
        %v6361 = vlaneseq
        %v6362 = vshrl.u32 %v6361, 7
        %v6363 = vsub.s32 %v6360, %v6362
        %v6364 = vrot.slane %v6350, %v6363
        %v6365 = vcombine.high %v6357, %v6357
        %v6366 = vcombine.high %v6364, %v6364
        %v6368 = vunpack.c.l.s4 1966171168
        %v6369 = vunpack.c.0.s8 %v6368
        %v6370 = vlaneseq
        %v6371 = vshrl.u32 %v6370, 7
        %v6372 = vsub.s32 %v6369, %v6371
        %v6373 = vrot.slane %v6357, %v6372
        %v6375 = vunpack.c.l.s4 1966171168
        %v6376 = vunpack.c.0.s8 %v6375
        %v6377 = vlaneseq
        %v6378 = vshrl.u32 %v6377, 7
        %v6379 = vsub.s32 %v6376, %v6378
        %v6380 = vrot.slane %v6364, %v6379
        %v6382 = vunpack.c.l.s4 1966171168
        %v6383 = vunpack.c.0.s8 %v6382
        %v6384 = vlaneseq
        %v6385 = vshrl.u32 %v6384, 7
        %v6386 = vsub.s32 %v6383, %v6385
        %v6387 = vrot.slane %v6365, %v6386
        %v6389 = vunpack.c.l.s4 1966171168
        %v6390 = vunpack.c.0.s8 %v6389
        %v6391 = vlaneseq
        %v6392 = vshrl.u32 %v6391, 7
        %v6393 = vsub.s32 %v6390, %v6392
        %v6394 = vrot.slane %v6366, %v6393
        %v6395 = vcombine.high %v6373, %v6373
        %v6396 = vcombine.high %v6380, %v6380
        %v6397 = vcombine.high %v6387, %v6387
        %v6398 = vcombine.high %v6394, %v6394
        %v6407 = vpack.c.bf16 %v6373, %v6373
        %v6408 = vpack.c.bf16 %v6387, %v6387
        %v6409 = vpack.c.bf16 %v6395, %v6395
        %v6410 = vpack.c.bf16 %v6397, %v6397
        %v6411 = vpack.c.bf16 %v6380, %v6380
        %v6412 = vpack.c.bf16 %v6394, %v6394
        %v6413 = vpack.c.bf16 %v6396, %v6396
        %v6414 = vpack.c.bf16 %v6398, %v6398
        %v6416 = vpack.i.b16 %v6341, %v6341
        %v6418 = vlaneseq
        %v6419 = vshrl.u32 %v6418, 7
        %v6420 = vsub.s32 0, %v6419
        %v6421 = vrot.slane %v6416, %v6420
        %v6423 = vpack.i.b16 %v6342, %v6342
        %v6425 = vlaneseq
        %v6426 = vshrl.u32 %v6425, 7
        %v6427 = vsub.s32 0, %v6426
        %v6428 = vrot.slane %v6423, %v6427
        %v6430 = vpack.i.b16 %v6343, %v6343
        %v6432 = vlaneseq
        %v6433 = vshrl.u32 %v6432, 7
        %v6434 = vsub.s32 0, %v6433
        %v6435 = vrot.slane %v6430, %v6434
        %v6437 = vpack.i.b16 %v6344, %v6344
        %v6439 = vlaneseq
        %v6440 = vshrl.u32 %v6439, 7
        %v6441 = vsub.s32 0, %v6440
        %v6442 = vrot.slane %v6437, %v6441
        %v6444 = vpack.i.b16 %v6345, %v6345
        %v6446 = vlaneseq
        %v6447 = vshrl.u32 %v6446, 7
        %v6448 = vsub.s32 0, %v6447
        %v6449 = vrot.slane %v6444, %v6448
        %v6451 = vpack.i.b16 %v6346, %v6346
        %v6453 = vlaneseq
        %v6454 = vshrl.u32 %v6453, 7
        %v6455 = vsub.s32 0, %v6454
        %v6456 = vrot.slane %v6451, %v6455
        %v6458 = vpack.i.b16 %v6347, %v6347
        %v6460 = vlaneseq
        %v6461 = vshrl.u32 %v6460, 7
        %v6462 = vsub.s32 0, %v6461
        %v6463 = vrot.slane %v6458, %v6462
        %v6465 = vpack.i.b16 %v6348, %v6348
        %v6467 = vlaneseq
        %v6468 = vshrl.u32 %v6467, 7
        %v6469 = vsub.s32 0, %v6468
        %v6470 = vrot.slane %v6465, %v6469
        %v6471 = vadd.bf16 %v6219, %v6421
        %v6472 = vadd.bf16 %v6220, %v6421
        %v6473 = vadd.bf16 %v6221, %v6421
        %v6474 = vadd.bf16 %v6222, %v6421
        %v6475 = vadd.bf16 %v6223, %v6421
        %v6476 = vadd.bf16 %v6224, %v6421
        %v6477 = vadd.bf16 %v6225, %v6421
        %v6478 = vadd.bf16 %v6226, %v6421
        %v6479 = vadd.bf16 %v6227, %v6428
        %v6480 = vadd.bf16 %v6228, %v6428
        %v6481 = vadd.bf16 %v6229, %v6428
        %v6482 = vadd.bf16 %v6230, %v6428
        %v6483 = vadd.bf16 %v6231, %v6428
        %v6484 = vadd.bf16 %v6232, %v6428
        %v6485 = vadd.bf16 %v6233, %v6428
        %v6486 = vadd.bf16 %v6234, %v6428
        %v6487 = vadd.bf16 %v6235, %v6435
        %v6488 = vadd.bf16 %v6236, %v6435
        %v6489 = vadd.bf16 %v6237, %v6435
        %v6490 = vadd.bf16 %v6238, %v6435
        %v6491 = vadd.bf16 %v6239, %v6435
        %v6492 = vadd.bf16 %v6240, %v6435
        %v6493 = vadd.bf16 %v6241, %v6435
        %v6494 = vadd.bf16 %v6242, %v6435
        %v6495 = vadd.bf16 %v6243, %v6442
        %v6496 = vadd.bf16 %v6244, %v6442
        %v6497 = vadd.bf16 %v6245, %v6442
        %v6498 = vadd.bf16 %v6246, %v6442
        %v6499 = vadd.bf16 %v6247, %v6442
        %v6500 = vadd.bf16 %v6248, %v6442
        %v6501 = vadd.bf16 %v6249, %v6442
        %v6502 = vadd.bf16 %v6250, %v6442
        %v6503 = vadd.bf16 %v6251, %v6449
        %v6504 = vadd.bf16 %v6252, %v6449
        %v6505 = vadd.bf16 %v6253, %v6449
        %v6506 = vadd.bf16 %v6254, %v6449
        %v6507 = vadd.bf16 %v6255, %v6449
        %v6508 = vadd.bf16 %v6256, %v6449
        %v6509 = vadd.bf16 %v6257, %v6449
        %v6510 = vadd.bf16 %v6258, %v6449
        %v6511 = vadd.bf16 %v6259, %v6456
        %v6512 = vadd.bf16 %v6260, %v6456
        %v6513 = vadd.bf16 %v6261, %v6456
        %v6514 = vadd.bf16 %v6262, %v6456
        %v6515 = vadd.bf16 %v6263, %v6456
        %v6516 = vadd.bf16 %v6264, %v6456
        %v6517 = vadd.bf16 %v6265, %v6456
        %v6518 = vadd.bf16 %v6266, %v6456
        %v6519 = vadd.bf16 %v6267, %v6463
        %v6520 = vadd.bf16 %v6268, %v6463
        %v6521 = vadd.bf16 %v6269, %v6463
        %v6522 = vadd.bf16 %v6270, %v6463
        %v6523 = vadd.bf16 %v6271, %v6463
        %v6524 = vadd.bf16 %v6272, %v6463
        %v6525 = vadd.bf16 %v6273, %v6463
        %v6526 = vadd.bf16 %v6274, %v6463
        %v6527 = vadd.bf16 %v6275, %v6470
        %v6528 = vadd.bf16 %v6276, %v6470
        %v6529 = vadd.bf16 %v6277, %v6470
        %v6530 = vadd.bf16 %v6278, %v6470
        %v6531 = vadd.bf16 %v6279, %v6470
        %v6532 = vadd.bf16 %v6280, %v6470
        %v6533 = vadd.bf16 %v6281, %v6470
        %v6534 = vadd.bf16 %v6282, %v6470
        %v6535 = vmax.bf16 %v6471, 0
        %v6536 = vmax.bf16 %v6472, 0
        %v6537 = vmax.bf16 %v6473, 0
        %v6538 = vmax.bf16 %v6474, 0
        %v6539 = vmax.bf16 %v6475, 0
        %v6540 = vmax.bf16 %v6476, 0
        %v6541 = vmax.bf16 %v6477, 0
        %v6542 = vmax.bf16 %v6478, 0
        %v6543 = vmax.bf16 %v6479, 0
        %v6544 = vmax.bf16 %v6480, 0
        %v6545 = vmax.bf16 %v6481, 0
        %v6546 = vmax.bf16 %v6482, 0
        %v6547 = vmax.bf16 %v6483, 0
        %v6548 = vmax.bf16 %v6484, 0
        %v6549 = vmax.bf16 %v6485, 0
        %v6550 = vmax.bf16 %v6486, 0
        %v6551 = vmax.bf16 %v6487, 0
        %v6552 = vmax.bf16 %v6488, 0
        %v6553 = vmax.bf16 %v6489, 0
        %v6554 = vmax.bf16 %v6490, 0
        %v6555 = vmax.bf16 %v6491, 0
        %v6556 = vmax.bf16 %v6492, 0
        %v6557 = vmax.bf16 %v6493, 0
        %v6558 = vmax.bf16 %v6494, 0
        %v6559 = vmax.bf16 %v6495, 0
        %v6560 = vmax.bf16 %v6496, 0
        %v6561 = vmax.bf16 %v6497, 0
        %v6562 = vmax.bf16 %v6498, 0
        %v6563 = vmax.bf16 %v6499, 0
        %v6564 = vmax.bf16 %v6500, 0
        %v6565 = vmax.bf16 %v6501, 0
        %v6566 = vmax.bf16 %v6502, 0
        %v6567 = vmax.bf16 %v6503, 0
        %v6568 = vmax.bf16 %v6504, 0
        %v6569 = vmax.bf16 %v6505, 0
        %v6570 = vmax.bf16 %v6506, 0
        %v6571 = vmax.bf16 %v6507, 0
        %v6572 = vmax.bf16 %v6508, 0
        %v6573 = vmax.bf16 %v6509, 0
        %v6574 = vmax.bf16 %v6510, 0
        %v6575 = vmax.bf16 %v6511, 0
        %v6576 = vmax.bf16 %v6512, 0
        %v6577 = vmax.bf16 %v6513, 0
        %v6578 = vmax.bf16 %v6514, 0
        %v6579 = vmax.bf16 %v6515, 0
        %v6580 = vmax.bf16 %v6516, 0
        %v6581 = vmax.bf16 %v6517, 0
        %v6582 = vmax.bf16 %v6518, 0
        %v6583 = vmax.bf16 %v6519, 0
        %v6584 = vmax.bf16 %v6520, 0
        %v6585 = vmax.bf16 %v6521, 0
        %v6586 = vmax.bf16 %v6522, 0
        %v6587 = vmax.bf16 %v6523, 0
        %v6588 = vmax.bf16 %v6524, 0
        %v6589 = vmax.bf16 %v6525, 0
        %v6590 = vmax.bf16 %v6526, 0
        %v6591 = vmax.bf16 %v6527, 0
        %v6592 = vmax.bf16 %v6528, 0
        %v6593 = vmax.bf16 %v6529, 0
        %v6594 = vmax.bf16 %v6530, 0
        %v6595 = vmax.bf16 %v6531, 0
        %v6596 = vmax.bf16 %v6532, 0
        %v6597 = vmax.bf16 %v6533, 0
        %v6598 = vmax.bf16 %v6534, 0
        %s6600 = vtos %v6407
        %v6601 = vstv %s6600
        %v6602 = vpack.i.b16 %v6601, %v6601
        %s6605 = vtos %v6408
        %v6606 = vstv %s6605
        %v6607 = vpack.i.b16 %v6606, %v6606
        %s6610 = vtos %v6409
        %v6611 = vstv %s6610
        %v6612 = vpack.i.b16 %v6611, %v6611
        %s6615 = vtos %v6410
        %v6616 = vstv %s6615
        %v6617 = vpack.i.b16 %v6616, %v6616
        %s6620 = vtos %v6411
        %v6621 = vstv %s6620
        %v6622 = vpack.i.b16 %v6621, %v6621
        %s6625 = vtos %v6412
        %v6626 = vstv %s6625
        %v6627 = vpack.i.b16 %v6626, %v6626
        %s6630 = vtos %v6413
        %v6631 = vstv %s6630
        %v6632 = vpack.i.b16 %v6631, %v6631
        %s6635 = vtos %v6414
        %v6636 = vstv %s6635
        %v6637 = vpack.i.b16 %v6636, %v6636
        %v6639 = vmul.bf16 %v6535, %v6602
        %v6640 = vmul.bf16 %v6536, %v6602
        %v6641 = vmul.bf16 %v6537, %v6602
        %v6642 = vmul.bf16 %v6538, %v6602
        %v6643 = vmul.bf16 %v6539, %v6602
        %v6644 = vmul.bf16 %v6540, %v6602
        %v6645 = vmul.bf16 %v6541, %v6602
        %v6646 = vmul.bf16 %v6542, %v6602
        %v6647 = vmul.bf16 %v6543, %v6607
        %v6648 = vmul.bf16 %v6544, %v6607
        %v6649 = vmul.bf16 %v6545, %v6607
        %v6650 = vmul.bf16 %v6546, %v6607
        %v6651 = vmul.bf16 %v6547, %v6607
        %v6652 = vmul.bf16 %v6548, %v6607
        %v6653 = vmul.bf16 %v6549, %v6607
        %v6654 = vmul.bf16 %v6550, %v6607
        %v6655 = vmul.bf16 %v6551, %v6612
        %v6656 = vmul.bf16 %v6552, %v6612
        %v6657 = vmul.bf16 %v6553, %v6612
        %v6658 = vmul.bf16 %v6554, %v6612
        %v6659 = vmul.bf16 %v6555, %v6612
        %v6660 = vmul.bf16 %v6556, %v6612
        %v6661 = vmul.bf16 %v6557, %v6612
        %v6662 = vmul.bf16 %v6558, %v6612
        %v6663 = vmul.bf16 %v6559, %v6617
        %v6664 = vmul.bf16 %v6560, %v6617
        %v6665 = vmul.bf16 %v6561, %v6617
        %v6666 = vmul.bf16 %v6562, %v6617
        %v6667 = vmul.bf16 %v6563, %v6617
        %v6668 = vmul.bf16 %v6564, %v6617
        %v6669 = vmul.bf16 %v6565, %v6617
        %v6670 = vmul.bf16 %v6566, %v6617
        %v6671 = vmul.bf16 %v6567, %v6622
        %v6672 = vmul.bf16 %v6568, %v6622
        %v6673 = vmul.bf16 %v6569, %v6622
        %v6674 = vmul.bf16 %v6570, %v6622
        %v6675 = vmul.bf16 %v6571, %v6622
        %v6676 = vmul.bf16 %v6572, %v6622
        %v6677 = vmul.bf16 %v6573, %v6622
        %v6678 = vmul.bf16 %v6574, %v6622
        %v6679 = vmul.bf16 %v6575, %v6627
        %v6680 = vmul.bf16 %v6576, %v6627
        %v6681 = vmul.bf16 %v6577, %v6627
        %v6682 = vmul.bf16 %v6578, %v6627
        %v6683 = vmul.bf16 %v6579, %v6627
        %v6684 = vmul.bf16 %v6580, %v6627
        %v6685 = vmul.bf16 %v6581, %v6627
        %v6686 = vmul.bf16 %v6582, %v6627
        %v6687 = vmul.bf16 %v6583, %v6632
        %v6688 = vmul.bf16 %v6584, %v6632
        %v6689 = vmul.bf16 %v6585, %v6632
        %v6690 = vmul.bf16 %v6586, %v6632
        %v6691 = vmul.bf16 %v6587, %v6632
        %v6692 = vmul.bf16 %v6588, %v6632
        %v6693 = vmul.bf16 %v6589, %v6632
        %v6694 = vmul.bf16 %v6590, %v6632
        %v6695 = vmul.bf16 %v6591, %v6637
        %v6696 = vmul.bf16 %v6592, %v6637
        %v6697 = vmul.bf16 %v6593, %v6637
        %v6698 = vmul.bf16 %v6594, %v6637
        %v6699 = vmul.bf16 %v6595, %v6637
        %v6700 = vmul.bf16 %v6596, %v6637
        %v6701 = vmul.bf16 %v6597, %v6637
        %v6702 = vmul.bf16 %v6598, %v6637
        %v6703 = vunpack.c.l.bf16 %v6639
        %v6704 = vunpack.c.h.bf16 %v6639
        %v6705 = vunpack.c.l.bf16 %v6640
        %v6706 = vunpack.c.h.bf16 %v6640
        %v6707 = vunpack.c.l.bf16 %v6641
        %v6708 = vunpack.c.h.bf16 %v6641
        %v6709 = vunpack.c.l.bf16 %v6642
        %v6710 = vunpack.c.h.bf16 %v6642
        %v6711 = vunpack.c.l.bf16 %v6643
        %v6712 = vunpack.c.h.bf16 %v6643
        %v6713 = vunpack.c.l.bf16 %v6644
        %v6714 = vunpack.c.h.bf16 %v6644
        %v6715 = vunpack.c.l.bf16 %v6645
        %v6716 = vunpack.c.h.bf16 %v6645
        %v6717 = vunpack.c.l.bf16 %v6646
        %v6718 = vunpack.c.h.bf16 %v6646
        %v6719 = vunpack.c.l.bf16 %v6647
        %v6720 = vunpack.c.h.bf16 %v6647
        %v6721 = vunpack.c.l.bf16 %v6648
        %v6722 = vunpack.c.h.bf16 %v6648
        %v6723 = vunpack.c.l.bf16 %v6649
        %v6724 = vunpack.c.h.bf16 %v6649
        %v6725 = vunpack.c.l.bf16 %v6650
        %v6726 = vunpack.c.h.bf16 %v6650
        %v6727 = vunpack.c.l.bf16 %v6651
        %v6728 = vunpack.c.h.bf16 %v6651
        %v6729 = vunpack.c.l.bf16 %v6652
        %v6730 = vunpack.c.h.bf16 %v6652
        %v6731 = vunpack.c.l.bf16 %v6653
        %v6732 = vunpack.c.h.bf16 %v6653
        %v6733 = vunpack.c.l.bf16 %v6654
        %v6734 = vunpack.c.h.bf16 %v6654
        %v6735 = vunpack.c.l.bf16 %v6655
        %v6736 = vunpack.c.h.bf16 %v6655
        %v6737 = vunpack.c.l.bf16 %v6656
        %v6738 = vunpack.c.h.bf16 %v6656
        %v6739 = vunpack.c.l.bf16 %v6657
        %v6740 = vunpack.c.h.bf16 %v6657
        %v6741 = vunpack.c.l.bf16 %v6658
        %v6742 = vunpack.c.h.bf16 %v6658
        %v6743 = vunpack.c.l.bf16 %v6659
        %v6744 = vunpack.c.h.bf16 %v6659
        %v6745 = vunpack.c.l.bf16 %v6660
        %v6746 = vunpack.c.h.bf16 %v6660
        %v6747 = vunpack.c.l.bf16 %v6661
        %v6748 = vunpack.c.h.bf16 %v6661
        %v6749 = vunpack.c.l.bf16 %v6662
        %v6750 = vunpack.c.h.bf16 %v6662
        %v6751 = vunpack.c.l.bf16 %v6663
        %v6752 = vunpack.c.h.bf16 %v6663
        %v6753 = vunpack.c.l.bf16 %v6664
        %v6754 = vunpack.c.h.bf16 %v6664
        %v6755 = vunpack.c.l.bf16 %v6665
        %v6756 = vunpack.c.h.bf16 %v6665
        %v6757 = vunpack.c.l.bf16 %v6666
        %v6758 = vunpack.c.h.bf16 %v6666
        %v6759 = vunpack.c.l.bf16 %v6667
        %v6760 = vunpack.c.h.bf16 %v6667
        %v6761 = vunpack.c.l.bf16 %v6668
        %v6762 = vunpack.c.h.bf16 %v6668
        %v6763 = vunpack.c.l.bf16 %v6669
        %v6764 = vunpack.c.h.bf16 %v6669
        %v6765 = vunpack.c.l.bf16 %v6670
        %v6766 = vunpack.c.h.bf16 %v6670
        %v6767 = vunpack.c.l.bf16 %v6671
        %v6768 = vunpack.c.h.bf16 %v6671
        %v6769 = vunpack.c.l.bf16 %v6672
        %v6770 = vunpack.c.h.bf16 %v6672
        %v6771 = vunpack.c.l.bf16 %v6673
        %v6772 = vunpack.c.h.bf16 %v6673
        %v6773 = vunpack.c.l.bf16 %v6674
        %v6774 = vunpack.c.h.bf16 %v6674
        %v6775 = vunpack.c.l.bf16 %v6675
        %v6776 = vunpack.c.h.bf16 %v6675
        %v6777 = vunpack.c.l.bf16 %v6676
        %v6778 = vunpack.c.h.bf16 %v6676
        %v6779 = vunpack.c.l.bf16 %v6677
        %v6780 = vunpack.c.h.bf16 %v6677
        %v6781 = vunpack.c.l.bf16 %v6678
        %v6782 = vunpack.c.h.bf16 %v6678
        %v6783 = vunpack.c.l.bf16 %v6679
        %v6784 = vunpack.c.h.bf16 %v6679
        %v6785 = vunpack.c.l.bf16 %v6680
        %v6786 = vunpack.c.h.bf16 %v6680
        %v6787 = vunpack.c.l.bf16 %v6681
        %v6788 = vunpack.c.h.bf16 %v6681
        %v6789 = vunpack.c.l.bf16 %v6682
        %v6790 = vunpack.c.h.bf16 %v6682
        %v6791 = vunpack.c.l.bf16 %v6683
        %v6792 = vunpack.c.h.bf16 %v6683
        %v6793 = vunpack.c.l.bf16 %v6684
        %v6794 = vunpack.c.h.bf16 %v6684
        %v6795 = vunpack.c.l.bf16 %v6685
        %v6796 = vunpack.c.h.bf16 %v6685
        %v6797 = vunpack.c.l.bf16 %v6686
        %v6798 = vunpack.c.h.bf16 %v6686
        %v6799 = vunpack.c.l.bf16 %v6687
        %v6800 = vunpack.c.h.bf16 %v6687
        %v6801 = vunpack.c.l.bf16 %v6688
        %v6802 = vunpack.c.h.bf16 %v6688
        %v6803 = vunpack.c.l.bf16 %v6689
        %v6804 = vunpack.c.h.bf16 %v6689
        %v6805 = vunpack.c.l.bf16 %v6690
        %v6806 = vunpack.c.h.bf16 %v6690
        %v6807 = vunpack.c.l.bf16 %v6691
        %v6808 = vunpack.c.h.bf16 %v6691
        %v6809 = vunpack.c.l.bf16 %v6692
        %v6810 = vunpack.c.h.bf16 %v6692
        %v6811 = vunpack.c.l.bf16 %v6693
        %v6812 = vunpack.c.h.bf16 %v6693
        %v6813 = vunpack.c.l.bf16 %v6694
        %v6814 = vunpack.c.h.bf16 %v6694
        %v6815 = vunpack.c.l.bf16 %v6695
        %v6816 = vunpack.c.h.bf16 %v6695
        %v6817 = vunpack.c.l.bf16 %v6696
        %v6818 = vunpack.c.h.bf16 %v6696
        %v6819 = vunpack.c.l.bf16 %v6697
        %v6820 = vunpack.c.h.bf16 %v6697
        %v6821 = vunpack.c.l.bf16 %v6698
        %v6822 = vunpack.c.h.bf16 %v6698
        %v6823 = vunpack.c.l.bf16 %v6699
        %v6824 = vunpack.c.h.bf16 %v6699
        %v6825 = vunpack.c.l.bf16 %v6700
        %v6826 = vunpack.c.h.bf16 %v6700
        %v6827 = vunpack.c.l.bf16 %v6701
        %v6828 = vunpack.c.h.bf16 %v6701
        %v6829 = vunpack.c.l.bf16 %v6702
        %v6830 = vunpack.c.h.bf16 %v6702
        %v6831 = vadd.f32 %v6703, %v6719
        %v6832 = vadd.f32 %v6831, %v6735
        %v6833 = vadd.f32 %v6832, %v6751
        %v6834 = vadd.f32 %v6833, %v6767
        %v6835 = vadd.f32 %v6834, %v6783
        %v6836 = vadd.f32 %v6835, %v6799
        %v6837 = vadd.f32 %v6836, %v6815
        %v6838 = vadd.f32 %v6704, %v6720
        %v6839 = vadd.f32 %v6838, %v6736
        %v6840 = vadd.f32 %v6839, %v6752
        %v6841 = vadd.f32 %v6840, %v6768
        %v6842 = vadd.f32 %v6841, %v6784
        %v6843 = vadd.f32 %v6842, %v6800
        %v6844 = vadd.f32 %v6843, %v6816
        %v6845 = vadd.f32 %v6705, %v6721
        %v6846 = vadd.f32 %v6845, %v6737
        %v6847 = vadd.f32 %v6846, %v6753
        %v6848 = vadd.f32 %v6847, %v6769
        %v6849 = vadd.f32 %v6848, %v6785
        %v6850 = vadd.f32 %v6849, %v6801
        %v6851 = vadd.f32 %v6850, %v6817
        %v6852 = vadd.f32 %v6706, %v6722
        %v6853 = vadd.f32 %v6852, %v6738
        %v6854 = vadd.f32 %v6853, %v6754
        %v6855 = vadd.f32 %v6854, %v6770
        %v6856 = vadd.f32 %v6855, %v6786
        %v6857 = vadd.f32 %v6856, %v6802
        %v6858 = vadd.f32 %v6857, %v6818
        %v6859 = vadd.f32 %v6707, %v6723
        %v6860 = vadd.f32 %v6859, %v6739
        %v6861 = vadd.f32 %v6860, %v6755
        %v6862 = vadd.f32 %v6861, %v6771
        %v6863 = vadd.f32 %v6862, %v6787
        %v6864 = vadd.f32 %v6863, %v6803
        %v6865 = vadd.f32 %v6864, %v6819
        %v6866 = vadd.f32 %v6708, %v6724
        %v6867 = vadd.f32 %v6866, %v6740
        %v6868 = vadd.f32 %v6867, %v6756
        %v6869 = vadd.f32 %v6868, %v6772
        %v6870 = vadd.f32 %v6869, %v6788
        %v6871 = vadd.f32 %v6870, %v6804
        %v6872 = vadd.f32 %v6871, %v6820
        %v6873 = vadd.f32 %v6709, %v6725
        %v6874 = vadd.f32 %v6873, %v6741
        %v6875 = vadd.f32 %v6874, %v6757
        %v6876 = vadd.f32 %v6875, %v6773
        %v6877 = vadd.f32 %v6876, %v6789
        %v6878 = vadd.f32 %v6877, %v6805
        %v6879 = vadd.f32 %v6878, %v6821
        %v6880 = vadd.f32 %v6710, %v6726
        %v6881 = vadd.f32 %v6880, %v6742
        %v6882 = vadd.f32 %v6881, %v6758
        %v6883 = vadd.f32 %v6882, %v6774
        %v6884 = vadd.f32 %v6883, %v6790
        %v6885 = vadd.f32 %v6884, %v6806
        %v6886 = vadd.f32 %v6885, %v6822
        %v6887 = vadd.f32 %v6711, %v6727
        %v6888 = vadd.f32 %v6887, %v6743
        %v6889 = vadd.f32 %v6888, %v6759
        %v6890 = vadd.f32 %v6889, %v6775
        %v6891 = vadd.f32 %v6890, %v6791
        %v6892 = vadd.f32 %v6891, %v6807
        %v6893 = vadd.f32 %v6892, %v6823
        %v6894 = vadd.f32 %v6712, %v6728
        %v6895 = vadd.f32 %v6894, %v6744
        %v6896 = vadd.f32 %v6895, %v6760
        %v6897 = vadd.f32 %v6896, %v6776
        %v6898 = vadd.f32 %v6897, %v6792
        %v6899 = vadd.f32 %v6898, %v6808
        %v6900 = vadd.f32 %v6899, %v6824
        %v6901 = vadd.f32 %v6713, %v6729
        %v6902 = vadd.f32 %v6901, %v6745
        %v6903 = vadd.f32 %v6902, %v6761
        %v6904 = vadd.f32 %v6903, %v6777
        %v6905 = vadd.f32 %v6904, %v6793
        %v6906 = vadd.f32 %v6905, %v6809
        %v6907 = vadd.f32 %v6906, %v6825
        %v6908 = vadd.f32 %v6714, %v6730
        %v6909 = vadd.f32 %v6908, %v6746
        %v6910 = vadd.f32 %v6909, %v6762
        %v6911 = vadd.f32 %v6910, %v6778
        %v6912 = vadd.f32 %v6911, %v6794
        %v6913 = vadd.f32 %v6912, %v6810
        %v6914 = vadd.f32 %v6913, %v6826
        %v6915 = vadd.f32 %v6715, %v6731
        %v6916 = vadd.f32 %v6915, %v6747
        %v6917 = vadd.f32 %v6916, %v6763
        %v6918 = vadd.f32 %v6917, %v6779
        %v6919 = vadd.f32 %v6918, %v6795
        %v6920 = vadd.f32 %v6919, %v6811
        %v6921 = vadd.f32 %v6920, %v6827
        %v6922 = vadd.f32 %v6716, %v6732
        %v6923 = vadd.f32 %v6922, %v6748
        %v6924 = vadd.f32 %v6923, %v6764
        %v6925 = vadd.f32 %v6924, %v6780
        %v6926 = vadd.f32 %v6925, %v6796
        %v6927 = vadd.f32 %v6926, %v6812
        %v6928 = vadd.f32 %v6927, %v6828
        %v6929 = vadd.f32 %v6717, %v6733
        %v6930 = vadd.f32 %v6929, %v6749
        %v6931 = vadd.f32 %v6930, %v6765
        %v6932 = vadd.f32 %v6931, %v6781
        %v6933 = vadd.f32 %v6932, %v6797
        %v6934 = vadd.f32 %v6933, %v6813
        %v6935 = vadd.f32 %v6934, %v6829
        %v6936 = vadd.f32 %v6718, %v6734
        %v6937 = vadd.f32 %v6936, %v6750
        %v6938 = vadd.f32 %v6937, %v6766
        %v6939 = vadd.f32 %v6938, %v6782
        %v6940 = vadd.f32 %v6939, %v6798
        %v6941 = vadd.f32 %v6940, %v6814
        %v6942 = vadd.f32 %v6941, %v6830
        %v6943 = vpack.c.bf16 %v6844, %v6837
        %v6944 = vpack.c.bf16 %v6858, %v6851
        %v6945 = vpack.c.bf16 %v6872, %v6865
        %v6946 = vpack.c.bf16 %v6886, %v6879
        %v6947 = vpack.c.bf16 %v6900, %v6893
        %v6948 = vpack.c.bf16 %v6914, %v6907
        %v6949 = vpack.c.bf16 %v6928, %v6921
        %v6950 = vpack.c.bf16 %v6942, %v6935
        %v6951 = vunpack.c.l.bf16 %v6943
        %v6952 = vunpack.c.h.bf16 %v6943
        %v6953 = vunpack.c.l.bf16 %v6944
        %v6954 = vunpack.c.h.bf16 %v6944
        %v6955 = vunpack.c.l.bf16 %v6945
        %v6956 = vunpack.c.h.bf16 %v6945
        %v6957 = vunpack.c.l.bf16 %v6946
        %v6958 = vunpack.c.h.bf16 %v6946
        %v6959 = vunpack.c.l.bf16 %v6947
        %v6960 = vunpack.c.h.bf16 %v6947
        %v6961 = vunpack.c.l.bf16 %v6948
        %v6962 = vunpack.c.h.bf16 %v6948
        %v6963 = vunpack.c.l.bf16 %v6949
        %v6964 = vunpack.c.h.bf16 %v6949
        %v6965 = vunpack.c.l.bf16 %v6950
        %v6966 = vunpack.c.h.bf16 %v6950
        %v6967 = vadd.f32 %v5667, %v6951
        %v6968 = vadd.f32 %v5668, %v6952
        %v6969 = vadd.f32 %v5669, %v6953
        %v6970 = vadd.f32 %v5670, %v6954
        %v6971 = vadd.f32 %v5671, %v6955
        %v6972 = vadd.f32 %v5672, %v6956
        %v6973 = vadd.f32 %v5673, %v6957
        %v6974 = vadd.f32 %v5674, %v6958
        %v6975 = vadd.f32 %v5675, %v6959
        %v6976 = vadd.f32 %v5676, %v6960
        %v6977 = vadd.f32 %v5677, %v6961
        %v6978 = vadd.f32 %v5678, %v6962
        %v6979 = vadd.f32 %v5679, %v6963
        %v6980 = vadd.f32 %v5680, %v6964
        %v6981 = vadd.f32 %v5681, %v6965
        %v6982 = vadd.f32 %v5682, %v6966
        %s6983 = scalar_lea.vmem [#allocation7], %s513
        %v6984 = vld [vmem:[%s6983] sm:$0xff]
        %v6985 = vld [vmem:[%s6983 + $0x8] sm:$0xff]
        %v6986 = vld [vmem:[%s6983 + $0x10] sm:$0xff]
        %v6987 = vld [vmem:[%s6983 + $0x18] sm:$0xff]
        %v6988 = vld [vmem:[%s6983 + $0x20] sm:$0xff]
        %v6989 = vld [vmem:[%s6983 + $0x28] sm:$0xff]
        %v6990 = vld [vmem:[%s6983 + $0x30] sm:$0xff]
        %v6991 = vld [vmem:[%s6983 + $0x38] sm:$0xff]
        %v6992 = vld [vmem:[%s6983 + $0x40] sm:$0xff]
        %v6993 = vld [vmem:[%s6983 + $0x48] sm:$0xff]
        %v6994 = vld [vmem:[%s6983 + $0x50] sm:$0xff]
        %v6995 = vld [vmem:[%s6983 + $0x58] sm:$0xff]
        %v6996 = vld [vmem:[%s6983 + $0x60] sm:$0xff]
        %v6997 = vld [vmem:[%s6983 + $0x68] sm:$0xff]
        %v6998 = vld [vmem:[%s6983 + $0x70] sm:$0xff]
        %v6999 = vld [vmem:[%s6983 + $0x78] sm:$0xff]
        %v7000 = vld [vmem:[#allocation6] sm:$0x1]
        %7002 = vset.pattern.permute.xlu0 0
        %7003 = vperm.xlu0 %7002, %v6984
        %v7004 = vpop.permute.xlu0 %7003
        %7007 = vset.pattern.permute.xlu0 0
        %7008 = vperm.xlu0 %7007, %v6985
        %v7009 = vpop.permute.xlu0 %7008
        %7012 = vset.pattern.permute.xlu0 0
        %7013 = vperm.xlu0 %7012, %v6986
        %v7014 = vpop.permute.xlu0 %7013
        %7017 = vset.pattern.permute.xlu0 0
        %7018 = vperm.xlu0 %7017, %v6987
        %v7019 = vpop.permute.xlu0 %7018
        %7022 = vset.pattern.permute.xlu0 0
        %7023 = vperm.xlu0 %7022, %v6988
        %v7024 = vpop.permute.xlu0 %7023
        %7027 = vset.pattern.permute.xlu0 0
        %7028 = vperm.xlu0 %7027, %v6989
        %v7029 = vpop.permute.xlu0 %7028
        %7032 = vset.pattern.permute.xlu0 0
        %7033 = vperm.xlu0 %7032, %v6990
        %v7034 = vpop.permute.xlu0 %7033
        %7037 = vset.pattern.permute.xlu0 0
        %7038 = vperm.xlu0 %7037, %v6991
        %v7039 = vpop.permute.xlu0 %7038
        %7042 = vset.pattern.permute.xlu0 0
        %7043 = vperm.xlu0 %7042, %v6992
        %v7044 = vpop.permute.xlu0 %7043
        %7047 = vset.pattern.permute.xlu0 0
        %7048 = vperm.xlu0 %7047, %v6993
        %v7049 = vpop.permute.xlu0 %7048
        %7052 = vset.pattern.permute.xlu0 0
        %7053 = vperm.xlu0 %7052, %v6994
        %v7054 = vpop.permute.xlu0 %7053
        %7057 = vset.pattern.permute.xlu0 0
        %7058 = vperm.xlu0 %7057, %v6995
        %v7059 = vpop.permute.xlu0 %7058
        %7062 = vset.pattern.permute.xlu0 0
        %7063 = vperm.xlu0 %7062, %v6996
        %v7064 = vpop.permute.xlu0 %7063
        %7067 = vset.pattern.permute.xlu0 0
        %7068 = vperm.xlu0 %7067, %v6997
        %v7069 = vpop.permute.xlu0 %7068
        %7072 = vset.pattern.permute.xlu0 0
        %7073 = vperm.xlu0 %7072, %v6998
        %v7074 = vpop.permute.xlu0 %7073
        %7077 = vset.pattern.permute.xlu0 0
        %7078 = vperm.xlu0 %7077, %v6999
        %v7079 = vpop.permute.xlu0 %7078
        %v7082 = vlaneseq
        %v7083 = vshrl.u32 %v7082, 7
        %v7084 = vsub.s32 0, %v7083
        %v7085 = vrot.slane %v7000, %v7084
        %v7087 = vadd.f32 %v7004, %v7085
        %v7088 = vadd.f32 %v7009, %v7085
        %v7089 = vadd.f32 %v7014, %v7085
        %v7090 = vadd.f32 %v7019, %v7085
        %v7091 = vadd.f32 %v7024, %v7085
        %v7092 = vadd.f32 %v7029, %v7085
        %v7093 = vadd.f32 %v7034, %v7085
        %v7094 = vadd.f32 %v7039, %v7085
        %v7095 = vadd.f32 %v7044, %v7085
        %v7096 = vadd.f32 %v7049, %v7085
        %v7097 = vadd.f32 %v7054, %v7085
        %v7098 = vadd.f32 %v7059, %v7085
        %v7099 = vadd.f32 %v7064, %v7085
        %v7100 = vadd.f32 %v7069, %v7085
        %v7101 = vadd.f32 %v7074, %v7085
        %v7102 = vadd.f32 %v7079, %v7085
        %v7103 = vmul.f32 %v6967, 0.8
        %v7104 = vmul.f32 %v6968, 0.8
        %v7105 = vmul.f32 %v6969, 0.8
        %v7106 = vmul.f32 %v6970, 0.8
        %v7107 = vmul.f32 %v6971, 0.8
        %v7108 = vmul.f32 %v6972, 0.8
        %v7109 = vmul.f32 %v6973, 0.8
        %v7110 = vmul.f32 %v6974, 0.8
        %v7111 = vmul.f32 %v6975, 0.8
        %v7112 = vmul.f32 %v6976, 0.8
        %v7113 = vmul.f32 %v6977, 0.8
        %v7114 = vmul.f32 %v6978, 0.8
        %v7115 = vmul.f32 %v6979, 0.8
        %v7116 = vmul.f32 %v6980, 0.8
        %v7117 = vmul.f32 %v6981, 0.8
        %v7118 = vmul.f32 %v6982, 0.8
        %v7119 = vadd.f32 %v7087, %v7103
        %v7120 = vadd.f32 %v7088, %v7104
        %v7121 = vadd.f32 %v7089, %v7105
        %v7122 = vadd.f32 %v7090, %v7106
        %v7123 = vadd.f32 %v7091, %v7107
        %v7124 = vadd.f32 %v7092, %v7108
        %v7125 = vadd.f32 %v7093, %v7109
        %v7126 = vadd.f32 %v7094, %v7110
        %v7127 = vadd.f32 %v7095, %v7111
        %v7128 = vadd.f32 %v7096, %v7112
        %v7129 = vadd.f32 %v7097, %v7113
        %v7130 = vadd.f32 %v7098, %v7114
        %v7131 = vadd.f32 %v7099, %v7115
        %v7132 = vadd.f32 %v7100, %v7116
        %v7133 = vadd.f32 %v7101, %v7117
        %v7134 = vadd.f32 %v7102, %v7118
        %v7135 = vsel %vm1709, %v7119, -1e+30
        %v7136 = vsel %vm1710, %v7120, -1e+30
        %v7137 = vsel %vm1711, %v7121, -1e+30
        %v7138 = vsel %vm1712, %v7122, -1e+30
        %v7139 = vsel %vm1713, %v7123, -1e+30
        %v7140 = vsel %vm1714, %v7124, -1e+30
        %v7141 = vsel %vm1715, %v7125, -1e+30
        %v7142 = vsel %vm1716, %v7126, -1e+30
        %v7143 = vsel %vm1717, %v7127, -1e+30
        %v7144 = vsel %vm1718, %v7128, -1e+30
        %v7145 = vsel %vm1719, %v7129, -1e+30
        %v7146 = vsel %vm1720, %v7130, -1e+30
        %v7147 = vsel %vm1721, %v7131, -1e+30
        %v7148 = vsel %vm1722, %v7132, -1e+30
        %v7149 = vsel %vm1723, %v7133, -1e+30
        %v7150 = vsel %vm1724, %v7134, -1e+30
        %7151 = vmax.xlane.f32.xlu0 %v7135
        %v7152 = vpop.xlane.xlu0 %7151
        %7153 = vmax.xlane.f32.xlu0 %v7136
        %v7154 = vpop.xlane.xlu0 %7153
        %7155 = vmax.xlane.f32.xlu0 %v7137
        %v7156 = vpop.xlane.xlu0 %7155
        %7157 = vmax.xlane.f32.xlu0 %v7138
        %v7158 = vpop.xlane.xlu0 %7157
        %7159 = vmax.xlane.f32.xlu0 %v7139
        %v7160 = vpop.xlane.xlu0 %7159
        %7161 = vmax.xlane.f32.xlu0 %v7140
        %v7162 = vpop.xlane.xlu0 %7161
        %7163 = vmax.xlane.f32.xlu0 %v7141
        %v7164 = vpop.xlane.xlu0 %7163
        %7165 = vmax.xlane.f32.xlu0 %v7142
        %v7166 = vpop.xlane.xlu0 %7165
        %7167 = vmax.xlane.f32.xlu0 %v7143
        %v7168 = vpop.xlane.xlu0 %7167
        %7169 = vmax.xlane.f32.xlu0 %v7144
        %v7170 = vpop.xlane.xlu0 %7169
        %7171 = vmax.xlane.f32.xlu0 %v7145
        %v7172 = vpop.xlane.xlu0 %7171
        %7173 = vmax.xlane.f32.xlu0 %v7146
        %v7174 = vpop.xlane.xlu0 %7173
        %7175 = vmax.xlane.f32.xlu0 %v7147
        %v7176 = vpop.xlane.xlu0 %7175
        %7177 = vmax.xlane.f32.xlu0 %v7148
        %v7178 = vpop.xlane.xlu0 %7177
        %7179 = vmax.xlane.f32.xlu0 %v7149
        %v7180 = vpop.xlane.xlu0 %7179
        %7181 = vmax.xlane.f32.xlu0 %v7150
        %v7182 = vpop.xlane.xlu0 %7181
        %v7183 = vsub.f32 %v7135, %v7152
        %v7184 = vsub.f32 %v7136, %v7154
        %v7185 = vsub.f32 %v7137, %v7156
        %v7186 = vsub.f32 %v7138, %v7158
        %v7187 = vsub.f32 %v7139, %v7160
        %v7188 = vsub.f32 %v7140, %v7162
        %v7189 = vsub.f32 %v7141, %v7164
        %v7190 = vsub.f32 %v7142, %v7166
        %v7191 = vsub.f32 %v7143, %v7168
        %v7192 = vsub.f32 %v7144, %v7170
        %v7193 = vsub.f32 %v7145, %v7172
        %v7194 = vsub.f32 %v7146, %v7174
        %v7195 = vsub.f32 %v7147, %v7176
        %v7196 = vsub.f32 %v7148, %v7178
        %v7197 = vsub.f32 %v7149, %v7180
        %v7198 = vsub.f32 %v7150, %v7182
        %v7199 = vmul.f32 %v7183, 1.442695
        %v7200 = vpow.pop %v7199
        %v7201 = vmul.f32 %v7184, 1.442695
        %v7202 = vpow.pop %v7201
        %v7203 = vmul.f32 %v7185, 1.442695
        %v7204 = vpow.pop %v7203
        %v7205 = vmul.f32 %v7186, 1.442695
        %v7206 = vpow.pop %v7205
        %v7207 = vmul.f32 %v7187, 1.442695
        %v7208 = vpow.pop %v7207
        %v7209 = vmul.f32 %v7188, 1.442695
        %v7210 = vpow.pop %v7209
        %v7211 = vmul.f32 %v7189, 1.442695
        %v7212 = vpow.pop %v7211
        %v7213 = vmul.f32 %v7190, 1.442695
        %v7214 = vpow.pop %v7213
        %v7215 = vmul.f32 %v7191, 1.442695
        %v7216 = vpow.pop %v7215
        %v7217 = vmul.f32 %v7192, 1.442695
        %v7218 = vpow.pop %v7217
        %v7219 = vmul.f32 %v7193, 1.442695
        %v7220 = vpow.pop %v7219
        %v7221 = vmul.f32 %v7194, 1.442695
        %v7222 = vpow.pop %v7221
        %v7223 = vmul.f32 %v7195, 1.442695
        %v7224 = vpow.pop %v7223
        %v7225 = vmul.f32 %v7196, 1.442695
        %v7226 = vpow.pop %v7225
        %v7227 = vmul.f32 %v7197, 1.442695
        %v7228 = vpow.pop %v7227
        %v7229 = vmul.f32 %v7198, 1.442695
        %v7230 = vpow.pop %v7229
        %v7231 = vsel %vm1709, %v7200, 0.0
        %v7232 = vsel %vm1710, %v7202, 0.0
        %v7233 = vsel %vm1711, %v7204, 0.0
        %v7234 = vsel %vm1712, %v7206, 0.0
        %v7235 = vsel %vm1713, %v7208, 0.0
        %v7236 = vsel %vm1714, %v7210, 0.0
        %v7237 = vsel %vm1715, %v7212, 0.0
        %v7238 = vsel %vm1716, %v7214, 0.0
        %v7239 = vsel %vm1717, %v7216, 0.0
        %v7240 = vsel %vm1718, %v7218, 0.0
        %v7241 = vsel %vm1719, %v7220, 0.0
        %v7242 = vsel %vm1720, %v7222, 0.0
        %v7243 = vsel %vm1721, %v7224, 0.0
        %v7244 = vsel %vm1722, %v7226, 0.0
        %v7245 = vsel %vm1723, %v7228, 0.0
        %v7246 = vsel %vm1724, %v7230, 0.0
        %7247 = vadd.xlane.f32.xlu0 %v7231
        %v7248 = vpop.xlane.xlu0 %7247
        %7249 = vadd.xlane.f32.xlu0 %v7232
        %v7250 = vpop.xlane.xlu0 %7249
        %7251 = vadd.xlane.f32.xlu0 %v7233
        %v7252 = vpop.xlane.xlu0 %7251
        %7253 = vadd.xlane.f32.xlu0 %v7234
        %v7254 = vpop.xlane.xlu0 %7253
        %7255 = vadd.xlane.f32.xlu0 %v7235
        %v7256 = vpop.xlane.xlu0 %7255
        %7257 = vadd.xlane.f32.xlu0 %v7236
        %v7258 = vpop.xlane.xlu0 %7257
        %7259 = vadd.xlane.f32.xlu0 %v7237
        %v7260 = vpop.xlane.xlu0 %7259
        %7261 = vadd.xlane.f32.xlu0 %v7238
        %v7262 = vpop.xlane.xlu0 %7261
        %7263 = vadd.xlane.f32.xlu0 %v7239
        %v7264 = vpop.xlane.xlu0 %7263
        %7265 = vadd.xlane.f32.xlu0 %v7240
        %v7266 = vpop.xlane.xlu0 %7265
        %7267 = vadd.xlane.f32.xlu0 %v7241
        %v7268 = vpop.xlane.xlu0 %7267
        %7269 = vadd.xlane.f32.xlu0 %v7242
        %v7270 = vpop.xlane.xlu0 %7269
        %7271 = vadd.xlane.f32.xlu0 %v7243
        %v7272 = vpop.xlane.xlu0 %7271
        %7273 = vadd.xlane.f32.xlu0 %v7244
        %v7274 = vpop.xlane.xlu0 %7273
        %7275 = vadd.xlane.f32.xlu0 %v7245
        %v7276 = vpop.xlane.xlu0 %7275
        %7277 = vadd.xlane.f32.xlu0 %v7246
        %v7278 = vpop.xlane.xlu0 %7277
        %v7279 = vmax.f32 %v7248, 1e-20
        %v7280 = vmax.f32 %v7250, 1e-20
        %v7281 = vmax.f32 %v7252, 1e-20
        %v7282 = vmax.f32 %v7254, 1e-20
        %v7283 = vmax.f32 %v7256, 1e-20
        %v7284 = vmax.f32 %v7258, 1e-20
        %v7285 = vmax.f32 %v7260, 1e-20
        %v7286 = vmax.f32 %v7262, 1e-20
        %v7287 = vmax.f32 %v7264, 1e-20
        %v7288 = vmax.f32 %v7266, 1e-20
        %v7289 = vmax.f32 %v7268, 1e-20
        %v7290 = vmax.f32 %v7270, 1e-20
        %v7291 = vmax.f32 %v7272, 1e-20
        %v7292 = vmax.f32 %v7274, 1e-20
        %v7293 = vmax.f32 %v7276, 1e-20
        %v7294 = vmax.f32 %v7278, 1e-20
        %v7295 = vrcp.pop %v7279
        %v7296 = vrcp.pop %v7280
        %v7297 = vrcp.pop %v7281
        %v7298 = vrcp.pop %v7282
        %v7299 = vrcp.pop %v7283
        %v7300 = vrcp.pop %v7284
        %v7301 = vrcp.pop %v7285
        %v7302 = vrcp.pop %v7286
        %v7303 = vrcp.pop %v7287
        %v7304 = vrcp.pop %v7288
        %v7305 = vrcp.pop %v7289
        %v7306 = vrcp.pop %v7290
        %v7307 = vrcp.pop %v7291
        %v7308 = vrcp.pop %v7292
        %v7309 = vrcp.pop %v7293
        %v7310 = vrcp.pop %v7294
        %v7311 = vmul.f32 %v7231, %v7295
        %v7312 = vmul.f32 %v7232, %v7296
        %v7313 = vmul.f32 %v7233, %v7297
        %v7314 = vmul.f32 %v7234, %v7298
        %v7315 = vmul.f32 %v7235, %v7299
        %v7316 = vmul.f32 %v7236, %v7300
        %v7317 = vmul.f32 %v7237, %v7301
        %v7318 = vmul.f32 %v7238, %v7302
        %v7319 = vmul.f32 %v7239, %v7303
        %v7320 = vmul.f32 %v7240, %v7304
        %v7321 = vmul.f32 %v7241, %v7305
        %v7322 = vmul.f32 %v7242, %v7306
        %v7323 = vmul.f32 %v7243, %v7307
        %v7324 = vmul.f32 %v7244, %v7308
        %v7325 = vmul.f32 %v7245, %v7309
        %v7326 = vmul.f32 %v7246, %v7310
        %v7327 = vld [vmem:[#allocation3] sm:$0xff]
        %v7328 = vld [vmem:[#allocation3 + $0x8] sm:$0xff]
        %v7329 = vld [vmem:[#allocation3 + $0x10] sm:$0xff]
        %v7330 = vld [vmem:[#allocation3 + $0x18] sm:$0xff]
        %v7331 = vld [vmem:[#allocation3 + $0x20] sm:$0xff]
        %v7332 = vld [vmem:[#allocation3 + $0x28] sm:$0xff]
        %v7333 = vld [vmem:[#allocation3 + $0x30] sm:$0xff]
        %v7334 = vld [vmem:[#allocation3 + $0x38] sm:$0xff]
        %v7335 = vld [vmem:[#allocation3 + $0x40] sm:$0xff]
        %v7336 = vld [vmem:[#allocation3 + $0x48] sm:$0xff]
        %v7337 = vld [vmem:[#allocation3 + $0x50] sm:$0xff]
        %v7338 = vld [vmem:[#allocation3 + $0x58] sm:$0xff]
        %v7339 = vld [vmem:[#allocation3 + $0x60] sm:$0xff]
        %v7340 = vld [vmem:[#allocation3 + $0x68] sm:$0xff]
        %v7341 = vld [vmem:[#allocation3 + $0x70] sm:$0xff]
        %v7342 = vld [vmem:[#allocation3 + $0x78] sm:$0xff]
        %v7343 = vld [vmem:[#allocation9] sm:$0x1]
        %v7345 = vlaneseq
        %v7346 = vshrl.u32 %v7345, 7
        %v7347 = vsub.s32 0, %v7346
        %v7348 = vrot.slane %v7343, %v7347
        %7350 = vmatprep.subr.mxu0 0.0
        %7351 = vmatpush1.msra.mxu0 %v7342
        %7352 = vmatprep.subr.mxu0 0.0
        %7353 = vmatpush1.msra.mxu0 %v7341
        %7354 = vmatprep.subr.mxu0 0.0
        %7355 = vmatpush1.msra.mxu0 %v7340
        %7356 = vmatprep.subr.mxu0 0.0
        %7357 = vmatpush1.msra.mxu0 %v7339
        %7358 = vmatprep.subr.mxu0 0.0
        %7359 = vmatpush1.msra.mxu0 %v7338
        %7360 = vmatprep.subr.mxu0 0.0
        %7361 = vmatpush1.msra.mxu0 %v7337
        %7362 = vmatprep.subr.mxu0 0.0
        %7363 = vmatpush1.msra.mxu0 %v7336
        %7364 = vmatprep.subr.mxu0 0.0
        %7365 = vmatpush1.msra.mxu0 %v7335
        %7366 = vmatprep.subr.mxu0 0.0
        %7367 = vmatpush1.msra.mxu0 %v7334
        %7368 = vmatprep.subr.mxu0 0.0
        %7369 = vmatpush1.msra.mxu0 %v7333
        %7370 = vmatprep.subr.mxu0 0.0
        %7371 = vmatpush1.msra.mxu0 %v7332
        %7372 = vmatprep.subr.mxu0 0.0
        %7373 = vmatpush1.msra.mxu0 %v7331
        %7374 = vmatprep.subr.mxu0 0.0
        %7375 = vmatpush1.msra.mxu0 %v7330
        %7376 = vmatprep.subr.mxu0 0.0
        %7377 = vmatpush1.msra.mxu0 %v7329
        %7378 = vmatprep.subr.mxu0 0.0
        %7379 = vmatpush1.msra.mxu0 %v7328
        %7380 = vmatprep.subr.mxu0 0.0
        %7381 = vmatpush1.msra.mxu0 %v7327
        %7382 = vmatprep.subr.mxu0 0.0
        %7383 = vmatpush2.msra.mxu0 0.0
        %7384 = vmatprep.subr.mxu0 0.0
        %7385 = vmatpush2.msra.mxu0 0.0
        %7386 = vmatprep.subr.mxu0 0.0
        %7387 = vmatpush2.msra.mxu0 0.0
        %7388 = vmatprep.subr.mxu0 0.0
        %7389 = vmatpush2.msra.mxu0 0.0
        %7390 = vmatprep.subr.mxu0 0.0
        %7391 = vmatpush2.msra.mxu0 0.0
        %7392 = vmatprep.subr.mxu0 0.0
        %7393 = vmatpush2.msra.mxu0 0.0
        %7394 = vmatprep.subr.mxu0 0.0
        %7395 = vmatpush2.msra.mxu0 0.0
        %7396 = vmatprep.subr.mxu0 0.0
        %7397 = vmatpush2.msra.mxu0 0.0
        %7398 = vmatprep.subr.mxu0 0.0
        %7399 = vmatpush2.msra.mxu0 0.0
        %7400 = vmatprep.subr.mxu0 0.0
        %7401 = vmatpush2.msra.mxu0 0.0
        %7402 = vmatprep.subr.mxu0 0.0
        %7403 = vmatpush2.msra.mxu0 0.0
        %7404 = vmatprep.subr.mxu0 0.0
        %7405 = vmatpush2.msra.mxu0 0.0
        %7406 = vmatprep.subr.mxu0 0.0
        %7407 = vmatpush2.msra.mxu0 0.0
        %7408 = vmatprep.subr.mxu0 0.0
        %7409 = vmatpush2.msra.mxu0 0.0
        %7410 = vmatprep.subr.mxu0 0.0
        %7411 = vmatpush2.msra.mxu0 0.0
        %7412 = vmatprep.subr.mxu0 0.0
        %7413 = vmatpush2.msra.mxu0 0.0
        %7414 = vmatprep.mubr.f32.mxu0 0.0
        %7415 = vmatmul.mubr.f32.gmra.mxu0 %v7311
        %v7416 = vpop.f32.mrf.mxu0
        %v7417 = vadd.f32 %v7348, %v7416
        %v7418 = vpop.f32.mrf.mxu0
        %7419 = vmatprep.mubr.f32.mxu0 0.0
        %7420 = vmatmul.mubr.f32.gmra.mxu0 %v7312
        %v7421 = vpop.f32.mrf.mxu0
        %v7422 = vadd.f32 %v7348, %v7421
        %v7423 = vpop.f32.mrf.mxu0
        %7424 = vmatprep.mubr.f32.mxu0 0.0
        %7425 = vmatmul.mubr.f32.gmra.mxu0 %v7313
        %v7426 = vpop.f32.mrf.mxu0
        %v7427 = vadd.f32 %v7348, %v7426
        %v7428 = vpop.f32.mrf.mxu0
        %7429 = vmatprep.mubr.f32.mxu0 0.0
        %7430 = vmatmul.mubr.f32.gmra.mxu0 %v7314
        %v7431 = vpop.f32.mrf.mxu0
        %v7432 = vadd.f32 %v7348, %v7431
        %v7433 = vpop.f32.mrf.mxu0
        %7434 = vmatprep.mubr.f32.mxu0 0.0
        %7435 = vmatmul.mubr.f32.gmra.mxu0 %v7315
        %v7436 = vpop.f32.mrf.mxu0
        %v7437 = vadd.f32 %v7348, %v7436
        %v7438 = vpop.f32.mrf.mxu0
        %7439 = vmatprep.mubr.f32.mxu0 0.0
        %7440 = vmatmul.mubr.f32.gmra.mxu0 %v7316
        %v7441 = vpop.f32.mrf.mxu0
        %v7442 = vadd.f32 %v7348, %v7441
        %v7443 = vpop.f32.mrf.mxu0
        %7444 = vmatprep.mubr.f32.mxu0 0.0
        %7445 = vmatmul.mubr.f32.gmra.mxu0 %v7317
        %v7446 = vpop.f32.mrf.mxu0
        %v7447 = vadd.f32 %v7348, %v7446
        %v7448 = vpop.f32.mrf.mxu0
        %7449 = vmatprep.mubr.f32.mxu0 0.0
        %7450 = vmatmul.mubr.f32.gmra.mxu0 %v7318
        %v7451 = vpop.f32.mrf.mxu0
        %v7452 = vadd.f32 %v7348, %v7451
        %v7453 = vpop.f32.mrf.mxu0
        %7454 = vmatprep.mubr.f32.mxu0 0.0
        %7455 = vmatmul.mubr.f32.gmra.mxu0 %v7319
        %v7456 = vpop.f32.mrf.mxu0
        %v7457 = vadd.f32 %v7348, %v7456
        %v7458 = vpop.f32.mrf.mxu0
        %7459 = vmatprep.mubr.f32.mxu0 0.0
        %7460 = vmatmul.mubr.f32.gmra.mxu0 %v7320
        %v7461 = vpop.f32.mrf.mxu0
        %v7462 = vadd.f32 %v7348, %v7461
        %v7463 = vpop.f32.mrf.mxu0
        %7464 = vmatprep.mubr.f32.mxu0 0.0
        %7465 = vmatmul.mubr.f32.gmra.mxu0 %v7321
        %v7466 = vpop.f32.mrf.mxu0
        %v7467 = vadd.f32 %v7348, %v7466
        %v7468 = vpop.f32.mrf.mxu0
        %7469 = vmatprep.mubr.f32.mxu0 0.0
        %7470 = vmatmul.mubr.f32.gmra.mxu0 %v7322
        %v7471 = vpop.f32.mrf.mxu0
        %v7472 = vadd.f32 %v7348, %v7471
        %v7473 = vpop.f32.mrf.mxu0
        %7474 = vmatprep.mubr.f32.mxu0 0.0
        %7475 = vmatmul.mubr.f32.gmra.mxu0 %v7323
        %v7476 = vpop.f32.mrf.mxu0
        %v7477 = vadd.f32 %v7348, %v7476
        %v7478 = vpop.f32.mrf.mxu0
        %7479 = vmatprep.mubr.f32.mxu0 0.0
        %7480 = vmatmul.mubr.f32.gmra.mxu0 %v7324
        %v7481 = vpop.f32.mrf.mxu0
        %v7482 = vadd.f32 %v7348, %v7481
        %v7483 = vpop.f32.mrf.mxu0
        %7484 = vmatprep.mubr.f32.mxu0 0.0
        %7485 = vmatmul.mubr.f32.gmra.mxu0 %v7325
        %v7486 = vpop.f32.mrf.mxu0
        %v7487 = vadd.f32 %v7348, %v7486
        %v7488 = vpop.f32.mrf.mxu0
        %7489 = vmatprep.mubr.f32.mxu0 0.0
        %7490 = vmatmul.mubr.f32.gmra.mxu0 %v7326
        %v7491 = vpop.f32.mrf.mxu0
        %v7492 = vadd.f32 %v7348, %v7491
        %v7493 = vpop.f32.mrf.mxu0
        %7494 = vdwg.mxu0
        %p7495 = scmp.lt.s32.totalorder %s35, 2
        // Predicated region
        $region85: #{tpu_custom_call.1} parent=67 // pred_check
          %p7496 = pneg %p7495
        $region86: #{tpu_custom_call.1} parent=67 // pred_check_branch
          %7498 = sbr.rel (%p7496) target = $region88
        $region87: #{tpu_custom_call.1} parent=67 // pred_region
          %v7499 = vmax.f32 %v7417, 0.0
          %v7500 = vmax.f32 %v7422, 0.0
          %v7501 = vmax.f32 %v7427, 0.0
          %v7502 = vmax.f32 %v7432, 0.0
          %v7503 = vmax.f32 %v7437, 0.0
          %v7504 = vmax.f32 %v7442, 0.0
          %v7505 = vmax.f32 %v7447, 0.0
          %v7506 = vmax.f32 %v7452, 0.0
          %v7507 = vmax.f32 %v7457, 0.0
          %v7508 = vmax.f32 %v7462, 0.0
          %v7509 = vmax.f32 %v7467, 0.0
          %v7510 = vmax.f32 %v7472, 0.0
          %v7511 = vmax.f32 %v7477, 0.0
          %v7512 = vmax.f32 %v7482, 0.0
          %v7513 = vmax.f32 %v7487, 0.0
          %v7514 = vmax.f32 %v7492, 0.0
          %p7515 = scmp.lt.s32.totalorder %s35, 0
          %s7516 = ssub.s32 0, %s35
          %s7517 = scalar_select %p7515, %s7516, %s35
          %s7518 = sand.u32 %s7517, 1
          %s7519 = ssub.s32 0, %s7518
          %s7520 = scalar_select %p7515, %s7519, %s7518
          %p7521 = scmp.ne.s32.totalorder %s7520, 0
          %p7522 = scmp.lt.s32.totalorder %s7520, 0
          %p7523 = pnand %p7522, %p7521
          %p7524 = pneg %p7523
          %s7525 = sadd.s32 %s7520, 2
          %s7526 = scalar_select %p7524, %s7525, %s7520
          %s7527 = smul.u32 %s7526, 128
          %s7528 = sadd.s32 %s513, %s7527
          %s7529 = scalar_lea.vmem [#allocation2], %s7528
          %vm7530 = vcmask 261120
          %7531 = vst.msk [vmem:[%s7529] sm:$0xff] %vm7530, %v7499
          %7532 = vst.msk [vmem:[%s7529 + $0x8] sm:$0xff] %vm7530, %v7500
          %7533 = vst.msk [vmem:[%s7529 + $0x10] sm:$0xff] %vm7530, %v7501
          %7534 = vst.msk [vmem:[%s7529 + $0x18] sm:$0xff] %vm7530, %v7502
          %7535 = vst.msk [vmem:[%s7529 + $0x20] sm:$0xff] %vm7530, %v7503
          %7536 = vst.msk [vmem:[%s7529 + $0x28] sm:$0xff] %vm7530, %v7504
          %7537 = vst.msk [vmem:[%s7529 + $0x30] sm:$0xff] %vm7530, %v7505
          %7538 = vst.msk [vmem:[%s7529 + $0x38] sm:$0xff] %vm7530, %v7506
          %7539 = vst.msk [vmem:[%s7529 + $0x40] sm:$0xff] %vm7530, %v7507
          %7540 = vst.msk [vmem:[%s7529 + $0x48] sm:$0xff] %vm7530, %v7508
          %7541 = vst.msk [vmem:[%s7529 + $0x50] sm:$0xff] %vm7530, %v7509
          %7542 = vst.msk [vmem:[%s7529 + $0x58] sm:$0xff] %vm7530, %v7510
          %7543 = vst.msk [vmem:[%s7529 + $0x60] sm:$0xff] %vm7530, %v7511
          %7544 = vst.msk [vmem:[%s7529 + $0x68] sm:$0xff] %vm7530, %v7512
          %7545 = vst.msk [vmem:[%s7529 + $0x70] sm:$0xff] %vm7530, %v7513
          %7546 = vst.msk [vmem:[%s7529 + $0x78] sm:$0xff] %vm7530, %v7514
        $region88: #{tpu_custom_call.1} parent=67 // pred_fallthru
          _
        %p7547 = scmp.eq.s32.totalorder %s35, 2
        // Predicated region
        $region89: #{tpu_custom_call.1} parent=67 // pred_check
          %p7548 = pneg %p7547
        $region90: #{tpu_custom_call.1} parent=67 // pred_check_branch
          %7550 = sbr.rel (%p7548) target = $region92
        $region91: #{tpu_custom_call.1} parent=67 // pred_region
          %v7551 = vld [vmem:[#allocation12] sm:$0x3]
          %7552 = vmatprep.subr.mxu0 0.0
          %7553 = vmatpush1.msra.mxu0 %v7492
          %7554 = vmatprep.subr.mxu0 0.0
          %7555 = vmatpush1.msra.mxu0 %v7487
          %7556 = vmatprep.subr.mxu0 0.0
          %7557 = vmatpush1.msra.mxu0 %v7482
          %7558 = vmatprep.subr.mxu0 0.0
          %7559 = vmatpush1.msra.mxu0 %v7477
          %7560 = vmatprep.subr.mxu0 0.0
          %7561 = vmatpush1.msra.mxu0 %v7472
          %7562 = vmatprep.subr.mxu0 0.0
          %7563 = vmatpush1.msra.mxu0 %v7467
          %7564 = vmatprep.subr.mxu0 0.0
          %7565 = vmatpush1.msra.mxu0 %v7462
          %7566 = vmatprep.subr.mxu0 0.0
          %7567 = vmatpush1.msra.mxu0 %v7457
          %7568 = vmatprep.subr.mxu0 0.0
          %7569 = vmatpush1.msra.mxu0 %v7452
          %7570 = vmatprep.subr.mxu0 0.0
          %7571 = vmatpush1.msra.mxu0 %v7447
          %7572 = vmatprep.subr.mxu0 0.0
          %7573 = vmatpush1.msra.mxu0 %v7442
          %7574 = vmatprep.subr.mxu0 0.0
          %7575 = vmatpush1.msra.mxu0 %v7437
          %7576 = vmatprep.subr.mxu0 0.0
          %7577 = vmatpush1.msra.mxu0 %v7432
          %7578 = vmatprep.subr.mxu0 0.0
          %7579 = vmatpush1.msra.mxu0 %v7427
          %7580 = vmatprep.subr.mxu0 0.0
          %7581 = vmatpush1.msra.mxu0 %v7422
          %7582 = vmatprep.subr.mxu0 0.0
          %7583 = vmatpush1.msra.mxu0 %v7417
          %7584 = vmatprep.subr.mxu0 0.0
          %7585 = vmatpush2.msra.mxu0 0.0
          %7586 = vmatprep.subr.mxu0 0.0
          %7587 = vmatpush2.msra.mxu0 0.0
          %7588 = vmatprep.subr.mxu0 0.0
          %7589 = vmatpush2.msra.mxu0 0.0
          %7590 = vmatprep.subr.mxu0 0.0
          %7591 = vmatpush2.msra.mxu0 0.0
          %7592 = vmatprep.subr.mxu0 0.0
          %7593 = vmatpush2.msra.mxu0 0.0
          %7594 = vmatprep.subr.mxu0 0.0
          %7595 = vmatpush2.msra.mxu0 0.0
          %7596 = vmatprep.subr.mxu0 0.0
          %7597 = vmatpush2.msra.mxu0 0.0
          %7598 = vmatprep.subr.mxu0 0.0
          %7599 = vmatpush2.msra.mxu0 0.0
          %7600 = vmatprep.subr.mxu0 0.0
          %7601 = vmatpush2.msra.mxu0 0.0
          %7602 = vmatprep.subr.mxu0 0.0
          %7603 = vmatpush2.msra.mxu0 0.0
          %7604 = vmatprep.subr.mxu0 0.0
          %7605 = vmatpush2.msra.mxu0 0.0
          %7606 = vmatprep.subr.mxu0 0.0
          %7607 = vmatpush2.msra.mxu0 0.0
          %7608 = vmatprep.subr.mxu0 0.0
          %7609 = vmatpush2.msra.mxu0 0.0
          %7610 = vmatprep.subr.mxu0 0.0
          %7611 = vmatpush2.msra.mxu0 0.0
          %7612 = vmatprep.subr.mxu0 0.0
          %7613 = vmatpush2.msra.mxu0 0.0
          %7614 = vmatprep.subr.mxu0 0.0
          %7615 = vmatpush2.msra.mxu0 0.0
          %7616 = vmatprep.mubr.f32.mxu0 0.0
          %7617 = vmatmul.mubr.f32.gmra.mxu0 %v1725
          %v7618 = vpop.f32.mrf.mxu0
          %v7619 = vadd.f32 0.0, %v7618
          %v7620 = vpop.f32.mrf.mxu0
          %7621 = vdwg.mxu0
          %v7622 = vadd.f32 %v7551, %v7619
          %vm7623 = vcmask 254976
          %7624 = vst.msk [vmem:[#allocation12] sm:$0x3] %vm7623, %v7622
        $region92: #{tpu_custom_call.1} parent=67 // pred_fallthru
          _
        %p7625 = pnand %p7547, %p515
        %p7626 = pneg %p7625
        // Predicated region
        $region93: #{tpu_custom_call.1} parent=67 // pred_check
          _
        $region94: #{tpu_custom_call.1} parent=67 // pred_check_branch
          %7628 = sbr.rel (%p7625) target = $region96
        $region95: #{tpu_custom_call.1} parent=67 // pred_region
          %v7629 = vld [vmem:[%s4] sm:$0x3]
          %v7630 = vmax.f32 %v7629, 1.0
          %v7631 = vld [vmem:[#allocation12] sm:$0x3]
          %7633 = vset.pattern.permute.xlu0 0
          %7634 = vperm.xlu0 %7633, %v7630
          %v7635 = vpop.permute.xlu0 %7634
          %v7637 = vrcp.pop %v7635
          %v7638 = vmul.f32 %v7631, %v7637
          %vm7639 = vcmask 254976
          %7640 = vst.msk [vmem:[#allocation12] sm:$0x3] %vm7639, %v7638
        $region96: #{tpu_custom_call.1} parent=67 // pred_fallthru
          _
        // Predicated region
        $region97: #{tpu_custom_call.1} parent=67 // pred_check
          %p7641 = pneg %p341
        $region98: #{tpu_custom_call.1} parent=67 // pred_check_branch
          %7643 = sbr.rel (%p7641) target = $region100
        $region99: #{tpu_custom_call.1} parent=67 // pred_region
          %s7645 = ssub.s32 32, 32
          %7646 = vsyncadd [#allocation13], %s7645
          %s7648 = sshll.u32 [#allocation12], 4
          %s7649 = int_to_ptr.vmem [resolvable:$true] %s7648
          %7651 = dma.vmem_to_hbm [thread:$0]  %s7649, 32, %s13, [#allocation13]
        $region100: #{tpu_custom_call.1} parent=67 // pred_fallthru
          _
        // Predicated region
        $region101: #{tpu_custom_call.1} parent=67 // pred_check
          %p7652 = pneg %p341
        $region102: #{tpu_custom_call.1} parent=67 // pred_check_branch
          %7654 = sbr.rel (%p7652) target = $region104
        $region103: #{tpu_custom_call.1} parent=67 // pred_region
          %7655 = dma.done [#allocation13], 32
        $region104: #{tpu_custom_call.1} parent=67 // pred_fallthru
          _
      $region68: #{tpu_custom_call.1} parent=5 // pred_fallthru
        _
      %p7656 = scmp.le.s32.totalorder 2, %s26
      // Predicated region
      $region105: #{tpu_custom_call.1} parent=5 // pred_check
        %p7657 = pneg %p7656
      $region106: #{tpu_custom_call.1} parent=5 // pred_check_branch
        %7659 = sbr.rel (%p7657) target = $region108
      $region107: #{tpu_custom_call.1} parent=5 // pred_region
        %s7660 = ssub.s32 %s26, 2
      $region108: #{tpu_custom_call.1} parent=5 // pred_fallthru
        _
    $region6: #{tpu_custom_call.1} parent=1 // loop_footer
      %s30 = sadd.s32 1, %s26
    $region7: #{tpu_custom_call.1} parent=1 // loop_footer_branch
      %25 = sbr.rel target = $region3
    $region8: #{tpu_custom_call.1} parent=1 // loop_exit
      _
    %7661 = vsyncpa [#allocation13], 1
    %s7662 = scalar_lea.sflag [#allocation13], 1
    %7663 = vsyncpa %s7662, 1

</llo_original>
